<compile_context>
chip_gen: v5e
topology: v5e:2x2
jax: 0.10.0
libtpu: 0.0.40
codegen_flags: <defaults>
</compile_context>

<pallas_src>
import functools

import jax
import jax.numpy as jnp
from jax import lax
from jax.experimental import pallas as pl
from jax.experimental.pallas import tpu as pltpu

EXPANSION = 4


# ----------------------------------------------------------------------------
# Generation-aware hardware knobs
# ----------------------------------------------------------------------------
@functools.lru_cache(maxsize=None)
def _tpu_num_cores():
    try:
        info = pltpu.get_tpu_info()
        for attr in ("num_cores", "core_count", "tensorcores_per_chip",
                     "num_tensorcores"):
            v = getattr(info, attr, None)
            if isinstance(v, int) and v > 0:
                return v
    except Exception:
        pass
    try:
        kind = jax.devices()[0].device_kind.lower()
        if "v7" in kind or "tpu7" in kind:
            return 2
    except Exception:
        pass
    return 1


@functools.lru_cache(maxsize=None)
def _vmem_limit_bytes():
    cap = None
    try:
        cap = int(pltpu.get_tpu_info().vmem_capacity_bytes)
    except Exception:
        cap = None
    if cap is None:
        try:
            kind = jax.devices()[0].device_kind.lower()
            cap = 64 * 2**20 if ("v7" in kind or "tpu7" in kind) else 128 * 2**20
        except Exception:
            cap = 64 * 2**20
    # ~25% headroom for compiler scratch / semaphores.
    return max(32 * 2**20, (cap * 3) // 4)


def _compiler_params(semantics):
    return pltpu.CompilerParams(dimension_semantics=semantics,
                                vmem_limit_bytes=_vmem_limit_bytes())


# ----------------------------------------------------------------------------
# Tiling helpers
# ----------------------------------------------------------------------------
def _round128(n):
    return ((n + 127) // 128) * 128


def _pick_tm(m):
    """Return (row_tile, padded_M).  Prefer one MXU-filling tile over many
    tiny tiles (tm=8 is ~3% MXU row utilisation + per-step overhead)."""
    for t in (256, 128):
        if m >= t and m % t == 0:
            return t, m
    if m <= 512:
        mp = max(16, ((m + 15) // 16) * 16)     # one tile; 16-row bf16 packing
        return mp, mp
    mp = ((m + 255) // 256) * 256
    return 256, mp


def _pick_tn(n, other_parallel_steps=1):
    """Lane-dense (multiple-of-128) column tile."""
    tn = n
    for t in (512, 256, 128):
        if n % t == 0:
            tn = t
            break
    # Only split N for the 2nd TensorCore on multi-core parts (v7x), and never
    # below 256 (keeps the 256-wide MXU full on v6e/v7x).
    if (_tpu_num_cores() > 1 and other_parallel_steps * (n // tn) < 2
            and n % 256 == 0 and n // 2 >= 256):
        tn = n // 2
    return tn


def _pick_th(h, w, tn, max_acc_elems=128 * 1024):
    """Largest divisor of H whose f32 accumulator (th*W, tn) stays <=512 KiB."""
    best = 1
    for th in range(1, h + 1):
        if h % th == 0 and th * w * tn <= max_acc_elems:
            best = th
    return best


# ----------------------------------------------------------------------------
# Pallas kernels
# ----------------------------------------------------------------------------
def _mm_bn_kernel(a_ref, b_ref, s_ref, t_ref, o_ref, *, relu):
    acc = jnp.dot(a_ref[...], b_ref[...], preferred_element_type=jnp.float32)
    y = acc * s_ref[...] + t_ref[...]
    if relu:
        y = jnp.maximum(y, 0.0)
    o_ref[...] = y.astype(o_ref.dtype)


def _mm_bn_res_relu_kernel(a_ref, b_ref, s_ref, t_ref, r_ref, o_ref):
    acc = jnp.dot(a_ref[...], b_ref[...], preferred_element_type=jnp.float32)
    y = acc * s_ref[...] + t_ref[...] + r_ref[...].astype(jnp.float32)
    o_ref[...] = jnp.maximum(y, 0.0).astype(o_ref.dtype)


def _conv3x3_kernel(x_ref, w_ref, s_ref, t_ref, o_ref, xs_ref, *, relu):
    """Direct 3x3 / stride-1 / pad-1 conv + BN (+ ReLU).

    x_ref : (1, H, W, Cin) bf16  -- full un-padded image (resident over hi/j)
    w_ref : (3, 3, Cin, tn) bf16
    s_ref/t_ref : (1, tn) f32    -- folded BN scale / bias
    o_ref : (1, th*W, tn) bf16   -- lane-dense flattened output rows
    xs_ref: ((H+2)*W, Cin) f32   -- scratch: image + zero top/bottom halo rows
    """
    _, h_img, w_img, cin = x_ref.shape
    _, blk_l, tn = o_ref.shape
    th = blk_l // w_img
    hi = pl.program_id(1)
    j = pl.program_id(2)

    # Fill the row-halo scratch once per image (first (hi, j) step for this b).
    @pl.when(jnp.logical_and(hi == 0, j == 0))
    def _fill():
        zrow = jnp.zeros((w_img, cin), jnp.float32)
        xs_ref[pl.ds(0, w_img), :] = zrow                       # top halo row
        xs_ref[pl.ds((h_img + 1) * w_img, w_img), :] = zrow     # bottom halo

        def fill_row(r, carry):
            off = pl.multiple_of((r + 1) * w_img, 8)
            xs_ref[pl.ds(off, w_img), :] = x_ref[0, r, :, :].astype(jnp.float32)
            return carry

        lax.fori_loop(0, h_img, fill_row, 0)

    L = th * w_img
    h0 = hi * th
    col = lax.broadcasted_iota(jnp.int32, (L, 1), 0) % w_img
    acc = jnp.zeros((L, tn), jnp.float32)
    for dy in range(3):
        start = pl.multiple_of((h0 + dy) * w_img, 8)
        slab = xs_ref[pl.ds(start, L), :]          # full-width rows, no copy
        for dx in range(3):
            if dx == 0:       # left tap: output col x reads input col x-1
                tap = jnp.where(col > 0, pltpu.roll(slab, 1, 0),
                                jnp.zeros_like(slab))
            elif dx == 2:     # right tap: output col x reads input col x+1
                tap = jnp.where(col < w_img - 1, pltpu.roll(slab, L - 1, 0),
                                jnp.zeros_like(slab))
            else:
                tap = slab
            acc = acc + jnp.dot(tap.astype(jnp.bfloat16), w_ref[dy, dx, :, :],
                                preferred_element_type=jnp.float32)
    y = acc * s_ref[...] + t_ref[...]
    if relu:
        y = jnp.maximum(y, 0.0)
    o_ref[...] = y.astype(o_ref.dtype)[None, :, :]


# ----------------------------------------------------------------------------
# Pallas wrappers
# ----------------------------------------------------------------------------
def matmul_bn(a, b, scale, bias, residual=None, relu=True):
    """act((a @ b) * scale + bias (+ residual)); bf16 operands, f32 epilogue."""
    m, k = a.shape
    n = b.shape[1]
    a = a.astype(jnp.bfloat16)
    if residual is not None:
        residual = residual.astype(jnp.bfloat16)

    tm, mp = _pick_tm(m)
    if mp != m:
        a = jnp.pad(a, ((0, mp - m), (0, 0)))
        if residual is not None:
            residual = jnp.pad(residual, ((0, mp - m), (0, 0)))
    m_steps = mp // tm
    tn = _pick_tn(n, m_steps)

    in_specs = [
        pl.BlockSpec((tm, k), lambda i, j: (i, 0)),
        pl.BlockSpec((k, tn), lambda i, j: (0, j)),
        pl.BlockSpec((1, tn), lambda i, j: (0, j)),
        pl.BlockSpec((1, tn), lambda i, j: (0, j)),
    ]
    args = [a, b, scale, bias]
    if residual is not None:
        in_specs.append(pl.BlockSpec((tm, tn), lambda i, j: (i, j)))
        args.append(residual)
        kernel = _mm_bn_res_relu_kernel
    else:
        kernel = functools.partial(_mm_bn_kernel, relu=relu)

    out = pl.pallas_call(
        kernel,
        out_shape=jax.ShapeDtypeStruct((mp, n), jnp.bfloat16),
        grid=(m_steps, n // tn),
        in_specs=in_specs,
        out_specs=pl.BlockSpec((tm, tn), lambda i, j: (i, j)),
        compiler_params=_compiler_params(("parallel", "parallel")),
    )(*args)
    return out if mp == m else out[:m]


def conv1x1_bn_act(x, p, relu=True, residual=None):
    """1x1 conv + BN (+ residual) (+ ReLU) fused in one Pallas matmul kernel."""
    b, h, w, cin = x.shape
    co_p = p["co_p"]
    a = x.reshape(b * h * w, cin)
    r = residual.reshape(b * h * w, co_p) if residual is not None else None
    y = matmul_bn(a, p["w"], p["scale"], p["bias"], residual=r, relu=relu)
    return y.reshape(b, h, w, co_p)


def _conv3x3_s1_im2col(x, p, relu):
    """Fallback for tiny / odd-width maps: one im2col matmul (HBM negligible)."""
    b, h, w, cin = x.shape
    xp = jnp.pad(x, ((0, 0), (1, 1), (1, 1), (0, 0)))
    cols = [xp[:, dy:dy + h, dx:dx + w, :]
            for dy in range(3) for dx in range(3)]
    a = jnp.concatenate(cols, axis=-1).reshape(b * h * w, 9 * cin)
    wm = p["w"].reshape(9 * cin, p["co_p"])
    y = matmul_bn(a, wm, p["scale"], p["bias"], relu=relu)
    return y.reshape(b, h, w, p["co_p"])


def conv3x3_s1_bn_act(x, p, relu=True):
    """3x3 / stride 1 / padding 1 conv + BN (+ ReLU).

    Large maps (W % 8 == 0): direct Pallas kernel, no XLA-side halo pad, row
    tiled, dx taps via pltpu.roll + edge masks.  Tiny/odd maps: im2col matmul.
    """
    b, h, w, cin = x.shape
    co_p = p["co_p"]
    if w % 8 != 0:
        return _conv3x3_s1_im2col(x, p, relu)

    x = x.astype(jnp.bfloat16)
    tn = _pick_tn(co_p, other_parallel_steps=b)
    th = _pick_th(h, w, tn)
    out = pl.pallas_call(
        functools.partial(_conv3x3_kernel, relu=relu),
        out_shape=jax.ShapeDtypeStruct((b, h * w, co_p), jnp.bfloat16),
        grid=(b, h // th, co_p // tn),
        in_specs=[
            pl.BlockSpec((1, h, w, cin), lambda bi, hi, j: (bi, 0, 0, 0)),
            pl.BlockSpec((3, 3, cin, tn), lambda bi, hi, j: (0, 0, 0, j)),
            pl.BlockSpec((1, tn), lambda bi, hi, j: (0, j)),
            pl.BlockSpec((1, tn), lambda bi, hi, j: (0, j)),
        ],
        out_specs=pl.BlockSpec((1, th * w, tn), lambda bi, hi, j: (bi, hi, j)),
        scratch_shapes=[pltpu.VMEM(((h + 2) * w, cin), jnp.float32)],
        compiler_params=_compiler_params(("parallel", "arbitrary", "arbitrary")),
    )(x, p["w"], p["scale"], p["bias"])
    return out.reshape(b, h, w, co_p)


def conv3x3_s2_stem(x, p):
    """Stem conv1 only (stride 2, Cin=3): tiny im2col + Pallas matmul (K=27)."""
    b, h, w, cin = x.shape
    stride = 2
    xp = jnp.pad(x, ((0, 0), (1, 1), (1, 1), (0, 0)))
    ho = (h + 2 - 3) // stride + 1
    wo = (w + 2 - 3) // stride + 1
    patches = []
    for dy in range(3):
        for dx in range(3):
            patches.append(xp[:, dy:dy + stride * (ho - 1) + 1:stride,
                              dx:dx + stride * (wo - 1) + 1:stride, :])
    a = jnp.concatenate(patches, axis=-1).reshape(b * ho * wo, 9 * cin)
    y = matmul_bn(a, p["w"], p["scale"], p["bias"], relu=True)
    return y.reshape(b, ho, wo, p["co_p"])


def avg_pool(x, s):
    """nn.AvgPool2d(s): kernel=s, stride=s, floor-drops the remainder."""
    if s == 1:
        return x
    b, h, w, c = x.shape
    ho, wo = h // s, w // s
    x = x[:, :ho * s, :wo * s, :]
    y = x.reshape(b, ho, s, wo, s, c).astype(jnp.float32)
    return y.mean(axis=(2, 4)).astype(x.dtype)


# ----------------------------------------------------------------------------
# Parameter construction (deterministic, synthetic) + TPU-friendly prep
# ----------------------------------------------------------------------------
def init_conv(key, cout, cin, kh, kw):
    fan_in = cin * kh * kw
    return jax.random.normal(key, (cout, cin, kh, kw), jnp.float32) / jnp.sqrt(
        float(fan_in))


def init_bn(key, c, eps=1e-5):
    k1, k2, k3, k4 = jax.random.split(key, 4)
    gamma = 1.0 + 0.1 * jax.random.normal(k1, (c,), jnp.float32)
    beta = 0.1 * jax.random.normal(k2, (c,), jnp.float32)
    mean = 0.1 * jax.random.normal(k3, (c,), jnp.float32)
    var = 0.5 + jax.random.uniform(k4, (c,), jnp.float32)
    scale = gamma / jnp.sqrt(var + eps)
    bias = beta - mean * scale
    return scale, bias


def make_bottleneck_params(key, inplanes, planes, stride):
    ks = jax.random.split(key, 8)
    p = {
        "conv1_w": init_conv(ks[0], planes, inplanes, 1, 1),
        "bn1": init_bn(ks[1], planes),
        "conv2_w": init_conv(ks[2], planes, planes, 3, 3),
        "bn2": init_bn(ks[3], planes),
        "conv3_w": init_conv(ks[4], planes * EXPANSION, planes, 1, 1),
        "bn3": init_bn(ks[5], planes * EXPANSION),
        "stride": stride,
        "ds_conv_w": None,
        "ds_bn": None,
    }
    if stride > 1 or inplanes != planes * EXPANSION:
        p["ds_conv_w"] = init_conv(ks[6], planes * EXPANSION, inplanes, 1, 1)
        p["ds_bn"] = init_bn(ks[7], planes * EXPANSION)
    return p


def make_resnet_params(key, layers, in_chn=3, width=64):
    keys = jax.random.split(key, 16)
    params = {
        "conv1_w": init_conv(keys[0], width // 2, in_chn, 3, 3),
        "bn1": init_bn(keys[1], width // 2),
        "conv2_w": init_conv(keys[2], width // 2, width // 2, 3, 3),
        "bn2": init_bn(keys[3], width // 2),
        "conv3_w": init_conv(keys[4], width, width // 2, 3, 3),
        "bn3": init_bn(keys[5], width),
    }
    inplanes = width
    stage_planes = (width, width * 2, width * 4, width * 8)
    stage_strides = (1, 2, 2, 2)
    stages = []
    for si in range(4):
        blocks = []
        planes, stride = stage_planes[si], stage_strides[si]
        for b in range(layers[si]):
            s = stride if b == 0 else 1
            bkey = jax.random.fold_in(keys[6 + si], b)
            blocks.append(make_bottleneck_params(bkey, inplanes, planes, s))
            inplanes = planes * EXPANSION
        stages.append(blocks)
    params["stages"] = stages
    return params


def _prep_bn(scale, bias, co_p):
    s = jnp.zeros((1, co_p), jnp.float32).at[0, :scale.shape[0]].set(scale)
    t = jnp.zeros((1, co_p), jnp.float32).at[0, :bias.shape[0]].set(bias)
    return s, t        # padded channels: scale=0, bias=0 -> output exactly 0


def _prep_conv1x1(w, bn, ci_p):
    cout, cin = w.shape[0], w.shape[1]
    co_p = _round128(cout)
    wm = jnp.zeros((ci_p, co_p), jnp.float32).at[:cin, :cout].set(
        w.reshape(cout, cin).T)
    s, t = _prep_bn(*bn, co_p)
    return {"w": wm.astype(jnp.bfloat16), "scale": s, "bias": t,
            "cout": cout, "co_p": co_p}


def _prep_conv3x3(w, bn, ci_p):
    cout, cin = w.shape[0], w.shape[1]
    co_p = _round128(cout)
    wt = jnp.transpose(w, (2, 3, 1, 0))                  # (3, 3, Cin, Cout)
    wm = jnp.zeros((3, 3, ci_p, co_p), jnp.float32).at[
        :, :, :cin, :cout].set(wt)
    s, t = _prep_bn(*bn, co_p)
    return {"w": wm.astype(jnp.bfloat16), "scale": s, "bias": t,
            "cout": cout, "co_p": co_p}


def _prep_conv3x3_im2col(w, bn):
    cout, cin = w.shape[0], w.shape[1]
    co_p = _round128(cout)
    wt = jnp.transpose(w, (2, 3, 1, 0)).reshape(9 * cin, cout)
    wm = jnp.zeros((9 * cin, co_p), jnp.float32).at[:, :cout].set(wt)
    s, t = _prep_bn(*bn, co_p)
    return {"w": wm.astype(jnp.bfloat16), "scale": s, "bias": t,
            "cout": cout, "co_p": co_p}


def prepare_params(params):
    """Fold/pad/cast raw PyTorch-layout params into the kernels' layouts."""
    pp = {"conv1": _prep_conv3x3_im2col(params["conv1_w"], params["bn1"])}
    c = pp["conv1"]["co_p"]
    pp["conv2"] = _prep_conv3x3(params["conv2_w"], params["bn2"], c)
    c = pp["conv2"]["co_p"]
    pp["conv3"] = _prep_conv3x3(params["conv3_w"], params["bn3"], c)
    c = pp["conv3"]["co_p"]
    stages = []
    for stage in params["stages"]:
        blocks = []
        for blk in stage:
            pb = {"stride": blk["stride"]}
            pb["conv1"] = _prep_conv1x1(blk["conv1_w"], blk["bn1"], c)
            pb["conv2"] = _prep_conv3x3(blk["conv2_w"], blk["bn2"],
                                        pb["conv1"]["co_p"])
            pb["conv3"] = _prep_conv1x1(blk["conv3_w"], blk["bn3"],
                                        pb["conv2"]["co_p"])
            pb["ds"] = (_prep_conv1x1(blk["ds_conv_w"], blk["ds_bn"], c)
                        if blk["ds_conv_w"] is not None else None)
            c = pb["conv3"]["co_p"]
            blocks.append(pb)
        stages.append(blocks)
    pp["stages"] = stages
    return pp


# ----------------------------------------------------------------------------
# Forward pass
# ----------------------------------------------------------------------------
def bottleneck_forward(x, pb):
    out = conv1x1_bn_act(x, pb["conv1"], relu=True)          # 1x1 + bn + relu
    out = conv3x3_s1_bn_act(out, pb["conv2"], relu=True)     # 3x3 + bn + relu
    out = avg_pool(out, pb["stride"])                        # anti-aliasing
    if pb["ds"] is not None:
        identity = conv1x1_bn_act(avg_pool(x, pb["stride"]), pb["ds"],
                                  relu=False)
    else:
        identity = x
    # conv3 + bn3 + residual add + relu fused in one Pallas kernel
    return conv1x1_bn_act(out, pb["conv3"], relu=True, residual=identity)


def _to_nchw(x, c_real):
    return jnp.transpose(x[..., :c_real].astype(jnp.float32), (0, 3, 1, 2))


def modified_resnet_forward(prepped, x_nchw):
    """Returns the list of 6 feature maps, each NCHW like the PyTorch model."""
    x_nchw = x_nchw.astype(jnp.float32)   # x = x.type(self.conv1.weight.dtype)
    outs = [x_nchw]
    x = jnp.transpose(x_nchw, (0, 2, 3, 1))                        # NHWC

    x = conv3x3_s2_stem(x, prepped["conv1"])
    x = conv3x3_s1_bn_act(x, prepped["conv2"], relu=True)
    x = conv3x3_s1_bn_act(x, prepped["conv3"], relu=True)
    outs.append(_to_nchw(x, prepped["conv3"]["cout"]))

    x = avg_pool(x, 2)
    for stage in prepped["stages"]:
        for pb in stage:
            x = bottleneck_forward(x, pb)
        outs.append(_to_nchw(x, stage[-1]["conv3"]["cout"]))
    return outs


# ----------------------------------------------------------------------------
if __name__ == "__main__":
    key = jax.random.PRNGKey(0)
    k_param, k_in = jax.random.split(key)

    layers = (1, 1, 1, 1)
    in_chn, width = 3, 16
    raw_params = make_resnet_params(k_param, layers, in_chn=in_chn, width=width)
    prepped = prepare_params(raw_params)

    # NCHW input, small: spatial 32 so every AvgPool2d/stride divides evenly.
    x = jax.random.normal(k_in, (2, in_chn, 32, 32), jnp.float32)

    fwd = jax.jit(lambda inp: modified_resnet_forward(prepped, inp))
    outs = fwd(x)
    outs = [jax.block_until_ready(o) for o in outs]

    expected = [
        (2, 3, 32, 32),     # input echo
        (2, 16, 16, 16),    # stem
        (2, 64, 8, 8),      # layer1
        (2, 128, 4, 4),     # layer2
        (2, 256, 2, 2),     # layer3
        (2, 512, 1, 1),     # layer4
    ]
    assert [tuple(o.shape) for o in outs] == expected, \
        [tuple(o.shape) for o in outs]
    assert all(bool(jnp.isfinite(o).all()) for o in outs)
    print("KERNEL_OK")
</pallas_src>

<mosaic_0001>
module attributes {stable_mosaic.version = 11 : i64} {
  func.func @_mm_bn_kernel(%arg0: i32, %arg1: i32, %arg2: memref<256x27xbf16, #tpu.memory_space<vmem>>, %arg3: memref<27x128xbf16, #tpu.memory_space<vmem>>, %arg4: memref<1x128xf32, #tpu.memory_space<vmem>>, %arg5: memref<1x128xf32, #tpu.memory_space<vmem>>, %arg6: memref<256x128xbf16, #tpu.memory_space<vmem>>) attributes {dimension_semantics = [#tpu.dimension_semantics<parallel>, #tpu.dimension_semantics<parallel>], iteration_bounds = array<i64: 2, 1>, scalar_prefetch = 0 : i64, scratch_operands = 0 : i64, tpu.core_type = #tpu.core_type<tc>, window_params = [{transform_indices = @transform_0, window_bounds = array<i64: 256, 27>}, {transform_indices = @transform_1, window_bounds = array<i64: 27, 128>}, {transform_indices = @transform_2, window_bounds = array<i64: 1, 128>}, {transform_indices = @transform_3, window_bounds = array<i64: 1, 128>}, {transform_indices = @transform_4, window_bounds = array<i64: 256, 128>}]} {
    %c0 = arith.constant 0 : index
    %c0_0 = arith.constant 0 : index
    %0 = vector.load %arg2[%c0, %c0_0] : memref<256x27xbf16, #tpu.memory_space<vmem>>, vector<256x27xbf16>
    %c0_1 = arith.constant 0 : index
    %c0_2 = arith.constant 0 : index
    %1 = vector.load %arg3[%c0_1, %c0_2] : memref<27x128xbf16, #tpu.memory_space<vmem>>, vector<27x128xbf16>
    %cst = arith.constant dense<0.000000e+00> : vector<256x128xf32>
    %2 = tpu.matmul %0, %1, %cst {dimension_numbers = #tpu.dot_dimension_numbers<[1], [0], [0], [1], [0, 0, 1, 1], [], []>} : vector<256x27xbf16>, vector<27x128xbf16>, vector<256x128xf32> -> vector<256x128xf32>
    %c0_3 = arith.constant 0 : index
    %c0_4 = arith.constant 0 : index
    %3 = vector.load %arg4[%c0_3, %c0_4] : memref<1x128xf32, #tpu.memory_space<vmem>>, vector<1x128xf32>
    %4 = vector.broadcast %3 : vector<1x128xf32> to vector<256x128xf32>
    %5 = arith.mulf %2, %4 : vector<256x128xf32>
    %c0_5 = arith.constant 0 : index
    %c0_6 = arith.constant 0 : index
    %6 = vector.load %arg5[%c0_5, %c0_6] : memref<1x128xf32, #tpu.memory_space<vmem>>, vector<1x128xf32>
    %7 = vector.broadcast %6 : vector<1x128xf32> to vector<256x128xf32>
    %8 = arith.addf %5, %7 : vector<256x128xf32>
    %cst_7 = arith.constant 0.000000e+00 : f32
    %9 = vector.broadcast %cst_7 : f32 to vector<256x128xf32>
    %10 = arith.maximumf %8, %9 : vector<256x128xf32>
    %11 = arith.truncf %10 : vector<256x128xf32> to vector<256x128xbf16>
    %c0_8 = arith.constant 0 : index
    %c0_9 = arith.constant 0 : index
    %12 = vector.load %arg6[%c0_8, %c0_9] : memref<256x128xbf16, #tpu.memory_space<vmem>>, vector<256x128xbf16>
    tpu.vector_store %arg6[%c0_8, %c0_9], %11 {strides = array<i32>} : memref<256x128xbf16, #tpu.memory_space<vmem>>, vector<256x128xbf16>,
    return
  }
  func.func @transform_0(%arg0: i32, %arg1: i32) -> (i32, i32) {
    %c0_i32 = arith.constant 0 : i32
    %c0_i32_0 = arith.constant 0 : i32
    return %arg0, %c0_i32 : i32, i32
  }
  func.func @transform_1(%arg0: i32, %arg1: i32) -> (i32, i32) {
    %c0_i32 = arith.constant 0 : i32
    %c0_i32_0 = arith.constant 0 : i32
    return %c0_i32, %arg1 : i32, i32
  }
  func.func @transform_2(%arg0: i32, %arg1: i32) -> (i32, i32) {
    %c0_i32 = arith.constant 0 : i32
    %c0_i32_0 = arith.constant 0 : i32
    return %c0_i32, %arg1 : i32, i32
  }
  func.func @transform_3(%arg0: i32, %arg1: i32) -> (i32, i32) {
    %c0_i32 = arith.constant 0 : i32
    %c0_i32_0 = arith.constant 0 : i32
    return %c0_i32, %arg1 : i32, i32
  }
  func.func @transform_4(%arg0: i32, %arg1: i32) -> (i32, i32) {
    %c0_i32 = arith.constant 0 : i32
    return %arg0, %arg1 : i32, i32
  }
}

module attributes {stable_mosaic.version = 11 : i64} {
  func.func @_conv3x3_kernel(%arg0: i32, %arg1: i32, %arg2: i32, %arg3: memref<1x16x16x128xbf16, #tpu.memory_space<vmem>>, %arg4: memref<3x3x128x128xbf16, #tpu.memory_space<vmem>>, %arg5: memref<1x128xf32, #tpu.memory_space<vmem>>, %arg6: memref<1x128xf32, #tpu.memory_space<vmem>>, %arg7: memref<1x256x128xbf16, #tpu.memory_space<vmem>>, %arg8: memref<288x128xf32, #tpu.memory_space<vmem>>) attributes {dimension_semantics = [#tpu.dimension_semantics<parallel>, #tpu.dimension_semantics<arbitrary>, #tpu.dimension_semantics<arbitrary>], iteration_bounds = array<i64: 2, 1, 1>, scalar_prefetch = 0 : i64, scratch_operands = 1 : i64, tpu.core_type = #tpu.core_type<tc>, window_params = [{transform_indices = @transform_0, window_bounds = array<i64: 1, 16, 16, 128>}, {transform_indices = @transform_1, window_bounds = array<i64: 3, 3, 128, 128>}, {transform_indices = @transform_2, window_bounds = array<i64: 1, 128>}, {transform_indices = @transform_3, window_bounds = array<i64: 1, 128>}, {transform_indices = @transform_4, window_bounds = array<i64: 1, 256, 128>}]} {
    %c0_i32 = arith.constant 0 : i32
    %0 = arith.cmpi eq, %arg1, %c0_i32 : i32
    %c0_i32_0 = arith.constant 0 : i32
    %1 = arith.cmpi eq, %arg2, %c0_i32_0 : i32
    %2 = arith.andi %0, %1 : i1
    %3 = arith.extui %2 : i1 to i32
    %c0_i32_1 = arith.constant 0 : i32
    %4 = arith.cmpi ne, %3, %c0_i32_1 : i32
    scf.if %4 {
      %cst_81 = arith.constant 0.000000e+00 : f32
      %137 = vector.broadcast %cst_81 : f32 to vector<16x128xf32>
      %c0_82 = arith.constant 0 : index
      %c0_83 = arith.constant 0 : index
      %138 = vector.load %arg8[%c0_82, %c0_83] : memref<288x128xf32, #tpu.memory_space<vmem>>, vector<16x128xf32>
      tpu.vector_store %arg8[%c0_82, %c0_83], %137 {strides = array<i32>} : memref<288x128xf32, #tpu.memory_space<vmem>>, vector<16x128xf32>,
      %c272 = arith.constant 272 : index
      %c0_84 = arith.constant 0 : index
      %139 = vector.load %arg8[%c272, %c0_84] : memref<288x128xf32, #tpu.memory_space<vmem>>, vector<16x128xf32>
      tpu.vector_store %arg8[%c272, %c0_84], %137 {strides = array<i32>} : memref<288x128xf32, #tpu.memory_space<vmem>>, vector<16x128xf32>,
      %c0_i32_85 = arith.constant 0 : i32
      %c16_i32_86 = arith.constant 16 : i32
      %140 = arith.addi %c0_i32_85, %c16_i32_86 : i32
      %c1_i32_87 = arith.constant 1 : i32
      scf.for %arg9 = %c0_i32_85 to %140 step %c1_i32_87  : i32 {
        %c1_i32_89 = arith.constant 1 : i32
        %141 = arith.addi %arg9, %c1_i32_89 : i32
        %c16_i32_90 = arith.constant 16 : i32
        %142 = arith.muli %141, %c16_i32_90 : i32
        %143 = tpu.assume_multiple %142, 8 : i32
        %c0_91 = arith.constant 0 : index
        %144 = arith.index_cast %arg9 : i32 to index
        %c0_92 = arith.constant 0 : index
        %c0_93 = arith.constant 0 : index
        %145 = vector.load %arg3[%c0_91, %144, %c0_92, %c0_93] : memref<1x16x16x128xbf16, #tpu.memory_space<vmem>>, vector<1x1x16x128xbf16>
        %146 = vector.shape_cast %145 : vector<1x1x16x128xbf16> to vector<16x128xbf16>
        %147 = arith.extf %146 : vector<16x128xbf16> to vector<16x128xf32>
        %148 = arith.index_cast %143 : i32 to index
        %c0_94 = arith.constant 0 : index
        %149 = vector.load %arg8[%148, %c0_94] : memref<288x128xf32, #tpu.memory_space<vmem>>, vector<16x128xf32>
        tpu.vector_store %arg8[%148, %c0_94], %147 {strides = array<i32>} : memref<288x128xf32, #tpu.memory_space<vmem>>, vector<16x128xf32>,
      }
      %c16_i32_88 = arith.constant 16 : i32
    } else {
    }
    %c16_i32 = arith.constant 16 : i32
    %5 = arith.muli %arg1, %c16_i32 : i32
    %6 = tpu.iota {dimensions = array<i32: 0>} : vector<256x1xi32>
    %c16_i32_2 = arith.constant 16 : i32
    %c0_i32_3 = arith.constant 0 : i32
    %7 = arith.cmpi eq, %c16_i32_2, %c0_i32_3 : i32
    %c1_i32 = arith.constant 1 : i32
    %8 = arith.select %7, %c1_i32, %c16_i32_2 : i32
    %9 = vector.broadcast %8 : i32 to vector<256x1xi32>
    %10 = arith.remsi %6, %9 : vector<256x1xi32>
    %c0_i32_4 = arith.constant 0 : i32
    %11 = vector.broadcast %c0_i32_4 : i32 to vector<256x1xi32>
    %12 = arith.cmpi ne, %10, %11 : vector<256x1xi32>
    %c0_i32_5 = arith.constant 0 : i32
    %13 = vector.broadcast %c0_i32_5 : i32 to vector<256x1xi32>
    %14 = arith.cmpi slt, %10, %13 : vector<256x1xi32>
    %c0_i32_6 = arith.constant 0 : i32
    %15 = arith.cmpi slt, %8, %c0_i32_6 : i32
    %16 = vector.broadcast %15 : i1 to vector<256x1xi1>
    %17 = vector.broadcast %16 : vector<256x1xi1> to vector<256x1xi1>
    %18 = arith.xori %14, %17 : vector<256x1xi1>
    %19 = arith.andi %18, %12 : vector<256x1xi1>
    %20 = vector.broadcast %8 : i32 to vector<256x1xi32>
    %21 = arith.addi %10, %20 : vector<256x1xi32>
    %22 = arith.select %19, %21, %10 : vector<256x1xi1>, vector<256x1xi32>
    %cst = arith.constant 0.000000e+00 : f32
    %23 = vector.broadcast %cst : f32 to vector<256x128xf32>
    %c0_i32_7 = arith.constant 0 : i32
    %24 = arith.addi %5, %c0_i32_7 : i32
    %c16_i32_8 = arith.constant 16 : i32
    %25 = arith.muli %24, %c16_i32_8 : i32
    %26 = tpu.assume_multiple %25, 8 : i32
    %27 = arith.index_cast %26 : i32 to index
    %c0 = arith.constant 0 : index
    %28 = vector.load %arg8[%27, %c0] : memref<288x128xf32, #tpu.memory_space<vmem>>, vector<256x128xf32>
    %c0_i32_9 = arith.constant 0 : i32
    %29 = vector.broadcast %c0_i32_9 : i32 to vector<256x1xi32>
    %30 = arith.cmpi sgt, %22, %29 : vector<256x1xi32>
    %c1_i32_10 = arith.constant 1 : i32
    %31 = tpu.dynamic_rotate %28 by %c1_i32_10 dim 0 : vector<256x128xf32>, i32 -> vector<256x128xf32>
    %cst_11 = arith.constant 0.000000e+00 : f32
    %32 = vector.broadcast %cst_11 : f32 to vector<256x128xf32>
    %33 = vector.shape_cast %30 : vector<256x1xi1> to vector<256x1xi1>
    %34 = vector.broadcast %33 : vector<256x1xi1> to vector<256x128xi1>
    %35 = arith.select %34, %31, %32 : vector<256x128xi1>, vector<256x128xf32>
    %36 = arith.truncf %35 : vector<256x128xf32> to vector<256x128xbf16>
    %c0_12 = arith.constant 0 : index
    %c0_13 = arith.constant 0 : index
    %c0_14 = arith.constant 0 : index
    %c0_15 = arith.constant 0 : index
    %37 = vector.load %arg4[%c0_12, %c0_13, %c0_14, %c0_15] : memref<3x3x128x128xbf16, #tpu.memory_space<vmem>>, vector<1x1x128x128xbf16>
    %38 = vector.shape_cast %37 : vector<1x1x128x128xbf16> to vector<128x128xbf16>
    %cst_16 = arith.constant dense<0.000000e+00> : vector<256x128xf32>
    %39 = tpu.matmul %36, %38, %cst_16 {dimension_numbers = #tpu.dot_dimension_numbers<[1], [0], [0], [1], [0, 0, 1, 1], [], []>} : vector<256x128xbf16>, vector<128x128xbf16>, vector<256x128xf32> -> vector<256x128xf32>
    %40 = arith.addf %23, %39 : vector<256x128xf32>
    %41 = arith.truncf %28 : vector<256x128xf32> to vector<256x128xbf16>
    %c0_17 = arith.constant 0 : index
    %c1 = arith.constant 1 : index
    %c0_18 = arith.constant 0 : index
    %c0_19 = arith.constant 0 : index
    %42 = vector.load %arg4[%c0_17, %c1, %c0_18, %c0_19] : memref<3x3x128x128xbf16, #tpu.memory_space<vmem>>, vector<1x1x128x128xbf16>
    %43 = vector.shape_cast %42 : vector<1x1x128x128xbf16> to vector<128x128xbf16>
    %cst_20 = arith.constant dense<0.000000e+00> : vector<256x128xf32>
    %44 = tpu.matmul %41, %43, %cst_20 {dimension_numbers = #tpu.dot_dimension_numbers<[1], [0], [0], [1], [0, 0, 1, 1], [], []>} : vector<256x128xbf16>, vector<128x128xbf16>, vector<256x128xf32> -> vector<256x128xf32>
    %45 = arith.addf %40, %44 : vector<256x128xf32>
    %c15_i32 = arith.constant 15 : i32
    %46 = vector.broadcast %c15_i32 : i32 to vector<256x1xi32>
    %47 = arith.cmpi slt, %22, %46 : vector<256x1xi32>
    %c255_i32 = arith.constant 255 : i32
    %48 = tpu.dynamic_rotate %28 by %c255_i32 dim 0 : vector<256x128xf32>, i32 -> vector<256x128xf32>
    %cst_21 = arith.constant 0.000000e+00 : f32
    %49 = vector.broadcast %cst_21 : f32 to vector<256x128xf32>
    %50 = vector.shape_cast %47 : vector<256x1xi1> to vector<256x1xi1>
    %51 = vector.broadcast %50 : vector<256x1xi1> to vector<256x128xi1>
    %52 = arith.select %51, %48, %49 : vector<256x128xi1>, vector<256x128xf32>
    %53 = arith.truncf %52 : vector<256x128xf32> to vector<256x128xbf16>
    %c0_22 = arith.constant 0 : index
    %c2 = arith.constant 2 : index
    %c0_23 = arith.constant 0 : index
    %c0_24 = arith.constant 0 : index
    %54 = vector.load %arg4[%c0_22, %c2, %c0_23, %c0_24] : memref<3x3x128x128xbf16, #tpu.memory_space<vmem>>, vector<1x1x128x128xbf16>
    %55 = vector.shape_cast %54 : vector<1x1x128x128xbf16> to vector<128x128xbf16>
    %cst_25 = arith.constant dense<0.000000e+00> : vector<256x128xf32>
    %56 = tpu.matmul %53, %55, %cst_25 {dimension_numbers = #tpu.dot_dimension_numbers<[1], [0], [0], [1], [0, 0, 1, 1], [], []>} : vector<256x128xbf16>, vector<128x128xbf16>, vector<256x128xf32> -> vector<256x128xf32>
    %57 = arith.addf %45, %56 : vector<256x128xf32>
    %c1_i32_26 = arith.constant 1 : i32
    %58 = arith.addi %5, %c1_i32_26 : i32
    %c16_i32_27 = arith.constant 16 : i32
    %59 = arith.muli %58, %c16_i32_27 : i32
    %60 = tpu.assume_multiple %59, 8 : i32
    %61 = arith.index_cast %60 : i32 to index
    %c0_28 = arith.constant 0 : index
    %62 = vector.load %arg8[%61, %c0_28] : memref<288x128xf32, #tpu.memory_space<vmem>>, vector<256x128xf32>
    %c0_i32_29 = arith.constant 0 : i32
    %63 = vector.broadcast %c0_i32_29 : i32 to vector<256x1xi32>
    %64 = arith.cmpi sgt, %22, %63 : vector<256x1xi32>
    %c1_i32_30 = arith.constant 1 : i32
    %65 = tpu.dynamic_rotate %62 by %c1_i32_30 dim 0 : vector<256x128xf32>, i32 -> vector<256x128xf32>
    %cst_31 = arith.constant 0.000000e+00 : f32
    %66 = vector.broadcast %cst_31 : f32 to vector<256x128xf32>
    %67 = vector.shape_cast %64 : vector<256x1xi1> to vector<256x1xi1>
    %68 = vector.broadcast %67 : vector<256x1xi1> to vector<256x128xi1>
    %69 = arith.select %68, %65, %66 : vector<256x128xi1>, vector<256x128xf32>
    %70 = arith.truncf %69 : vector<256x128xf32> to vector<256x128xbf16>
    %c1_32 = arith.constant 1 : index
    %c0_33 = arith.constant 0 : index
    %c0_34 = arith.constant 0 : index
    %c0_35 = arith.constant 0 : index
    %71 = vector.load %arg4[%c1_32, %c0_33, %c0_34, %c0_35] : memref<3x3x128x128xbf16, #tpu.memory_space<vmem>>, vector<1x1x128x128xbf16>
    %72 = vector.shape_cast %71 : vector<1x1x128x128xbf16> to vector<128x128xbf16>
    %cst_36 = arith.constant dense<0.000000e+00> : vector<256x128xf32>
    %73 = tpu.matmul %70, %72, %cst_36 {dimension_numbers = #tpu.dot_dimension_numbers<[1], [0], [0], [1], [0, 0, 1, 1], [], []>} : vector<256x128xbf16>, vector<128x128xbf16>, vector<256x128xf32> -> vector<256x128xf32>
    %74 = arith.addf %57, %73 : vector<256x128xf32>
    %75 = arith.truncf %62 : vector<256x128xf32> to vector<256x128xbf16>
    %c1_37 = arith.constant 1 : index
    %c1_38 = arith.constant 1 : index
    %c0_39 = arith.constant 0 : index
    %c0_40 = arith.constant 0 : index
    %76 = vector.load %arg4[%c1_37, %c1_38, %c0_39, %c0_40] : memref<3x3x128x128xbf16, #tpu.memory_space<vmem>>, vector<1x1x128x128xbf16>
    %77 = vector.shape_cast %76 : vector<1x1x128x128xbf16> to vector<128x128xbf16>
    %cst_41 = arith.constant dense<0.000000e+00> : vector<256x128xf32>
    %78 = tpu.matmul %75, %77, %cst_41 {dimension_numbers = #tpu.dot_dimension_numbers<[1], [0], [0], [1], [0, 0, 1, 1], [], []>} : vector<256x128xbf16>, vector<128x128xbf16>, vector<256x128xf32> -> vector<256x128xf32>
    %79 = arith.addf %74, %78 : vector<256x128xf32>
    %c15_i32_42 = arith.constant 15 : i32
    %80 = vector.broadcast %c15_i32_42 : i32 to vector<256x1xi32>
    %81 = arith.cmpi slt, %22, %80 : vector<256x1xi32>
    %c255_i32_43 = arith.constant 255 : i32
    %82 = tpu.dynamic_rotate %62 by %c255_i32_43 dim 0 : vector<256x128xf32>, i32 -> vector<256x128xf32>
    %cst_44 = arith.constant 0.000000e+00 : f32
    %83 = vector.broadcast %cst_44 : f32 to vector<256x128xf32>
    %84 = vector.shape_cast %81 : vector<256x1xi1> to vector<256x1xi1>
    %85 = vector.broadcast %84 : vector<256x1xi1> to vector<256x128xi1>
    %86 = arith.select %85, %82, %83 : vector<256x128xi1>, vector<256x128xf32>
    %87 = arith.truncf %86 : vector<256x128xf32> to vector<256x128xbf16>
    %c1_45 = arith.constant 1 : index
    %c2_46 = arith.constant 2 : index
    %c0_47 = arith.constant 0 : index
    %c0_48 = arith.constant 0 : index
    %88 = vector.load %arg4[%c1_45, %c2_46, %c0_47, %c0_48] : memref<3x3x128x128xbf16, #tpu.memory_space<vmem>>, vector<1x1x128x128xbf16>
    %89 = vector.shape_cast %88 : vector<1x1x128x128xbf16> to vector<128x128xbf16>
    %cst_49 = arith.constant dense<0.000000e+00> : vector<256x128xf32>
    %90 = tpu.matmul %87, %89, %cst_49 {dimension_numbers = #tpu.dot_dimension_numbers<[1], [0], [0], [1], [0, 0, 1, 1], [], []>} : vector<256x128xbf16>, vector<128x128xbf16>, vector<256x128xf32> -> vector<256x128xf32>
    %91 = arith.addf %79, %90 : vector<256x128xf32>
    %c2_i32 = arith.constant 2 : i32
    %92 = arith.addi %5, %c2_i32 : i32
    %c16_i32_50 = arith.constant 16 : i32
    %93 = arith.muli %92, %c16_i32_50 : i32
    %94 = tpu.assume_multiple %93, 8 : i32
    %95 = arith.index_cast %94 : i32 to index
    %c0_51 = arith.constant 0 : index
    %96 = vector.load %arg8[%95, %c0_51] : memref<288x128xf32, #tpu.memory_space<vmem>>, vector<256x128xf32>
    %c0_i32_52 = arith.constant 0 : i32
    %97 = vector.broadcast %c0_i32_52 : i32 to vector<256x1xi32>
    %98 = arith.cmpi sgt, %22, %97 : vector<256x1xi32>
    %c1_i32_53 = arith.constant 1 : i32
    %99 = tpu.dynamic_rotate %96 by %c1_i32_53 dim 0 : vector<256x128xf32>, i32 -> vector<256x128xf32>
    %cst_54 = arith.constant 0.000000e+00 : f32
    %100 = vector.broadcast %cst_54 : f32 to vector<256x128xf32>
    %101 = vector.shape_cast %98 : vector<256x1xi1> to vector<256x1xi1>
    %102 = vector.broadcast %101 : vector<256x1xi1> to vector<256x128xi1>
    %103 = arith.select %102, %99, %100 : vector<256x128xi1>, vector<256x128xf32>
    %104 = arith.truncf %103 : vector<256x128xf32> to vector<256x128xbf16>
    %c2_55 = arith.constant 2 : index
    %c0_56 = arith.constant 0 : index
    %c0_57 = arith.constant 0 : index
    %c0_58 = arith.constant 0 : index
    %105 = vector.load %arg4[%c2_55, %c0_56, %c0_57, %c0_58] : memref<3x3x128x128xbf16, #tpu.memory_space<vmem>>, vector<1x1x128x128xbf16>
    %106 = vector.shape_cast %105 : vector<1x1x128x128xbf16> to vector<128x128xbf16>
    %cst_59 = arith.constant dense<0.000000e+00> : vector<256x128xf32>
    %107 = tpu.matmul %104, %106, %cst_59 {dimension_numbers = #tpu.dot_dimension_numbers<[1], [0], [0], [1], [0, 0, 1, 1], [], []>} : vector<256x128xbf16>, vector<128x128xbf16>, vector<256x128xf32> -> vector<256x128xf32>
    %108 = arith.addf %91, %107 : vector<256x128xf32>
    %109 = arith.truncf %96 : vector<256x128xf32> to vector<256x128xbf16>
    %c2_60 = arith.constant 2 : index
    %c1_61 = arith.constant 1 : index
    %c0_62 = arith.constant 0 : index
    %c0_63 = arith.constant 0 : index
    %110 = vector.load %arg4[%c2_60, %c1_61, %c0_62, %c0_63] : memref<3x3x128x128xbf16, #tpu.memory_space<vmem>>, vector<1x1x128x128xbf16>
    %111 = vector.shape_cast %110 : vector<1x1x128x128xbf16> to vector<128x128xbf16>
    %cst_64 = arith.constant dense<0.000000e+00> : vector<256x128xf32>
    %112 = tpu.matmul %109, %111, %cst_64 {dimension_numbers = #tpu.dot_dimension_numbers<[1], [0], [0], [1], [0, 0, 1, 1], [], []>} : vector<256x128xbf16>, vector<128x128xbf16>, vector<256x128xf32> -> vector<256x128xf32>
    %113 = arith.addf %108, %112 : vector<256x128xf32>
    %c15_i32_65 = arith.constant 15 : i32
    %114 = vector.broadcast %c15_i32_65 : i32 to vector<256x1xi32>
    %115 = arith.cmpi slt, %22, %114 : vector<256x1xi32>
    %c255_i32_66 = arith.constant 255 : i32
    %116 = tpu.dynamic_rotate %96 by %c255_i32_66 dim 0 : vector<256x128xf32>, i32 -> vector<256x128xf32>
    %cst_67 = arith.constant 0.000000e+00 : f32
    %117 = vector.broadcast %cst_67 : f32 to vector<256x128xf32>
    %118 = vector.shape_cast %115 : vector<256x1xi1> to vector<256x1xi1>
    %119 = vector.broadcast %118 : vector<256x1xi1> to vector<256x128xi1>
    %120 = arith.select %119, %116, %117 : vector<256x128xi1>, vector<256x128xf32>
    %121 = arith.truncf %120 : vector<256x128xf32> to vector<256x128xbf16>
    %c2_68 = arith.constant 2 : index
    %c2_69 = arith.constant 2 : index
    %c0_70 = arith.constant 0 : index
    %c0_71 = arith.constant 0 : index
    %122 = vector.load %arg4[%c2_68, %c2_69, %c0_70, %c0_71] : memref<3x3x128x128xbf16, #tpu.memory_space<vmem>>, vector<1x1x128x128xbf16>
    %123 = vector.shape_cast %122 : vector<1x1x128x128xbf16> to vector<128x128xbf16>
    %cst_72 = arith.constant dense<0.000000e+00> : vector<256x128xf32>
    %124 = tpu.matmul %121, %123, %cst_72 {dimension_numbers = #tpu.dot_dimension_numbers<[1], [0], [0], [1], [0, 0, 1, 1], [], []>} : vector<256x128xbf16>, vector<128x128xbf16>, vector<256x128xf32> -> vector<256x128xf32>
    %125 = arith.addf %113, %124 : vector<256x128xf32>
    %c0_73 = arith.constant 0 : index
    %c0_74 = arith.constant 0 : index
    %126 = vector.load %arg5[%c0_73, %c0_74] : memref<1x128xf32, #tpu.memory_space<vmem>>, vector<1x128xf32>
    %127 = vector.broadcast %126 : vector<1x128xf32> to vector<256x128xf32>
    %128 = arith.mulf %125, %127 : vector<256x128xf32>
    %c0_75 = arith.constant 0 : index
    %c0_76 = arith.constant 0 : index
    %129 = vector.load %arg6[%c0_75, %c0_76] : memref<1x128xf32, #tpu.memory_space<vmem>>, vector<1x128xf32>
    %130 = vector.broadcast %129 : vector<1x128xf32> to vector<256x128xf32>
    %131 = arith.addf %128, %130 : vector<256x128xf32>
    %cst_77 = arith.constant 0.000000e+00 : f32
    %132 = vector.broadcast %cst_77 : f32 to vector<256x128xf32>
    %133 = arith.maximumf %131, %132 : vector<256x128xf32>
    %134 = arith.truncf %133 : vector<256x128xf32> to vector<256x128xbf16>
    %135 = vector.shape_cast %134 : vector<256x128xbf16> to vector<1x256x128xbf16>
    %c0_78 = arith.constant 0 : index
    %c0_79 = arith.constant 0 : index
    %c0_80 = arith.constant 0 : index
    %136 = vector.load %arg7[%c0_78, %c0_79, %c0_80] : memref<1x256x128xbf16, #tpu.memory_space<vmem>>, vector<1x256x128xbf16>
    tpu.vector_store %arg7[%c0_78, %c0_79, %c0_80], %135 {strides = array<i32>} : memref<1x256x128xbf16, #tpu.memory_space<vmem>>, vector<1x256x128xbf16>,
    return
  }
  func.func @transform_0(%arg0: i32, %arg1: i32, %arg2: i32) -> (i32, i32, i32, i32) {
    %c0_i32 = arith.constant 0 : i32
    %c0_i32_0 = arith.constant 0 : i32
    %c0_i32_1 = arith.constant 0 : i32
    %c0_i32_2 = arith.constant 0 : i32
    return %arg0, %c0_i32, %c0_i32_0, %c0_i32_1 : i32, i32, i32, i32
  }
  func.func @transform_1(%arg0: i32, %arg1: i32, %arg2: i32) -> (i32, i32, i32, i32) {
    %c0_i32 = arith.constant 0 : i32
    %c0_i32_0 = arith.constant 0 : i32
    %c0_i32_1 = arith.constant 0 : i32
    %c0_i32_2 = arith.constant 0 : i32
    return %c0_i32, %c0_i32_0, %c0_i32_1, %arg2 : i32, i32, i32, i32
  }
  func.func @transform_2(%arg0: i32, %arg1: i32, %arg2: i32) -> (i32, i32) {
    %c0_i32 = arith.constant 0 : i32
    %c0_i32_0 = arith.constant 0 : i32
    return %c0_i32, %arg2 : i32, i32
  }
  func.func @transform_3(%arg0: i32, %arg1: i32, %arg2: i32) -> (i32, i32) {
    %c0_i32 = arith.constant 0 : i32
    %c0_i32_0 = arith.constant 0 : i32
    return %c0_i32, %arg2 : i32, i32
  }
  func.func @transform_4(%arg0: i32, %arg1: i32, %arg2: i32) -> (i32, i32, i32) {
    %c0_i32 = arith.constant 0 : i32
    return %arg0, %arg1, %arg2 : i32, i32, i32
  }
}

module attributes {stable_mosaic.version = 11 : i64} {
  func.func @_mm_bn_kernel(%arg0: i32, %arg1: i32, %arg2: memref<128x128xbf16, #tpu.memory_space<vmem>>, %arg3: memref<128x128xbf16, #tpu.memory_space<vmem>>, %arg4: memref<1x128xf32, #tpu.memory_space<vmem>>, %arg5: memref<1x128xf32, #tpu.memory_space<vmem>>, %arg6: memref<128x128xbf16, #tpu.memory_space<vmem>>) attributes {dimension_semantics = [#tpu.dimension_semantics<parallel>, #tpu.dimension_semantics<parallel>], iteration_bounds = array<i64: 1, 1>, scalar_prefetch = 0 : i64, scratch_operands = 0 : i64, tpu.core_type = #tpu.core_type<tc>, window_params = [{transform_indices = @transform_0, window_bounds = array<i64: 128, 128>}, {transform_indices = @transform_1, window_bounds = array<i64: 128, 128>}, {transform_indices = @transform_2, window_bounds = array<i64: 1, 128>}, {transform_indices = @transform_3, window_bounds = array<i64: 1, 128>}, {transform_indices = @transform_4, window_bounds = array<i64: 128, 128>}]} {
    %c0 = arith.constant 0 : index
    %c0_0 = arith.constant 0 : index
    %0 = vector.load %arg2[%c0, %c0_0] : memref<128x128xbf16, #tpu.memory_space<vmem>>, vector<128x128xbf16>
    %c0_1 = arith.constant 0 : index
    %c0_2 = arith.constant 0 : index
    %1 = vector.load %arg3[%c0_1, %c0_2] : memref<128x128xbf16, #tpu.memory_space<vmem>>, vector<128x128xbf16>
    %cst = arith.constant dense<0.000000e+00> : vector<128x128xf32>
    %2 = tpu.matmul %0, %1, %cst {dimension_numbers = #tpu.dot_dimension_numbers<[1], [0], [0], [1], [0, 0, 1, 1], [], []>} : vector<128x128xbf16>, vector<128x128xbf16>, vector<128x128xf32> -> vector<128x128xf32>
    %c0_3 = arith.constant 0 : index
    %c0_4 = arith.constant 0 : index
    %3 = vector.load %arg4[%c0_3, %c0_4] : memref<1x128xf32, #tpu.memory_space<vmem>>, vector<1x128xf32>
    %4 = vector.broadcast %3 : vector<1x128xf32> to vector<128x128xf32>
    %5 = arith.mulf %2, %4 : vector<128x128xf32>
    %c0_5 = arith.constant 0 : index
    %c0_6 = arith.constant 0 : index
    %6 = vector.load %arg5[%c0_5, %c0_6] : memref<1x128xf32, #tpu.memory_space<vmem>>, vector<1x128xf32>
    %7 = vector.broadcast %6 : vector<1x128xf32> to vector<128x128xf32>
    %8 = arith.addf %5, %7 : vector<128x128xf32>
    %cst_7 = arith.constant 0.000000e+00 : f32
    %9 = vector.broadcast %cst_7 : f32 to vector<128x128xf32>
    %10 = arith.maximumf %8, %9 : vector<128x128xf32>
    %11 = arith.truncf %10 : vector<128x128xf32> to vector<128x128xbf16>
    %c0_8 = arith.constant 0 : index
    %c0_9 = arith.constant 0 : index
    %12 = vector.load %arg6[%c0_8, %c0_9] : memref<128x128xbf16, #tpu.memory_space<vmem>>, vector<128x128xbf16>
    tpu.vector_store %arg6[%c0_8, %c0_9], %11 {strides = array<i32>} : memref<128x128xbf16, #tpu.memory_space<vmem>>, vector<128x128xbf16>,
    return
  }
  func.func @transform_0(%arg0: i32, %arg1: i32) -> (i32, i32) {
    %c0_i32 = arith.constant 0 : i32
    %c0_i32_0 = arith.constant 0 : i32
    return %arg0, %c0_i32 : i32, i32
  }
  func.func @transform_1(%arg0: i32, %arg1: i32) -> (i32, i32) {
    %c0_i32 = arith.constant 0 : i32
    %c0_i32_0 = arith.constant 0 : i32
    return %c0_i32, %arg1 : i32, i32
  }
  func.func @transform_2(%arg0: i32, %arg1: i32) -> (i32, i32) {
    %c0_i32 = arith.constant 0 : i32
    %c0_i32_0 = arith.constant 0 : i32
    return %c0_i32, %arg1 : i32, i32
  }
  func.func @transform_3(%arg0: i32, %arg1: i32) -> (i32, i32) {
    %c0_i32 = arith.constant 0 : i32
    %c0_i32_0 = arith.constant 0 : i32
    return %c0_i32, %arg1 : i32, i32
  }
  func.func @transform_4(%arg0: i32, %arg1: i32) -> (i32, i32) {
    %c0_i32 = arith.constant 0 : i32
    return %arg0, %arg1 : i32, i32
  }
}

module attributes {stable_mosaic.version = 11 : i64} {
  func.func @_conv3x3_kernel(%arg0: i32, %arg1: i32, %arg2: i32, %arg3: memref<1x8x8x128xbf16, #tpu.memory_space<vmem>>, %arg4: memref<3x3x128x128xbf16, #tpu.memory_space<vmem>>, %arg5: memref<1x128xf32, #tpu.memory_space<vmem>>, %arg6: memref<1x128xf32, #tpu.memory_space<vmem>>, %arg7: memref<1x64x128xbf16, #tpu.memory_space<vmem>>, %arg8: memref<80x128xf32, #tpu.memory_space<vmem>>) attributes {dimension_semantics = [#tpu.dimension_semantics<parallel>, #tpu.dimension_semantics<arbitrary>, #tpu.dimension_semantics<arbitrary>], iteration_bounds = array<i64: 2, 1, 1>, scalar_prefetch = 0 : i64, scratch_operands = 1 : i64, tpu.core_type = #tpu.core_type<tc>, window_params = [{transform_indices = @transform_0, window_bounds = array<i64: 1, 8, 8, 128>}, {transform_indices = @transform_1, window_bounds = array<i64: 3, 3, 128, 128>}, {transform_indices = @transform_2, window_bounds = array<i64: 1, 128>}, {transform_indices = @transform_3, window_bounds = array<i64: 1, 128>}, {transform_indices = @transform_4, window_bounds = array<i64: 1, 64, 128>}]} {
    %c0_i32 = arith.constant 0 : i32
    %0 = arith.cmpi eq, %arg1, %c0_i32 : i32
    %c0_i32_0 = arith.constant 0 : i32
    %1 = arith.cmpi eq, %arg2, %c0_i32_0 : i32
    %2 = arith.andi %0, %1 : i1
    %3 = arith.extui %2 : i1 to i32
    %c0_i32_1 = arith.constant 0 : i32
    %4 = arith.cmpi ne, %3, %c0_i32_1 : i32
    scf.if %4 {
      %cst_81 = arith.constant 0.000000e+00 : f32
      %137 = vector.broadcast %cst_81 : f32 to vector<8x128xf32>
      %c0_82 = arith.constant 0 : index
      %c0_83 = arith.constant 0 : index
      %138 = vector.load %arg8[%c0_82, %c0_83] : memref<80x128xf32, #tpu.memory_space<vmem>>, vector<8x128xf32>
      tpu.vector_store %arg8[%c0_82, %c0_83], %137 {strides = array<i32>} : memref<80x128xf32, #tpu.memory_space<vmem>>, vector<8x128xf32>,
      %c72 = arith.constant 72 : index
      %c0_84 = arith.constant 0 : index
      %139 = vector.load %arg8[%c72, %c0_84] : memref<80x128xf32, #tpu.memory_space<vmem>>, vector<8x128xf32>
      tpu.vector_store %arg8[%c72, %c0_84], %137 {strides = array<i32>} : memref<80x128xf32, #tpu.memory_space<vmem>>, vector<8x128xf32>,
      %c0_i32_85 = arith.constant 0 : i32
      %c8_i32_86 = arith.constant 8 : i32
      %140 = arith.addi %c0_i32_85, %c8_i32_86 : i32
      %c1_i32_87 = arith.constant 1 : i32
      scf.for %arg9 = %c0_i32_85 to %140 step %c1_i32_87  : i32 {
        %c1_i32_89 = arith.constant 1 : i32
        %141 = arith.addi %arg9, %c1_i32_89 : i32
        %c8_i32_90 = arith.constant 8 : i32
        %142 = arith.muli %141, %c8_i32_90 : i32
        %143 = tpu.assume_multiple %142, 8 : i32
        %c0_91 = arith.constant 0 : index
        %144 = arith.index_cast %arg9 : i32 to index
        %c0_92 = arith.constant 0 : index
        %c0_93 = arith.constant 0 : index
        %145 = vector.load %arg3[%c0_91, %144, %c0_92, %c0_93] : memref<1x8x8x128xbf16, #tpu.memory_space<vmem>>, vector<1x1x8x128xbf16>
        %146 = vector.shape_cast %145 : vector<1x1x8x128xbf16> to vector<8x128xbf16>
        %147 = arith.extf %146 : vector<8x128xbf16> to vector<8x128xf32>
        %148 = arith.index_cast %143 : i32 to index
        %c0_94 = arith.constant 0 : index
        %149 = vector.load %arg8[%148, %c0_94] : memref<80x128xf32, #tpu.memory_space<vmem>>, vector<8x128xf32>
        tpu.vector_store %arg8[%148, %c0_94], %147 {strides = array<i32>} : memref<80x128xf32, #tpu.memory_space<vmem>>, vector<8x128xf32>,
      }
      %c8_i32_88 = arith.constant 8 : i32
    } else {
    }
    %c8_i32 = arith.constant 8 : i32
    %5 = arith.muli %arg1, %c8_i32 : i32
    %6 = tpu.iota {dimensions = array<i32: 0>} : vector<64x1xi32>
    %c8_i32_2 = arith.constant 8 : i32
    %c0_i32_3 = arith.constant 0 : i32
    %7 = arith.cmpi eq, %c8_i32_2, %c0_i32_3 : i32
    %c1_i32 = arith.constant 1 : i32
    %8 = arith.select %7, %c1_i32, %c8_i32_2 : i32
    %9 = vector.broadcast %8 : i32 to vector<64x1xi32>
    %10 = arith.remsi %6, %9 : vector<64x1xi32>
    %c0_i32_4 = arith.constant 0 : i32
    %11 = vector.broadcast %c0_i32_4 : i32 to vector<64x1xi32>
    %12 = arith.cmpi ne, %10, %11 : vector<64x1xi32>
    %c0_i32_5 = arith.constant 0 : i32
    %13 = vector.broadcast %c0_i32_5 : i32 to vector<64x1xi32>
    %14 = arith.cmpi slt, %10, %13 : vector<64x1xi32>
    %c0_i32_6 = arith.constant 0 : i32
    %15 = arith.cmpi slt, %8, %c0_i32_6 : i32
    %16 = vector.broadcast %15 : i1 to vector<64x1xi1>
    %17 = vector.broadcast %16 : vector<64x1xi1> to vector<64x1xi1>
    %18 = arith.xori %14, %17 : vector<64x1xi1>
    %19 = arith.andi %18, %12 : vector<64x1xi1>
    %20 = vector.broadcast %8 : i32 to vector<64x1xi32>
    %21 = arith.addi %10, %20 : vector<64x1xi32>
    %22 = arith.select %19, %21, %10 : vector<64x1xi1>, vector<64x1xi32>
    %cst = arith.constant 0.000000e+00 : f32
    %23 = vector.broadcast %cst : f32 to vector<64x128xf32>
    %c0_i32_7 = arith.constant 0 : i32
    %24 = arith.addi %5, %c0_i32_7 : i32
    %c8_i32_8 = arith.constant 8 : i32
    %25 = arith.muli %24, %c8_i32_8 : i32
    %26 = tpu.assume_multiple %25, 8 : i32
    %27 = arith.index_cast %26 : i32 to index
    %c0 = arith.constant 0 : index
    %28 = vector.load %arg8[%27, %c0] : memref<80x128xf32, #tpu.memory_space<vmem>>, vector<64x128xf32>
    %c0_i32_9 = arith.constant 0 : i32
    %29 = vector.broadcast %c0_i32_9 : i32 to vector<64x1xi32>
    %30 = arith.cmpi sgt, %22, %29 : vector<64x1xi32>
    %c1_i32_10 = arith.constant 1 : i32
    %31 = tpu.dynamic_rotate %28 by %c1_i32_10 dim 0 : vector<64x128xf32>, i32 -> vector<64x128xf32>
    %cst_11 = arith.constant 0.000000e+00 : f32
    %32 = vector.broadcast %cst_11 : f32 to vector<64x128xf32>
    %33 = vector.shape_cast %30 : vector<64x1xi1> to vector<64x1xi1>
    %34 = vector.broadcast %33 : vector<64x1xi1> to vector<64x128xi1>
    %35 = arith.select %34, %31, %32 : vector<64x128xi1>, vector<64x128xf32>
    %36 = arith.truncf %35 : vector<64x128xf32> to vector<64x128xbf16>
    %c0_12 = arith.constant 0 : index
    %c0_13 = arith.constant 0 : index
    %c0_14 = arith.constant 0 : index
    %c0_15 = arith.constant 0 : index
    %37 = vector.load %arg4[%c0_12, %c0_13, %c0_14, %c0_15] : memref<3x3x128x128xbf16, #tpu.memory_space<vmem>>, vector<1x1x128x128xbf16>
    %38 = vector.shape_cast %37 : vector<1x1x128x128xbf16> to vector<128x128xbf16>
    %cst_16 = arith.constant dense<0.000000e+00> : vector<64x128xf32>
    %39 = tpu.matmul %36, %38, %cst_16 {dimension_numbers = #tpu.dot_dimension_numbers<[1], [0], [0], [1], [0, 0, 1, 1], [], []>} : vector<64x128xbf16>, vector<128x128xbf16>, vector<64x128xf32> -> vector<64x128xf32>
    %40 = arith.addf %23, %39 : vector<64x128xf32>
    %41 = arith.truncf %28 : vector<64x128xf32> to vector<64x128xbf16>
    %c0_17 = arith.constant 0 : index
    %c1 = arith.constant 1 : index
    %c0_18 = arith.constant 0 : index
    %c0_19 = arith.constant 0 : index
    %42 = vector.load %arg4[%c0_17, %c1, %c0_18, %c0_19] : memref<3x3x128x128xbf16, #tpu.memory_space<vmem>>, vector<1x1x128x128xbf16>
    %43 = vector.shape_cast %42 : vector<1x1x128x128xbf16> to vector<128x128xbf16>
    %cst_20 = arith.constant dense<0.000000e+00> : vector<64x128xf32>
    %44 = tpu.matmul %41, %43, %cst_20 {dimension_numbers = #tpu.dot_dimension_numbers<[1], [0], [0], [1], [0, 0, 1, 1], [], []>} : vector<64x128xbf16>, vector<128x128xbf16>, vector<64x128xf32> -> vector<64x128xf32>
    %45 = arith.addf %40, %44 : vector<64x128xf32>
    %c7_i32 = arith.constant 7 : i32
    %46 = vector.broadcast %c7_i32 : i32 to vector<64x1xi32>
    %47 = arith.cmpi slt, %22, %46 : vector<64x1xi32>
    %c63_i32 = arith.constant 63 : i32
    %48 = tpu.dynamic_rotate %28 by %c63_i32 dim 0 : vector<64x128xf32>, i32 -> vector<64x128xf32>
    %cst_21 = arith.constant 0.000000e+00 : f32
    %49 = vector.broadcast %cst_21 : f32 to vector<64x128xf32>
    %50 = vector.shape_cast %47 : vector<64x1xi1> to vector<64x1xi1>
    %51 = vector.broadcast %50 : vector<64x1xi1> to vector<64x128xi1>
    %52 = arith.select %51, %48, %49 : vector<64x128xi1>, vector<64x128xf32>
    %53 = arith.truncf %52 : vector<64x128xf32> to vector<64x128xbf16>
    %c0_22 = arith.constant 0 : index
    %c2 = arith.constant 2 : index
    %c0_23 = arith.constant 0 : index
    %c0_24 = arith.constant 0 : index
    %54 = vector.load %arg4[%c0_22, %c2, %c0_23, %c0_24] : memref<3x3x128x128xbf16, #tpu.memory_space<vmem>>, vector<1x1x128x128xbf16>
    %55 = vector.shape_cast %54 : vector<1x1x128x128xbf16> to vector<128x128xbf16>
    %cst_25 = arith.constant dense<0.000000e+00> : vector<64x128xf32>
    %56 = tpu.matmul %53, %55, %cst_25 {dimension_numbers = #tpu.dot_dimension_numbers<[1], [0], [0], [1], [0, 0, 1, 1], [], []>} : vector<64x128xbf16>, vector<128x128xbf16>, vector<64x128xf32> -> vector<64x128xf32>
    %57 = arith.addf %45, %56 : vector<64x128xf32>
    %c1_i32_26 = arith.constant 1 : i32
    %58 = arith.addi %5, %c1_i32_26 : i32
    %c8_i32_27 = arith.constant 8 : i32
    %59 = arith.muli %58, %c8_i32_27 : i32
    %60 = tpu.assume_multiple %59, 8 : i32
    %61 = arith.index_cast %60 : i32 to index
    %c0_28 = arith.constant 0 : index
    %62 = vector.load %arg8[%61, %c0_28] : memref<80x128xf32, #tpu.memory_space<vmem>>, vector<64x128xf32>
    %c0_i32_29 = arith.constant 0 : i32
    %63 = vector.broadcast %c0_i32_29 : i32 to vector<64x1xi32>
    %64 = arith.cmpi sgt, %22, %63 : vector<64x1xi32>
    %c1_i32_30 = arith.constant 1 : i32
    %65 = tpu.dynamic_rotate %62 by %c1_i32_30 dim 0 : vector<64x128xf32>, i32 -> vector<64x128xf32>
    %cst_31 = arith.constant 0.000000e+00 : f32
    %66 = vector.broadcast %cst_31 : f32 to vector<64x128xf32>
    %67 = vector.shape_cast %64 : vector<64x1xi1> to vector<64x1xi1>
    %68 = vector.broadcast %67 : vector<64x1xi1> to vector<64x128xi1>
    %69 = arith.select %68, %65, %66 : vector<64x128xi1>, vector<64x128xf32>
    %70 = arith.truncf %69 : vector<64x128xf32> to vector<64x128xbf16>
    %c1_32 = arith.constant 1 : index
    %c0_33 = arith.constant 0 : index
    %c0_34 = arith.constant 0 : index
    %c0_35 = arith.constant 0 : index
    %71 = vector.load %arg4[%c1_32, %c0_33, %c0_34, %c0_35] : memref<3x3x128x128xbf16, #tpu.memory_space<vmem>>, vector<1x1x128x128xbf16>
    %72 = vector.shape_cast %71 : vector<1x1x128x128xbf16> to vector<128x128xbf16>
    %cst_36 = arith.constant dense<0.000000e+00> : vector<64x128xf32>
    %73 = tpu.matmul %70, %72, %cst_36 {dimension_numbers = #tpu.dot_dimension_numbers<[1], [0], [0], [1], [0, 0, 1, 1], [], []>} : vector<64x128xbf16>, vector<128x128xbf16>, vector<64x128xf32> -> vector<64x128xf32>
    %74 = arith.addf %57, %73 : vector<64x128xf32>
    %75 = arith.truncf %62 : vector<64x128xf32> to vector<64x128xbf16>
    %c1_37 = arith.constant 1 : index
    %c1_38 = arith.constant 1 : index
    %c0_39 = arith.constant 0 : index
    %c0_40 = arith.constant 0 : index
    %76 = vector.load %arg4[%c1_37, %c1_38, %c0_39, %c0_40] : memref<3x3x128x128xbf16, #tpu.memory_space<vmem>>, vector<1x1x128x128xbf16>
    %77 = vector.shape_cast %76 : vector<1x1x128x128xbf16> to vector<128x128xbf16>
    %cst_41 = arith.constant dense<0.000000e+00> : vector<64x128xf32>
    %78 = tpu.matmul %75, %77, %cst_41 {dimension_numbers = #tpu.dot_dimension_numbers<[1], [0], [0], [1], [0, 0, 1, 1], [], []>} : vector<64x128xbf16>, vector<128x128xbf16>, vector<64x128xf32> -> vector<64x128xf32>
    %79 = arith.addf %74, %78 : vector<64x128xf32>
    %c7_i32_42 = arith.constant 7 : i32
    %80 = vector.broadcast %c7_i32_42 : i32 to vector<64x1xi32>
    %81 = arith.cmpi slt, %22, %80 : vector<64x1xi32>
    %c63_i32_43 = arith.constant 63 : i32
    %82 = tpu.dynamic_rotate %62 by %c63_i32_43 dim 0 : vector<64x128xf32>, i32 -> vector<64x128xf32>
    %cst_44 = arith.constant 0.000000e+00 : f32
    %83 = vector.broadcast %cst_44 : f32 to vector<64x128xf32>
    %84 = vector.shape_cast %81 : vector<64x1xi1> to vector<64x1xi1>
    %85 = vector.broadcast %84 : vector<64x1xi1> to vector<64x128xi1>
    %86 = arith.select %85, %82, %83 : vector<64x128xi1>, vector<64x128xf32>
    %87 = arith.truncf %86 : vector<64x128xf32> to vector<64x128xbf16>
    %c1_45 = arith.constant 1 : index
    %c2_46 = arith.constant 2 : index
    %c0_47 = arith.constant 0 : index
    %c0_48 = arith.constant 0 : index
    %88 = vector.load %arg4[%c1_45, %c2_46, %c0_47, %c0_48] : memref<3x3x128x128xbf16, #tpu.memory_space<vmem>>, vector<1x1x128x128xbf16>
    %89 = vector.shape_cast %88 : vector<1x1x128x128xbf16> to vector<128x128xbf16>
    %cst_49 = arith.constant dense<0.000000e+00> : vector<64x128xf32>
    %90 = tpu.matmul %87, %89, %cst_49 {dimension_numbers = #tpu.dot_dimension_numbers<[1], [0], [0], [1], [0, 0, 1, 1], [], []>} : vector<64x128xbf16>, vector<128x128xbf16>, vector<64x128xf32> -> vector<64x128xf32>
    %91 = arith.addf %79, %90 : vector<64x128xf32>
    %c2_i32 = arith.constant 2 : i32
    %92 = arith.addi %5, %c2_i32 : i32
    %c8_i32_50 = arith.constant 8 : i32
    %93 = arith.muli %92, %c8_i32_50 : i32
    %94 = tpu.assume_multiple %93, 8 : i32
    %95 = arith.index_cast %94 : i32 to index
    %c0_51 = arith.constant 0 : index
    %96 = vector.load %arg8[%95, %c0_51] : memref<80x128xf32, #tpu.memory_space<vmem>>, vector<64x128xf32>
    %c0_i32_52 = arith.constant 0 : i32
    %97 = vector.broadcast %c0_i32_52 : i32 to vector<64x1xi32>
    %98 = arith.cmpi sgt, %22, %97 : vector<64x1xi32>
    %c1_i32_53 = arith.constant 1 : i32
    %99 = tpu.dynamic_rotate %96 by %c1_i32_53 dim 0 : vector<64x128xf32>, i32 -> vector<64x128xf32>
    %cst_54 = arith.constant 0.000000e+00 : f32
    %100 = vector.broadcast %cst_54 : f32 to vector<64x128xf32>
    %101 = vector.shape_cast %98 : vector<64x1xi1> to vector<64x1xi1>
    %102 = vector.broadcast %101 : vector<64x1xi1> to vector<64x128xi1>
    %103 = arith.select %102, %99, %100 : vector<64x128xi1>, vector<64x128xf32>
    %104 = arith.truncf %103 : vector<64x128xf32> to vector<64x128xbf16>
    %c2_55 = arith.constant 2 : index
    %c0_56 = arith.constant 0 : index
    %c0_57 = arith.constant 0 : index
    %c0_58 = arith.constant 0 : index
    %105 = vector.load %arg4[%c2_55, %c0_56, %c0_57, %c0_58] : memref<3x3x128x128xbf16, #tpu.memory_space<vmem>>, vector<1x1x128x128xbf16>
    %106 = vector.shape_cast %105 : vector<1x1x128x128xbf16> to vector<128x128xbf16>
    %cst_59 = arith.constant dense<0.000000e+00> : vector<64x128xf32>
    %107 = tpu.matmul %104, %106, %cst_59 {dimension_numbers = #tpu.dot_dimension_numbers<[1], [0], [0], [1], [0, 0, 1, 1], [], []>} : vector<64x128xbf16>, vector<128x128xbf16>, vector<64x128xf32> -> vector<64x128xf32>
    %108 = arith.addf %91, %107 : vector<64x128xf32>
    %109 = arith.truncf %96 : vector<64x128xf32> to vector<64x128xbf16>
    %c2_60 = arith.constant 2 : index
    %c1_61 = arith.constant 1 : index
    %c0_62 = arith.constant 0 : index
    %c0_63 = arith.constant 0 : index
    %110 = vector.load %arg4[%c2_60, %c1_61, %c0_62, %c0_63] : memref<3x3x128x128xbf16, #tpu.memory_space<vmem>>, vector<1x1x128x128xbf16>
    %111 = vector.shape_cast %110 : vector<1x1x128x128xbf16> to vector<128x128xbf16>
    %cst_64 = arith.constant dense<0.000000e+00> : vector<64x128xf32>
    %112 = tpu.matmul %109, %111, %cst_64 {dimension_numbers = #tpu.dot_dimension_numbers<[1], [0], [0], [1], [0, 0, 1, 1], [], []>} : vector<64x128xbf16>, vector<128x128xbf16>, vector<64x128xf32> -> vector<64x128xf32>
    %113 = arith.addf %108, %112 : vector<64x128xf32>
    %c7_i32_65 = arith.constant 7 : i32
    %114 = vector.broadcast %c7_i32_65 : i32 to vector<64x1xi32>
    %115 = arith.cmpi slt, %22, %114 : vector<64x1xi32>
    %c63_i32_66 = arith.constant 63 : i32
    %116 = tpu.dynamic_rotate %96 by %c63_i32_66 dim 0 : vector<64x128xf32>, i32 -> vector<64x128xf32>
    %cst_67 = arith.constant 0.000000e+00 : f32
    %117 = vector.broadcast %cst_67 : f32 to vector<64x128xf32>
    %118 = vector.shape_cast %115 : vector<64x1xi1> to vector<64x1xi1>
    %119 = vector.broadcast %118 : vector<64x1xi1> to vector<64x128xi1>
    %120 = arith.select %119, %116, %117 : vector<64x128xi1>, vector<64x128xf32>
    %121 = arith.truncf %120 : vector<64x128xf32> to vector<64x128xbf16>
    %c2_68 = arith.constant 2 : index
    %c2_69 = arith.constant 2 : index
    %c0_70 = arith.constant 0 : index
    %c0_71 = arith.constant 0 : index
    %122 = vector.load %arg4[%c2_68, %c2_69, %c0_70, %c0_71] : memref<3x3x128x128xbf16, #tpu.memory_space<vmem>>, vector<1x1x128x128xbf16>
    %123 = vector.shape_cast %122 : vector<1x1x128x128xbf16> to vector<128x128xbf16>
    %cst_72 = arith.constant dense<0.000000e+00> : vector<64x128xf32>
    %124 = tpu.matmul %121, %123, %cst_72 {dimension_numbers = #tpu.dot_dimension_numbers<[1], [0], [0], [1], [0, 0, 1, 1], [], []>} : vector<64x128xbf16>, vector<128x128xbf16>, vector<64x128xf32> -> vector<64x128xf32>
    %125 = arith.addf %113, %124 : vector<64x128xf32>
    %c0_73 = arith.constant 0 : index
    %c0_74 = arith.constant 0 : index
    %126 = vector.load %arg5[%c0_73, %c0_74] : memref<1x128xf32, #tpu.memory_space<vmem>>, vector<1x128xf32>
    %127 = vector.broadcast %126 : vector<1x128xf32> to vector<64x128xf32>
    %128 = arith.mulf %125, %127 : vector<64x128xf32>
    %c0_75 = arith.constant 0 : index
    %c0_76 = arith.constant 0 : index
    %129 = vector.load %arg6[%c0_75, %c0_76] : memref<1x128xf32, #tpu.memory_space<vmem>>, vector<1x128xf32>
    %130 = vector.broadcast %129 : vector<1x128xf32> to vector<64x128xf32>
    %131 = arith.addf %128, %130 : vector<64x128xf32>
    %cst_77 = arith.constant 0.000000e+00 : f32
    %132 = vector.broadcast %cst_77 : f32 to vector<64x128xf32>
    %133 = arith.maximumf %131, %132 : vector<64x128xf32>
    %134 = arith.truncf %133 : vector<64x128xf32> to vector<64x128xbf16>
    %135 = vector.shape_cast %134 : vector<64x128xbf16> to vector<1x64x128xbf16>
    %c0_78 = arith.constant 0 : index
    %c0_79 = arith.constant 0 : index
    %c0_80 = arith.constant 0 : index
    %136 = vector.load %arg7[%c0_78, %c0_79, %c0_80] : memref<1x64x128xbf16, #tpu.memory_space<vmem>>, vector<1x64x128xbf16>
    tpu.vector_store %arg7[%c0_78, %c0_79, %c0_80], %135 {strides = array<i32>} : memref<1x64x128xbf16, #tpu.memory_space<vmem>>, vector<1x64x128xbf16>,
    return
  }
  func.func @transform_0(%arg0: i32, %arg1: i32, %arg2: i32) -> (i32, i32, i32, i32) {
    %c0_i32 = arith.constant 0 : i32
    %c0_i32_0 = arith.constant 0 : i32
    %c0_i32_1 = arith.constant 0 : i32
    %c0_i32_2 = arith.constant 0 : i32
    return %arg0, %c0_i32, %c0_i32_0, %c0_i32_1 : i32, i32, i32, i32
  }
  func.func @transform_1(%arg0: i32, %arg1: i32, %arg2: i32) -> (i32, i32, i32, i32) {
    %c0_i32 = arith.constant 0 : i32
    %c0_i32_0 = arith.constant 0 : i32
    %c0_i32_1 = arith.constant 0 : i32
    %c0_i32_2 = arith.constant 0 : i32
    return %c0_i32, %c0_i32_0, %c0_i32_1, %arg2 : i32, i32, i32, i32
  }
  func.func @transform_2(%arg0: i32, %arg1: i32, %arg2: i32) -> (i32, i32) {
    %c0_i32 = arith.constant 0 : i32
    %c0_i32_0 = arith.constant 0 : i32
    return %c0_i32, %arg2 : i32, i32
  }
  func.func @transform_3(%arg0: i32, %arg1: i32, %arg2: i32) -> (i32, i32) {
    %c0_i32 = arith.constant 0 : i32
    %c0_i32_0 = arith.constant 0 : i32
    return %c0_i32, %arg2 : i32, i32
  }
  func.func @transform_4(%arg0: i32, %arg1: i32, %arg2: i32) -> (i32, i32, i32) {
    %c0_i32 = arith.constant 0 : i32
    return %arg0, %arg1, %arg2 : i32, i32, i32
  }
}

module attributes {stable_mosaic.version = 11 : i64} {
  func.func @_mm_bn_kernel(%arg0: i32, %arg1: i32, %arg2: memref<128x128xbf16, #tpu.memory_space<vmem>>, %arg3: memref<128x128xbf16, #tpu.memory_space<vmem>>, %arg4: memref<1x128xf32, #tpu.memory_space<vmem>>, %arg5: memref<1x128xf32, #tpu.memory_space<vmem>>, %arg6: memref<128x128xbf16, #tpu.memory_space<vmem>>) attributes {dimension_semantics = [#tpu.dimension_semantics<parallel>, #tpu.dimension_semantics<parallel>], iteration_bounds = array<i64: 1, 1>, scalar_prefetch = 0 : i64, scratch_operands = 0 : i64, tpu.core_type = #tpu.core_type<tc>, window_params = [{transform_indices = @transform_0, window_bounds = array<i64: 128, 128>}, {transform_indices = @transform_1, window_bounds = array<i64: 128, 128>}, {transform_indices = @transform_2, window_bounds = array<i64: 1, 128>}, {transform_indices = @transform_3, window_bounds = array<i64: 1, 128>}, {transform_indices = @transform_4, window_bounds = array<i64: 128, 128>}]} {
    %c0 = arith.constant 0 : index
    %c0_0 = arith.constant 0 : index
    %0 = vector.load %arg2[%c0, %c0_0] : memref<128x128xbf16, #tpu.memory_space<vmem>>, vector<128x128xbf16>
    %c0_1 = arith.constant 0 : index
    %c0_2 = arith.constant 0 : index
    %1 = vector.load %arg3[%c0_1, %c0_2] : memref<128x128xbf16, #tpu.memory_space<vmem>>, vector<128x128xbf16>
    %cst = arith.constant dense<0.000000e+00> : vector<128x128xf32>
    %2 = tpu.matmul %0, %1, %cst {dimension_numbers = #tpu.dot_dimension_numbers<[1], [0], [0], [1], [0, 0, 1, 1], [], []>} : vector<128x128xbf16>, vector<128x128xbf16>, vector<128x128xf32> -> vector<128x128xf32>
    %c0_3 = arith.constant 0 : index
    %c0_4 = arith.constant 0 : index
    %3 = vector.load %arg4[%c0_3, %c0_4] : memref<1x128xf32, #tpu.memory_space<vmem>>, vector<1x128xf32>
    %4 = vector.broadcast %3 : vector<1x128xf32> to vector<128x128xf32>
    %5 = arith.mulf %2, %4 : vector<128x128xf32>
    %c0_5 = arith.constant 0 : index
    %c0_6 = arith.constant 0 : index
    %6 = vector.load %arg5[%c0_5, %c0_6] : memref<1x128xf32, #tpu.memory_space<vmem>>, vector<1x128xf32>
    %7 = vector.broadcast %6 : vector<1x128xf32> to vector<128x128xf32>
    %8 = arith.addf %5, %7 : vector<128x128xf32>
    %9 = arith.truncf %8 : vector<128x128xf32> to vector<128x128xbf16>
    %c0_7 = arith.constant 0 : index
    %c0_8 = arith.constant 0 : index
    %10 = vector.load %arg6[%c0_7, %c0_8] : memref<128x128xbf16, #tpu.memory_space<vmem>>, vector<128x128xbf16>
    tpu.vector_store %arg6[%c0_7, %c0_8], %9 {strides = array<i32>} : memref<128x128xbf16, #tpu.memory_space<vmem>>, vector<128x128xbf16>,
    return
  }
  func.func @transform_0(%arg0: i32, %arg1: i32) -> (i32, i32) {
    %c0_i32 = arith.constant 0 : i32
    %c0_i32_0 = arith.constant 0 : i32
    return %arg0, %c0_i32 : i32, i32
  }
  func.func @transform_1(%arg0: i32, %arg1: i32) -> (i32, i32) {
    %c0_i32 = arith.constant 0 : i32
    %c0_i32_0 = arith.constant 0 : i32
    return %c0_i32, %arg1 : i32, i32
  }
  func.func @transform_2(%arg0: i32, %arg1: i32) -> (i32, i32) {
    %c0_i32 = arith.constant 0 : i32
    %c0_i32_0 = arith.constant 0 : i32
    return %c0_i32, %arg1 : i32, i32
  }
  func.func @transform_3(%arg0: i32, %arg1: i32) -> (i32, i32) {
    %c0_i32 = arith.constant 0 : i32
    %c0_i32_0 = arith.constant 0 : i32
    return %c0_i32, %arg1 : i32, i32
  }
  func.func @transform_4(%arg0: i32, %arg1: i32) -> (i32, i32) {
    %c0_i32 = arith.constant 0 : i32
    return %arg0, %arg1 : i32, i32
  }
}

module attributes {stable_mosaic.version = 11 : i64} {
  func.func @_mm_bn_res_relu_kernel(%arg0: i32, %arg1: i32, %arg2: memref<128x128xbf16, #tpu.memory_space<vmem>>, %arg3: memref<128x128xbf16, #tpu.memory_space<vmem>>, %arg4: memref<1x128xf32, #tpu.memory_space<vmem>>, %arg5: memref<1x128xf32, #tpu.memory_space<vmem>>, %arg6: memref<128x128xbf16, #tpu.memory_space<vmem>>, %arg7: memref<128x128xbf16, #tpu.memory_space<vmem>>) attributes {dimension_semantics = [#tpu.dimension_semantics<parallel>, #tpu.dimension_semantics<parallel>], iteration_bounds = array<i64: 1, 1>, scalar_prefetch = 0 : i64, scratch_operands = 0 : i64, tpu.core_type = #tpu.core_type<tc>, window_params = [{transform_indices = @transform_0, window_bounds = array<i64: 128, 128>}, {transform_indices = @transform_1, window_bounds = array<i64: 128, 128>}, {transform_indices = @transform_2, window_bounds = array<i64: 1, 128>}, {transform_indices = @transform_3, window_bounds = array<i64: 1, 128>}, {transform_indices = @transform_4, window_bounds = array<i64: 128, 128>}, {transform_indices = @transform_5, window_bounds = array<i64: 128, 128>}]} {
    %c0 = arith.constant 0 : index
    %c0_0 = arith.constant 0 : index
    %0 = vector.load %arg2[%c0, %c0_0] : memref<128x128xbf16, #tpu.memory_space<vmem>>, vector<128x128xbf16>
    %c0_1 = arith.constant 0 : index
    %c0_2 = arith.constant 0 : index
    %1 = vector.load %arg3[%c0_1, %c0_2] : memref<128x128xbf16, #tpu.memory_space<vmem>>, vector<128x128xbf16>
    %cst = arith.constant dense<0.000000e+00> : vector<128x128xf32>
    %2 = tpu.matmul %0, %1, %cst {dimension_numbers = #tpu.dot_dimension_numbers<[1], [0], [0], [1], [0, 0, 1, 1], [], []>} : vector<128x128xbf16>, vector<128x128xbf16>, vector<128x128xf32> -> vector<128x128xf32>
    %c0_3 = arith.constant 0 : index
    %c0_4 = arith.constant 0 : index
    %3 = vector.load %arg4[%c0_3, %c0_4] : memref<1x128xf32, #tpu.memory_space<vmem>>, vector<1x128xf32>
    %4 = vector.broadcast %3 : vector<1x128xf32> to vector<128x128xf32>
    %5 = arith.mulf %2, %4 : vector<128x128xf32>
    %c0_5 = arith.constant 0 : index
    %c0_6 = arith.constant 0 : index
    %6 = vector.load %arg5[%c0_5, %c0_6] : memref<1x128xf32, #tpu.memory_space<vmem>>, vector<1x128xf32>
    %7 = vector.broadcast %6 : vector<1x128xf32> to vector<128x128xf32>
    %8 = arith.addf %5, %7 : vector<128x128xf32>
    %c0_7 = arith.constant 0 : index
    %c0_8 = arith.constant 0 : index
    %9 = vector.load %arg6[%c0_7, %c0_8] : memref<128x128xbf16, #tpu.memory_space<vmem>>, vector<128x128xbf16>
    %10 = arith.extf %9 : vector<128x128xbf16> to vector<128x128xf32>
    %11 = arith.addf %8, %10 : vector<128x128xf32>
    %cst_9 = arith.constant 0.000000e+00 : f32
    %12 = vector.broadcast %cst_9 : f32 to vector<128x128xf32>
    %13 = arith.maximumf %11, %12 : vector<128x128xf32>
    %14 = arith.truncf %13 : vector<128x128xf32> to vector<128x128xbf16>
    %c0_10 = arith.constant 0 : index
    %c0_11 = arith.constant 0 : index
    %15 = vector.load %arg7[%c0_10, %c0_11] : memref<128x128xbf16, #tpu.memory_space<vmem>>, vector<128x128xbf16>
    tpu.vector_store %arg7[%c0_10, %c0_11], %14 {strides = array<i32>} : memref<128x128xbf16, #tpu.memory_space<vmem>>, vector<128x128xbf16>,
    return
  }
  func.func @transform_0(%arg0: i32, %arg1: i32) -> (i32, i32) {
    %c0_i32 = arith.constant 0 : i32
    %c0_i32_0 = arith.constant 0 : i32
    return %arg0, %c0_i32 : i32, i32
  }
  func.func @transform_1(%arg0: i32, %arg1: i32) -> (i32, i32) {
    %c0_i32 = arith.constant 0 : i32
    %c0_i32_0 = arith.constant 0 : i32
    return %c0_i32, %arg1 : i32, i32
  }
  func.func @transform_2(%arg0: i32, %arg1: i32) -> (i32, i32) {
    %c0_i32 = arith.constant 0 : i32
    %c0_i32_0 = arith.constant 0 : i32
    return %c0_i32, %arg1 : i32, i32
  }
  func.func @transform_3(%arg0: i32, %arg1: i32) -> (i32, i32) {
    %c0_i32 = arith.constant 0 : i32
    %c0_i32_0 = arith.constant 0 : i32
    return %c0_i32, %arg1 : i32, i32
  }
  func.func @transform_4(%arg0: i32, %arg1: i32) -> (i32, i32) {
    %c0_i32 = arith.constant 0 : i32
    return %arg0, %arg1 : i32, i32
  }
  func.func @transform_5(%arg0: i32, %arg1: i32) -> (i32, i32) {
    %c0_i32 = arith.constant 0 : i32
    return %arg0, %arg1 : i32, i32
  }
}

module attributes {stable_mosaic.version = 11 : i64} {
  func.func @_mm_bn_kernel(%arg0: i32, %arg1: i32, %arg2: memref<32x128xbf16, #tpu.memory_space<vmem>>, %arg3: memref<128x128xbf16, #tpu.memory_space<vmem>>, %arg4: memref<1x128xf32, #tpu.memory_space<vmem>>, %arg5: memref<1x128xf32, #tpu.memory_space<vmem>>, %arg6: memref<32x128xbf16, #tpu.memory_space<vmem>>) attributes {dimension_semantics = [#tpu.dimension_semantics<parallel>, #tpu.dimension_semantics<parallel>], iteration_bounds = array<i64: 1, 1>, scalar_prefetch = 0 : i64, scratch_operands = 0 : i64, tpu.core_type = #tpu.core_type<tc>, window_params = [{transform_indices = @transform_0, window_bounds = array<i64: 32, 128>}, {transform_indices = @transform_1, window_bounds = array<i64: 128, 128>}, {transform_indices = @transform_2, window_bounds = array<i64: 1, 128>}, {transform_indices = @transform_3, window_bounds = array<i64: 1, 128>}, {transform_indices = @transform_4, window_bounds = array<i64: 32, 128>}]} {
    %c0 = arith.constant 0 : index
    %c0_0 = arith.constant 0 : index
    %0 = vector.load %arg2[%c0, %c0_0] : memref<32x128xbf16, #tpu.memory_space<vmem>>, vector<32x128xbf16>
    %c0_1 = arith.constant 0 : index
    %c0_2 = arith.constant 0 : index
    %1 = vector.load %arg3[%c0_1, %c0_2] : memref<128x128xbf16, #tpu.memory_space<vmem>>, vector<128x128xbf16>
    %cst = arith.constant dense<0.000000e+00> : vector<32x128xf32>
    %2 = tpu.matmul %0, %1, %cst {dimension_numbers = #tpu.dot_dimension_numbers<[1], [0], [0], [1], [0, 0, 1, 1], [], []>} : vector<32x128xbf16>, vector<128x128xbf16>, vector<32x128xf32> -> vector<32x128xf32>
    %c0_3 = arith.constant 0 : index
    %c0_4 = arith.constant 0 : index
    %3 = vector.load %arg4[%c0_3, %c0_4] : memref<1x128xf32, #tpu.memory_space<vmem>>, vector<1x128xf32>
    %4 = vector.broadcast %3 : vector<1x128xf32> to vector<32x128xf32>
    %5 = arith.mulf %2, %4 : vector<32x128xf32>
    %c0_5 = arith.constant 0 : index
    %c0_6 = arith.constant 0 : index
    %6 = vector.load %arg5[%c0_5, %c0_6] : memref<1x128xf32, #tpu.memory_space<vmem>>, vector<1x128xf32>
    %7 = vector.broadcast %6 : vector<1x128xf32> to vector<32x128xf32>
    %8 = arith.addf %5, %7 : vector<32x128xf32>
    %9 = arith.truncf %8 : vector<32x128xf32> to vector<32x128xbf16>
    %c0_7 = arith.constant 0 : index
    %c0_8 = arith.constant 0 : index
    %10 = vector.load %arg6[%c0_7, %c0_8] : memref<32x128xbf16, #tpu.memory_space<vmem>>, vector<32x128xbf16>
    tpu.vector_store %arg6[%c0_7, %c0_8], %9 {strides = array<i32>} : memref<32x128xbf16, #tpu.memory_space<vmem>>, vector<32x128xbf16>,
    return
  }
  func.func @transform_0(%arg0: i32, %arg1: i32) -> (i32, i32) {
    %c0_i32 = arith.constant 0 : i32
    %c0_i32_0 = arith.constant 0 : i32
    return %arg0, %c0_i32 : i32, i32
  }
  func.func @transform_1(%arg0: i32, %arg1: i32) -> (i32, i32) {
    %c0_i32 = arith.constant 0 : i32
    %c0_i32_0 = arith.constant 0 : i32
    return %c0_i32, %arg1 : i32, i32
  }
  func.func @transform_2(%arg0: i32, %arg1: i32) -> (i32, i32) {
    %c0_i32 = arith.constant 0 : i32
    %c0_i32_0 = arith.constant 0 : i32
    return %c0_i32, %arg1 : i32, i32
  }
  func.func @transform_3(%arg0: i32, %arg1: i32) -> (i32, i32) {
    %c0_i32 = arith.constant 0 : i32
    %c0_i32_0 = arith.constant 0 : i32
    return %c0_i32, %arg1 : i32, i32
  }
  func.func @transform_4(%arg0: i32, %arg1: i32) -> (i32, i32) {
    %c0_i32 = arith.constant 0 : i32
    return %arg0, %arg1 : i32, i32
  }
}

module attributes {stable_mosaic.version = 11 : i64} {
  func.func @_mm_bn_res_relu_kernel(%arg0: i32, %arg1: i32, %arg2: memref<32x128xbf16, #tpu.memory_space<vmem>>, %arg3: memref<128x128xbf16, #tpu.memory_space<vmem>>, %arg4: memref<1x128xf32, #tpu.memory_space<vmem>>, %arg5: memref<1x128xf32, #tpu.memory_space<vmem>>, %arg6: memref<32x128xbf16, #tpu.memory_space<vmem>>, %arg7: memref<32x128xbf16, #tpu.memory_space<vmem>>) attributes {dimension_semantics = [#tpu.dimension_semantics<parallel>, #tpu.dimension_semantics<parallel>], iteration_bounds = array<i64: 1, 1>, scalar_prefetch = 0 : i64, scratch_operands = 0 : i64, tpu.core_type = #tpu.core_type<tc>, window_params = [{transform_indices = @transform_0, window_bounds = array<i64: 32, 128>}, {transform_indices = @transform_1, window_bounds = array<i64: 128, 128>}, {transform_indices = @transform_2, window_bounds = array<i64: 1, 128>}, {transform_indices = @transform_3, window_bounds = array<i64: 1, 128>}, {transform_indices = @transform_4, window_bounds = array<i64: 32, 128>}, {transform_indices = @transform_5, window_bounds = array<i64: 32, 128>}]} {
    %c0 = arith.constant 0 : index
    %c0_0 = arith.constant 0 : index
    %0 = vector.load %arg2[%c0, %c0_0] : memref<32x128xbf16, #tpu.memory_space<vmem>>, vector<32x128xbf16>
    %c0_1 = arith.constant 0 : index
    %c0_2 = arith.constant 0 : index
    %1 = vector.load %arg3[%c0_1, %c0_2] : memref<128x128xbf16, #tpu.memory_space<vmem>>, vector<128x128xbf16>
    %cst = arith.constant dense<0.000000e+00> : vector<32x128xf32>
    %2 = tpu.matmul %0, %1, %cst {dimension_numbers = #tpu.dot_dimension_numbers<[1], [0], [0], [1], [0, 0, 1, 1], [], []>} : vector<32x128xbf16>, vector<128x128xbf16>, vector<32x128xf32> -> vector<32x128xf32>
    %c0_3 = arith.constant 0 : index
    %c0_4 = arith.constant 0 : index
    %3 = vector.load %arg4[%c0_3, %c0_4] : memref<1x128xf32, #tpu.memory_space<vmem>>, vector<1x128xf32>
    %4 = vector.broadcast %3 : vector<1x128xf32> to vector<32x128xf32>
    %5 = arith.mulf %2, %4 : vector<32x128xf32>
    %c0_5 = arith.constant 0 : index
    %c0_6 = arith.constant 0 : index
    %6 = vector.load %arg5[%c0_5, %c0_6] : memref<1x128xf32, #tpu.memory_space<vmem>>, vector<1x128xf32>
    %7 = vector.broadcast %6 : vector<1x128xf32> to vector<32x128xf32>
    %8 = arith.addf %5, %7 : vector<32x128xf32>
    %c0_7 = arith.constant 0 : index
    %c0_8 = arith.constant 0 : index
    %9 = vector.load %arg6[%c0_7, %c0_8] : memref<32x128xbf16, #tpu.memory_space<vmem>>, vector<32x128xbf16>
    %10 = arith.extf %9 : vector<32x128xbf16> to vector<32x128xf32>
    %11 = arith.addf %8, %10 : vector<32x128xf32>
    %cst_9 = arith.constant 0.000000e+00 : f32
    %12 = vector.broadcast %cst_9 : f32 to vector<32x128xf32>
    %13 = arith.maximumf %11, %12 : vector<32x128xf32>
    %14 = arith.truncf %13 : vector<32x128xf32> to vector<32x128xbf16>
    %c0_10 = arith.constant 0 : index
    %c0_11 = arith.constant 0 : index
    %15 = vector.load %arg7[%c0_10, %c0_11] : memref<32x128xbf16, #tpu.memory_space<vmem>>, vector<32x128xbf16>
    tpu.vector_store %arg7[%c0_10, %c0_11], %14 {strides = array<i32>} : memref<32x128xbf16, #tpu.memory_space<vmem>>, vector<32x128xbf16>,
    return
  }
  func.func @transform_0(%arg0: i32, %arg1: i32) -> (i32, i32) {
    %c0_i32 = arith.constant 0 : i32
    %c0_i32_0 = arith.constant 0 : i32
    return %arg0, %c0_i32 : i32, i32
  }
  func.func @transform_1(%arg0: i32, %arg1: i32) -> (i32, i32) {
    %c0_i32 = arith.constant 0 : i32
    %c0_i32_0 = arith.constant 0 : i32
    return %c0_i32, %arg1 : i32, i32
  }
  func.func @transform_2(%arg0: i32, %arg1: i32) -> (i32, i32) {
    %c0_i32 = arith.constant 0 : i32
    %c0_i32_0 = arith.constant 0 : i32
    return %c0_i32, %arg1 : i32, i32
  }
  func.func @transform_3(%arg0: i32, %arg1: i32) -> (i32, i32) {
    %c0_i32 = arith.constant 0 : i32
    %c0_i32_0 = arith.constant 0 : i32
    return %c0_i32, %arg1 : i32, i32
  }
  func.func @transform_4(%arg0: i32, %arg1: i32) -> (i32, i32) {
    %c0_i32 = arith.constant 0 : i32
    return %arg0, %arg1 : i32, i32
  }
  func.func @transform_5(%arg0: i32, %arg1: i32) -> (i32, i32) {
    %c0_i32 = arith.constant 0 : i32
    return %arg0, %arg1 : i32, i32
  }
}

module attributes {stable_mosaic.version = 11 : i64} {
  func.func @_mm_bn_kernel(%arg0: i32, %arg1: i32, %arg2: memref<32x128xbf16, #tpu.memory_space<vmem>>, %arg3: memref<128x128xbf16, #tpu.memory_space<vmem>>, %arg4: memref<1x128xf32, #tpu.memory_space<vmem>>, %arg5: memref<1x128xf32, #tpu.memory_space<vmem>>, %arg6: memref<32x128xbf16, #tpu.memory_space<vmem>>) attributes {dimension_semantics = [#tpu.dimension_semantics<parallel>, #tpu.dimension_semantics<parallel>], iteration_bounds = array<i64: 1, 1>, scalar_prefetch = 0 : i64, scratch_operands = 0 : i64, tpu.core_type = #tpu.core_type<tc>, window_params = [{transform_indices = @transform_0, window_bounds = array<i64: 32, 128>}, {transform_indices = @transform_1, window_bounds = array<i64: 128, 128>}, {transform_indices = @transform_2, window_bounds = array<i64: 1, 128>}, {transform_indices = @transform_3, window_bounds = array<i64: 1, 128>}, {transform_indices = @transform_4, window_bounds = array<i64: 32, 128>}]} {
    %c0 = arith.constant 0 : index
    %c0_0 = arith.constant 0 : index
    %0 = vector.load %arg2[%c0, %c0_0] : memref<32x128xbf16, #tpu.memory_space<vmem>>, vector<32x128xbf16>
    %c0_1 = arith.constant 0 : index
    %c0_2 = arith.constant 0 : index
    %1 = vector.load %arg3[%c0_1, %c0_2] : memref<128x128xbf16, #tpu.memory_space<vmem>>, vector<128x128xbf16>
    %cst = arith.constant dense<0.000000e+00> : vector<32x128xf32>
    %2 = tpu.matmul %0, %1, %cst {dimension_numbers = #tpu.dot_dimension_numbers<[1], [0], [0], [1], [0, 0, 1, 1], [], []>} : vector<32x128xbf16>, vector<128x128xbf16>, vector<32x128xf32> -> vector<32x128xf32>
    %c0_3 = arith.constant 0 : index
    %c0_4 = arith.constant 0 : index
    %3 = vector.load %arg4[%c0_3, %c0_4] : memref<1x128xf32, #tpu.memory_space<vmem>>, vector<1x128xf32>
    %4 = vector.broadcast %3 : vector<1x128xf32> to vector<32x128xf32>
    %5 = arith.mulf %2, %4 : vector<32x128xf32>
    %c0_5 = arith.constant 0 : index
    %c0_6 = arith.constant 0 : index
    %6 = vector.load %arg5[%c0_5, %c0_6] : memref<1x128xf32, #tpu.memory_space<vmem>>, vector<1x128xf32>
    %7 = vector.broadcast %6 : vector<1x128xf32> to vector<32x128xf32>
    %8 = arith.addf %5, %7 : vector<32x128xf32>
    %cst_7 = arith.constant 0.000000e+00 : f32
    %9 = vector.broadcast %cst_7 : f32 to vector<32x128xf32>
    %10 = arith.maximumf %8, %9 : vector<32x128xf32>
    %11 = arith.truncf %10 : vector<32x128xf32> to vector<32x128xbf16>
    %c0_8 = arith.constant 0 : index
    %c0_9 = arith.constant 0 : index
    %12 = vector.load %arg6[%c0_8, %c0_9] : memref<32x128xbf16, #tpu.memory_space<vmem>>, vector<32x128xbf16>
    tpu.vector_store %arg6[%c0_8, %c0_9], %11 {strides = array<i32>} : memref<32x128xbf16, #tpu.memory_space<vmem>>, vector<32x128xbf16>,
    return
  }
  func.func @transform_0(%arg0: i32, %arg1: i32) -> (i32, i32) {
    %c0_i32 = arith.constant 0 : i32
    %c0_i32_0 = arith.constant 0 : i32
    return %arg0, %c0_i32 : i32, i32
  }
  func.func @transform_1(%arg0: i32, %arg1: i32) -> (i32, i32) {
    %c0_i32 = arith.constant 0 : i32
    %c0_i32_0 = arith.constant 0 : i32
    return %c0_i32, %arg1 : i32, i32
  }
  func.func @transform_2(%arg0: i32, %arg1: i32) -> (i32, i32) {
    %c0_i32 = arith.constant 0 : i32
    %c0_i32_0 = arith.constant 0 : i32
    return %c0_i32, %arg1 : i32, i32
  }
  func.func @transform_3(%arg0: i32, %arg1: i32) -> (i32, i32) {
    %c0_i32 = arith.constant 0 : i32
    %c0_i32_0 = arith.constant 0 : i32
    return %c0_i32, %arg1 : i32, i32
  }
  func.func @transform_4(%arg0: i32, %arg1: i32) -> (i32, i32) {
    %c0_i32 = arith.constant 0 : i32
    return %arg0, %arg1 : i32, i32
  }
}

module attributes {stable_mosaic.version = 11 : i64} {
  func.func @_mm_bn_kernel(%arg0: i32, %arg1: i32, %arg2: memref<32x1152xbf16, #tpu.memory_space<vmem>>, %arg3: memref<1152x128xbf16, #tpu.memory_space<vmem>>, %arg4: memref<1x128xf32, #tpu.memory_space<vmem>>, %arg5: memref<1x128xf32, #tpu.memory_space<vmem>>, %arg6: memref<32x128xbf16, #tpu.memory_space<vmem>>) attributes {dimension_semantics = [#tpu.dimension_semantics<parallel>, #tpu.dimension_semantics<parallel>], iteration_bounds = array<i64: 1, 1>, scalar_prefetch = 0 : i64, scratch_operands = 0 : i64, tpu.core_type = #tpu.core_type<tc>, window_params = [{transform_indices = @transform_0, window_bounds = array<i64: 32, 1152>}, {transform_indices = @transform_1, window_bounds = array<i64: 1152, 128>}, {transform_indices = @transform_2, window_bounds = array<i64: 1, 128>}, {transform_indices = @transform_3, window_bounds = array<i64: 1, 128>}, {transform_indices = @transform_4, window_bounds = array<i64: 32, 128>}]} {
    %c0 = arith.constant 0 : index
    %c0_0 = arith.constant 0 : index
    %0 = vector.load %arg2[%c0, %c0_0] : memref<32x1152xbf16, #tpu.memory_space<vmem>>, vector<32x1152xbf16>
    %c0_1 = arith.constant 0 : index
    %c0_2 = arith.constant 0 : index
    %1 = vector.load %arg3[%c0_1, %c0_2] : memref<1152x128xbf16, #tpu.memory_space<vmem>>, vector<1152x128xbf16>
    %cst = arith.constant dense<0.000000e+00> : vector<32x128xf32>
    %2 = tpu.matmul %0, %1, %cst {dimension_numbers = #tpu.dot_dimension_numbers<[1], [0], [0], [1], [0, 0, 1, 1], [], []>} : vector<32x1152xbf16>, vector<1152x128xbf16>, vector<32x128xf32> -> vector<32x128xf32>
    %c0_3 = arith.constant 0 : index
    %c0_4 = arith.constant 0 : index
    %3 = vector.load %arg4[%c0_3, %c0_4] : memref<1x128xf32, #tpu.memory_space<vmem>>, vector<1x128xf32>
    %4 = vector.broadcast %3 : vector<1x128xf32> to vector<32x128xf32>
    %5 = arith.mulf %2, %4 : vector<32x128xf32>
    %c0_5 = arith.constant 0 : index
    %c0_6 = arith.constant 0 : index
    %6 = vector.load %arg5[%c0_5, %c0_6] : memref<1x128xf32, #tpu.memory_space<vmem>>, vector<1x128xf32>
    %7 = vector.broadcast %6 : vector<1x128xf32> to vector<32x128xf32>
    %8 = arith.addf %5, %7 : vector<32x128xf32>
    %cst_7 = arith.constant 0.000000e+00 : f32
    %9 = vector.broadcast %cst_7 : f32 to vector<32x128xf32>
    %10 = arith.maximumf %8, %9 : vector<32x128xf32>
    %11 = arith.truncf %10 : vector<32x128xf32> to vector<32x128xbf16>
    %c0_8 = arith.constant 0 : index
    %c0_9 = arith.constant 0 : index
    %12 = vector.load %arg6[%c0_8, %c0_9] : memref<32x128xbf16, #tpu.memory_space<vmem>>, vector<32x128xbf16>
    tpu.vector_store %arg6[%c0_8, %c0_9], %11 {strides = array<i32>} : memref<32x128xbf16, #tpu.memory_space<vmem>>, vector<32x128xbf16>,
    return
  }
  func.func @transform_0(%arg0: i32, %arg1: i32) -> (i32, i32) {
    %c0_i32 = arith.constant 0 : i32
    %c0_i32_0 = arith.constant 0 : i32
    return %arg0, %c0_i32 : i32, i32
  }
  func.func @transform_1(%arg0: i32, %arg1: i32) -> (i32, i32) {
    %c0_i32 = arith.constant 0 : i32
    %c0_i32_0 = arith.constant 0 : i32
    return %c0_i32, %arg1 : i32, i32
  }
  func.func @transform_2(%arg0: i32, %arg1: i32) -> (i32, i32) {
    %c0_i32 = arith.constant 0 : i32
    %c0_i32_0 = arith.constant 0 : i32
    return %c0_i32, %arg1 : i32, i32
  }
  func.func @transform_3(%arg0: i32, %arg1: i32) -> (i32, i32) {
    %c0_i32 = arith.constant 0 : i32
    %c0_i32_0 = arith.constant 0 : i32
    return %c0_i32, %arg1 : i32, i32
  }
  func.func @transform_4(%arg0: i32, %arg1: i32) -> (i32, i32) {
    %c0_i32 = arith.constant 0 : i32
    return %arg0, %arg1 : i32, i32
  }
}

module attributes {stable_mosaic.version = 11 : i64} {
  func.func @_mm_bn_kernel(%arg0: i32, %arg1: i32, %arg2: memref<16x128xbf16, #tpu.memory_space<vmem>>, %arg3: memref<128x256xbf16, #tpu.memory_space<vmem>>, %arg4: memref<1x256xf32, #tpu.memory_space<vmem>>, %arg5: memref<1x256xf32, #tpu.memory_space<vmem>>, %arg6: memref<16x256xbf16, #tpu.memory_space<vmem>>) attributes {dimension_semantics = [#tpu.dimension_semantics<parallel>, #tpu.dimension_semantics<parallel>], iteration_bounds = array<i64: 1, 1>, scalar_prefetch = 0 : i64, scratch_operands = 0 : i64, tpu.core_type = #tpu.core_type<tc>, window_params = [{transform_indices = @transform_0, window_bounds = array<i64: 16, 128>}, {transform_indices = @transform_1, window_bounds = array<i64: 128, 256>}, {transform_indices = @transform_2, window_bounds = array<i64: 1, 256>}, {transform_indices = @transform_3, window_bounds = array<i64: 1, 256>}, {transform_indices = @transform_4, window_bounds = array<i64: 16, 256>}]} {
    %c0 = arith.constant 0 : index
    %c0_0 = arith.constant 0 : index
    %0 = vector.load %arg2[%c0, %c0_0] : memref<16x128xbf16, #tpu.memory_space<vmem>>, vector<16x128xbf16>
    %c0_1 = arith.constant 0 : index
    %c0_2 = arith.constant 0 : index
    %1 = vector.load %arg3[%c0_1, %c0_2] : memref<128x256xbf16, #tpu.memory_space<vmem>>, vector<128x256xbf16>
    %cst = arith.constant dense<0.000000e+00> : vector<16x256xf32>
    %2 = tpu.matmul %0, %1, %cst {dimension_numbers = #tpu.dot_dimension_numbers<[1], [0], [0], [1], [0, 0, 1, 1], [], []>} : vector<16x128xbf16>, vector<128x256xbf16>, vector<16x256xf32> -> vector<16x256xf32>
    %c0_3 = arith.constant 0 : index
    %c0_4 = arith.constant 0 : index
    %3 = vector.load %arg4[%c0_3, %c0_4] : memref<1x256xf32, #tpu.memory_space<vmem>>, vector<1x256xf32>
    %4 = vector.broadcast %3 : vector<1x256xf32> to vector<16x256xf32>
    %5 = arith.mulf %2, %4 : vector<16x256xf32>
    %c0_5 = arith.constant 0 : index
    %c0_6 = arith.constant 0 : index
    %6 = vector.load %arg5[%c0_5, %c0_6] : memref<1x256xf32, #tpu.memory_space<vmem>>, vector<1x256xf32>
    %7 = vector.broadcast %6 : vector<1x256xf32> to vector<16x256xf32>
    %8 = arith.addf %5, %7 : vector<16x256xf32>
    %9 = arith.truncf %8 : vector<16x256xf32> to vector<16x256xbf16>
    %c0_7 = arith.constant 0 : index
    %c0_8 = arith.constant 0 : index
    %10 = vector.load %arg6[%c0_7, %c0_8] : memref<16x256xbf16, #tpu.memory_space<vmem>>, vector<16x256xbf16>
    tpu.vector_store %arg6[%c0_7, %c0_8], %9 {strides = array<i32>} : memref<16x256xbf16, #tpu.memory_space<vmem>>, vector<16x256xbf16>,
    return
  }
  func.func @transform_0(%arg0: i32, %arg1: i32) -> (i32, i32) {
    %c0_i32 = arith.constant 0 : i32
    %c0_i32_0 = arith.constant 0 : i32
    return %arg0, %c0_i32 : i32, i32
  }
  func.func @transform_1(%arg0: i32, %arg1: i32) -> (i32, i32) {
    %c0_i32 = arith.constant 0 : i32
    %c0_i32_0 = arith.constant 0 : i32
    return %c0_i32, %arg1 : i32, i32
  }
  func.func @transform_2(%arg0: i32, %arg1: i32) -> (i32, i32) {
    %c0_i32 = arith.constant 0 : i32
    %c0_i32_0 = arith.constant 0 : i32
    return %c0_i32, %arg1 : i32, i32
  }
  func.func @transform_3(%arg0: i32, %arg1: i32) -> (i32, i32) {
    %c0_i32 = arith.constant 0 : i32
    %c0_i32_0 = arith.constant 0 : i32
    return %c0_i32, %arg1 : i32, i32
  }
  func.func @transform_4(%arg0: i32, %arg1: i32) -> (i32, i32) {
    %c0_i32 = arith.constant 0 : i32
    return %arg0, %arg1 : i32, i32
  }
}

module attributes {stable_mosaic.version = 11 : i64} {
  func.func @_mm_bn_kernel(%arg0: i32, %arg1: i32, %arg2: memref<16x256xbf16, #tpu.memory_space<vmem>>, %arg3: memref<256x128xbf16, #tpu.memory_space<vmem>>, %arg4: memref<1x128xf32, #tpu.memory_space<vmem>>, %arg5: memref<1x128xf32, #tpu.memory_space<vmem>>, %arg6: memref<16x128xbf16, #tpu.memory_space<vmem>>) attributes {dimension_semantics = [#tpu.dimension_semantics<parallel>, #tpu.dimension_semantics<parallel>], iteration_bounds = array<i64: 1, 1>, scalar_prefetch = 0 : i64, scratch_operands = 0 : i64, tpu.core_type = #tpu.core_type<tc>, window_params = [{transform_indices = @transform_0, window_bounds = array<i64: 16, 256>}, {transform_indices = @transform_1, window_bounds = array<i64: 256, 128>}, {transform_indices = @transform_2, window_bounds = array<i64: 1, 128>}, {transform_indices = @transform_3, window_bounds = array<i64: 1, 128>}, {transform_indices = @transform_4, window_bounds = array<i64: 16, 128>}]} {
    %c0 = arith.constant 0 : index
    %c0_0 = arith.constant 0 : index
    %0 = vector.load %arg2[%c0, %c0_0] : memref<16x256xbf16, #tpu.memory_space<vmem>>, vector<16x256xbf16>
    %c0_1 = arith.constant 0 : index
    %c0_2 = arith.constant 0 : index
    %1 = vector.load %arg3[%c0_1, %c0_2] : memref<256x128xbf16, #tpu.memory_space<vmem>>, vector<256x128xbf16>
    %cst = arith.constant dense<0.000000e+00> : vector<16x128xf32>
    %2 = tpu.matmul %0, %1, %cst {dimension_numbers = #tpu.dot_dimension_numbers<[1], [0], [0], [1], [0, 0, 1, 1], [], []>} : vector<16x256xbf16>, vector<256x128xbf16>, vector<16x128xf32> -> vector<16x128xf32>
    %c0_3 = arith.constant 0 : index
    %c0_4 = arith.constant 0 : index
    %3 = vector.load %arg4[%c0_3, %c0_4] : memref<1x128xf32, #tpu.memory_space<vmem>>, vector<1x128xf32>
    %4 = vector.broadcast %3 : vector<1x128xf32> to vector<16x128xf32>
    %5 = arith.mulf %2, %4 : vector<16x128xf32>
    %c0_5 = arith.constant 0 : index
    %c0_6 = arith.constant 0 : index
    %6 = vector.load %arg5[%c0_5, %c0_6] : memref<1x128xf32, #tpu.memory_space<vmem>>, vector<1x128xf32>
    %7 = vector.broadcast %6 : vector<1x128xf32> to vector<16x128xf32>
    %8 = arith.addf %5, %7 : vector<16x128xf32>
    %cst_7 = arith.constant 0.000000e+00 : f32
    %9 = vector.broadcast %cst_7 : f32 to vector<16x128xf32>
    %10 = arith.maximumf %8, %9 : vector<16x128xf32>
    %11 = arith.truncf %10 : vector<16x128xf32> to vector<16x128xbf16>
    %c0_8 = arith.constant 0 : index
    %c0_9 = arith.constant 0 : index
    %12 = vector.load %arg6[%c0_8, %c0_9] : memref<16x128xbf16, #tpu.memory_space<vmem>>, vector<16x128xbf16>
    tpu.vector_store %arg6[%c0_8, %c0_9], %11 {strides = array<i32>} : memref<16x128xbf16, #tpu.memory_space<vmem>>, vector<16x128xbf16>,
    return
  }
  func.func @transform_0(%arg0: i32, %arg1: i32) -> (i32, i32) {
    %c0_i32 = arith.constant 0 : i32
    %c0_i32_0 = arith.constant 0 : i32
    return %arg0, %c0_i32 : i32, i32
  }
  func.func @transform_1(%arg0: i32, %arg1: i32) -> (i32, i32) {
    %c0_i32 = arith.constant 0 : i32
    %c0_i32_0 = arith.constant 0 : i32
    return %c0_i32, %arg1 : i32, i32
  }
  func.func @transform_2(%arg0: i32, %arg1: i32) -> (i32, i32) {
    %c0_i32 = arith.constant 0 : i32
    %c0_i32_0 = arith.constant 0 : i32
    return %c0_i32, %arg1 : i32, i32
  }
  func.func @transform_3(%arg0: i32, %arg1: i32) -> (i32, i32) {
    %c0_i32 = arith.constant 0 : i32
    %c0_i32_0 = arith.constant 0 : i32
    return %c0_i32, %arg1 : i32, i32
  }
  func.func @transform_4(%arg0: i32, %arg1: i32) -> (i32, i32) {
    %c0_i32 = arith.constant 0 : i32
    return %arg0, %arg1 : i32, i32
  }
}

module attributes {stable_mosaic.version = 11 : i64} {
  func.func @_mm_bn_res_relu_kernel(%arg0: i32, %arg1: i32, %arg2: memref<16x128xbf16, #tpu.memory_space<vmem>>, %arg3: memref<128x256xbf16, #tpu.memory_space<vmem>>, %arg4: memref<1x256xf32, #tpu.memory_space<vmem>>, %arg5: memref<1x256xf32, #tpu.memory_space<vmem>>, %arg6: memref<16x256xbf16, #tpu.memory_space<vmem>>, %arg7: memref<16x256xbf16, #tpu.memory_space<vmem>>) attributes {dimension_semantics = [#tpu.dimension_semantics<parallel>, #tpu.dimension_semantics<parallel>], iteration_bounds = array<i64: 1, 1>, scalar_prefetch = 0 : i64, scratch_operands = 0 : i64, tpu.core_type = #tpu.core_type<tc>, window_params = [{transform_indices = @transform_0, window_bounds = array<i64: 16, 128>}, {transform_indices = @transform_1, window_bounds = array<i64: 128, 256>}, {transform_indices = @transform_2, window_bounds = array<i64: 1, 256>}, {transform_indices = @transform_3, window_bounds = array<i64: 1, 256>}, {transform_indices = @transform_4, window_bounds = array<i64: 16, 256>}, {transform_indices = @transform_5, window_bounds = array<i64: 16, 256>}]} {
    %c0 = arith.constant 0 : index
    %c0_0 = arith.constant 0 : index
    %0 = vector.load %arg2[%c0, %c0_0] : memref<16x128xbf16, #tpu.memory_space<vmem>>, vector<16x128xbf16>
    %c0_1 = arith.constant 0 : index
    %c0_2 = arith.constant 0 : index
    %1 = vector.load %arg3[%c0_1, %c0_2] : memref<128x256xbf16, #tpu.memory_space<vmem>>, vector<128x256xbf16>
    %cst = arith.constant dense<0.000000e+00> : vector<16x256xf32>
    %2 = tpu.matmul %0, %1, %cst {dimension_numbers = #tpu.dot_dimension_numbers<[1], [0], [0], [1], [0, 0, 1, 1], [], []>} : vector<16x128xbf16>, vector<128x256xbf16>, vector<16x256xf32> -> vector<16x256xf32>
    %c0_3 = arith.constant 0 : index
    %c0_4 = arith.constant 0 : index
    %3 = vector.load %arg4[%c0_3, %c0_4] : memref<1x256xf32, #tpu.memory_space<vmem>>, vector<1x256xf32>
    %4 = vector.broadcast %3 : vector<1x256xf32> to vector<16x256xf32>
    %5 = arith.mulf %2, %4 : vector<16x256xf32>
    %c0_5 = arith.constant 0 : index
    %c0_6 = arith.constant 0 : index
    %6 = vector.load %arg5[%c0_5, %c0_6] : memref<1x256xf32, #tpu.memory_space<vmem>>, vector<1x256xf32>
    %7 = vector.broadcast %6 : vector<1x256xf32> to vector<16x256xf32>
    %8 = arith.addf %5, %7 : vector<16x256xf32>
    %c0_7 = arith.constant 0 : index
    %c0_8 = arith.constant 0 : index
    %9 = vector.load %arg6[%c0_7, %c0_8] : memref<16x256xbf16, #tpu.memory_space<vmem>>, vector<16x256xbf16>
    %10 = arith.extf %9 : vector<16x256xbf16> to vector<16x256xf32>
    %11 = arith.addf %8, %10 : vector<16x256xf32>
    %cst_9 = arith.constant 0.000000e+00 : f32
    %12 = vector.broadcast %cst_9 : f32 to vector<16x256xf32>
    %13 = arith.maximumf %11, %12 : vector<16x256xf32>
    %14 = arith.truncf %13 : vector<16x256xf32> to vector<16x256xbf16>
    %c0_10 = arith.constant 0 : index
    %c0_11 = arith.constant 0 : index
    %15 = vector.load %arg7[%c0_10, %c0_11] : memref<16x256xbf16, #tpu.memory_space<vmem>>, vector<16x256xbf16>
    tpu.vector_store %arg7[%c0_10, %c0_11], %14 {strides = array<i32>} : memref<16x256xbf16, #tpu.memory_space<vmem>>, vector<16x256xbf16>,
    return
  }
  func.func @transform_0(%arg0: i32, %arg1: i32) -> (i32, i32) {
    %c0_i32 = arith.constant 0 : i32
    %c0_i32_0 = arith.constant 0 : i32
    return %arg0, %c0_i32 : i32, i32
  }
  func.func @transform_1(%arg0: i32, %arg1: i32) -> (i32, i32) {
    %c0_i32 = arith.constant 0 : i32
    %c0_i32_0 = arith.constant 0 : i32
    return %c0_i32, %arg1 : i32, i32
  }
  func.func @transform_2(%arg0: i32, %arg1: i32) -> (i32, i32) {
    %c0_i32 = arith.constant 0 : i32
    %c0_i32_0 = arith.constant 0 : i32
    return %c0_i32, %arg1 : i32, i32
  }
  func.func @transform_3(%arg0: i32, %arg1: i32) -> (i32, i32) {
    %c0_i32 = arith.constant 0 : i32
    %c0_i32_0 = arith.constant 0 : i32
    return %c0_i32, %arg1 : i32, i32
  }
  func.func @transform_4(%arg0: i32, %arg1: i32) -> (i32, i32) {
    %c0_i32 = arith.constant 0 : i32
    return %arg0, %arg1 : i32, i32
  }
  func.func @transform_5(%arg0: i32, %arg1: i32) -> (i32, i32) {
    %c0_i32 = arith.constant 0 : i32
    return %arg0, %arg1 : i32, i32
  }
}

module attributes {stable_mosaic.version = 11 : i64} {
  func.func @_mm_bn_kernel(%arg0: i32, %arg1: i32, %arg2: memref<16x1152xbf16, #tpu.memory_space<vmem>>, %arg3: memref<1152x128xbf16, #tpu.memory_space<vmem>>, %arg4: memref<1x128xf32, #tpu.memory_space<vmem>>, %arg5: memref<1x128xf32, #tpu.memory_space<vmem>>, %arg6: memref<16x128xbf16, #tpu.memory_space<vmem>>) attributes {dimension_semantics = [#tpu.dimension_semantics<parallel>, #tpu.dimension_semantics<parallel>], iteration_bounds = array<i64: 1, 1>, scalar_prefetch = 0 : i64, scratch_operands = 0 : i64, tpu.core_type = #tpu.core_type<tc>, window_params = [{transform_indices = @transform_0, window_bounds = array<i64: 16, 1152>}, {transform_indices = @transform_1, window_bounds = array<i64: 1152, 128>}, {transform_indices = @transform_2, window_bounds = array<i64: 1, 128>}, {transform_indices = @transform_3, window_bounds = array<i64: 1, 128>}, {transform_indices = @transform_4, window_bounds = array<i64: 16, 128>}]} {
    %c0 = arith.constant 0 : index
    %c0_0 = arith.constant 0 : index
    %0 = vector.load %arg2[%c0, %c0_0] : memref<16x1152xbf16, #tpu.memory_space<vmem>>, vector<16x1152xbf16>
    %c0_1 = arith.constant 0 : index
    %c0_2 = arith.constant 0 : index
    %1 = vector.load %arg3[%c0_1, %c0_2] : memref<1152x128xbf16, #tpu.memory_space<vmem>>, vector<1152x128xbf16>
    %cst = arith.constant dense<0.000000e+00> : vector<16x128xf32>
    %2 = tpu.matmul %0, %1, %cst {dimension_numbers = #tpu.dot_dimension_numbers<[1], [0], [0], [1], [0, 0, 1, 1], [], []>} : vector<16x1152xbf16>, vector<1152x128xbf16>, vector<16x128xf32> -> vector<16x128xf32>
    %c0_3 = arith.constant 0 : index
    %c0_4 = arith.constant 0 : index
    %3 = vector.load %arg4[%c0_3, %c0_4] : memref<1x128xf32, #tpu.memory_space<vmem>>, vector<1x128xf32>
    %4 = vector.broadcast %3 : vector<1x128xf32> to vector<16x128xf32>
    %5 = arith.mulf %2, %4 : vector<16x128xf32>
    %c0_5 = arith.constant 0 : index
    %c0_6 = arith.constant 0 : index
    %6 = vector.load %arg5[%c0_5, %c0_6] : memref<1x128xf32, #tpu.memory_space<vmem>>, vector<1x128xf32>
    %7 = vector.broadcast %6 : vector<1x128xf32> to vector<16x128xf32>
    %8 = arith.addf %5, %7 : vector<16x128xf32>
    %cst_7 = arith.constant 0.000000e+00 : f32
    %9 = vector.broadcast %cst_7 : f32 to vector<16x128xf32>
    %10 = arith.maximumf %8, %9 : vector<16x128xf32>
    %11 = arith.truncf %10 : vector<16x128xf32> to vector<16x128xbf16>
    %c0_8 = arith.constant 0 : index
    %c0_9 = arith.constant 0 : index
    %12 = vector.load %arg6[%c0_8, %c0_9] : memref<16x128xbf16, #tpu.memory_space<vmem>>, vector<16x128xbf16>
    tpu.vector_store %arg6[%c0_8, %c0_9], %11 {strides = array<i32>} : memref<16x128xbf16, #tpu.memory_space<vmem>>, vector<16x128xbf16>,
    return
  }
  func.func @transform_0(%arg0: i32, %arg1: i32) -> (i32, i32) {
    %c0_i32 = arith.constant 0 : i32
    %c0_i32_0 = arith.constant 0 : i32
    return %arg0, %c0_i32 : i32, i32
  }
  func.func @transform_1(%arg0: i32, %arg1: i32) -> (i32, i32) {
    %c0_i32 = arith.constant 0 : i32
    %c0_i32_0 = arith.constant 0 : i32
    return %c0_i32, %arg1 : i32, i32
  }
  func.func @transform_2(%arg0: i32, %arg1: i32) -> (i32, i32) {
    %c0_i32 = arith.constant 0 : i32
    %c0_i32_0 = arith.constant 0 : i32
    return %c0_i32, %arg1 : i32, i32
  }
  func.func @transform_3(%arg0: i32, %arg1: i32) -> (i32, i32) {
    %c0_i32 = arith.constant 0 : i32
    %c0_i32_0 = arith.constant 0 : i32
    return %c0_i32, %arg1 : i32, i32
  }
  func.func @transform_4(%arg0: i32, %arg1: i32) -> (i32, i32) {
    %c0_i32 = arith.constant 0 : i32
    return %arg0, %arg1 : i32, i32
  }
}

module attributes {stable_mosaic.version = 11 : i64} {
  func.func @_mm_bn_kernel(%arg0: i32, %arg1: i32, %arg2: memref<16x256xbf16, #tpu.memory_space<vmem>>, %arg3: memref<256x512xbf16, #tpu.memory_space<vmem>>, %arg4: memref<1x512xf32, #tpu.memory_space<vmem>>, %arg5: memref<1x512xf32, #tpu.memory_space<vmem>>, %arg6: memref<16x512xbf16, #tpu.memory_space<vmem>>) attributes {dimension_semantics = [#tpu.dimension_semantics<parallel>, #tpu.dimension_semantics<parallel>], iteration_bounds = array<i64: 1, 1>, scalar_prefetch = 0 : i64, scratch_operands = 0 : i64, tpu.core_type = #tpu.core_type<tc>, window_params = [{transform_indices = @transform_0, window_bounds = array<i64: 16, 256>}, {transform_indices = @transform_1, window_bounds = array<i64: 256, 512>}, {transform_indices = @transform_2, window_bounds = array<i64: 1, 512>}, {transform_indices = @transform_3, window_bounds = array<i64: 1, 512>}, {transform_indices = @transform_4, window_bounds = array<i64: 16, 512>}]} {
    %c0 = arith.constant 0 : index
    %c0_0 = arith.constant 0 : index
    %0 = vector.load %arg2[%c0, %c0_0] : memref<16x256xbf16, #tpu.memory_space<vmem>>, vector<16x256xbf16>
    %c0_1 = arith.constant 0 : index
    %c0_2 = arith.constant 0 : index
    %1 = vector.load %arg3[%c0_1, %c0_2] : memref<256x512xbf16, #tpu.memory_space<vmem>>, vector<256x512xbf16>
    %cst = arith.constant dense<0.000000e+00> : vector<16x512xf32>
    %2 = tpu.matmul %0, %1, %cst {dimension_numbers = #tpu.dot_dimension_numbers<[1], [0], [0], [1], [0, 0, 1, 1], [], []>} : vector<16x256xbf16>, vector<256x512xbf16>, vector<16x512xf32> -> vector<16x512xf32>
    %c0_3 = arith.constant 0 : index
    %c0_4 = arith.constant 0 : index
    %3 = vector.load %arg4[%c0_3, %c0_4] : memref<1x512xf32, #tpu.memory_space<vmem>>, vector<1x512xf32>
    %4 = vector.broadcast %3 : vector<1x512xf32> to vector<16x512xf32>
    %5 = arith.mulf %2, %4 : vector<16x512xf32>
    %c0_5 = arith.constant 0 : index
    %c0_6 = arith.constant 0 : index
    %6 = vector.load %arg5[%c0_5, %c0_6] : memref<1x512xf32, #tpu.memory_space<vmem>>, vector<1x512xf32>
    %7 = vector.broadcast %6 : vector<1x512xf32> to vector<16x512xf32>
    %8 = arith.addf %5, %7 : vector<16x512xf32>
    %9 = arith.truncf %8 : vector<16x512xf32> to vector<16x512xbf16>
    %c0_7 = arith.constant 0 : index
    %c0_8 = arith.constant 0 : index
    %10 = vector.load %arg6[%c0_7, %c0_8] : memref<16x512xbf16, #tpu.memory_space<vmem>>, vector<16x512xbf16>
    tpu.vector_store %arg6[%c0_7, %c0_8], %9 {strides = array<i32>} : memref<16x512xbf16, #tpu.memory_space<vmem>>, vector<16x512xbf16>,
    return
  }
  func.func @transform_0(%arg0: i32, %arg1: i32) -> (i32, i32) {
    %c0_i32 = arith.constant 0 : i32
    %c0_i32_0 = arith.constant 0 : i32
    return %arg0, %c0_i32 : i32, i32
  }
  func.func @transform_1(%arg0: i32, %arg1: i32) -> (i32, i32) {
    %c0_i32 = arith.constant 0 : i32
    %c0_i32_0 = arith.constant 0 : i32
    return %c0_i32, %arg1 : i32, i32
  }
  func.func @transform_2(%arg0: i32, %arg1: i32) -> (i32, i32) {
    %c0_i32 = arith.constant 0 : i32
    %c0_i32_0 = arith.constant 0 : i32
    return %c0_i32, %arg1 : i32, i32
  }
  func.func @transform_3(%arg0: i32, %arg1: i32) -> (i32, i32) {
    %c0_i32 = arith.constant 0 : i32
    %c0_i32_0 = arith.constant 0 : i32
    return %c0_i32, %arg1 : i32, i32
  }
  func.func @transform_4(%arg0: i32, %arg1: i32) -> (i32, i32) {
    %c0_i32 = arith.constant 0 : i32
    return %arg0, %arg1 : i32, i32
  }
}

module attributes {stable_mosaic.version = 11 : i64} {
  func.func @_mm_bn_res_relu_kernel(%arg0: i32, %arg1: i32, %arg2: memref<16x128xbf16, #tpu.memory_space<vmem>>, %arg3: memref<128x512xbf16, #tpu.memory_space<vmem>>, %arg4: memref<1x512xf32, #tpu.memory_space<vmem>>, %arg5: memref<1x512xf32, #tpu.memory_space<vmem>>, %arg6: memref<16x512xbf16, #tpu.memory_space<vmem>>, %arg7: memref<16x512xbf16, #tpu.memory_space<vmem>>) attributes {dimension_semantics = [#tpu.dimension_semantics<parallel>, #tpu.dimension_semantics<parallel>], iteration_bounds = array<i64: 1, 1>, scalar_prefetch = 0 : i64, scratch_operands = 0 : i64, tpu.core_type = #tpu.core_type<tc>, window_params = [{transform_indices = @transform_0, window_bounds = array<i64: 16, 128>}, {transform_indices = @transform_1, window_bounds = array<i64: 128, 512>}, {transform_indices = @transform_2, window_bounds = array<i64: 1, 512>}, {transform_indices = @transform_3, window_bounds = array<i64: 1, 512>}, {transform_indices = @transform_4, window_bounds = array<i64: 16, 512>}, {transform_indices = @transform_5, window_bounds = array<i64: 16, 512>}]} {
    %c0 = arith.constant 0 : index
    %c0_0 = arith.constant 0 : index
    %0 = vector.load %arg2[%c0, %c0_0] : memref<16x128xbf16, #tpu.memory_space<vmem>>, vector<16x128xbf16>
    %c0_1 = arith.constant 0 : index
    %c0_2 = arith.constant 0 : index
    %1 = vector.load %arg3[%c0_1, %c0_2] : memref<128x512xbf16, #tpu.memory_space<vmem>>, vector<128x512xbf16>
    %cst = arith.constant dense<0.000000e+00> : vector<16x512xf32>
    %2 = tpu.matmul %0, %1, %cst {dimension_numbers = #tpu.dot_dimension_numbers<[1], [0], [0], [1], [0, 0, 1, 1], [], []>} : vector<16x128xbf16>, vector<128x512xbf16>, vector<16x512xf32> -> vector<16x512xf32>
    %c0_3 = arith.constant 0 : index
    %c0_4 = arith.constant 0 : index
    %3 = vector.load %arg4[%c0_3, %c0_4] : memref<1x512xf32, #tpu.memory_space<vmem>>, vector<1x512xf32>
    %4 = vector.broadcast %3 : vector<1x512xf32> to vector<16x512xf32>
    %5 = arith.mulf %2, %4 : vector<16x512xf32>
    %c0_5 = arith.constant 0 : index
    %c0_6 = arith.constant 0 : index
    %6 = vector.load %arg5[%c0_5, %c0_6] : memref<1x512xf32, #tpu.memory_space<vmem>>, vector<1x512xf32>
    %7 = vector.broadcast %6 : vector<1x512xf32> to vector<16x512xf32>
    %8 = arith.addf %5, %7 : vector<16x512xf32>
    %c0_7 = arith.constant 0 : index
    %c0_8 = arith.constant 0 : index
    %9 = vector.load %arg6[%c0_7, %c0_8] : memref<16x512xbf16, #tpu.memory_space<vmem>>, vector<16x512xbf16>
    %10 = arith.extf %9 : vector<16x512xbf16> to vector<16x512xf32>
    %11 = arith.addf %8, %10 : vector<16x512xf32>
    %cst_9 = arith.constant 0.000000e+00 : f32
    %12 = vector.broadcast %cst_9 : f32 to vector<16x512xf32>
    %13 = arith.maximumf %11, %12 : vector<16x512xf32>
    %14 = arith.truncf %13 : vector<16x512xf32> to vector<16x512xbf16>
    %c0_10 = arith.constant 0 : index
    %c0_11 = arith.constant 0 : index
    %15 = vector.load %arg7[%c0_10, %c0_11] : memref<16x512xbf16, #tpu.memory_space<vmem>>, vector<16x512xbf16>
    tpu.vector_store %arg7[%c0_10, %c0_11], %14 {strides = array<i32>} : memref<16x512xbf16, #tpu.memory_space<vmem>>, vector<16x512xbf16>,
    return
  }
  func.func @transform_0(%arg0: i32, %arg1: i32) -> (i32, i32) {
    %c0_i32 = arith.constant 0 : i32
    %c0_i32_0 = arith.constant 0 : i32
    return %arg0, %c0_i32 : i32, i32
  }
  func.func @transform_1(%arg0: i32, %arg1: i32) -> (i32, i32) {
    %c0_i32 = arith.constant 0 : i32
    %c0_i32_0 = arith.constant 0 : i32
    return %c0_i32, %arg1 : i32, i32
  }
  func.func @transform_2(%arg0: i32, %arg1: i32) -> (i32, i32) {
    %c0_i32 = arith.constant 0 : i32
    %c0_i32_0 = arith.constant 0 : i32
    return %c0_i32, %arg1 : i32, i32
  }
  func.func @transform_3(%arg0: i32, %arg1: i32) -> (i32, i32) {
    %c0_i32 = arith.constant 0 : i32
    %c0_i32_0 = arith.constant 0 : i32
    return %c0_i32, %arg1 : i32, i32
  }
  func.func @transform_4(%arg0: i32, %arg1: i32) -> (i32, i32) {
    %c0_i32 = arith.constant 0 : i32
    return %arg0, %arg1 : i32, i32
  }
  func.func @transform_5(%arg0: i32, %arg1: i32) -> (i32, i32) {
    %c0_i32 = arith.constant 0 : i32
    return %arg0, %arg1 : i32, i32
  }
}

</mosaic_0001>

<llo_original>
// kernel: _lambda_.19
$region0: #{_lambda_.19}
  #allocation0 [shape = 'u32[]', space=smem, size = 0x4, offset = 0x4, fixed_abs, tag = 'smem constant byte address 0x4 - core index']
  #allocation1 [shape = 'u32[72,128]{1,0:T(1,128)}', space=vmem, size = 0x9000, scoped, tag = 'internal scratch']
  %s0 = inlined_call_operand.vmem [shape: bf16[512,27], index: 0, kind: input, shape index: {}]
  %s1 = inlined_call_operand.vmem [shape: bf16[27,128], index: 1, kind: input, shape index: {}]
  %s2 = inlined_call_operand.vmem [shape: f32[1,128], index: 2, kind: input, shape index: {}]
  %s3 = inlined_call_operand.vmem [shape: f32[1,128], index: 3, kind: input, shape index: {}]
  %s4 = inlined_call_operand.vmem [shape: bf16[512,128], index: 4, kind: output, shape index: {}]
  %s5 = sld [smem:[#allocation0]]
  $region49: #{_lambda_.19} parent=0
    _
  %s7 = ssub.s32 1, %s5
  %s8 = scalar_select 0, %s7, %s5
  loop: start=0, step=1, limit=4
  $region2: #{_lambda_.19} parent=0 // loop_pre_header
    _
  $region3: #{_lambda_.19} parent=0 // loop_header
    %s10 = sphi 0, %s14
    %p11 = scmp.ge.s32.totalorder %s10, 4
    %s17 = sphi 0, %s29
    %s18 = sphi 0, %s25
    %s19 = sphi 0, %s17
    %s20 = sphi 0, %s18
    %s21 = sphi 0, %s19
    %s22 = sphi 0, %s20
    %s32 = sphi 0, %s34
    %s35 = sphi 0, %s32
    %s36 = sphi 0, %s35
    %s52 = sphi 0, %s36
    %s58 = sphi 0, %s60
    %s61 = sphi 0, %s58
    %s62 = sphi 0, %s61
    %s78 = sphi 0, %s62
    %s84 = sphi 0, %s86
    %s87 = sphi 0, %s84
    %s88 = sphi 0, %s87
    %s104 = sphi 0, %s88
    %s110 = sphi 0, %s112
    %s113 = sphi 0, %s110
    %s114 = sphi 0, %s113
    %s130 = sphi 0, %s114
    %s138 = sphi 0, %s140
    %s141 = sphi 0, %s138
    %s142 = sphi 0, %s141
    %s158 = sphi 0, %s142
  $region4: #{_lambda_.19} parent=0 // loop_header_branch
    %13 = sbr.rel (%p11) target = $region8
  $region5: #{_lambda_.19} parent=0 // loop_body
    %s15 = ssub.s32 %s10, 1
    %s16 = ssub.s32 %s10, 2
    %s23 = sadd.s32 1, %s18
    %p24 = scmp.ge.s32.totalorder %s23, 1
    %s25 = scalar_select %p24, 0, %s23
    %s26 = sadd.s32 1, %s17
    %s27 = scalar_select %p24, %s26, %s17
    %p28 = scmp.ge.s32.totalorder %s27, 2
    %s29 = scalar_select %p28, 0, %s27
    %s30 = ssub.s32 %s17, %s29
    %p31 = scmp.eq.s32.totalorder %s30, 0
    %s33 = sadd.s32 %s32, 1
    %s34 = scalar_select %p31, %s32, %s33
    %p37 = pneg %p31
    %p38 = scmp.eq.s32.totalorder %s10, 1
    %p39 = por %p37, %p38
    %p40 = scmp.ne.s32.totalorder %s32, %s35
    %p41 = scmp.eq.s32.totalorder %s10, 0
    %p42 = por %p40, %p41
    %p43 = scmp.ne.s32.totalorder %s32, %s35
    %p44 = scmp.eq.s32.totalorder %s15, 1
    %p45 = por %p43, %p44
    %p46 = scmp.ne.s32.totalorder %s35, %s36
    %p47 = scmp.eq.s32.totalorder %s15, 0
    %p48 = por %p46, %p47
    %p49 = scmp.ne.s32.totalorder %s35, %s36
    %p50 = scmp.eq.s32.totalorder %s16, 1
    %p51 = por %p49, %p50
    %p53 = scmp.ne.s32.totalorder %s36, %s52
    %p54 = scmp.eq.s32.totalorder %s16, 0
    %p55 = por %p53, %p54
    %s56 = ssub.s32 %s18, %s25
    %p57 = scmp.eq.s32.totalorder %s56, 0
    %s59 = sadd.s32 %s58, 1
    %s60 = scalar_select %p57, %s58, %s59
    %p63 = pneg %p57
    %p64 = scmp.eq.s32.totalorder %s10, 1
    %p65 = por %p63, %p64
    %p66 = scmp.ne.s32.totalorder %s58, %s61
    %p67 = scmp.eq.s32.totalorder %s10, 0
    %p68 = por %p66, %p67
    %p69 = scmp.ne.s32.totalorder %s58, %s61
    %p70 = scmp.eq.s32.totalorder %s15, 1
    %p71 = por %p69, %p70
    %p72 = scmp.ne.s32.totalorder %s61, %s62
    %p73 = scmp.eq.s32.totalorder %s15, 0
    %p74 = por %p72, %p73
    %p75 = scmp.ne.s32.totalorder %s61, %s62
    %p76 = scmp.eq.s32.totalorder %s16, 1
    %p77 = por %p75, %p76
    %p79 = scmp.ne.s32.totalorder %s62, %s78
    %p80 = scmp.eq.s32.totalorder %s16, 0
    %p81 = por %p79, %p80
    %s82 = ssub.s32 %s18, %s25
    %p83 = scmp.eq.s32.totalorder %s82, 0
    %s85 = sadd.s32 %s84, 1
    %s86 = scalar_select %p83, %s84, %s85
    %p89 = pneg %p83
    %p90 = scmp.eq.s32.totalorder %s10, 1
    %p91 = por %p89, %p90
    %p92 = scmp.ne.s32.totalorder %s84, %s87
    %p93 = scmp.eq.s32.totalorder %s10, 0
    %p94 = por %p92, %p93
    %p95 = scmp.ne.s32.totalorder %s84, %s87
    %p96 = scmp.eq.s32.totalorder %s15, 1
    %p97 = por %p95, %p96
    %p98 = scmp.ne.s32.totalorder %s87, %s88
    %p99 = scmp.eq.s32.totalorder %s15, 0
    %p100 = por %p98, %p99
    %p101 = scmp.ne.s32.totalorder %s87, %s88
    %p102 = scmp.eq.s32.totalorder %s16, 1
    %p103 = por %p101, %p102
    %p105 = scmp.ne.s32.totalorder %s88, %s104
    %p106 = scmp.eq.s32.totalorder %s16, 0
    %p107 = por %p105, %p106
    %s108 = ssub.s32 %s18, %s25
    %p109 = scmp.eq.s32.totalorder %s108, 0
    %s111 = sadd.s32 %s110, 1
    %s112 = scalar_select %p109, %s110, %s111
    %p115 = pneg %p109
    %p116 = scmp.eq.s32.totalorder %s10, 1
    %p117 = por %p115, %p116
    %p118 = scmp.ne.s32.totalorder %s110, %s113
    %p119 = scmp.eq.s32.totalorder %s10, 0
    %p120 = por %p118, %p119
    %p121 = scmp.ne.s32.totalorder %s110, %s113
    %p122 = scmp.eq.s32.totalorder %s15, 1
    %p123 = por %p121, %p122
    %p124 = scmp.ne.s32.totalorder %s113, %s114
    %p125 = scmp.eq.s32.totalorder %s15, 0
    %p126 = por %p124, %p125
    %p127 = scmp.ne.s32.totalorder %s113, %s114
    %p128 = scmp.eq.s32.totalorder %s16, 1
    %p129 = por %p127, %p128
    %p131 = scmp.ne.s32.totalorder %s114, %s130
    %p132 = scmp.eq.s32.totalorder %s16, 0
    %p133 = por %p131, %p132
    %s134 = ssub.s32 %s17, %s29
    %s135 = ssub.s32 %s18, %s25
    %s136 = sor.u32 %s134, %s135
    %p137 = scmp.eq.s32.totalorder %s136, 0
    %s139 = sadd.s32 %s138, 1
    %s140 = scalar_select %p137, %s138, %s139
    %p143 = pneg %p137
    %p144 = scmp.eq.s32.totalorder %s10, 1
    %p145 = por %p143, %p144
    %p146 = scmp.ne.s32.totalorder %s138, %s141
    %p147 = scmp.eq.s32.totalorder %s10, 0
    %p148 = por %p146, %p147
    %p149 = scmp.ne.s32.totalorder %s138, %s141
    %p150 = scmp.eq.s32.totalorder %s15, 1
    %p151 = por %p149, %p150
    %p152 = scmp.ne.s32.totalorder %s141, %s142
    %p153 = scmp.eq.s32.totalorder %s15, 0
    %p154 = por %p152, %p153
    %p155 = scmp.ne.s32.totalorder %s141, %s142
    %p156 = scmp.eq.s32.totalorder %s16, 1
    %p157 = por %p155, %p156
    %p159 = scmp.ne.s32.totalorder %s142, %s158
    %p160 = scmp.eq.s32.totalorder %s16, 0
    %p161 = por %p159, %p160
    %p162 = scmp.le.s32.totalorder 1, %s10
    %p163 = scmp.lt.s32.totalorder %s10, 3
    %p164 = pnand %p162, %p163
    %p165 = pneg %p164
    // Predicated region
    $region9: #{_lambda_.19} parent=5 // pred_check
      _
    $region10: #{_lambda_.19} parent=5 // pred_check_branch
      %167 = sbr.rel (%p164) target = $region12
    $region11: #{_lambda_.19} parent=5 // pred_region
      %s168 = ssub.s32 %s10, 1
      // Predicated region
      $region13: #{_lambda_.19} parent=11 // pred_check
        %p169 = pneg %p74
      $region14: #{_lambda_.19} parent=11 // pred_check_branch
        %171 = sbr.rel (%p169) target = $region16
      $region15: #{_lambda_.19} parent=11 // pred_region
        %p172 = scmp.lt.s32.totalorder %s20, 0
        %s173 = scalar_select %p172, %s20, 0
        %s174 = smul.addr %s173, 4
        %s175 = scalar_lea.vmem %s1, %s174
      $region16: #{_lambda_.19} parent=11 // pred_fallthru
        _
      // Predicated region
      $region17: #{_lambda_.19} parent=11 // pred_check
        %p176 = pneg %p100
      $region18: #{_lambda_.19} parent=11 // pred_check_branch
        %178 = sbr.rel (%p176) target = $region20
      $region19: #{_lambda_.19} parent=11 // pred_region
        %p179 = scmp.lt.s32.totalorder %s20, 0
        %s180 = scalar_select %p179, %s20, 0
        %s181 = scalar_lea.vmem %s2, %s180
      $region20: #{_lambda_.19} parent=11 // pred_fallthru
        _
      // Predicated region
      $region21: #{_lambda_.19} parent=11 // pred_check
        %p182 = pneg %p126
      $region22: #{_lambda_.19} parent=11 // pred_check_branch
        %184 = sbr.rel (%p182) target = $region24
      $region23: #{_lambda_.19} parent=11 // pred_region
        %p185 = scmp.lt.s32.totalorder %s20, 0
        %s186 = scalar_select %p185, %s20, 0
        %s187 = scalar_lea.vmem %s3, %s186
      $region24: #{_lambda_.19} parent=11 // pred_fallthru
        _
    $region12: #{_lambda_.19} parent=5 // pred_fallthru
      _
    %p188 = scmp.lt.s32.totalorder %s10, 2
    // Predicated region
    $region25: #{_lambda_.19} parent=5 // pred_check
      %p189 = pneg %p188
    $region26: #{_lambda_.19} parent=5 // pred_check_branch
      %191 = sbr.rel (%p189) target = $region28
    $region27: #{_lambda_.19} parent=5 // pred_region
      // Predicated region
      $region29: #{_lambda_.19} parent=27 // pred_check
        %p192 = pneg %p42
      $region30: #{_lambda_.19} parent=27 // pred_check_branch
        %194 = sbr.rel (%p192) target = $region32
      $region31: #{_lambda_.19} parent=27 // pred_region
        %s195 = smul.u32 32, %s17
        %p196 = scmp.lt.s32.totalorder %s195, 63
        %s197 = scalar_select %p196, %s195, 63
        %s198 = smul.addr %s197, 4
        %s199 = scalar_lea.vmem %s0, %s198
        %s200 = smul.u32 32, %s17
      $region32: #{_lambda_.19} parent=27 // pred_fallthru
        _
    $region28: #{_lambda_.19} parent=5 // pred_fallthru
      _
    %p201 = scmp.le.s32.totalorder 1, %s10
    %p202 = scmp.lt.s32.totalorder %s10, 3
    %p203 = pnand %p201, %p202
    %p204 = pneg %p203
    // Predicated region
    $region33: #{_lambda_.19} parent=5 // pred_check
      _
    $region34: #{_lambda_.19} parent=5 // pred_check_branch
      %206 = sbr.rel (%p203) target = $region36
    $region35: #{_lambda_.19} parent=5 // pred_region
      %s207 = ssub.s32 %s10, 1
      %s208 = smul.u32 32, %s19
      %p209 = scmp.lt.s32.totalorder %s208, 63
      %s210 = scalar_select %p209, %s208, 63
      %s211 = smul.addr %s210, 4
      %s212 = scalar_lea.vmem %s0, %s211
      %p213 = pneg %p48
      %p214 = pneg %p45
      %p215 = scmp.lt.s32.totalorder %s20, 0
      %s216 = scalar_select %p215, %s20, 0
      %s217 = smul.addr %s216, 4
      %s218 = scalar_lea.vmem %s1, %s217
      %p219 = pneg %p74
      %p220 = pneg %p71
      %p221 = scmp.lt.s32.totalorder %s20, 0
      %s222 = scalar_select %p221, %s20, 0
      %s223 = scalar_lea.vmem %s2, %s222
      %p224 = pneg %p100
      %p225 = pneg %p97
      %p226 = scmp.lt.s32.totalorder %s20, 0
      %s227 = scalar_select %p226, %s20, 0
      %s228 = scalar_lea.vmem %s3, %s227
      %p229 = pneg %p126
      %p230 = pneg %p123
      %p231 = pneg %p154
      %p232 = pneg %p151
      %s233 = smul.u32 32, %s19
      %p234 = scmp.lt.s32.totalorder %s233, 63
      %s235 = scalar_select %p234, %s233, 63
      %p236 = scmp.lt.s32.totalorder %s20, 0
      %s237 = scalar_select %p236, %s20, 0
      %s238 = sadd.s32 %s237, %s235
      %s239 = smul.addr %s238, 4
      %s240 = scalar_lea.vmem %s4, %s239
      %s241 = smul.u32 32, %s19
      %p242 = scmp.lt.s32.totalorder %s241, 63
      %s243 = scalar_select %p242, %s241, 63
      %s244 = smul.addr %s243, 4
      %s245 = scalar_lea.vmem %s0, %s244
      %s246 = smul.u32 32, %s19
      %p247 = scmp.lt.s32.totalorder %s20, 0
      %s248 = scalar_select %p247, %s20, 0
      %s249 = smul.addr %s248, 4
      %s250 = scalar_lea.vmem %s1, %s249
      %p251 = scmp.lt.s32.totalorder %s20, 0
      %s252 = scalar_select %p251, %s20, 0
      %s253 = scalar_lea.vmem %s2, %s252
      %p254 = scmp.lt.s32.totalorder %s20, 0
      %s255 = scalar_select %p254, %s20, 0
      %s256 = scalar_lea.vmem %s3, %s255
      %s257 = smul.u32 32, %s19
      %p258 = scmp.lt.s32.totalorder %s257, 63
      %s259 = scalar_select %p258, %s257, 63
      %p260 = scmp.lt.s32.totalorder %s20, 0
      %s261 = scalar_select %p260, %s20, 0
      %s262 = sadd.s32 %s261, %s259
      %s263 = smul.addr %s262, 4
      %s264 = scalar_lea.vmem %s4, %s263
      %s265 = smul.u32 32, %s19
      %v267 = vld [vmem:[%s245] sm:$0xf]
      %v268 = vld [vmem:[%s245 + $0x4] sm:$0xf]
      %v269 = vld [vmem:[%s245 + $0x8] sm:$0xf]
      %v270 = vld [vmem:[%s245 + $0xc] sm:$0xf]
      %v271 = vld [vmem:[%s245 + $0x10] sm:$0xf]
      %v272 = vld [vmem:[%s245 + $0x14] sm:$0xf]
      %v273 = vld [vmem:[%s245 + $0x18] sm:$0xf]
      %v274 = vld [vmem:[%s245 + $0x1c] sm:$0xf]
      %v275 = vld [vmem:[%s245 + $0x20] sm:$0xf]
      %v276 = vld [vmem:[%s245 + $0x24] sm:$0xf]
      %v277 = vld [vmem:[%s245 + $0x28] sm:$0xf]
      %v278 = vld [vmem:[%s245 + $0x2c] sm:$0xf]
      %v279 = vld [vmem:[%s245 + $0x30] sm:$0xf]
      %v280 = vld [vmem:[%s245 + $0x34] sm:$0xf]
      %v281 = vld [vmem:[%s245 + $0x38] sm:$0xf]
      %v282 = vld [vmem:[%s245 + $0x3c] sm:$0xf]
      %v283 = vld [vmem:[%s245 + $0x40] sm:$0xf]
      %v284 = vld [vmem:[%s245 + $0x44] sm:$0xf]
      %v285 = vld [vmem:[%s245 + $0x48] sm:$0xf]
      %v286 = vld [vmem:[%s245 + $0x4c] sm:$0xf]
      %v287 = vld [vmem:[%s245 + $0x50] sm:$0xf]
      %v288 = vld [vmem:[%s245 + $0x54] sm:$0xf]
      %v289 = vld [vmem:[%s245 + $0x58] sm:$0xf]
      %v290 = vld [vmem:[%s245 + $0x5c] sm:$0xf]
      %v291 = vld [vmem:[%s245 + $0x60] sm:$0xf]
      %v292 = vld [vmem:[%s245 + $0x64] sm:$0xf]
      %v293 = vld [vmem:[%s245 + $0x68] sm:$0xf]
      %v294 = vld [vmem:[%s245 + $0x6c] sm:$0xf]
      %v295 = vld [vmem:[%s245 + $0x70] sm:$0xf]
      %v296 = vld [vmem:[%s245 + $0x74] sm:$0xf]
      %v297 = vld [vmem:[%s245 + $0x78] sm:$0xf]
      %v298 = vld [vmem:[%s245 + $0x7c] sm:$0xf]
      %v299 = vld [vmem:[%s250] sm:$0xf]
      %v300 = vld [vmem:[%s250 + $0x4] sm:$0xf]
      %v301 = vld [vmem:[%s250 + $0x8] sm:$0xf]
      %v302 = vld [vmem:[%s250 + $0xc] sm:$0x3]
      %v335 = vunpack.c.l.b16 %v267
      %v336 = vunpack.c.l.b16 %v268
      %v337 = vunpack.c.l.b16 %v269
      %v338 = vunpack.c.l.b16 %v270
      %v339 = vunpack.c.l.b16 %v271
      %v340 = vunpack.c.l.b16 %v272
      %v341 = vunpack.c.l.b16 %v273
      %v342 = vunpack.c.l.b16 %v274
      %v343 = vunpack.c.l.b16 %v275
      %v344 = vunpack.c.l.b16 %v276
      %v345 = vunpack.c.l.b16 %v277
      %v346 = vunpack.c.l.b16 %v278
      %v347 = vunpack.c.l.b16 %v279
      %v348 = vunpack.c.l.b16 %v280
      %v349 = vunpack.c.l.b16 %v281
      %v350 = vunpack.c.l.b16 %v282
      %v351 = vunpack.c.l.b16 %v283
      %v352 = vunpack.c.l.b16 %v284
      %v353 = vunpack.c.l.b16 %v285
      %v354 = vunpack.c.l.b16 %v286
      %v355 = vunpack.c.l.b16 %v287
      %v356 = vunpack.c.l.b16 %v288
      %v357 = vunpack.c.l.b16 %v289
      %v358 = vunpack.c.l.b16 %v290
      %v359 = vunpack.c.l.b16 %v291
      %v360 = vunpack.c.l.b16 %v292
      %v361 = vunpack.c.l.b16 %v293
      %v362 = vunpack.c.l.b16 %v294
      %v363 = vunpack.c.l.b16 %v295
      %v364 = vunpack.c.l.b16 %v296
      %v365 = vunpack.c.l.b16 %v297
      %v366 = vunpack.c.l.b16 %v298
      %v367 = vpack.c.b16 %v336, %v335
      %v368 = vpack.c.b16 %v338, %v337
      %v369 = vpack.c.b16 %v340, %v339
      %v370 = vpack.c.b16 %v342, %v341
      %v371 = vpack.c.b16 %v344, %v343
      %v372 = vpack.c.b16 %v346, %v345
      %v373 = vpack.c.b16 %v348, %v347
      %v374 = vpack.c.b16 %v350, %v349
      %v375 = vpack.c.b16 %v352, %v351
      %v376 = vpack.c.b16 %v354, %v353
      %v377 = vpack.c.b16 %v356, %v355
      %v378 = vpack.c.b16 %v358, %v357
      %v379 = vpack.c.b16 %v360, %v359
      %v380 = vpack.c.b16 %v362, %v361
      %v381 = vpack.c.b16 %v364, %v363
      %v382 = vpack.c.b16 %v366, %v365
      %v387 = vunpack.c.l.b16 %v299
      %v388 = vunpack.c.l.b16 %v300
      %v389 = vunpack.c.l.b16 %v301
      %v390 = vunpack.c.l.b16 %v302
      %v391 = vpack.c.b16 %v388, %v387
      %v392 = vpack.c.b16 %v390, %v389
      %vm394 = vcmask 220160
      %v396 = vsel %vm394, %v367, 0
      %v399 = vsel %vm394, %v368, 0
      %v402 = vsel %vm394, %v369, 0
      %v405 = vsel %vm394, %v370, 0
      %v408 = vsel %vm394, %v371, 0
      %v411 = vsel %vm394, %v372, 0
      %v414 = vsel %vm394, %v373, 0
      %v417 = vsel %vm394, %v374, 0
      %v420 = vsel %vm394, %v375, 0
      %v423 = vsel %vm394, %v376, 0
      %v426 = vsel %vm394, %v377, 0
      %v429 = vsel %vm394, %v378, 0
      %v432 = vsel %vm394, %v379, 0
      %v435 = vsel %vm394, %v380, 0
      %v438 = vsel %vm394, %v381, 0
      %v441 = vsel %vm394, %v382, 0
      %vm443 = vcmask 1044480
      %vm444 = vcmask 1045504
      %v445 = vsel %vm443, 4294967295, 65535
      %v446 = vsel %vm444, %v445, 0
      %v448 = vand.u32 %v392, %v446
      %450 = vmatpush.bf16.msra.mxu0 0
      %451 = vmatpush.bf16.msra.mxu0 0
      %452 = vmatpush.bf16.msra.mxu0 0
      %453 = vmatpush.bf16.msra.mxu0 0
      %454 = vmatpush.bf16.msra.mxu0 0
      %455 = vmatpush.bf16.msra.mxu0 0
      %456 = vmatpush.bf16.msra.mxu0 %v448
      %457 = vmatpush.bf16.msra.mxu0 %v391
      %458 = vmatmul.bf16.gmra.mxu0 %v396
      %v459 = vpop.f32.mrf.mxu0
      %v460 = vadd.f32 0.0, %v459
      %v461 = vpop.f32.mrf.mxu0
      %v462 = vadd.f32 0.0, %v461
      %463 = vmatmul.bf16.gmra.mxu0 %v399
      %v464 = vpop.f32.mrf.mxu0
      %v465 = vadd.f32 0.0, %v464
      %v466 = vpop.f32.mrf.mxu0
      %v467 = vadd.f32 0.0, %v466
      %468 = vmatmul.bf16.gmra.mxu0 %v402
      %v469 = vpop.f32.mrf.mxu0
      %v470 = vadd.f32 0.0, %v469
      %v471 = vpop.f32.mrf.mxu0
      %v472 = vadd.f32 0.0, %v471
      %473 = vmatmul.bf16.gmra.mxu0 %v405
      %v474 = vpop.f32.mrf.mxu0
      %v475 = vadd.f32 0.0, %v474
      %v476 = vpop.f32.mrf.mxu0
      %v477 = vadd.f32 0.0, %v476
      %478 = vmatmul.bf16.gmra.mxu0 %v408
      %v479 = vpop.f32.mrf.mxu0
      %v480 = vadd.f32 0.0, %v479
      %v481 = vpop.f32.mrf.mxu0
      %v482 = vadd.f32 0.0, %v481
      %483 = vmatmul.bf16.gmra.mxu0 %v411
      %v484 = vpop.f32.mrf.mxu0
      %v485 = vadd.f32 0.0, %v484
      %v486 = vpop.f32.mrf.mxu0
      %v487 = vadd.f32 0.0, %v486
      %488 = vmatmul.bf16.gmra.mxu0 %v414
      %v489 = vpop.f32.mrf.mxu0
      %v490 = vadd.f32 0.0, %v489
      %v491 = vpop.f32.mrf.mxu0
      %v492 = vadd.f32 0.0, %v491
      %493 = vmatmul.bf16.gmra.mxu0 %v417
      %v494 = vpop.f32.mrf.mxu0
      %v495 = vadd.f32 0.0, %v494
      %v496 = vpop.f32.mrf.mxu0
      %v497 = vadd.f32 0.0, %v496
      %498 = vmatmul.bf16.gmra.mxu0 %v420
      %v499 = vpop.f32.mrf.mxu0
      %v500 = vadd.f32 0.0, %v499
      %v501 = vpop.f32.mrf.mxu0
      %v502 = vadd.f32 0.0, %v501
      %503 = vmatmul.bf16.gmra.mxu0 %v423
      %v504 = vpop.f32.mrf.mxu0
      %v505 = vadd.f32 0.0, %v504
      %v506 = vpop.f32.mrf.mxu0
      %v507 = vadd.f32 0.0, %v506
      %508 = vmatmul.bf16.gmra.mxu0 %v426
      %v509 = vpop.f32.mrf.mxu0
      %v510 = vadd.f32 0.0, %v509
      %v511 = vpop.f32.mrf.mxu0
      %v512 = vadd.f32 0.0, %v511
      %513 = vmatmul.bf16.gmra.mxu0 %v429
      %v514 = vpop.f32.mrf.mxu0
      %v515 = vadd.f32 0.0, %v514
      %v516 = vpop.f32.mrf.mxu0
      %v517 = vadd.f32 0.0, %v516
      %518 = vmatmul.bf16.gmra.mxu0 %v432
      %v519 = vpop.f32.mrf.mxu0
      %v520 = vadd.f32 0.0, %v519
      %v521 = vpop.f32.mrf.mxu0
      %v522 = vadd.f32 0.0, %v521
      %523 = vmatmul.bf16.gmra.mxu0 %v435
      %v524 = vpop.f32.mrf.mxu0
      %v525 = vadd.f32 0.0, %v524
      %v526 = vpop.f32.mrf.mxu0
      %v527 = vadd.f32 0.0, %v526
      %528 = vmatmul.bf16.gmra.mxu0 %v438
      %v529 = vpop.f32.mrf.mxu0
      %v530 = vadd.f32 0.0, %v529
      %v531 = vpop.f32.mrf.mxu0
      %v532 = vadd.f32 0.0, %v531
      %533 = vmatmul.bf16.gmra.mxu0 %v441
      %v534 = vpop.f32.mrf.mxu0
      %v535 = vadd.f32 0.0, %v534
      %v536 = vpop.f32.mrf.mxu0
      %v537 = vadd.f32 0.0, %v536
      %538 = vdwg.mxu0
      %v539 = vld [vmem:[%s253] sm:$0x1]
      %v541 = vperm.slane %v539, 0
      %v543 = vmul.f32 %v460, %v541
      %v544 = vmul.f32 %v462, %v541
      %v545 = vmul.f32 %v465, %v541
      %v546 = vmul.f32 %v467, %v541
      %v547 = vmul.f32 %v470, %v541
      %v548 = vmul.f32 %v472, %v541
      %v549 = vmul.f32 %v475, %v541
      %v550 = vmul.f32 %v477, %v541
      %v551 = vmul.f32 %v480, %v541
      %v552 = vmul.f32 %v482, %v541
      %v553 = vmul.f32 %v485, %v541
      %v554 = vmul.f32 %v487, %v541
      %v555 = vmul.f32 %v490, %v541
      %v556 = vmul.f32 %v492, %v541
      %v557 = vmul.f32 %v495, %v541
      %v558 = vmul.f32 %v497, %v541
      %v559 = vmul.f32 %v500, %v541
      %v560 = vmul.f32 %v502, %v541
      %v561 = vmul.f32 %v505, %v541
      %v562 = vmul.f32 %v507, %v541
      %v563 = vmul.f32 %v510, %v541
      %v564 = vmul.f32 %v512, %v541
      %v565 = vmul.f32 %v515, %v541
      %v566 = vmul.f32 %v517, %v541
      %v567 = vmul.f32 %v520, %v541
      %v568 = vmul.f32 %v522, %v541
      %v569 = vmul.f32 %v525, %v541
      %v570 = vmul.f32 %v527, %v541
      %v571 = vmul.f32 %v530, %v541
      %v572 = vmul.f32 %v532, %v541
      %v573 = vmul.f32 %v535, %v541
      %v574 = vmul.f32 %v537, %v541
      %v575 = vld [vmem:[%s256] sm:$0x1]
      %v577 = vperm.slane %v575, 0
      %v579 = vadd.f32 %v543, %v577
      %v580 = vadd.f32 %v544, %v577
      %v581 = vadd.f32 %v545, %v577
      %v582 = vadd.f32 %v546, %v577
      %v583 = vadd.f32 %v547, %v577
      %v584 = vadd.f32 %v548, %v577
      %v585 = vadd.f32 %v549, %v577
      %v586 = vadd.f32 %v550, %v577
      %v587 = vadd.f32 %v551, %v577
      %v588 = vadd.f32 %v552, %v577
      %v589 = vadd.f32 %v553, %v577
      %v590 = vadd.f32 %v554, %v577
      %v591 = vadd.f32 %v555, %v577
      %v592 = vadd.f32 %v556, %v577
      %v593 = vadd.f32 %v557, %v577
      %v594 = vadd.f32 %v558, %v577
      %v595 = vadd.f32 %v559, %v577
      %v596 = vadd.f32 %v560, %v577
      %v597 = vadd.f32 %v561, %v577
      %v598 = vadd.f32 %v562, %v577
      %v599 = vadd.f32 %v563, %v577
      %v600 = vadd.f32 %v564, %v577
      %v601 = vadd.f32 %v565, %v577
      %v602 = vadd.f32 %v566, %v577
      %v603 = vadd.f32 %v567, %v577
      %v604 = vadd.f32 %v568, %v577
      %v605 = vadd.f32 %v569, %v577
      %v606 = vadd.f32 %v570, %v577
      %v607 = vadd.f32 %v571, %v577
      %v608 = vadd.f32 %v572, %v577
      %v609 = vadd.f32 %v573, %v577
      %v610 = vadd.f32 %v574, %v577
      %v611 = vmax.f32 %v579, 0.0
      %v612 = vmax.f32 %v580, 0.0
      %v613 = vmax.f32 %v581, 0.0
      %v614 = vmax.f32 %v582, 0.0
      %v615 = vmax.f32 %v583, 0.0
      %v616 = vmax.f32 %v584, 0.0
      %v617 = vmax.f32 %v585, 0.0
      %v618 = vmax.f32 %v586, 0.0
      %v619 = vmax.f32 %v587, 0.0
      %v620 = vmax.f32 %v588, 0.0
      %v621 = vmax.f32 %v589, 0.0
      %v622 = vmax.f32 %v590, 0.0
      %v623 = vmax.f32 %v591, 0.0
      %v624 = vmax.f32 %v592, 0.0
      %v625 = vmax.f32 %v593, 0.0
      %v626 = vmax.f32 %v594, 0.0
      %v627 = vmax.f32 %v595, 0.0
      %v628 = vmax.f32 %v596, 0.0
      %v629 = vmax.f32 %v597, 0.0
      %v630 = vmax.f32 %v598, 0.0
      %v631 = vmax.f32 %v599, 0.0
      %v632 = vmax.f32 %v600, 0.0
      %v633 = vmax.f32 %v601, 0.0
      %v634 = vmax.f32 %v602, 0.0
      %v635 = vmax.f32 %v603, 0.0
      %v636 = vmax.f32 %v604, 0.0
      %v637 = vmax.f32 %v605, 0.0
      %v638 = vmax.f32 %v606, 0.0
      %v639 = vmax.f32 %v607, 0.0
      %v640 = vmax.f32 %v608, 0.0
      %v641 = vmax.f32 %v609, 0.0
      %v642 = vmax.f32 %v610, 0.0
      %v643 = vpack.c.bf16 %v611, %v611
      %v644 = vpack.c.bf16 %v612, %v612
      %v645 = vpack.c.bf16 %v613, %v613
      %v646 = vpack.c.bf16 %v614, %v614
      %v647 = vpack.c.bf16 %v615, %v615
      %v648 = vpack.c.bf16 %v616, %v616
      %v649 = vpack.c.bf16 %v617, %v617
      %v650 = vpack.c.bf16 %v618, %v618
      %v651 = vpack.c.bf16 %v619, %v619
      %v652 = vpack.c.bf16 %v620, %v620
      %v653 = vpack.c.bf16 %v621, %v621
      %v654 = vpack.c.bf16 %v622, %v622
      %v655 = vpack.c.bf16 %v623, %v623
      %v656 = vpack.c.bf16 %v624, %v624
      %v657 = vpack.c.bf16 %v625, %v625
      %v658 = vpack.c.bf16 %v626, %v626
      %v659 = vpack.c.bf16 %v627, %v627
      %v660 = vpack.c.bf16 %v628, %v628
      %v661 = vpack.c.bf16 %v629, %v629
      %v662 = vpack.c.bf16 %v630, %v630
      %v663 = vpack.c.bf16 %v631, %v631
      %v664 = vpack.c.bf16 %v632, %v632
      %v665 = vpack.c.bf16 %v633, %v633
      %v666 = vpack.c.bf16 %v634, %v634
      %v667 = vpack.c.bf16 %v635, %v635
      %v668 = vpack.c.bf16 %v636, %v636
      %v669 = vpack.c.bf16 %v637, %v637
      %v670 = vpack.c.bf16 %v638, %v638
      %v671 = vpack.c.bf16 %v639, %v639
      %v672 = vpack.c.bf16 %v640, %v640
      %v673 = vpack.c.bf16 %v641, %v641
      %v674 = vpack.c.bf16 %v642, %v642
      %675 = vst [vmem:[%s264] sm:$0xf] %v643
      %676 = vst [vmem:[%s264 + $0x4] sm:$0xf] %v644
      %677 = vst [vmem:[%s264 + $0x8] sm:$0xf] %v645
      %678 = vst [vmem:[%s264 + $0xc] sm:$0xf] %v646
      %679 = vst [vmem:[%s264 + $0x10] sm:$0xf] %v647
      %680 = vst [vmem:[%s264 + $0x14] sm:$0xf] %v648
      %681 = vst [vmem:[%s264 + $0x18] sm:$0xf] %v649
      %682 = vst [vmem:[%s264 + $0x1c] sm:$0xf] %v650
      %683 = vst [vmem:[%s264 + $0x20] sm:$0xf] %v651
      %684 = vst [vmem:[%s264 + $0x24] sm:$0xf] %v652
      %685 = vst [vmem:[%s264 + $0x28] sm:$0xf] %v653
      %686 = vst [vmem:[%s264 + $0x2c] sm:$0xf] %v654
      %687 = vst [vmem:[%s264 + $0x30] sm:$0xf] %v655
      %688 = vst [vmem:[%s264 + $0x34] sm:$0xf] %v656
      %689 = vst [vmem:[%s264 + $0x38] sm:$0xf] %v657
      %690 = vst [vmem:[%s264 + $0x3c] sm:$0xf] %v658
      %691 = vst [vmem:[%s264 + $0x40] sm:$0xf] %v659
      %692 = vst [vmem:[%s264 + $0x44] sm:$0xf] %v660
      %693 = vst [vmem:[%s264 + $0x48] sm:$0xf] %v661
      %694 = vst [vmem:[%s264 + $0x4c] sm:$0xf] %v662
      %695 = vst [vmem:[%s264 + $0x50] sm:$0xf] %v663
      %696 = vst [vmem:[%s264 + $0x54] sm:$0xf] %v664
      %697 = vst [vmem:[%s264 + $0x58] sm:$0xf] %v665
      %698 = vst [vmem:[%s264 + $0x5c] sm:$0xf] %v666
      %699 = vst [vmem:[%s264 + $0x60] sm:$0xf] %v667
      %700 = vst [vmem:[%s264 + $0x64] sm:$0xf] %v668
      %701 = vst [vmem:[%s264 + $0x68] sm:$0xf] %v669
      %702 = vst [vmem:[%s264 + $0x6c] sm:$0xf] %v670
      %703 = vst [vmem:[%s264 + $0x70] sm:$0xf] %v671
      %704 = vst [vmem:[%s264 + $0x74] sm:$0xf] %v672
      %705 = vst [vmem:[%s264 + $0x78] sm:$0xf] %v673
      %706 = vst [vmem:[%s264 + $0x7c] sm:$0xf] %v674
      %s707 = smul.u32 32, %s19
      %p708 = scmp.lt.s32.totalorder %s707, 63
      %s709 = scalar_select %p708, %s707, 63
      %p710 = scmp.lt.s32.totalorder %s20, 0
      %s711 = scalar_select %p710, %s20, 0
      %s712 = sadd.s32 %s711, %s709
      %s713 = smul.addr %s712, 4
      %s714 = scalar_lea.vmem %s4, %s713
      // Predicated region
      $region37: #{_lambda_.19} parent=35 // pred_check
        %p715 = pneg %p151
      $region38: #{_lambda_.19} parent=35 // pred_check_branch
        %717 = sbr.rel (%p715) target = $region40
      $region39: #{_lambda_.19} parent=35 // pred_region
        %s718 = smul.u32 32, %s19
      $region40: #{_lambda_.19} parent=35 // pred_fallthru
        _
    $region36: #{_lambda_.19} parent=5 // pred_fallthru
      _
    %p719 = scmp.le.s32.totalorder 2, %s10
    // Predicated region
    $region41: #{_lambda_.19} parent=5 // pred_check
      %p720 = pneg %p719
    $region42: #{_lambda_.19} parent=5 // pred_check_branch
      %722 = sbr.rel (%p720) target = $region44
    $region43: #{_lambda_.19} parent=5 // pred_region
      %s723 = ssub.s32 %s10, 2
      // Predicated region
      $region45: #{_lambda_.19} parent=43 // pred_check
        %p724 = pneg %p157
      $region46: #{_lambda_.19} parent=43 // pred_check_branch
        %726 = sbr.rel (%p724) target = $region48
      $region47: #{_lambda_.19} parent=43 // pred_region
        %s727 = smul.u32 32, %s21
        %p728 = scmp.lt.s32.totalorder %s727, 63
        %s729 = scalar_select %p728, %s727, 63
        %p730 = scmp.lt.s32.totalorder %s22, 0
        %s731 = scalar_select %p730, %s22, 0
        %s732 = sadd.s32 %s731, %s729
        %s733 = smul.addr %s732, 4
        %s734 = scalar_lea.vmem %s4, %s733
      $region48: #{_lambda_.19} parent=43 // pred_fallthru
        _
    $region44: #{_lambda_.19} parent=5 // pred_fallthru
      _
  $region6: #{_lambda_.19} parent=0 // loop_footer
    %s14 = sadd.s32 1, %s10
  $region7: #{_lambda_.19} parent=0 // loop_footer_branch
    %9 = sbr.rel target = $region3
  $region8: #{_lambda_.19} parent=0 // loop_exit
    _

// kernel: _lambda_.22
$region0: #{_lambda_.22}
  #allocation0 [shape = 'u32[]', space=smem, size = 0x4, offset = 0x4, fixed_abs, tag = 'smem constant byte address 0x4 - core index']
  #allocation1 [shape = 'u32[72,128]{1,0:T(1,128)}', space=vmem, size = 0x9000, scoped, tag = 'internal scratch']
  %s0 = inlined_call_operand.vmem [shape: bf16[128,128], index: 0, kind: input, shape index: {}]
  %s1 = inlined_call_operand.vmem [shape: bf16[128,128], index: 1, kind: input, shape index: {}]
  %s2 = inlined_call_operand.vmem [shape: f32[1,128], index: 2, kind: input, shape index: {}]
  %s3 = inlined_call_operand.vmem [shape: f32[1,128], index: 3, kind: input, shape index: {}]
  %s4 = inlined_call_operand.vmem [shape: bf16[128,128], index: 4, kind: output, shape index: {}]
  %s5 = sld [smem:[#allocation0]]
  $region26: #{_lambda_.22} parent=0
    _
  %s7 = ssub.s32 1, %s5
  %s8 = scalar_select 0, %s7, %s5
  // Predicated region
  $region2: #{_lambda_.22} parent=0 // pred_check
    _
  $region3: #{_lambda_.22} parent=0 // pred_check_branch
    %10 = sbr.rel (0) target = $region5
  $region4: #{_lambda_.22} parent=0 // pred_region
    _
  $region5: #{_lambda_.22} parent=0 // pred_fallthru
    _
  // Predicated region
  $region6: #{_lambda_.22} parent=0 // pred_check
    _
  $region7: #{_lambda_.22} parent=0 // pred_check_branch
    %12 = sbr.rel (0) target = $region9
  $region8: #{_lambda_.22} parent=0 // pred_region
    _
  $region9: #{_lambda_.22} parent=0 // pred_fallthru
    _
  // Predicated region
  $region10: #{_lambda_.22} parent=0 // pred_check
    _
  $region11: #{_lambda_.22} parent=0 // pred_check_branch
    %14 = sbr.rel (0) target = $region13
  $region12: #{_lambda_.22} parent=0 // pred_region
    _
  $region13: #{_lambda_.22} parent=0 // pred_fallthru
    _
  // Predicated region
  $region14: #{_lambda_.22} parent=0 // pred_check
    _
  $region15: #{_lambda_.22} parent=0 // pred_check_branch
    %16 = sbr.rel (0) target = $region17
  $region16: #{_lambda_.22} parent=0 // pred_region
    _
  $region17: #{_lambda_.22} parent=0 // pred_fallthru
    _
  %v17 = vld [vmem:[%s0] sm:$0xf]
  %v18 = vld [vmem:[%s0 + $0x4] sm:$0xf]
  %v19 = vld [vmem:[%s0 + $0x8] sm:$0xf]
  %v20 = vld [vmem:[%s0 + $0xc] sm:$0xf]
  %v21 = vld [vmem:[%s0 + $0x10] sm:$0xf]
  %v22 = vld [vmem:[%s0 + $0x14] sm:$0xf]
  %v23 = vld [vmem:[%s0 + $0x18] sm:$0xf]
  %v24 = vld [vmem:[%s0 + $0x1c] sm:$0xf]
  %v25 = vld [vmem:[%s0 + $0x20] sm:$0xf]
  %v26 = vld [vmem:[%s0 + $0x24] sm:$0xf]
  %v27 = vld [vmem:[%s0 + $0x28] sm:$0xf]
  %v28 = vld [vmem:[%s0 + $0x2c] sm:$0xf]
  %v29 = vld [vmem:[%s0 + $0x30] sm:$0xf]
  %v30 = vld [vmem:[%s0 + $0x34] sm:$0xf]
  %v31 = vld [vmem:[%s0 + $0x38] sm:$0xf]
  %v32 = vld [vmem:[%s0 + $0x3c] sm:$0xf]
  %v33 = vld [vmem:[%s1] sm:$0xf]
  %v34 = vld [vmem:[%s1 + $0x4] sm:$0xf]
  %v35 = vld [vmem:[%s1 + $0x8] sm:$0xf]
  %v36 = vld [vmem:[%s1 + $0xc] sm:$0xf]
  %v37 = vld [vmem:[%s1 + $0x10] sm:$0xf]
  %v38 = vld [vmem:[%s1 + $0x14] sm:$0xf]
  %v39 = vld [vmem:[%s1 + $0x18] sm:$0xf]
  %v40 = vld [vmem:[%s1 + $0x1c] sm:$0xf]
  %v41 = vld [vmem:[%s1 + $0x20] sm:$0xf]
  %v42 = vld [vmem:[%s1 + $0x24] sm:$0xf]
  %v43 = vld [vmem:[%s1 + $0x28] sm:$0xf]
  %v44 = vld [vmem:[%s1 + $0x2c] sm:$0xf]
  %v45 = vld [vmem:[%s1 + $0x30] sm:$0xf]
  %v46 = vld [vmem:[%s1 + $0x34] sm:$0xf]
  %v47 = vld [vmem:[%s1 + $0x38] sm:$0xf]
  %v48 = vld [vmem:[%s1 + $0x3c] sm:$0xf]
  %v65 = vunpack.c.l.b16 %v17
  %v66 = vunpack.c.l.b16 %v18
  %v67 = vunpack.c.l.b16 %v19
  %v68 = vunpack.c.l.b16 %v20
  %v69 = vunpack.c.l.b16 %v21
  %v70 = vunpack.c.l.b16 %v22
  %v71 = vunpack.c.l.b16 %v23
  %v72 = vunpack.c.l.b16 %v24
  %v73 = vunpack.c.l.b16 %v25
  %v74 = vunpack.c.l.b16 %v26
  %v75 = vunpack.c.l.b16 %v27
  %v76 = vunpack.c.l.b16 %v28
  %v77 = vunpack.c.l.b16 %v29
  %v78 = vunpack.c.l.b16 %v30
  %v79 = vunpack.c.l.b16 %v31
  %v80 = vunpack.c.l.b16 %v32
  %v81 = vpack.c.b16 %v66, %v65
  %v82 = vpack.c.b16 %v68, %v67
  %v83 = vpack.c.b16 %v70, %v69
  %v84 = vpack.c.b16 %v72, %v71
  %v85 = vpack.c.b16 %v74, %v73
  %v86 = vpack.c.b16 %v76, %v75
  %v87 = vpack.c.b16 %v78, %v77
  %v88 = vpack.c.b16 %v80, %v79
  %v113 = vunpack.c.l.b16 %v33
  %v114 = vunpack.c.l.b16 %v34
  %v115 = vunpack.c.l.b16 %v35
  %v116 = vunpack.c.l.b16 %v36
  %v117 = vunpack.c.l.b16 %v37
  %v118 = vunpack.c.l.b16 %v38
  %v119 = vunpack.c.l.b16 %v39
  %v120 = vunpack.c.l.b16 %v40
  %v121 = vunpack.c.l.b16 %v41
  %v122 = vunpack.c.l.b16 %v42
  %v123 = vunpack.c.l.b16 %v43
  %v124 = vunpack.c.l.b16 %v44
  %v125 = vunpack.c.l.b16 %v45
  %v126 = vunpack.c.l.b16 %v46
  %v127 = vunpack.c.l.b16 %v47
  %v128 = vunpack.c.l.b16 %v48
  %v129 = vpack.c.b16 %v114, %v113
  %v130 = vpack.c.b16 %v116, %v115
  %v131 = vpack.c.b16 %v118, %v117
  %v132 = vpack.c.b16 %v120, %v119
  %v133 = vpack.c.b16 %v122, %v121
  %v134 = vpack.c.b16 %v124, %v123
  %v135 = vpack.c.b16 %v126, %v125
  %v136 = vpack.c.b16 %v128, %v127
  %145 = vmatpush.bf16.msra.mxu0 %v136
  %146 = vmatpush.bf16.msra.mxu0 %v135
  %147 = vmatpush.bf16.msra.mxu0 %v134
  %148 = vmatpush.bf16.msra.mxu0 %v133
  %149 = vmatpush.bf16.msra.mxu0 %v132
  %150 = vmatpush.bf16.msra.mxu0 %v131
  %151 = vmatpush.bf16.msra.mxu0 %v130
  %152 = vmatpush.bf16.msra.mxu0 %v129
  %153 = vmatmul.bf16.gmra.mxu0 %v81
  %v154 = vpop.f32.mrf.mxu0
  %v155 = vadd.f32 0.0, %v154
  %v156 = vpop.f32.mrf.mxu0
  %v157 = vadd.f32 0.0, %v156
  %158 = vmatmul.bf16.gmra.mxu0 %v82
  %v159 = vpop.f32.mrf.mxu0
  %v160 = vadd.f32 0.0, %v159
  %v161 = vpop.f32.mrf.mxu0
  %v162 = vadd.f32 0.0, %v161
  %163 = vmatmul.bf16.gmra.mxu0 %v83
  %v164 = vpop.f32.mrf.mxu0
  %v165 = vadd.f32 0.0, %v164
  %v166 = vpop.f32.mrf.mxu0
  %v167 = vadd.f32 0.0, %v166
  %168 = vmatmul.bf16.gmra.mxu0 %v84
  %v169 = vpop.f32.mrf.mxu0
  %v170 = vadd.f32 0.0, %v169
  %v171 = vpop.f32.mrf.mxu0
  %v172 = vadd.f32 0.0, %v171
  %173 = vmatmul.bf16.gmra.mxu0 %v85
  %v174 = vpop.f32.mrf.mxu0
  %v175 = vadd.f32 0.0, %v174
  %v176 = vpop.f32.mrf.mxu0
  %v177 = vadd.f32 0.0, %v176
  %178 = vmatmul.bf16.gmra.mxu0 %v86
  %v179 = vpop.f32.mrf.mxu0
  %v180 = vadd.f32 0.0, %v179
  %v181 = vpop.f32.mrf.mxu0
  %v182 = vadd.f32 0.0, %v181
  %183 = vmatmul.bf16.gmra.mxu0 %v87
  %v184 = vpop.f32.mrf.mxu0
  %v185 = vadd.f32 0.0, %v184
  %v186 = vpop.f32.mrf.mxu0
  %v187 = vadd.f32 0.0, %v186
  %188 = vmatmul.bf16.gmra.mxu0 %v88
  %v189 = vpop.f32.mrf.mxu0
  %v190 = vadd.f32 0.0, %v189
  %v191 = vpop.f32.mrf.mxu0
  %v192 = vadd.f32 0.0, %v191
  %193 = vdwg.mxu0
  %v194 = vld [vmem:[%s2] sm:$0x1]
  %v196 = vperm.slane %v194, 0
  %v198 = vmul.f32 %v155, %v196
  %v199 = vmul.f32 %v157, %v196
  %v200 = vmul.f32 %v160, %v196
  %v201 = vmul.f32 %v162, %v196
  %v202 = vmul.f32 %v165, %v196
  %v203 = vmul.f32 %v167, %v196
  %v204 = vmul.f32 %v170, %v196
  %v205 = vmul.f32 %v172, %v196
  %v206 = vmul.f32 %v175, %v196
  %v207 = vmul.f32 %v177, %v196
  %v208 = vmul.f32 %v180, %v196
  %v209 = vmul.f32 %v182, %v196
  %v210 = vmul.f32 %v185, %v196
  %v211 = vmul.f32 %v187, %v196
  %v212 = vmul.f32 %v190, %v196
  %v213 = vmul.f32 %v192, %v196
  %v214 = vld [vmem:[%s3] sm:$0x1]
  %v216 = vperm.slane %v214, 0
  %v218 = vadd.f32 %v198, %v216
  %v219 = vadd.f32 %v199, %v216
  %v220 = vadd.f32 %v200, %v216
  %v221 = vadd.f32 %v201, %v216
  %v222 = vadd.f32 %v202, %v216
  %v223 = vadd.f32 %v203, %v216
  %v224 = vadd.f32 %v204, %v216
  %v225 = vadd.f32 %v205, %v216
  %v226 = vadd.f32 %v206, %v216
  %v227 = vadd.f32 %v207, %v216
  %v228 = vadd.f32 %v208, %v216
  %v229 = vadd.f32 %v209, %v216
  %v230 = vadd.f32 %v210, %v216
  %v231 = vadd.f32 %v211, %v216
  %v232 = vadd.f32 %v212, %v216
  %v233 = vadd.f32 %v213, %v216
  %v234 = vmax.f32 %v218, 0.0
  %v235 = vmax.f32 %v219, 0.0
  %v236 = vmax.f32 %v220, 0.0
  %v237 = vmax.f32 %v221, 0.0
  %v238 = vmax.f32 %v222, 0.0
  %v239 = vmax.f32 %v223, 0.0
  %v240 = vmax.f32 %v224, 0.0
  %v241 = vmax.f32 %v225, 0.0
  %v242 = vmax.f32 %v226, 0.0
  %v243 = vmax.f32 %v227, 0.0
  %v244 = vmax.f32 %v228, 0.0
  %v245 = vmax.f32 %v229, 0.0
  %v246 = vmax.f32 %v230, 0.0
  %v247 = vmax.f32 %v231, 0.0
  %v248 = vmax.f32 %v232, 0.0
  %v249 = vmax.f32 %v233, 0.0
  %v250 = vpack.c.bf16 %v234, %v234
  %v251 = vpack.c.bf16 %v235, %v235
  %v252 = vpack.c.bf16 %v236, %v236
  %v253 = vpack.c.bf16 %v237, %v237
  %v254 = vpack.c.bf16 %v238, %v238
  %v255 = vpack.c.bf16 %v239, %v239
  %v256 = vpack.c.bf16 %v240, %v240
  %v257 = vpack.c.bf16 %v241, %v241
  %v258 = vpack.c.bf16 %v242, %v242
  %v259 = vpack.c.bf16 %v243, %v243
  %v260 = vpack.c.bf16 %v244, %v244
  %v261 = vpack.c.bf16 %v245, %v245
  %v262 = vpack.c.bf16 %v246, %v246
  %v263 = vpack.c.bf16 %v247, %v247
  %v264 = vpack.c.bf16 %v248, %v248
  %v265 = vpack.c.bf16 %v249, %v249
  %266 = vst [vmem:[%s4] sm:$0xf] %v250
  %267 = vst [vmem:[%s4 + $0x4] sm:$0xf] %v251
  %268 = vst [vmem:[%s4 + $0x8] sm:$0xf] %v252
  %269 = vst [vmem:[%s4 + $0xc] sm:$0xf] %v253
  %270 = vst [vmem:[%s4 + $0x10] sm:$0xf] %v254
  %271 = vst [vmem:[%s4 + $0x14] sm:$0xf] %v255
  %272 = vst [vmem:[%s4 + $0x18] sm:$0xf] %v256
  %273 = vst [vmem:[%s4 + $0x1c] sm:$0xf] %v257
  %274 = vst [vmem:[%s4 + $0x20] sm:$0xf] %v258
  %275 = vst [vmem:[%s4 + $0x24] sm:$0xf] %v259
  %276 = vst [vmem:[%s4 + $0x28] sm:$0xf] %v260
  %277 = vst [vmem:[%s4 + $0x2c] sm:$0xf] %v261
  %278 = vst [vmem:[%s4 + $0x30] sm:$0xf] %v262
  %279 = vst [vmem:[%s4 + $0x34] sm:$0xf] %v263
  %280 = vst [vmem:[%s4 + $0x38] sm:$0xf] %v264
  %281 = vst [vmem:[%s4 + $0x3c] sm:$0xf] %v265
  // Predicated region
  $region18: #{_lambda_.22} parent=0 // pred_check
    _
  $region19: #{_lambda_.22} parent=0 // pred_check_branch
    %283 = sbr.rel (0) target = $region21
  $region20: #{_lambda_.22} parent=0 // pred_region
    _
  $region21: #{_lambda_.22} parent=0 // pred_fallthru
    _
  // Predicated region
  $region22: #{_lambda_.22} parent=0 // pred_check
    _
  $region23: #{_lambda_.22} parent=0 // pred_check_branch
    %285 = sbr.rel (0) target = $region25
  $region24: #{_lambda_.22} parent=0 // pred_region
    _
  $region25: #{_lambda_.22} parent=0 // pred_fallthru
    _

// kernel: _lambda_.20
$region0: #{_lambda_.20}
  #allocation0 [shape = 'u32[]', space=smem, size = 0x4, offset = 0x4, fixed_abs, tag = 'smem constant byte address 0x4 - core index']
  #allocation1 [shape = 'u32[72,128]{1,0:T(1,128)}', space=vmem, size = 0x9000, scoped, tag = 'internal scratch']
  #allocation2 [shape = 'f32[288,128]{1,0:T(8,128)}', space=vmem, size = 0x24000, scoped, tag = 'scratch operand']
  %s0 = inlined_call_operand.vmem [shape: bf16[2,16,16,128], index: 0, kind: input, shape index: {}]
  %s1 = inlined_call_operand.vmem [shape: bf16[3,3,128,128], index: 1, kind: input, shape index: {}]
  %s2 = inlined_call_operand.vmem [shape: f32[1,128], index: 2, kind: input, shape index: {}]
  %s3 = inlined_call_operand.vmem [shape: f32[1,128], index: 3, kind: input, shape index: {}]
  %s4 = inlined_call_operand.vmem [shape: bf16[2,256,128], index: 4, kind: output, shape index: {}]
  %s5 = sld [smem:[#allocation0]]
  $region60: #{_lambda_.20} parent=0
    _
  %s7 = ssub.s32 1, %s5
  %s8 = scalar_select 0, %s7, %s5
  loop: start=0, step=1, limit=4
  $region2: #{_lambda_.20} parent=0 // loop_pre_header
    _
  $region3: #{_lambda_.20} parent=0 // loop_header
    %s10 = sphi 0, %s14
    %p11 = scmp.ge.s32.totalorder %s10, 4
    %s17 = sphi 0, %s36
    %s18 = sphi 0, %s32
    %s19 = sphi 0, %s28
    %s20 = sphi 0, %s17
    %s21 = sphi 0, %s18
    %s22 = sphi 0, %s19
    %s23 = sphi 0, %s20
    %s24 = sphi 0, %s21
    %s25 = sphi 0, %s22
    %s39 = sphi 0, %s41
    %s42 = sphi 0, %s39
    %s43 = sphi 0, %s42
    %s59 = sphi 0, %s43
    %s65 = sphi 0, %s67
    %s68 = sphi 0, %s65
    %s69 = sphi 0, %s68
    %s85 = sphi 0, %s69
    %s91 = sphi 0, %s93
    %s94 = sphi 0, %s91
    %s95 = sphi 0, %s94
    %s111 = sphi 0, %s95
    %s117 = sphi 0, %s119
    %s120 = sphi 0, %s117
    %s121 = sphi 0, %s120
    %s137 = sphi 0, %s121
    %s147 = sphi 0, %s149
    %s150 = sphi 0, %s147
    %s151 = sphi 0, %s150
    %s167 = sphi 0, %s151
  $region4: #{_lambda_.20} parent=0 // loop_header_branch
    %13 = sbr.rel (%p11) target = $region8
  $region5: #{_lambda_.20} parent=0 // loop_body
    %s15 = ssub.s32 %s10, 1
    %s16 = ssub.s32 %s10, 2
    %s26 = sadd.s32 1, %s19
    %p27 = scmp.ge.s32.totalorder %s26, 1
    %s28 = scalar_select %p27, 0, %s26
    %s29 = sadd.s32 1, %s18
    %s30 = scalar_select %p27, %s29, %s18
    %p31 = scmp.ge.s32.totalorder %s30, 1
    %s32 = scalar_select %p31, 0, %s30
    %s33 = sadd.s32 1, %s17
    %s34 = scalar_select %p31, %s33, %s17
    %p35 = scmp.ge.s32.totalorder %s34, 2
    %s36 = scalar_select %p35, 0, %s34
    %s37 = ssub.s32 %s17, %s36
    %p38 = scmp.eq.s32.totalorder %s37, 0
    %s40 = sadd.s32 %s39, 1
    %s41 = scalar_select %p38, %s39, %s40
    %p44 = pneg %p38
    %p45 = scmp.eq.s32.totalorder %s10, 1
    %p46 = por %p44, %p45
    %p47 = scmp.ne.s32.totalorder %s39, %s42
    %p48 = scmp.eq.s32.totalorder %s10, 0
    %p49 = por %p47, %p48
    %p50 = scmp.ne.s32.totalorder %s39, %s42
    %p51 = scmp.eq.s32.totalorder %s15, 1
    %p52 = por %p50, %p51
    %p53 = scmp.ne.s32.totalorder %s42, %s43
    %p54 = scmp.eq.s32.totalorder %s15, 0
    %p55 = por %p53, %p54
    %p56 = scmp.ne.s32.totalorder %s42, %s43
    %p57 = scmp.eq.s32.totalorder %s16, 1
    %p58 = por %p56, %p57
    %p60 = scmp.ne.s32.totalorder %s43, %s59
    %p61 = scmp.eq.s32.totalorder %s16, 0
    %p62 = por %p60, %p61
    %s63 = ssub.s32 %s19, %s28
    %p64 = scmp.eq.s32.totalorder %s63, 0
    %s66 = sadd.s32 %s65, 1
    %s67 = scalar_select %p64, %s65, %s66
    %p70 = pneg %p64
    %p71 = scmp.eq.s32.totalorder %s10, 1
    %p72 = por %p70, %p71
    %p73 = scmp.ne.s32.totalorder %s65, %s68
    %p74 = scmp.eq.s32.totalorder %s10, 0
    %p75 = por %p73, %p74
    %p76 = scmp.ne.s32.totalorder %s65, %s68
    %p77 = scmp.eq.s32.totalorder %s15, 1
    %p78 = por %p76, %p77
    %p79 = scmp.ne.s32.totalorder %s68, %s69
    %p80 = scmp.eq.s32.totalorder %s15, 0
    %p81 = por %p79, %p80
    %p82 = scmp.ne.s32.totalorder %s68, %s69
    %p83 = scmp.eq.s32.totalorder %s16, 1
    %p84 = por %p82, %p83
    %p86 = scmp.ne.s32.totalorder %s69, %s85
    %p87 = scmp.eq.s32.totalorder %s16, 0
    %p88 = por %p86, %p87
    %s89 = ssub.s32 %s19, %s28
    %p90 = scmp.eq.s32.totalorder %s89, 0
    %s92 = sadd.s32 %s91, 1
    %s93 = scalar_select %p90, %s91, %s92
    %p96 = pneg %p90
    %p97 = scmp.eq.s32.totalorder %s10, 1
    %p98 = por %p96, %p97
    %p99 = scmp.ne.s32.totalorder %s91, %s94
    %p100 = scmp.eq.s32.totalorder %s10, 0
    %p101 = por %p99, %p100
    %p102 = scmp.ne.s32.totalorder %s91, %s94
    %p103 = scmp.eq.s32.totalorder %s15, 1
    %p104 = por %p102, %p103
    %p105 = scmp.ne.s32.totalorder %s94, %s95
    %p106 = scmp.eq.s32.totalorder %s15, 0
    %p107 = por %p105, %p106
    %p108 = scmp.ne.s32.totalorder %s94, %s95
    %p109 = scmp.eq.s32.totalorder %s16, 1
    %p110 = por %p108, %p109
    %p112 = scmp.ne.s32.totalorder %s95, %s111
    %p113 = scmp.eq.s32.totalorder %s16, 0
    %p114 = por %p112, %p113
    %s115 = ssub.s32 %s19, %s28
    %p116 = scmp.eq.s32.totalorder %s115, 0
    %s118 = sadd.s32 %s117, 1
    %s119 = scalar_select %p116, %s117, %s118
    %p122 = pneg %p116
    %p123 = scmp.eq.s32.totalorder %s10, 1
    %p124 = por %p122, %p123
    %p125 = scmp.ne.s32.totalorder %s117, %s120
    %p126 = scmp.eq.s32.totalorder %s10, 0
    %p127 = por %p125, %p126
    %p128 = scmp.ne.s32.totalorder %s117, %s120
    %p129 = scmp.eq.s32.totalorder %s15, 1
    %p130 = por %p128, %p129
    %p131 = scmp.ne.s32.totalorder %s120, %s121
    %p132 = scmp.eq.s32.totalorder %s15, 0
    %p133 = por %p131, %p132
    %p134 = scmp.ne.s32.totalorder %s120, %s121
    %p135 = scmp.eq.s32.totalorder %s16, 1
    %p136 = por %p134, %p135
    %p138 = scmp.ne.s32.totalorder %s121, %s137
    %p139 = scmp.eq.s32.totalorder %s16, 0
    %p140 = por %p138, %p139
    %s141 = ssub.s32 %s17, %s36
    %s142 = ssub.s32 %s18, %s32
    %s143 = sor.u32 %s141, %s142
    %s144 = ssub.s32 %s19, %s28
    %s145 = sor.u32 %s143, %s144
    %p146 = scmp.eq.s32.totalorder %s145, 0
    %s148 = sadd.s32 %s147, 1
    %s149 = scalar_select %p146, %s147, %s148
    %p152 = pneg %p146
    %p153 = scmp.eq.s32.totalorder %s10, 1
    %p154 = por %p152, %p153
    %p155 = scmp.ne.s32.totalorder %s147, %s150
    %p156 = scmp.eq.s32.totalorder %s10, 0
    %p157 = por %p155, %p156
    %p158 = scmp.ne.s32.totalorder %s147, %s150
    %p159 = scmp.eq.s32.totalorder %s15, 1
    %p160 = por %p158, %p159
    %p161 = scmp.ne.s32.totalorder %s150, %s151
    %p162 = scmp.eq.s32.totalorder %s15, 0
    %p163 = por %p161, %p162
    %p164 = scmp.ne.s32.totalorder %s150, %s151
    %p165 = scmp.eq.s32.totalorder %s16, 1
    %p166 = por %p164, %p165
    %p168 = scmp.ne.s32.totalorder %s151, %s167
    %p169 = scmp.eq.s32.totalorder %s16, 0
    %p170 = por %p168, %p169
    %p171 = scmp.le.s32.totalorder 1, %s10
    %p172 = scmp.lt.s32.totalorder %s10, 3
    %p173 = pnand %p171, %p172
    %p174 = pneg %p173
    // Predicated region
    $region9: #{_lambda_.20} parent=5 // pred_check
      _
    $region10: #{_lambda_.20} parent=5 // pred_check_branch
      %176 = sbr.rel (%p173) target = $region12
    $region11: #{_lambda_.20} parent=5 // pred_region
      %s177 = ssub.s32 %s10, 1
      // Predicated region
      $region13: #{_lambda_.20} parent=11 // pred_check
        %p178 = pneg %p81
      $region14: #{_lambda_.20} parent=11 // pred_check_branch
        %180 = sbr.rel (%p178) target = $region16
      $region15: #{_lambda_.20} parent=11 // pred_region
        %p181 = scmp.lt.s32.totalorder %s22, 0
        %s182 = scalar_select %p181, %s22, 0
        %s183 = smul.addr %s182, 4
        %s184 = scalar_lea.vmem %s1, %s183
      $region16: #{_lambda_.20} parent=11 // pred_fallthru
        _
      // Predicated region
      $region17: #{_lambda_.20} parent=11 // pred_check
        %p185 = pneg %p107
      $region18: #{_lambda_.20} parent=11 // pred_check_branch
        %187 = sbr.rel (%p185) target = $region20
      $region19: #{_lambda_.20} parent=11 // pred_region
        %p188 = scmp.lt.s32.totalorder %s22, 0
        %s189 = scalar_select %p188, %s22, 0
        %s190 = scalar_lea.vmem %s2, %s189
      $region20: #{_lambda_.20} parent=11 // pred_fallthru
        _
      // Predicated region
      $region21: #{_lambda_.20} parent=11 // pred_check
        %p191 = pneg %p133
      $region22: #{_lambda_.20} parent=11 // pred_check_branch
        %193 = sbr.rel (%p191) target = $region24
      $region23: #{_lambda_.20} parent=11 // pred_region
        %p194 = scmp.lt.s32.totalorder %s22, 0
        %s195 = scalar_select %p194, %s22, 0
        %s196 = scalar_lea.vmem %s3, %s195
      $region24: #{_lambda_.20} parent=11 // pred_fallthru
        _
    $region12: #{_lambda_.20} parent=5 // pred_fallthru
      _
    %p197 = scmp.lt.s32.totalorder %s10, 2
    // Predicated region
    $region25: #{_lambda_.20} parent=5 // pred_check
      %p198 = pneg %p197
    $region26: #{_lambda_.20} parent=5 // pred_check_branch
      %200 = sbr.rel (%p198) target = $region28
    $region27: #{_lambda_.20} parent=5 // pred_region
      // Predicated region
      $region29: #{_lambda_.20} parent=27 // pred_check
        %p201 = pneg %p49
      $region30: #{_lambda_.20} parent=27 // pred_check_branch
        %203 = sbr.rel (%p201) target = $region32
      $region31: #{_lambda_.20} parent=27 // pred_region
        %p204 = scmp.lt.s32.totalorder %s17, 1
        %s205 = scalar_select %p204, %s17, 1
        %s206 = smul.addr %s205, 32
        %s207 = smul.addr %s206, 4
        %s208 = scalar_lea.vmem %s0, %s207
      $region32: #{_lambda_.20} parent=27 // pred_fallthru
        _
    $region28: #{_lambda_.20} parent=5 // pred_fallthru
      _
    %p209 = scmp.le.s32.totalorder 1, %s10
    %p210 = scmp.lt.s32.totalorder %s10, 3
    %p211 = pnand %p209, %p210
    %p212 = pneg %p211
    // Predicated region
    $region33: #{_lambda_.20} parent=5 // pred_check
      _
    $region34: #{_lambda_.20} parent=5 // pred_check_branch
      %214 = sbr.rel (%p211) target = $region36
    $region35: #{_lambda_.20} parent=5 // pred_region
      %s215 = ssub.s32 %s10, 1
      %p216 = scmp.lt.s32.totalorder %s20, 1
      %s217 = scalar_select %p216, %s20, 1
      %s218 = smul.addr %s217, 32
      %s219 = smul.addr %s218, 4
      %s220 = scalar_lea.vmem %s0, %s219
      %p221 = pneg %p55
      %p222 = pneg %p52
      %p223 = scmp.lt.s32.totalorder %s22, 0
      %s224 = scalar_select %p223, %s22, 0
      %s225 = smul.addr %s224, 4
      %s226 = scalar_lea.vmem %s1, %s225
      %p227 = pneg %p81
      %p228 = pneg %p78
      %p229 = scmp.lt.s32.totalorder %s22, 0
      %s230 = scalar_select %p229, %s22, 0
      %s231 = scalar_lea.vmem %s2, %s230
      %p232 = pneg %p107
      %p233 = pneg %p104
      %p234 = scmp.lt.s32.totalorder %s22, 0
      %s235 = scalar_select %p234, %s22, 0
      %s236 = scalar_lea.vmem %s3, %s235
      %p237 = pneg %p133
      %p238 = pneg %p130
      %p239 = pneg %p163
      %p240 = pneg %p160
      %s241 = smul.u32 32, %s21
      %p242 = scmp.lt.s32.totalorder %s20, 1
      %s243 = scalar_select %p242, %s20, 1
      %p244 = scmp.lt.s32.totalorder %s241, 31
      %s245 = scalar_select %p244, %s241, 31
      %p246 = scmp.lt.s32.totalorder %s22, 0
      %s247 = scalar_select %p246, %s22, 0
      %s248 = sadd.s32 %s247, %s245
      %s249 = smul.addr %s243, 32
      %s250 = sadd.s32 %s248, %s249
      %s251 = smul.addr %s250, 4
      %s252 = scalar_lea.vmem %s4, %s251
      %p253 = scmp.lt.s32.totalorder %s20, 1
      %s254 = scalar_select %p253, %s20, 1
      %s255 = smul.addr %s254, 32
      %s256 = smul.addr %s255, 4
      %s257 = scalar_lea.vmem %s0, %s256
      %p258 = scmp.lt.s32.totalorder %s22, 0
      %s259 = scalar_select %p258, %s22, 0
      %s260 = smul.addr %s259, 4
      %s261 = scalar_lea.vmem %s1, %s260
      %p262 = scmp.lt.s32.totalorder %s22, 0
      %s263 = scalar_select %p262, %s22, 0
      %s264 = scalar_lea.vmem %s2, %s263
      %p265 = scmp.lt.s32.totalorder %s22, 0
      %s266 = scalar_select %p265, %s22, 0
      %s267 = scalar_lea.vmem %s3, %s266
      %s268 = smul.u32 32, %s21
      %p269 = scmp.lt.s32.totalorder %s20, 1
      %s270 = scalar_select %p269, %s20, 1
      %p271 = scmp.lt.s32.totalorder %s268, 31
      %s272 = scalar_select %p271, %s268, 31
      %p273 = scmp.lt.s32.totalorder %s22, 0
      %s274 = scalar_select %p273, %s22, 0
      %s275 = sadd.s32 %s274, %s272
      %s276 = smul.addr %s270, 32
      %s277 = sadd.s32 %s275, %s276
      %s278 = smul.addr %s277, 4
      %s279 = scalar_lea.vmem %s4, %s278
      %s280 = smul.u32 32, %s21
      %p281 = scmp.eq.s32.totalorder %s21, 0
      %p282 = scmp.eq.s32.totalorder %s22, 0
      %p283 = pnand %p281, %p282
      %p284 = pneg %p283
      // Predicated region
      $region37: #{_lambda_.20} parent=35 // pred_check
        _
      $region38: #{_lambda_.20} parent=35 // pred_check_branch
        %286 = sbr.rel (%p283) target = $region40
      $region39: #{_lambda_.20} parent=35 // pred_region
        %287 = vst [vmem:[#allocation2] sm:$0xff] 0.0
        %288 = vst [vmem:[#allocation2 + $0x8] sm:$0xff] 0.0
        %289 = vst [vmem:[#allocation2 + $0x110] sm:$0xff] 0.0
        %290 = vst [vmem:[#allocation2 + $0x118] sm:$0xff] 0.0
        loop: start=0, step=1, limit=16
        $region41: #{_lambda_.20} parent=39 // loop_pre_header
          _
        $region42: #{_lambda_.20} parent=39 // loop_header
          %s292 = sphi 0, %s296
          %p293 = scmp.ge.s32.totalorder %s292, 16
        $region43: #{_lambda_.20} parent=39 // loop_header_branch
          %295 = sbr.rel (%p293) target = $region47
        $region44: #{_lambda_.20} parent=39 // loop_body
          %s297 = sadd.s32 %s292, 1
          %s298 = smul.u32 %s297, 16
          %s299 = smul.u32 %s292, 2
          %s300 = smul.addr %s299, 4
          %s301 = scalar_lea.vmem %s257, %s300
          %v302 = vld [vmem:[%s301] sm:$0xf]
          %v303 = vld [vmem:[%s301 + $0x4] sm:$0xf]
          %v304 = vunpack.c.l.bf16 %v302
          %v305 = vunpack.c.l.bf16 %v303
          %s306 = scalar_lea.vmem [#allocation2], %s298
          %307 = vst [vmem:[%s306] sm:$0xff] %v304
          %308 = vst [vmem:[%s306 + $0x8] sm:$0xff] %v305
        $region45: #{_lambda_.20} parent=39 // loop_footer
          %s296 = sadd.s32 1, %s292
        $region46: #{_lambda_.20} parent=39 // loop_footer_branch
          %291 = sbr.rel target = $region42
        $region47: #{_lambda_.20} parent=39 // loop_exit
          _
      $region40: #{_lambda_.20} parent=35 // pred_fallthru
        _
      %s309 = smul.u32 %s21, 16
      %v310 = vlaneseq
      %v311 = vshrl.u32 %v310, 7
      %v312 = vadd.s32 %v311, 8
      %v313 = vadd.s32 %v311, 16
      %v314 = vadd.s32 %v311, 24
      %v315 = vadd.s32 %v311, 32
      %v316 = vadd.s32 %v311, 40
      %v317 = vadd.s32 %v311, 48
      %v318 = vadd.s32 %v311, 56
      %v319 = vadd.s32 %v311, 64
      %v320 = vadd.s32 %v311, 72
      %v321 = vadd.s32 %v311, 80
      %v322 = vadd.s32 %v311, 88
      %v323 = vadd.s32 %v311, 96
      %v324 = vadd.s32 %v311, 104
      %v325 = vadd.s32 %v311, 112
      %v326 = vadd.s32 %v311, 120
      %v327 = vadd.s32 %v311, 128
      %v328 = vadd.s32 %v311, 136
      %v329 = vadd.s32 %v311, 144
      %v330 = vadd.s32 %v311, 152
      %v331 = vadd.s32 %v311, 160
      %v332 = vadd.s32 %v311, 168
      %v333 = vadd.s32 %v311, 176
      %v334 = vadd.s32 %v311, 184
      %v335 = vadd.s32 %v311, 192
      %v336 = vadd.s32 %v311, 200
      %v337 = vadd.s32 %v311, 208
      %v338 = vadd.s32 %v311, 216
      %v339 = vadd.s32 %v311, 224
      %v340 = vadd.s32 %v311, 232
      %v341 = vadd.s32 %v311, 240
      %v342 = vadd.s32 %v311, 248
      %vm343 = vcmp.lt.s32.totalorder %v311, 0
      %v344 = vsub.s32 0, %v311
      %v345 = vsel %vm343, %v344, %v311
      %v346 = vshrl.u32 %v345, 4
      %v347 = vand.u32 %v345, 15
      %v348 = vsub.s32 0, %v347
      %v349 = vsel %vm343, %v348, %v347
      %vm350 = vcmp.lt.s32.totalorder %v312, 0
      %v351 = vsub.s32 0, %v312
      %v352 = vsel %vm350, %v351, %v312
      %v353 = vshrl.u32 %v352, 4
      %v354 = vand.u32 %v352, 15
      %v355 = vsub.s32 0, %v354
      %v356 = vsel %vm350, %v355, %v354
      %vm357 = vcmp.lt.s32.totalorder %v313, 0
      %v358 = vsub.s32 0, %v313
      %v359 = vsel %vm357, %v358, %v313
      %v360 = vshrl.u32 %v359, 4
      %v361 = vand.u32 %v359, 15
      %v362 = vsub.s32 0, %v361
      %v363 = vsel %vm357, %v362, %v361
      %vm364 = vcmp.lt.s32.totalorder %v314, 0
      %v365 = vsub.s32 0, %v314
      %v366 = vsel %vm364, %v365, %v314
      %v367 = vshrl.u32 %v366, 4
      %v368 = vand.u32 %v366, 15
      %v369 = vsub.s32 0, %v368
      %v370 = vsel %vm364, %v369, %v368
      %vm371 = vcmp.lt.s32.totalorder %v315, 0
      %v372 = vsub.s32 0, %v315
      %v373 = vsel %vm371, %v372, %v315
      %v374 = vshrl.u32 %v373, 4
      %v375 = vand.u32 %v373, 15
      %v376 = vsub.s32 0, %v375
      %v377 = vsel %vm371, %v376, %v375
      %vm378 = vcmp.lt.s32.totalorder %v316, 0
      %v379 = vsub.s32 0, %v316
      %v380 = vsel %vm378, %v379, %v316
      %v381 = vshrl.u32 %v380, 4
      %v382 = vand.u32 %v380, 15
      %v383 = vsub.s32 0, %v382
      %v384 = vsel %vm378, %v383, %v382
      %vm385 = vcmp.lt.s32.totalorder %v317, 0
      %v386 = vsub.s32 0, %v317
      %v387 = vsel %vm385, %v386, %v317
      %v388 = vshrl.u32 %v387, 4
      %v389 = vand.u32 %v387, 15
      %v390 = vsub.s32 0, %v389
      %v391 = vsel %vm385, %v390, %v389
      %vm392 = vcmp.lt.s32.totalorder %v318, 0
      %v393 = vsub.s32 0, %v318
      %v394 = vsel %vm392, %v393, %v318
      %v395 = vshrl.u32 %v394, 4
      %v396 = vand.u32 %v394, 15
      %v397 = vsub.s32 0, %v396
      %v398 = vsel %vm392, %v397, %v396
      %vm399 = vcmp.lt.s32.totalorder %v319, 0
      %v400 = vsub.s32 0, %v319
      %v401 = vsel %vm399, %v400, %v319
      %v402 = vshrl.u32 %v401, 4
      %v403 = vand.u32 %v401, 15
      %v404 = vsub.s32 0, %v403
      %v405 = vsel %vm399, %v404, %v403
      %vm406 = vcmp.lt.s32.totalorder %v320, 0
      %v407 = vsub.s32 0, %v320
      %v408 = vsel %vm406, %v407, %v320
      %v409 = vshrl.u32 %v408, 4
      %v410 = vand.u32 %v408, 15
      %v411 = vsub.s32 0, %v410
      %v412 = vsel %vm406, %v411, %v410
      %vm413 = vcmp.lt.s32.totalorder %v321, 0
      %v414 = vsub.s32 0, %v321
      %v415 = vsel %vm413, %v414, %v321
      %v416 = vshrl.u32 %v415, 4
      %v417 = vand.u32 %v415, 15
      %v418 = vsub.s32 0, %v417
      %v419 = vsel %vm413, %v418, %v417
      %vm420 = vcmp.lt.s32.totalorder %v322, 0
      %v421 = vsub.s32 0, %v322
      %v422 = vsel %vm420, %v421, %v322
      %v423 = vshrl.u32 %v422, 4
      %v424 = vand.u32 %v422, 15
      %v425 = vsub.s32 0, %v424
      %v426 = vsel %vm420, %v425, %v424
      %vm427 = vcmp.lt.s32.totalorder %v323, 0
      %v428 = vsub.s32 0, %v323
      %v429 = vsel %vm427, %v428, %v323
      %v430 = vshrl.u32 %v429, 4
      %v431 = vand.u32 %v429, 15
      %v432 = vsub.s32 0, %v431
      %v433 = vsel %vm427, %v432, %v431
      %vm434 = vcmp.lt.s32.totalorder %v324, 0
      %v435 = vsub.s32 0, %v324
      %v436 = vsel %vm434, %v435, %v324
      %v437 = vshrl.u32 %v436, 4
      %v438 = vand.u32 %v436, 15
      %v439 = vsub.s32 0, %v438
      %v440 = vsel %vm434, %v439, %v438
      %vm441 = vcmp.lt.s32.totalorder %v325, 0
      %v442 = vsub.s32 0, %v325
      %v443 = vsel %vm441, %v442, %v325
      %v444 = vshrl.u32 %v443, 4
      %v445 = vand.u32 %v443, 15
      %v446 = vsub.s32 0, %v445
      %v447 = vsel %vm441, %v446, %v445
      %vm448 = vcmp.lt.s32.totalorder %v326, 0
      %v449 = vsub.s32 0, %v326
      %v450 = vsel %vm448, %v449, %v326
      %v451 = vshrl.u32 %v450, 4
      %v452 = vand.u32 %v450, 15
      %v453 = vsub.s32 0, %v452
      %v454 = vsel %vm448, %v453, %v452
      %vm455 = vcmp.lt.s32.totalorder %v327, 0
      %v456 = vsub.s32 0, %v327
      %v457 = vsel %vm455, %v456, %v327
      %v458 = vshrl.u32 %v457, 4
      %v459 = vand.u32 %v457, 15
      %v460 = vsub.s32 0, %v459
      %v461 = vsel %vm455, %v460, %v459
      %vm462 = vcmp.lt.s32.totalorder %v328, 0
      %v463 = vsub.s32 0, %v328
      %v464 = vsel %vm462, %v463, %v328
      %v465 = vshrl.u32 %v464, 4
      %v466 = vand.u32 %v464, 15
      %v467 = vsub.s32 0, %v466
      %v468 = vsel %vm462, %v467, %v466
      %vm469 = vcmp.lt.s32.totalorder %v329, 0
      %v470 = vsub.s32 0, %v329
      %v471 = vsel %vm469, %v470, %v329
      %v472 = vshrl.u32 %v471, 4
      %v473 = vand.u32 %v471, 15
      %v474 = vsub.s32 0, %v473
      %v475 = vsel %vm469, %v474, %v473
      %vm476 = vcmp.lt.s32.totalorder %v330, 0
      %v477 = vsub.s32 0, %v330
      %v478 = vsel %vm476, %v477, %v330
      %v479 = vshrl.u32 %v478, 4
      %v480 = vand.u32 %v478, 15
      %v481 = vsub.s32 0, %v480
      %v482 = vsel %vm476, %v481, %v480
      %vm483 = vcmp.lt.s32.totalorder %v331, 0
      %v484 = vsub.s32 0, %v331
      %v485 = vsel %vm483, %v484, %v331
      %v486 = vshrl.u32 %v485, 4
      %v487 = vand.u32 %v485, 15
      %v488 = vsub.s32 0, %v487
      %v489 = vsel %vm483, %v488, %v487
      %vm490 = vcmp.lt.s32.totalorder %v332, 0
      %v491 = vsub.s32 0, %v332
      %v492 = vsel %vm490, %v491, %v332
      %v493 = vshrl.u32 %v492, 4
      %v494 = vand.u32 %v492, 15
      %v495 = vsub.s32 0, %v494
      %v496 = vsel %vm490, %v495, %v494
      %vm497 = vcmp.lt.s32.totalorder %v333, 0
      %v498 = vsub.s32 0, %v333
      %v499 = vsel %vm497, %v498, %v333
      %v500 = vshrl.u32 %v499, 4
      %v501 = vand.u32 %v499, 15
      %v502 = vsub.s32 0, %v501
      %v503 = vsel %vm497, %v502, %v501
      %vm504 = vcmp.lt.s32.totalorder %v334, 0
      %v505 = vsub.s32 0, %v334
      %v506 = vsel %vm504, %v505, %v334
      %v507 = vshrl.u32 %v506, 4
      %v508 = vand.u32 %v506, 15
      %v509 = vsub.s32 0, %v508
      %v510 = vsel %vm504, %v509, %v508
      %vm511 = vcmp.lt.s32.totalorder %v335, 0
      %v512 = vsub.s32 0, %v335
      %v513 = vsel %vm511, %v512, %v335
      %v514 = vshrl.u32 %v513, 4
      %v515 = vand.u32 %v513, 15
      %v516 = vsub.s32 0, %v515
      %v517 = vsel %vm511, %v516, %v515
      %vm518 = vcmp.lt.s32.totalorder %v336, 0
      %v519 = vsub.s32 0, %v336
      %v520 = vsel %vm518, %v519, %v336
      %v521 = vshrl.u32 %v520, 4
      %v522 = vand.u32 %v520, 15
      %v523 = vsub.s32 0, %v522
      %v524 = vsel %vm518, %v523, %v522
      %vm525 = vcmp.lt.s32.totalorder %v337, 0
      %v526 = vsub.s32 0, %v337
      %v527 = vsel %vm525, %v526, %v337
      %v528 = vshrl.u32 %v527, 4
      %v529 = vand.u32 %v527, 15
      %v530 = vsub.s32 0, %v529
      %v531 = vsel %vm525, %v530, %v529
      %vm532 = vcmp.lt.s32.totalorder %v338, 0
      %v533 = vsub.s32 0, %v338
      %v534 = vsel %vm532, %v533, %v338
      %v535 = vshrl.u32 %v534, 4
      %v536 = vand.u32 %v534, 15
      %v537 = vsub.s32 0, %v536
      %v538 = vsel %vm532, %v537, %v536
      %vm539 = vcmp.lt.s32.totalorder %v339, 0
      %v540 = vsub.s32 0, %v339
      %v541 = vsel %vm539, %v540, %v339
      %v542 = vshrl.u32 %v541, 4
      %v543 = vand.u32 %v541, 15
      %v544 = vsub.s32 0, %v543
      %v545 = vsel %vm539, %v544, %v543
      %vm546 = vcmp.lt.s32.totalorder %v340, 0
      %v547 = vsub.s32 0, %v340
      %v548 = vsel %vm546, %v547, %v340
      %v549 = vshrl.u32 %v548, 4
      %v550 = vand.u32 %v548, 15
      %v551 = vsub.s32 0, %v550
      %v552 = vsel %vm546, %v551, %v550
      %vm553 = vcmp.lt.s32.totalorder %v341, 0
      %v554 = vsub.s32 0, %v341
      %v555 = vsel %vm553, %v554, %v341
      %v556 = vshrl.u32 %v555, 4
      %v557 = vand.u32 %v555, 15
      %v558 = vsub.s32 0, %v557
      %v559 = vsel %vm553, %v558, %v557
      %vm560 = vcmp.lt.s32.totalorder %v342, 0
      %v561 = vsub.s32 0, %v342
      %v562 = vsel %vm560, %v561, %v342
      %v563 = vshrl.u32 %v562, 4
      %v564 = vand.u32 %v562, 15
      %v565 = vsub.s32 0, %v564
      %v566 = vsel %vm560, %v565, %v564
      %vm567 = vcmp.ne.s32.totalorder %v349, 0
      %vm568 = vcmp.ne.s32.totalorder %v356, 0
      %vm569 = vcmp.ne.s32.totalorder %v363, 0
      %vm570 = vcmp.ne.s32.totalorder %v370, 0
      %vm571 = vcmp.ne.s32.totalorder %v377, 0
      %vm572 = vcmp.ne.s32.totalorder %v384, 0
      %vm573 = vcmp.ne.s32.totalorder %v391, 0
      %vm574 = vcmp.ne.s32.totalorder %v398, 0
      %vm575 = vcmp.ne.s32.totalorder %v405, 0
      %vm576 = vcmp.ne.s32.totalorder %v412, 0
      %vm577 = vcmp.ne.s32.totalorder %v419, 0
      %vm578 = vcmp.ne.s32.totalorder %v426, 0
      %vm579 = vcmp.ne.s32.totalorder %v433, 0
      %vm580 = vcmp.ne.s32.totalorder %v440, 0
      %vm581 = vcmp.ne.s32.totalorder %v447, 0
      %vm582 = vcmp.ne.s32.totalorder %v454, 0
      %vm583 = vcmp.ne.s32.totalorder %v461, 0
      %vm584 = vcmp.ne.s32.totalorder %v468, 0
      %vm585 = vcmp.ne.s32.totalorder %v475, 0
      %vm586 = vcmp.ne.s32.totalorder %v482, 0
      %vm587 = vcmp.ne.s32.totalorder %v489, 0
      %vm588 = vcmp.ne.s32.totalorder %v496, 0
      %vm589 = vcmp.ne.s32.totalorder %v503, 0
      %vm590 = vcmp.ne.s32.totalorder %v510, 0
      %vm591 = vcmp.ne.s32.totalorder %v517, 0
      %vm592 = vcmp.ne.s32.totalorder %v524, 0
      %vm593 = vcmp.ne.s32.totalorder %v531, 0
      %vm594 = vcmp.ne.s32.totalorder %v538, 0
      %vm595 = vcmp.ne.s32.totalorder %v545, 0
      %vm596 = vcmp.ne.s32.totalorder %v552, 0
      %vm597 = vcmp.ne.s32.totalorder %v559, 0
      %vm598 = vcmp.ne.s32.totalorder %v566, 0
      %vm599 = vcmp.lt.s32.totalorder %v349, 0
      %vm600 = vcmp.lt.s32.totalorder %v356, 0
      %vm601 = vcmp.lt.s32.totalorder %v363, 0
      %vm602 = vcmp.lt.s32.totalorder %v370, 0
      %vm603 = vcmp.lt.s32.totalorder %v377, 0
      %vm604 = vcmp.lt.s32.totalorder %v384, 0
      %vm605 = vcmp.lt.s32.totalorder %v391, 0
      %vm606 = vcmp.lt.s32.totalorder %v398, 0
      %vm607 = vcmp.lt.s32.totalorder %v405, 0
      %vm608 = vcmp.lt.s32.totalorder %v412, 0
      %vm609 = vcmp.lt.s32.totalorder %v419, 0
      %vm610 = vcmp.lt.s32.totalorder %v426, 0
      %vm611 = vcmp.lt.s32.totalorder %v433, 0
      %vm612 = vcmp.lt.s32.totalorder %v440, 0
      %vm613 = vcmp.lt.s32.totalorder %v447, 0
      %vm614 = vcmp.lt.s32.totalorder %v454, 0
      %vm615 = vcmp.lt.s32.totalorder %v461, 0
      %vm616 = vcmp.lt.s32.totalorder %v468, 0
      %vm617 = vcmp.lt.s32.totalorder %v475, 0
      %vm618 = vcmp.lt.s32.totalorder %v482, 0
      %vm619 = vcmp.lt.s32.totalorder %v489, 0
      %vm620 = vcmp.lt.s32.totalorder %v496, 0
      %vm621 = vcmp.lt.s32.totalorder %v503, 0
      %vm622 = vcmp.lt.s32.totalorder %v510, 0
      %vm623 = vcmp.lt.s32.totalorder %v517, 0
      %vm624 = vcmp.lt.s32.totalorder %v524, 0
      %vm625 = vcmp.lt.s32.totalorder %v531, 0
      %vm626 = vcmp.lt.s32.totalorder %v538, 0
      %vm627 = vcmp.lt.s32.totalorder %v545, 0
      %vm628 = vcmp.lt.s32.totalorder %v552, 0
      %vm629 = vcmp.lt.s32.totalorder %v559, 0
      %vm630 = vcmp.lt.s32.totalorder %v566, 0
      %vm631 = vmand %vm599, %vm567
      %vm632 = vmand %vm600, %vm568
      %vm633 = vmand %vm601, %vm569
      %vm634 = vmand %vm602, %vm570
      %vm635 = vmand %vm603, %vm571
      %vm636 = vmand %vm604, %vm572
      %vm637 = vmand %vm605, %vm573
      %vm638 = vmand %vm606, %vm574
      %vm639 = vmand %vm607, %vm575
      %vm640 = vmand %vm608, %vm576
      %vm641 = vmand %vm609, %vm577
      %vm642 = vmand %vm610, %vm578
      %vm643 = vmand %vm611, %vm579
      %vm644 = vmand %vm612, %vm580
      %vm645 = vmand %vm613, %vm581
      %vm646 = vmand %vm614, %vm582
      %vm647 = vmand %vm615, %vm583
      %vm648 = vmand %vm616, %vm584
      %vm649 = vmand %vm617, %vm585
      %vm650 = vmand %vm618, %vm586
      %vm651 = vmand %vm619, %vm587
      %vm652 = vmand %vm620, %vm588
      %vm653 = vmand %vm621, %vm589
      %vm654 = vmand %vm622, %vm590
      %vm655 = vmand %vm623, %vm591
      %vm656 = vmand %vm624, %vm592
      %vm657 = vmand %vm625, %vm593
      %vm658 = vmand %vm626, %vm594
      %vm659 = vmand %vm627, %vm595
      %vm660 = vmand %vm628, %vm596
      %vm661 = vmand %vm629, %vm597
      %vm662 = vmand %vm630, %vm598
      %v663 = vadd.s32 %v349, 16
      %v664 = vadd.s32 %v356, 16
      %v665 = vadd.s32 %v363, 16
      %v666 = vadd.s32 %v370, 16
      %v667 = vadd.s32 %v377, 16
      %v668 = vadd.s32 %v384, 16
      %v669 = vadd.s32 %v391, 16
      %v670 = vadd.s32 %v398, 16
      %v671 = vadd.s32 %v405, 16
      %v672 = vadd.s32 %v412, 16
      %v673 = vadd.s32 %v419, 16
      %v674 = vadd.s32 %v426, 16
      %v675 = vadd.s32 %v433, 16
      %v676 = vadd.s32 %v440, 16
      %v677 = vadd.s32 %v447, 16
      %v678 = vadd.s32 %v454, 16
      %v679 = vadd.s32 %v461, 16
      %v680 = vadd.s32 %v468, 16
      %v681 = vadd.s32 %v475, 16
      %v682 = vadd.s32 %v482, 16
      %v683 = vadd.s32 %v489, 16
      %v684 = vadd.s32 %v496, 16
      %v685 = vadd.s32 %v503, 16
      %v686 = vadd.s32 %v510, 16
      %v687 = vadd.s32 %v517, 16
      %v688 = vadd.s32 %v524, 16
      %v689 = vadd.s32 %v531, 16
      %v690 = vadd.s32 %v538, 16
      %v691 = vadd.s32 %v545, 16
      %v692 = vadd.s32 %v552, 16
      %v693 = vadd.s32 %v559, 16
      %v694 = vadd.s32 %v566, 16
      %v695 = vsel %vm631, %v663, %v349
      %v696 = vsel %vm632, %v664, %v356
      %v697 = vsel %vm633, %v665, %v363
      %v698 = vsel %vm634, %v666, %v370
      %v699 = vsel %vm635, %v667, %v377
      %v700 = vsel %vm636, %v668, %v384
      %v701 = vsel %vm637, %v669, %v391
      %v702 = vsel %vm638, %v670, %v398
      %v703 = vsel %vm639, %v671, %v405
      %v704 = vsel %vm640, %v672, %v412
      %v705 = vsel %vm641, %v673, %v419
      %v706 = vsel %vm642, %v674, %v426
      %v707 = vsel %vm643, %v675, %v433
      %v708 = vsel %vm644, %v676, %v440
      %v709 = vsel %vm645, %v677, %v447
      %v710 = vsel %vm646, %v678, %v454
      %v711 = vsel %vm647, %v679, %v461
      %v712 = vsel %vm648, %v680, %v468
      %v713 = vsel %vm649, %v681, %v475
      %v714 = vsel %vm650, %v682, %v482
      %v715 = vsel %vm651, %v683, %v489
      %v716 = vsel %vm652, %v684, %v496
      %v717 = vsel %vm653, %v685, %v503
      %v718 = vsel %vm654, %v686, %v510
      %v719 = vsel %vm655, %v687, %v517
      %v720 = vsel %vm656, %v688, %v524
      %v721 = vsel %vm657, %v689, %v531
      %v722 = vsel %vm658, %v690, %v538
      %v723 = vsel %vm659, %v691, %v545
      %v724 = vsel %vm660, %v692, %v552
      %v725 = vsel %vm661, %v693, %v559
      %v726 = vsel %vm662, %v694, %v566
      %s727 = smul.u32 %s21, 256
      %s728 = scalar_lea.vmem [#allocation2], %s727
      %v729 = vld [vmem:[%s728] sm:$0xff]
      %v730 = vld [vmem:[%s728 + $0x8] sm:$0xff]
      %v731 = vld [vmem:[%s728 + $0x10] sm:$0xff]
      %v732 = vld [vmem:[%s728 + $0x18] sm:$0xff]
      %v733 = vld [vmem:[%s728 + $0x20] sm:$0xff]
      %v734 = vld [vmem:[%s728 + $0x28] sm:$0xff]
      %v735 = vld [vmem:[%s728 + $0x30] sm:$0xff]
      %v736 = vld [vmem:[%s728 + $0x38] sm:$0xff]
      %v737 = vld [vmem:[%s728 + $0x40] sm:$0xff]
      %v738 = vld [vmem:[%s728 + $0x48] sm:$0xff]
      %v739 = vld [vmem:[%s728 + $0x50] sm:$0xff]
      %v740 = vld [vmem:[%s728 + $0x58] sm:$0xff]
      %v741 = vld [vmem:[%s728 + $0x60] sm:$0xff]
      %v742 = vld [vmem:[%s728 + $0x68] sm:$0xff]
      %v743 = vld [vmem:[%s728 + $0x70] sm:$0xff]
      %v744 = vld [vmem:[%s728 + $0x78] sm:$0xff]
      %v745 = vld [vmem:[%s728 + $0x80] sm:$0xff]
      %v746 = vld [vmem:[%s728 + $0x88] sm:$0xff]
      %v747 = vld [vmem:[%s728 + $0x90] sm:$0xff]
      %v748 = vld [vmem:[%s728 + $0x98] sm:$0xff]
      %v749 = vld [vmem:[%s728 + $0xa0] sm:$0xff]
      %v750 = vld [vmem:[%s728 + $0xa8] sm:$0xff]
      %v751 = vld [vmem:[%s728 + $0xb0] sm:$0xff]
      %v752 = vld [vmem:[%s728 + $0xb8] sm:$0xff]
      %v753 = vld [vmem:[%s728 + $0xc0] sm:$0xff]
      %v754 = vld [vmem:[%s728 + $0xc8] sm:$0xff]
      %v755 = vld [vmem:[%s728 + $0xd0] sm:$0xff]
      %v756 = vld [vmem:[%s728 + $0xd8] sm:$0xff]
      %v757 = vld [vmem:[%s728 + $0xe0] sm:$0xff]
      %v758 = vld [vmem:[%s728 + $0xe8] sm:$0xff]
      %v759 = vld [vmem:[%s728 + $0xf0] sm:$0xff]
      %v760 = vld [vmem:[%s728 + $0xf8] sm:$0xff]
      %vm761 = vcmp.gt.s32.totalorder %v695, 0
      %vm762 = vcmp.gt.s32.totalorder %v696, 0
      %vm763 = vcmp.gt.s32.totalorder %v697, 0
      %vm764 = vcmp.gt.s32.totalorder %v698, 0
      %vm765 = vcmp.gt.s32.totalorder %v699, 0
      %vm766 = vcmp.gt.s32.totalorder %v700, 0
      %vm767 = vcmp.gt.s32.totalorder %v701, 0
      %vm768 = vcmp.gt.s32.totalorder %v702, 0
      %vm769 = vcmp.gt.s32.totalorder %v703, 0
      %vm770 = vcmp.gt.s32.totalorder %v704, 0
      %vm771 = vcmp.gt.s32.totalorder %v705, 0
      %vm772 = vcmp.gt.s32.totalorder %v706, 0
      %vm773 = vcmp.gt.s32.totalorder %v707, 0
      %vm774 = vcmp.gt.s32.totalorder %v708, 0
      %vm775 = vcmp.gt.s32.totalorder %v709, 0
      %vm776 = vcmp.gt.s32.totalorder %v710, 0
      %vm777 = vcmp.gt.s32.totalorder %v711, 0
      %vm778 = vcmp.gt.s32.totalorder %v712, 0
      %vm779 = vcmp.gt.s32.totalorder %v713, 0
      %vm780 = vcmp.gt.s32.totalorder %v714, 0
      %vm781 = vcmp.gt.s32.totalorder %v715, 0
      %vm782 = vcmp.gt.s32.totalorder %v716, 0
      %vm783 = vcmp.gt.s32.totalorder %v717, 0
      %vm784 = vcmp.gt.s32.totalorder %v718, 0
      %vm785 = vcmp.gt.s32.totalorder %v719, 0
      %vm786 = vcmp.gt.s32.totalorder %v720, 0
      %vm787 = vcmp.gt.s32.totalorder %v721, 0
      %vm788 = vcmp.gt.s32.totalorder %v722, 0
      %vm789 = vcmp.gt.s32.totalorder %v723, 0
      %vm790 = vcmp.gt.s32.totalorder %v724, 0
      %vm791 = vcmp.gt.s32.totalorder %v725, 0
      %vm792 = vcmp.gt.s32.totalorder %v726, 0
      %v793 = vrot.slane %v729, 7
      %v794 = vrot.slane %v730, 7
      %v795 = vrot.slane %v731, 7
      %v796 = vrot.slane %v732, 7
      %v797 = vrot.slane %v733, 7
      %v798 = vrot.slane %v734, 7
      %v799 = vrot.slane %v735, 7
      %v800 = vrot.slane %v736, 7
      %v801 = vrot.slane %v737, 7
      %v802 = vrot.slane %v738, 7
      %v803 = vrot.slane %v739, 7
      %v804 = vrot.slane %v740, 7
      %v805 = vrot.slane %v741, 7
      %v806 = vrot.slane %v742, 7
      %v807 = vrot.slane %v743, 7
      %v808 = vrot.slane %v744, 7
      %v809 = vrot.slane %v745, 7
      %v810 = vrot.slane %v746, 7
      %v811 = vrot.slane %v747, 7
      %v812 = vrot.slane %v748, 7
      %v813 = vrot.slane %v749, 7
      %v814 = vrot.slane %v750, 7
      %v815 = vrot.slane %v751, 7
      %v816 = vrot.slane %v752, 7
      %v817 = vrot.slane %v753, 7
      %v818 = vrot.slane %v754, 7
      %v819 = vrot.slane %v755, 7
      %v820 = vrot.slane %v756, 7
      %v821 = vrot.slane %v757, 7
      %v822 = vrot.slane %v758, 7
      %v823 = vrot.slane %v759, 7
      %v824 = vrot.slane %v760, 7
      %vm825 = vcmp.lt.s32.totalorder %v311, 1
      %v826 = vsel %vm825, %v823, %v824
      %v827 = vsel %vm825, %v822, %v823
      %v828 = vsel %vm825, %v821, %v822
      %v829 = vsel %vm825, %v820, %v821
      %v830 = vsel %vm825, %v819, %v820
      %v831 = vsel %vm825, %v818, %v819
      %v832 = vsel %vm825, %v817, %v818
      %v833 = vsel %vm825, %v816, %v817
      %v834 = vsel %vm825, %v815, %v816
      %v835 = vsel %vm825, %v814, %v815
      %v836 = vsel %vm825, %v813, %v814
      %v837 = vsel %vm825, %v812, %v813
      %v838 = vsel %vm825, %v811, %v812
      %v839 = vsel %vm825, %v810, %v811
      %v840 = vsel %vm825, %v809, %v810
      %v841 = vsel %vm825, %v808, %v809
      %v842 = vsel %vm825, %v807, %v808
      %v843 = vsel %vm825, %v806, %v807
      %v844 = vsel %vm825, %v805, %v806
      %v845 = vsel %vm825, %v804, %v805
      %v846 = vsel %vm825, %v803, %v804
      %v847 = vsel %vm825, %v802, %v803
      %v848 = vsel %vm825, %v801, %v802
      %v849 = vsel %vm825, %v800, %v801
      %v850 = vsel %vm825, %v799, %v800
      %v851 = vsel %vm825, %v798, %v799
      %v852 = vsel %vm825, %v797, %v798
      %v853 = vsel %vm825, %v796, %v797
      %v854 = vsel %vm825, %v795, %v796
      %v855 = vsel %vm825, %v794, %v795
      %v856 = vsel %vm825, %v793, %v794
      %v857 = vsel %vm825, %v824, %v793
      %v858 = vsel %vm761, 1, 0
      %v859 = vsel %vm762, 1, 0
      %v860 = vsel %vm763, 1, 0
      %v861 = vsel %vm764, 1, 0
      %v862 = vsel %vm765, 1, 0
      %v863 = vsel %vm766, 1, 0
      %v864 = vsel %vm767, 1, 0
      %v865 = vsel %vm768, 1, 0
      %v866 = vsel %vm769, 1, 0
      %v867 = vsel %vm770, 1, 0
      %v868 = vsel %vm771, 1, 0
      %v869 = vsel %vm772, 1, 0
      %v870 = vsel %vm773, 1, 0
      %v871 = vsel %vm774, 1, 0
      %v872 = vsel %vm775, 1, 0
      %v873 = vsel %vm776, 1, 0
      %v874 = vsel %vm777, 1, 0
      %v875 = vsel %vm778, 1, 0
      %v876 = vsel %vm779, 1, 0
      %v877 = vsel %vm780, 1, 0
      %v878 = vsel %vm781, 1, 0
      %v879 = vsel %vm782, 1, 0
      %v880 = vsel %vm783, 1, 0
      %v881 = vsel %vm784, 1, 0
      %v882 = vsel %vm785, 1, 0
      %v883 = vsel %vm786, 1, 0
      %v884 = vsel %vm787, 1, 0
      %v885 = vsel %vm788, 1, 0
      %v886 = vsel %vm789, 1, 0
      %v887 = vsel %vm790, 1, 0
      %v888 = vsel %vm791, 1, 0
      %v889 = vsel %vm792, 1, 0
      %vm890 = vcmp.eq.s32.totalorder %v858, 1
      %vm891 = vcmp.eq.s32.totalorder %v859, 1
      %vm892 = vcmp.eq.s32.totalorder %v860, 1
      %vm893 = vcmp.eq.s32.totalorder %v861, 1
      %vm894 = vcmp.eq.s32.totalorder %v862, 1
      %vm895 = vcmp.eq.s32.totalorder %v863, 1
      %vm896 = vcmp.eq.s32.totalorder %v864, 1
      %vm897 = vcmp.eq.s32.totalorder %v865, 1
      %vm898 = vcmp.eq.s32.totalorder %v866, 1
      %vm899 = vcmp.eq.s32.totalorder %v867, 1
      %vm900 = vcmp.eq.s32.totalorder %v868, 1
      %vm901 = vcmp.eq.s32.totalorder %v869, 1
      %vm902 = vcmp.eq.s32.totalorder %v870, 1
      %vm903 = vcmp.eq.s32.totalorder %v871, 1
      %vm904 = vcmp.eq.s32.totalorder %v872, 1
      %vm905 = vcmp.eq.s32.totalorder %v873, 1
      %vm906 = vcmp.eq.s32.totalorder %v874, 1
      %vm907 = vcmp.eq.s32.totalorder %v875, 1
      %vm908 = vcmp.eq.s32.totalorder %v876, 1
      %vm909 = vcmp.eq.s32.totalorder %v877, 1
      %vm910 = vcmp.eq.s32.totalorder %v878, 1
      %vm911 = vcmp.eq.s32.totalorder %v879, 1
      %vm912 = vcmp.eq.s32.totalorder %v880, 1
      %vm913 = vcmp.eq.s32.totalorder %v881, 1
      %vm914 = vcmp.eq.s32.totalorder %v882, 1
      %vm915 = vcmp.eq.s32.totalorder %v883, 1
      %vm916 = vcmp.eq.s32.totalorder %v884, 1
      %vm917 = vcmp.eq.s32.totalorder %v885, 1
      %vm918 = vcmp.eq.s32.totalorder %v886, 1
      %vm919 = vcmp.eq.s32.totalorder %v887, 1
      %vm920 = vcmp.eq.s32.totalorder %v888, 1
      %vm921 = vcmp.eq.s32.totalorder %v889, 1
      %v922 = vsel %vm890, %v857, 0.0
      %v923 = vsel %vm891, %v856, 0.0
      %v924 = vsel %vm892, %v855, 0.0
      %v925 = vsel %vm893, %v854, 0.0
      %v926 = vsel %vm894, %v853, 0.0
      %v927 = vsel %vm895, %v852, 0.0
      %v928 = vsel %vm896, %v851, 0.0
      %v929 = vsel %vm897, %v850, 0.0
      %v930 = vsel %vm898, %v849, 0.0
      %v931 = vsel %vm899, %v848, 0.0
      %v932 = vsel %vm900, %v847, 0.0
      %v933 = vsel %vm901, %v846, 0.0
      %v934 = vsel %vm902, %v845, 0.0
      %v935 = vsel %vm903, %v844, 0.0
      %v936 = vsel %vm904, %v843, 0.0
      %v937 = vsel %vm905, %v842, 0.0
      %v938 = vsel %vm906, %v841, 0.0
      %v939 = vsel %vm907, %v840, 0.0
      %v940 = vsel %vm908, %v839, 0.0
      %v941 = vsel %vm909, %v838, 0.0
      %v942 = vsel %vm910, %v837, 0.0
      %v943 = vsel %vm911, %v836, 0.0
      %v944 = vsel %vm912, %v835, 0.0
      %v945 = vsel %vm913, %v834, 0.0
      %v946 = vsel %vm914, %v833, 0.0
      %v947 = vsel %vm915, %v832, 0.0
      %v948 = vsel %vm916, %v831, 0.0
      %v949 = vsel %vm917, %v830, 0.0
      %v950 = vsel %vm918, %v829, 0.0
      %v951 = vsel %vm919, %v828, 0.0
      %v952 = vsel %vm920, %v827, 0.0
      %v953 = vsel %vm921, %v826, 0.0
      %v954 = vpack.c.bf16 %v923, %v922
      %v955 = vpack.c.bf16 %v925, %v924
      %v956 = vpack.c.bf16 %v927, %v926
      %v957 = vpack.c.bf16 %v929, %v928
      %v958 = vpack.c.bf16 %v931, %v930
      %v959 = vpack.c.bf16 %v933, %v932
      %v960 = vpack.c.bf16 %v935, %v934
      %v961 = vpack.c.bf16 %v937, %v936
      %v962 = vpack.c.bf16 %v939, %v938
      %v963 = vpack.c.bf16 %v941, %v940
      %v964 = vpack.c.bf16 %v943, %v942
      %v965 = vpack.c.bf16 %v945, %v944
      %v966 = vpack.c.bf16 %v947, %v946
      %v967 = vpack.c.bf16 %v949, %v948
      %v968 = vpack.c.bf16 %v951, %v950
      %v969 = vpack.c.bf16 %v953, %v952
      %v970 = vld [vmem:[%s261] sm:$0xf]
      %v971 = vld [vmem:[%s261 + $0x4] sm:$0xf]
      %v972 = vld [vmem:[%s261 + $0x8] sm:$0xf]
      %v973 = vld [vmem:[%s261 + $0xc] sm:$0xf]
      %v974 = vld [vmem:[%s261 + $0x10] sm:$0xf]
      %v975 = vld [vmem:[%s261 + $0x14] sm:$0xf]
      %v976 = vld [vmem:[%s261 + $0x18] sm:$0xf]
      %v977 = vld [vmem:[%s261 + $0x1c] sm:$0xf]
      %v978 = vld [vmem:[%s261 + $0x20] sm:$0xf]
      %v979 = vld [vmem:[%s261 + $0x24] sm:$0xf]
      %v980 = vld [vmem:[%s261 + $0x28] sm:$0xf]
      %v981 = vld [vmem:[%s261 + $0x2c] sm:$0xf]
      %v982 = vld [vmem:[%s261 + $0x30] sm:$0xf]
      %v983 = vld [vmem:[%s261 + $0x34] sm:$0xf]
      %v984 = vld [vmem:[%s261 + $0x38] sm:$0xf]
      %v985 = vld [vmem:[%s261 + $0x3c] sm:$0xf]
      %v986 = vpack.c.bf16 %v730, %v729
      %v987 = vpack.c.bf16 %v732, %v731
      %v988 = vpack.c.bf16 %v734, %v733
      %v989 = vpack.c.bf16 %v736, %v735
      %v990 = vpack.c.bf16 %v738, %v737
      %v991 = vpack.c.bf16 %v740, %v739
      %v992 = vpack.c.bf16 %v742, %v741
      %v993 = vpack.c.bf16 %v744, %v743
      %v994 = vpack.c.bf16 %v746, %v745
      %v995 = vpack.c.bf16 %v748, %v747
      %v996 = vpack.c.bf16 %v750, %v749
      %v997 = vpack.c.bf16 %v752, %v751
      %v998 = vpack.c.bf16 %v754, %v753
      %v999 = vpack.c.bf16 %v756, %v755
      %v1000 = vpack.c.bf16 %v758, %v757
      %v1001 = vpack.c.bf16 %v760, %v759
      %s1002 = scalar_lea.vmem %s261, 64
      %v1003 = vld [vmem:[%s1002] sm:$0xf]
      %v1004 = vld [vmem:[%s1002 + $0x4] sm:$0xf]
      %v1005 = vld [vmem:[%s1002 + $0x8] sm:$0xf]
      %v1006 = vld [vmem:[%s1002 + $0xc] sm:$0xf]
      %v1007 = vld [vmem:[%s1002 + $0x10] sm:$0xf]
      %v1008 = vld [vmem:[%s1002 + $0x14] sm:$0xf]
      %v1009 = vld [vmem:[%s1002 + $0x18] sm:$0xf]
      %v1010 = vld [vmem:[%s1002 + $0x1c] sm:$0xf]
      %v1011 = vld [vmem:[%s1002 + $0x20] sm:$0xf]
      %v1012 = vld [vmem:[%s1002 + $0x24] sm:$0xf]
      %v1013 = vld [vmem:[%s1002 + $0x28] sm:$0xf]
      %v1014 = vld [vmem:[%s1002 + $0x2c] sm:$0xf]
      %v1015 = vld [vmem:[%s1002 + $0x30] sm:$0xf]
      %v1016 = vld [vmem:[%s1002 + $0x34] sm:$0xf]
      %v1017 = vld [vmem:[%s1002 + $0x38] sm:$0xf]
      %v1018 = vld [vmem:[%s1002 + $0x3c] sm:$0xf]
      %v1035 = vunpack.c.l.b16 %v1003
      %v1036 = vunpack.c.l.b16 %v1004
      %v1037 = vunpack.c.l.b16 %v1005
      %v1038 = vunpack.c.l.b16 %v1006
      %v1039 = vunpack.c.l.b16 %v1007
      %v1040 = vunpack.c.l.b16 %v1008
      %v1041 = vunpack.c.l.b16 %v1009
      %v1042 = vunpack.c.l.b16 %v1010
      %v1043 = vunpack.c.l.b16 %v1011
      %v1044 = vunpack.c.l.b16 %v1012
      %v1045 = vunpack.c.l.b16 %v1013
      %v1046 = vunpack.c.l.b16 %v1014
      %v1047 = vunpack.c.l.b16 %v1015
      %v1048 = vunpack.c.l.b16 %v1016
      %v1049 = vunpack.c.l.b16 %v1017
      %v1050 = vunpack.c.l.b16 %v1018
      %v1051 = vpack.c.b16 %v1036, %v1035
      %v1052 = vpack.c.b16 %v1038, %v1037
      %v1053 = vpack.c.b16 %v1040, %v1039
      %v1054 = vpack.c.b16 %v1042, %v1041
      %v1055 = vpack.c.b16 %v1044, %v1043
      %v1056 = vpack.c.b16 %v1046, %v1045
      %v1057 = vpack.c.b16 %v1048, %v1047
      %v1058 = vpack.c.b16 %v1050, %v1049
      %1067 = vmatpush.bf16.msra.mxu0 %v1058
      %1068 = vmatpush.bf16.msra.mxu0 %v1057
      %1069 = vmatpush.bf16.msra.mxu0 %v1056
      %1070 = vmatpush.bf16.msra.mxu0 %v1055
      %1071 = vmatpush.bf16.msra.mxu0 %v1054
      %1072 = vmatpush.bf16.msra.mxu0 %v1053
      %1073 = vmatpush.bf16.msra.mxu0 %v1052
      %1074 = vmatpush.bf16.msra.mxu0 %v1051
      %1075 = vmatmul.bf16.gmra.mxu0 %v986
      %v1076 = vpop.f32.mrf.mxu0
      %v1077 = vadd.f32 0.0, %v1076
      %v1078 = vpop.f32.mrf.mxu0
      %v1079 = vadd.f32 0.0, %v1078
      %1080 = vmatmul.bf16.gmra.mxu0 %v987
      %v1081 = vpop.f32.mrf.mxu0
      %v1082 = vadd.f32 0.0, %v1081
      %v1083 = vpop.f32.mrf.mxu0
      %v1084 = vadd.f32 0.0, %v1083
      %1085 = vmatmul.bf16.gmra.mxu0 %v988
      %v1086 = vpop.f32.mrf.mxu0
      %v1087 = vadd.f32 0.0, %v1086
      %v1088 = vpop.f32.mrf.mxu0
      %v1089 = vadd.f32 0.0, %v1088
      %1090 = vmatmul.bf16.gmra.mxu0 %v989
      %v1091 = vpop.f32.mrf.mxu0
      %v1092 = vadd.f32 0.0, %v1091
      %v1093 = vpop.f32.mrf.mxu0
      %v1094 = vadd.f32 0.0, %v1093
      %1095 = vmatmul.bf16.gmra.mxu0 %v990
      %v1096 = vpop.f32.mrf.mxu0
      %v1097 = vadd.f32 0.0, %v1096
      %v1098 = vpop.f32.mrf.mxu0
      %v1099 = vadd.f32 0.0, %v1098
      %1100 = vmatmul.bf16.gmra.mxu0 %v991
      %v1101 = vpop.f32.mrf.mxu0
      %v1102 = vadd.f32 0.0, %v1101
      %v1103 = vpop.f32.mrf.mxu0
      %v1104 = vadd.f32 0.0, %v1103
      %1105 = vmatmul.bf16.gmra.mxu0 %v992
      %v1106 = vpop.f32.mrf.mxu0
      %v1107 = vadd.f32 0.0, %v1106
      %v1108 = vpop.f32.mrf.mxu0
      %v1109 = vadd.f32 0.0, %v1108
      %1110 = vmatmul.bf16.gmra.mxu0 %v993
      %v1111 = vpop.f32.mrf.mxu0
      %v1112 = vadd.f32 0.0, %v1111
      %v1113 = vpop.f32.mrf.mxu0
      %v1114 = vadd.f32 0.0, %v1113
      %1115 = vmatmul.bf16.gmra.mxu0 %v994
      %v1116 = vpop.f32.mrf.mxu0
      %v1117 = vadd.f32 0.0, %v1116
      %v1118 = vpop.f32.mrf.mxu0
      %v1119 = vadd.f32 0.0, %v1118
      %1120 = vmatmul.bf16.gmra.mxu0 %v995
      %v1121 = vpop.f32.mrf.mxu0
      %v1122 = vadd.f32 0.0, %v1121
      %v1123 = vpop.f32.mrf.mxu0
      %v1124 = vadd.f32 0.0, %v1123
      %1125 = vmatmul.bf16.gmra.mxu0 %v996
      %v1126 = vpop.f32.mrf.mxu0
      %v1127 = vadd.f32 0.0, %v1126
      %v1128 = vpop.f32.mrf.mxu0
      %v1129 = vadd.f32 0.0, %v1128
      %1130 = vmatmul.bf16.gmra.mxu0 %v997
      %v1131 = vpop.f32.mrf.mxu0
      %v1132 = vadd.f32 0.0, %v1131
      %v1133 = vpop.f32.mrf.mxu0
      %v1134 = vadd.f32 0.0, %v1133
      %1135 = vmatmul.bf16.gmra.mxu0 %v998
      %v1136 = vpop.f32.mrf.mxu0
      %v1137 = vadd.f32 0.0, %v1136
      %v1138 = vpop.f32.mrf.mxu0
      %v1139 = vadd.f32 0.0, %v1138
      %1140 = vmatmul.bf16.gmra.mxu0 %v999
      %v1141 = vpop.f32.mrf.mxu0
      %v1142 = vadd.f32 0.0, %v1141
      %v1143 = vpop.f32.mrf.mxu0
      %v1144 = vadd.f32 0.0, %v1143
      %1145 = vmatmul.bf16.gmra.mxu0 %v1000
      %v1146 = vpop.f32.mrf.mxu0
      %v1147 = vadd.f32 0.0, %v1146
      %v1148 = vpop.f32.mrf.mxu0
      %v1149 = vadd.f32 0.0, %v1148
      %1150 = vmatmul.bf16.gmra.mxu0 %v1001
      %v1151 = vpop.f32.mrf.mxu0
      %v1152 = vadd.f32 0.0, %v1151
      %v1153 = vpop.f32.mrf.mxu0
      %v1154 = vadd.f32 0.0, %v1153
      %1155 = vdwg.mxu0
      %v1172 = vunpack.c.l.b16 %v970
      %v1173 = vunpack.c.l.b16 %v971
      %v1174 = vunpack.c.l.b16 %v972
      %v1175 = vunpack.c.l.b16 %v973
      %v1176 = vunpack.c.l.b16 %v974
      %v1177 = vunpack.c.l.b16 %v975
      %v1178 = vunpack.c.l.b16 %v976
      %v1179 = vunpack.c.l.b16 %v977
      %v1180 = vunpack.c.l.b16 %v978
      %v1181 = vunpack.c.l.b16 %v979
      %v1182 = vunpack.c.l.b16 %v980
      %v1183 = vunpack.c.l.b16 %v981
      %v1184 = vunpack.c.l.b16 %v982
      %v1185 = vunpack.c.l.b16 %v983
      %v1186 = vunpack.c.l.b16 %v984
      %v1187 = vunpack.c.l.b16 %v985
      %v1188 = vpack.c.b16 %v1173, %v1172
      %v1189 = vpack.c.b16 %v1175, %v1174
      %v1190 = vpack.c.b16 %v1177, %v1176
      %v1191 = vpack.c.b16 %v1179, %v1178
      %v1192 = vpack.c.b16 %v1181, %v1180
      %v1193 = vpack.c.b16 %v1183, %v1182
      %v1194 = vpack.c.b16 %v1185, %v1184
      %v1195 = vpack.c.b16 %v1187, %v1186
      %1204 = vmatpush.bf16.msra.mxu0 %v1195
      %1205 = vmatpush.bf16.msra.mxu0 %v1194
      %1206 = vmatpush.bf16.msra.mxu0 %v1193
      %1207 = vmatpush.bf16.msra.mxu0 %v1192
      %1208 = vmatpush.bf16.msra.mxu0 %v1191
      %1209 = vmatpush.bf16.msra.mxu0 %v1190
      %1210 = vmatpush.bf16.msra.mxu0 %v1189
      %1211 = vmatpush.bf16.msra.mxu0 %v1188
      %1212 = vmatmul.bf16.gmra.mxu0 %v954
      %v1213 = vpop.f32.mrf.mxu0
      %v1214 = vadd.f32 %v1077, %v1213
      %v1215 = vpop.f32.mrf.mxu0
      %v1216 = vadd.f32 %v1079, %v1215
      %1217 = vmatmul.bf16.gmra.mxu0 %v955
      %v1218 = vpop.f32.mrf.mxu0
      %v1219 = vadd.f32 %v1082, %v1218
      %v1220 = vpop.f32.mrf.mxu0
      %v1221 = vadd.f32 %v1084, %v1220
      %1222 = vmatmul.bf16.gmra.mxu0 %v956
      %v1223 = vpop.f32.mrf.mxu0
      %v1224 = vadd.f32 %v1087, %v1223
      %v1225 = vpop.f32.mrf.mxu0
      %v1226 = vadd.f32 %v1089, %v1225
      %1227 = vmatmul.bf16.gmra.mxu0 %v957
      %v1228 = vpop.f32.mrf.mxu0
      %v1229 = vadd.f32 %v1092, %v1228
      %v1230 = vpop.f32.mrf.mxu0
      %v1231 = vadd.f32 %v1094, %v1230
      %1232 = vmatmul.bf16.gmra.mxu0 %v958
      %v1233 = vpop.f32.mrf.mxu0
      %v1234 = vadd.f32 %v1097, %v1233
      %v1235 = vpop.f32.mrf.mxu0
      %v1236 = vadd.f32 %v1099, %v1235
      %1237 = vmatmul.bf16.gmra.mxu0 %v959
      %v1238 = vpop.f32.mrf.mxu0
      %v1239 = vadd.f32 %v1102, %v1238
      %v1240 = vpop.f32.mrf.mxu0
      %v1241 = vadd.f32 %v1104, %v1240
      %1242 = vmatmul.bf16.gmra.mxu0 %v960
      %v1243 = vpop.f32.mrf.mxu0
      %v1244 = vadd.f32 %v1107, %v1243
      %v1245 = vpop.f32.mrf.mxu0
      %v1246 = vadd.f32 %v1109, %v1245
      %1247 = vmatmul.bf16.gmra.mxu0 %v961
      %v1248 = vpop.f32.mrf.mxu0
      %v1249 = vadd.f32 %v1112, %v1248
      %v1250 = vpop.f32.mrf.mxu0
      %v1251 = vadd.f32 %v1114, %v1250
      %1252 = vmatmul.bf16.gmra.mxu0 %v962
      %v1253 = vpop.f32.mrf.mxu0
      %v1254 = vadd.f32 %v1117, %v1253
      %v1255 = vpop.f32.mrf.mxu0
      %v1256 = vadd.f32 %v1119, %v1255
      %1257 = vmatmul.bf16.gmra.mxu0 %v963
      %v1258 = vpop.f32.mrf.mxu0
      %v1259 = vadd.f32 %v1122, %v1258
      %v1260 = vpop.f32.mrf.mxu0
      %v1261 = vadd.f32 %v1124, %v1260
      %1262 = vmatmul.bf16.gmra.mxu0 %v964
      %v1263 = vpop.f32.mrf.mxu0
      %v1264 = vadd.f32 %v1127, %v1263
      %v1265 = vpop.f32.mrf.mxu0
      %v1266 = vadd.f32 %v1129, %v1265
      %1267 = vmatmul.bf16.gmra.mxu0 %v965
      %v1268 = vpop.f32.mrf.mxu0
      %v1269 = vadd.f32 %v1132, %v1268
      %v1270 = vpop.f32.mrf.mxu0
      %v1271 = vadd.f32 %v1134, %v1270
      %1272 = vmatmul.bf16.gmra.mxu0 %v966
      %v1273 = vpop.f32.mrf.mxu0
      %v1274 = vadd.f32 %v1137, %v1273
      %v1275 = vpop.f32.mrf.mxu0
      %v1276 = vadd.f32 %v1139, %v1275
      %1277 = vmatmul.bf16.gmra.mxu0 %v967
      %v1278 = vpop.f32.mrf.mxu0
      %v1279 = vadd.f32 %v1142, %v1278
      %v1280 = vpop.f32.mrf.mxu0
      %v1281 = vadd.f32 %v1144, %v1280
      %1282 = vmatmul.bf16.gmra.mxu0 %v968
      %v1283 = vpop.f32.mrf.mxu0
      %v1284 = vadd.f32 %v1147, %v1283
      %v1285 = vpop.f32.mrf.mxu0
      %v1286 = vadd.f32 %v1149, %v1285
      %1287 = vmatmul.bf16.gmra.mxu0 %v969
      %v1288 = vpop.f32.mrf.mxu0
      %v1289 = vadd.f32 %v1152, %v1288
      %v1290 = vpop.f32.mrf.mxu0
      %v1291 = vadd.f32 %v1154, %v1290
      %1292 = vdwg.mxu0
      %vm1293 = vcmp.lt.s32.totalorder %v695, 15
      %vm1294 = vcmp.lt.s32.totalorder %v696, 15
      %vm1295 = vcmp.lt.s32.totalorder %v697, 15
      %vm1296 = vcmp.lt.s32.totalorder %v698, 15
      %vm1297 = vcmp.lt.s32.totalorder %v699, 15
      %vm1298 = vcmp.lt.s32.totalorder %v700, 15
      %vm1299 = vcmp.lt.s32.totalorder %v701, 15
      %vm1300 = vcmp.lt.s32.totalorder %v702, 15
      %vm1301 = vcmp.lt.s32.totalorder %v703, 15
      %vm1302 = vcmp.lt.s32.totalorder %v704, 15
      %vm1303 = vcmp.lt.s32.totalorder %v705, 15
      %vm1304 = vcmp.lt.s32.totalorder %v706, 15
      %vm1305 = vcmp.lt.s32.totalorder %v707, 15
      %vm1306 = vcmp.lt.s32.totalorder %v708, 15
      %vm1307 = vcmp.lt.s32.totalorder %v709, 15
      %vm1308 = vcmp.lt.s32.totalorder %v710, 15
      %vm1309 = vcmp.lt.s32.totalorder %v711, 15
      %vm1310 = vcmp.lt.s32.totalorder %v712, 15
      %vm1311 = vcmp.lt.s32.totalorder %v713, 15
      %vm1312 = vcmp.lt.s32.totalorder %v714, 15
      %vm1313 = vcmp.lt.s32.totalorder %v715, 15
      %vm1314 = vcmp.lt.s32.totalorder %v716, 15
      %vm1315 = vcmp.lt.s32.totalorder %v717, 15
      %vm1316 = vcmp.lt.s32.totalorder %v718, 15
      %vm1317 = vcmp.lt.s32.totalorder %v719, 15
      %vm1318 = vcmp.lt.s32.totalorder %v720, 15
      %vm1319 = vcmp.lt.s32.totalorder %v721, 15
      %vm1320 = vcmp.lt.s32.totalorder %v722, 15
      %vm1321 = vcmp.lt.s32.totalorder %v723, 15
      %vm1322 = vcmp.lt.s32.totalorder %v724, 15
      %vm1323 = vcmp.lt.s32.totalorder %v725, 15
      %vm1324 = vcmp.lt.s32.totalorder %v726, 15
      %v1325 = vrot.slane %v729, 1
      %v1326 = vrot.slane %v730, 1
      %v1327 = vrot.slane %v731, 1
      %v1328 = vrot.slane %v732, 1
      %v1329 = vrot.slane %v733, 1
      %v1330 = vrot.slane %v734, 1
      %v1331 = vrot.slane %v735, 1
      %v1332 = vrot.slane %v736, 1
      %v1333 = vrot.slane %v737, 1
      %v1334 = vrot.slane %v738, 1
      %v1335 = vrot.slane %v739, 1
      %v1336 = vrot.slane %v740, 1
      %v1337 = vrot.slane %v741, 1
      %v1338 = vrot.slane %v742, 1
      %v1339 = vrot.slane %v743, 1
      %v1340 = vrot.slane %v744, 1
      %v1341 = vrot.slane %v745, 1
      %v1342 = vrot.slane %v746, 1
      %v1343 = vrot.slane %v747, 1
      %v1344 = vrot.slane %v748, 1
      %v1345 = vrot.slane %v749, 1
      %v1346 = vrot.slane %v750, 1
      %v1347 = vrot.slane %v751, 1
      %v1348 = vrot.slane %v752, 1
      %v1349 = vrot.slane %v753, 1
      %v1350 = vrot.slane %v754, 1
      %v1351 = vrot.slane %v755, 1
      %v1352 = vrot.slane %v756, 1
      %v1353 = vrot.slane %v757, 1
      %v1354 = vrot.slane %v758, 1
      %v1355 = vrot.slane %v759, 1
      %v1356 = vrot.slane %v760, 1
      %vm1357 = vcmp.lt.s32.totalorder %v311, 7
      %v1358 = vsel %vm1357, %v1355, %v1356
      %v1359 = vsel %vm1357, %v1354, %v1355
      %v1360 = vsel %vm1357, %v1353, %v1354
      %v1361 = vsel %vm1357, %v1352, %v1353
      %v1362 = vsel %vm1357, %v1351, %v1352
      %v1363 = vsel %vm1357, %v1350, %v1351
      %v1364 = vsel %vm1357, %v1349, %v1350
      %v1365 = vsel %vm1357, %v1348, %v1349
      %v1366 = vsel %vm1357, %v1347, %v1348
      %v1367 = vsel %vm1357, %v1346, %v1347
      %v1368 = vsel %vm1357, %v1345, %v1346
      %v1369 = vsel %vm1357, %v1344, %v1345
      %v1370 = vsel %vm1357, %v1343, %v1344
      %v1371 = vsel %vm1357, %v1342, %v1343
      %v1372 = vsel %vm1357, %v1341, %v1342
      %v1373 = vsel %vm1357, %v1340, %v1341
      %v1374 = vsel %vm1357, %v1339, %v1340
      %v1375 = vsel %vm1357, %v1338, %v1339
      %v1376 = vsel %vm1357, %v1337, %v1338
      %v1377 = vsel %vm1357, %v1336, %v1337
      %v1378 = vsel %vm1357, %v1335, %v1336
      %v1379 = vsel %vm1357, %v1334, %v1335
      %v1380 = vsel %vm1357, %v1333, %v1334
      %v1381 = vsel %vm1357, %v1332, %v1333
      %v1382 = vsel %vm1357, %v1331, %v1332
      %v1383 = vsel %vm1357, %v1330, %v1331
      %v1384 = vsel %vm1357, %v1329, %v1330
      %v1385 = vsel %vm1357, %v1328, %v1329
      %v1386 = vsel %vm1357, %v1327, %v1328
      %v1387 = vsel %vm1357, %v1326, %v1327
      %v1388 = vsel %vm1357, %v1325, %v1326
      %v1389 = vsel %vm1357, %v1356, %v1325
      %v1390 = vsel %vm1293, 1, 0
      %v1391 = vsel %vm1294, 1, 0
      %v1392 = vsel %vm1295, 1, 0
      %v1393 = vsel %vm1296, 1, 0
      %v1394 = vsel %vm1297, 1, 0
      %v1395 = vsel %vm1298, 1, 0
      %v1396 = vsel %vm1299, 1, 0
      %v1397 = vsel %vm1300, 1, 0
      %v1398 = vsel %vm1301, 1, 0
      %v1399 = vsel %vm1302, 1, 0
      %v1400 = vsel %vm1303, 1, 0
      %v1401 = vsel %vm1304, 1, 0
      %v1402 = vsel %vm1305, 1, 0
      %v1403 = vsel %vm1306, 1, 0
      %v1404 = vsel %vm1307, 1, 0
      %v1405 = vsel %vm1308, 1, 0
      %v1406 = vsel %vm1309, 1, 0
      %v1407 = vsel %vm1310, 1, 0
      %v1408 = vsel %vm1311, 1, 0
      %v1409 = vsel %vm1312, 1, 0
      %v1410 = vsel %vm1313, 1, 0
      %v1411 = vsel %vm1314, 1, 0
      %v1412 = vsel %vm1315, 1, 0
      %v1413 = vsel %vm1316, 1, 0
      %v1414 = vsel %vm1317, 1, 0
      %v1415 = vsel %vm1318, 1, 0
      %v1416 = vsel %vm1319, 1, 0
      %v1417 = vsel %vm1320, 1, 0
      %v1418 = vsel %vm1321, 1, 0
      %v1419 = vsel %vm1322, 1, 0
      %v1420 = vsel %vm1323, 1, 0
      %v1421 = vsel %vm1324, 1, 0
      %vm1422 = vcmp.eq.s32.totalorder %v1390, 1
      %vm1423 = vcmp.eq.s32.totalorder %v1391, 1
      %vm1424 = vcmp.eq.s32.totalorder %v1392, 1
      %vm1425 = vcmp.eq.s32.totalorder %v1393, 1
      %vm1426 = vcmp.eq.s32.totalorder %v1394, 1
      %vm1427 = vcmp.eq.s32.totalorder %v1395, 1
      %vm1428 = vcmp.eq.s32.totalorder %v1396, 1
      %vm1429 = vcmp.eq.s32.totalorder %v1397, 1
      %vm1430 = vcmp.eq.s32.totalorder %v1398, 1
      %vm1431 = vcmp.eq.s32.totalorder %v1399, 1
      %vm1432 = vcmp.eq.s32.totalorder %v1400, 1
      %vm1433 = vcmp.eq.s32.totalorder %v1401, 1
      %vm1434 = vcmp.eq.s32.totalorder %v1402, 1
      %vm1435 = vcmp.eq.s32.totalorder %v1403, 1
      %vm1436 = vcmp.eq.s32.totalorder %v1404, 1
      %vm1437 = vcmp.eq.s32.totalorder %v1405, 1
      %vm1438 = vcmp.eq.s32.totalorder %v1406, 1
      %vm1439 = vcmp.eq.s32.totalorder %v1407, 1
      %vm1440 = vcmp.eq.s32.totalorder %v1408, 1
      %vm1441 = vcmp.eq.s32.totalorder %v1409, 1
      %vm1442 = vcmp.eq.s32.totalorder %v1410, 1
      %vm1443 = vcmp.eq.s32.totalorder %v1411, 1
      %vm1444 = vcmp.eq.s32.totalorder %v1412, 1
      %vm1445 = vcmp.eq.s32.totalorder %v1413, 1
      %vm1446 = vcmp.eq.s32.totalorder %v1414, 1
      %vm1447 = vcmp.eq.s32.totalorder %v1415, 1
      %vm1448 = vcmp.eq.s32.totalorder %v1416, 1
      %vm1449 = vcmp.eq.s32.totalorder %v1417, 1
      %vm1450 = vcmp.eq.s32.totalorder %v1418, 1
      %vm1451 = vcmp.eq.s32.totalorder %v1419, 1
      %vm1452 = vcmp.eq.s32.totalorder %v1420, 1
      %vm1453 = vcmp.eq.s32.totalorder %v1421, 1
      %v1454 = vsel %vm1422, %v1388, 0.0
      %v1455 = vsel %vm1423, %v1387, 0.0
      %v1456 = vsel %vm1424, %v1386, 0.0
      %v1457 = vsel %vm1425, %v1385, 0.0
      %v1458 = vsel %vm1426, %v1384, 0.0
      %v1459 = vsel %vm1427, %v1383, 0.0
      %v1460 = vsel %vm1428, %v1382, 0.0
      %v1461 = vsel %vm1429, %v1381, 0.0
      %v1462 = vsel %vm1430, %v1380, 0.0
      %v1463 = vsel %vm1431, %v1379, 0.0
      %v1464 = vsel %vm1432, %v1378, 0.0
      %v1465 = vsel %vm1433, %v1377, 0.0
      %v1466 = vsel %vm1434, %v1376, 0.0
      %v1467 = vsel %vm1435, %v1375, 0.0
      %v1468 = vsel %vm1436, %v1374, 0.0
      %v1469 = vsel %vm1437, %v1373, 0.0
      %v1470 = vsel %vm1438, %v1372, 0.0
      %v1471 = vsel %vm1439, %v1371, 0.0
      %v1472 = vsel %vm1440, %v1370, 0.0
      %v1473 = vsel %vm1441, %v1369, 0.0
      %v1474 = vsel %vm1442, %v1368, 0.0
      %v1475 = vsel %vm1443, %v1367, 0.0
      %v1476 = vsel %vm1444, %v1366, 0.0
      %v1477 = vsel %vm1445, %v1365, 0.0
      %v1478 = vsel %vm1446, %v1364, 0.0
      %v1479 = vsel %vm1447, %v1363, 0.0
      %v1480 = vsel %vm1448, %v1362, 0.0
      %v1481 = vsel %vm1449, %v1361, 0.0
      %v1482 = vsel %vm1450, %v1360, 0.0
      %v1483 = vsel %vm1451, %v1359, 0.0
      %v1484 = vsel %vm1452, %v1358, 0.0
      %v1485 = vsel %vm1453, %v1389, 0.0
      %v1486 = vpack.c.bf16 %v1455, %v1454
      %v1487 = vpack.c.bf16 %v1457, %v1456
      %v1488 = vpack.c.bf16 %v1459, %v1458
      %v1489 = vpack.c.bf16 %v1461, %v1460
      %v1490 = vpack.c.bf16 %v1463, %v1462
      %v1491 = vpack.c.bf16 %v1465, %v1464
      %v1492 = vpack.c.bf16 %v1467, %v1466
      %v1493 = vpack.c.bf16 %v1469, %v1468
      %v1494 = vpack.c.bf16 %v1471, %v1470
      %v1495 = vpack.c.bf16 %v1473, %v1472
      %v1496 = vpack.c.bf16 %v1475, %v1474
      %v1497 = vpack.c.bf16 %v1477, %v1476
      %v1498 = vpack.c.bf16 %v1479, %v1478
      %v1499 = vpack.c.bf16 %v1481, %v1480
      %v1500 = vpack.c.bf16 %v1483, %v1482
      %v1501 = vpack.c.bf16 %v1485, %v1484
      %s1502 = scalar_lea.vmem %s261, 128
      %v1503 = vld [vmem:[%s1502] sm:$0xf]
      %v1504 = vld [vmem:[%s1502 + $0x4] sm:$0xf]
      %v1505 = vld [vmem:[%s1502 + $0x8] sm:$0xf]
      %v1506 = vld [vmem:[%s1502 + $0xc] sm:$0xf]
      %v1507 = vld [vmem:[%s1502 + $0x10] sm:$0xf]
      %v1508 = vld [vmem:[%s1502 + $0x14] sm:$0xf]
      %v1509 = vld [vmem:[%s1502 + $0x18] sm:$0xf]
      %v1510 = vld [vmem:[%s1502 + $0x1c] sm:$0xf]
      %v1511 = vld [vmem:[%s1502 + $0x20] sm:$0xf]
      %v1512 = vld [vmem:[%s1502 + $0x24] sm:$0xf]
      %v1513 = vld [vmem:[%s1502 + $0x28] sm:$0xf]
      %v1514 = vld [vmem:[%s1502 + $0x2c] sm:$0xf]
      %v1515 = vld [vmem:[%s1502 + $0x30] sm:$0xf]
      %v1516 = vld [vmem:[%s1502 + $0x34] sm:$0xf]
      %v1517 = vld [vmem:[%s1502 + $0x38] sm:$0xf]
      %v1518 = vld [vmem:[%s1502 + $0x3c] sm:$0xf]
      %v1535 = vunpack.c.l.b16 %v1503
      %v1536 = vunpack.c.l.b16 %v1504
      %v1537 = vunpack.c.l.b16 %v1505
      %v1538 = vunpack.c.l.b16 %v1506
      %v1539 = vunpack.c.l.b16 %v1507
      %v1540 = vunpack.c.l.b16 %v1508
      %v1541 = vunpack.c.l.b16 %v1509
      %v1542 = vunpack.c.l.b16 %v1510
      %v1543 = vunpack.c.l.b16 %v1511
      %v1544 = vunpack.c.l.b16 %v1512
      %v1545 = vunpack.c.l.b16 %v1513
      %v1546 = vunpack.c.l.b16 %v1514
      %v1547 = vunpack.c.l.b16 %v1515
      %v1548 = vunpack.c.l.b16 %v1516
      %v1549 = vunpack.c.l.b16 %v1517
      %v1550 = vunpack.c.l.b16 %v1518
      %v1551 = vpack.c.b16 %v1536, %v1535
      %v1552 = vpack.c.b16 %v1538, %v1537
      %v1553 = vpack.c.b16 %v1540, %v1539
      %v1554 = vpack.c.b16 %v1542, %v1541
      %v1555 = vpack.c.b16 %v1544, %v1543
      %v1556 = vpack.c.b16 %v1546, %v1545
      %v1557 = vpack.c.b16 %v1548, %v1547
      %v1558 = vpack.c.b16 %v1550, %v1549
      %1567 = vmatpush.bf16.msra.mxu0 %v1558
      %1568 = vmatpush.bf16.msra.mxu0 %v1557
      %1569 = vmatpush.bf16.msra.mxu0 %v1556
      %1570 = vmatpush.bf16.msra.mxu0 %v1555
      %1571 = vmatpush.bf16.msra.mxu0 %v1554
      %1572 = vmatpush.bf16.msra.mxu0 %v1553
      %1573 = vmatpush.bf16.msra.mxu0 %v1552
      %1574 = vmatpush.bf16.msra.mxu0 %v1551
      %1575 = vmatmul.bf16.gmra.mxu0 %v1486
      %v1576 = vpop.f32.mrf.mxu0
      %v1577 = vadd.f32 0.0, %v1576
      %v1578 = vpop.f32.mrf.mxu0
      %v1579 = vadd.f32 0.0, %v1578
      %1580 = vmatmul.bf16.gmra.mxu0 %v1487
      %v1581 = vpop.f32.mrf.mxu0
      %v1582 = vadd.f32 0.0, %v1581
      %v1583 = vpop.f32.mrf.mxu0
      %v1584 = vadd.f32 0.0, %v1583
      %1585 = vmatmul.bf16.gmra.mxu0 %v1488
      %v1586 = vpop.f32.mrf.mxu0
      %v1587 = vadd.f32 0.0, %v1586
      %v1588 = vpop.f32.mrf.mxu0
      %v1589 = vadd.f32 0.0, %v1588
      %1590 = vmatmul.bf16.gmra.mxu0 %v1489
      %v1591 = vpop.f32.mrf.mxu0
      %v1592 = vadd.f32 0.0, %v1591
      %v1593 = vpop.f32.mrf.mxu0
      %v1594 = vadd.f32 0.0, %v1593
      %1595 = vmatmul.bf16.gmra.mxu0 %v1490
      %v1596 = vpop.f32.mrf.mxu0
      %v1597 = vadd.f32 0.0, %v1596
      %v1598 = vpop.f32.mrf.mxu0
      %v1599 = vadd.f32 0.0, %v1598
      %1600 = vmatmul.bf16.gmra.mxu0 %v1491
      %v1601 = vpop.f32.mrf.mxu0
      %v1602 = vadd.f32 0.0, %v1601
      %v1603 = vpop.f32.mrf.mxu0
      %v1604 = vadd.f32 0.0, %v1603
      %1605 = vmatmul.bf16.gmra.mxu0 %v1492
      %v1606 = vpop.f32.mrf.mxu0
      %v1607 = vadd.f32 0.0, %v1606
      %v1608 = vpop.f32.mrf.mxu0
      %v1609 = vadd.f32 0.0, %v1608
      %1610 = vmatmul.bf16.gmra.mxu0 %v1493
      %v1611 = vpop.f32.mrf.mxu0
      %v1612 = vadd.f32 0.0, %v1611
      %v1613 = vpop.f32.mrf.mxu0
      %v1614 = vadd.f32 0.0, %v1613
      %1615 = vmatmul.bf16.gmra.mxu0 %v1494
      %v1616 = vpop.f32.mrf.mxu0
      %v1617 = vadd.f32 0.0, %v1616
      %v1618 = vpop.f32.mrf.mxu0
      %v1619 = vadd.f32 0.0, %v1618
      %1620 = vmatmul.bf16.gmra.mxu0 %v1495
      %v1621 = vpop.f32.mrf.mxu0
      %v1622 = vadd.f32 0.0, %v1621
      %v1623 = vpop.f32.mrf.mxu0
      %v1624 = vadd.f32 0.0, %v1623
      %1625 = vmatmul.bf16.gmra.mxu0 %v1496
      %v1626 = vpop.f32.mrf.mxu0
      %v1627 = vadd.f32 0.0, %v1626
      %v1628 = vpop.f32.mrf.mxu0
      %v1629 = vadd.f32 0.0, %v1628
      %1630 = vmatmul.bf16.gmra.mxu0 %v1497
      %v1631 = vpop.f32.mrf.mxu0
      %v1632 = vadd.f32 0.0, %v1631
      %v1633 = vpop.f32.mrf.mxu0
      %v1634 = vadd.f32 0.0, %v1633
      %1635 = vmatmul.bf16.gmra.mxu0 %v1498
      %v1636 = vpop.f32.mrf.mxu0
      %v1637 = vadd.f32 0.0, %v1636
      %v1638 = vpop.f32.mrf.mxu0
      %v1639 = vadd.f32 0.0, %v1638
      %1640 = vmatmul.bf16.gmra.mxu0 %v1499
      %v1641 = vpop.f32.mrf.mxu0
      %v1642 = vadd.f32 0.0, %v1641
      %v1643 = vpop.f32.mrf.mxu0
      %v1644 = vadd.f32 0.0, %v1643
      %1645 = vmatmul.bf16.gmra.mxu0 %v1500
      %v1646 = vpop.f32.mrf.mxu0
      %v1647 = vadd.f32 0.0, %v1646
      %v1648 = vpop.f32.mrf.mxu0
      %v1649 = vadd.f32 0.0, %v1648
      %1650 = vmatmul.bf16.gmra.mxu0 %v1501
      %v1651 = vpop.f32.mrf.mxu0
      %v1652 = vadd.f32 0.0, %v1651
      %v1653 = vpop.f32.mrf.mxu0
      %v1654 = vadd.f32 0.0, %v1653
      %1655 = vdwg.mxu0
      %v1656 = vadd.f32 %v1214, %v1577
      %v1657 = vadd.f32 %v1216, %v1579
      %v1658 = vadd.f32 %v1219, %v1582
      %v1659 = vadd.f32 %v1221, %v1584
      %v1660 = vadd.f32 %v1224, %v1587
      %v1661 = vadd.f32 %v1226, %v1589
      %v1662 = vadd.f32 %v1229, %v1592
      %v1663 = vadd.f32 %v1231, %v1594
      %v1664 = vadd.f32 %v1234, %v1597
      %v1665 = vadd.f32 %v1236, %v1599
      %v1666 = vadd.f32 %v1239, %v1602
      %v1667 = vadd.f32 %v1241, %v1604
      %v1668 = vadd.f32 %v1244, %v1607
      %v1669 = vadd.f32 %v1246, %v1609
      %v1670 = vadd.f32 %v1249, %v1612
      %v1671 = vadd.f32 %v1251, %v1614
      %v1672 = vadd.f32 %v1254, %v1617
      %v1673 = vadd.f32 %v1256, %v1619
      %v1674 = vadd.f32 %v1259, %v1622
      %v1675 = vadd.f32 %v1261, %v1624
      %v1676 = vadd.f32 %v1264, %v1627
      %v1677 = vadd.f32 %v1266, %v1629
      %v1678 = vadd.f32 %v1269, %v1632
      %v1679 = vadd.f32 %v1271, %v1634
      %v1680 = vadd.f32 %v1274, %v1637
      %v1681 = vadd.f32 %v1276, %v1639
      %v1682 = vadd.f32 %v1279, %v1642
      %v1683 = vadd.f32 %v1281, %v1644
      %v1684 = vadd.f32 %v1284, %v1647
      %v1685 = vadd.f32 %v1286, %v1649
      %v1686 = vadd.f32 %v1289, %v1652
      %v1687 = vadd.f32 %v1291, %v1654
      %s1688 = sadd.s32 %s309, 1
      %s1689 = smul.u32 %s1688, 16
      %s1690 = scalar_lea.vmem [#allocation2], %s1689
      %v1691 = vld [vmem:[%s1690] sm:$0xff]
      %v1692 = vld [vmem:[%s1690 + $0x8] sm:$0xff]
      %v1693 = vld [vmem:[%s1690 + $0x10] sm:$0xff]
      %v1694 = vld [vmem:[%s1690 + $0x18] sm:$0xff]
      %v1695 = vld [vmem:[%s1690 + $0x20] sm:$0xff]
      %v1696 = vld [vmem:[%s1690 + $0x28] sm:$0xff]
      %v1697 = vld [vmem:[%s1690 + $0x30] sm:$0xff]
      %v1698 = vld [vmem:[%s1690 + $0x38] sm:$0xff]
      %v1699 = vld [vmem:[%s1690 + $0x40] sm:$0xff]
      %v1700 = vld [vmem:[%s1690 + $0x48] sm:$0xff]
      %v1701 = vld [vmem:[%s1690 + $0x50] sm:$0xff]
      %v1702 = vld [vmem:[%s1690 + $0x58] sm:$0xff]
      %v1703 = vld [vmem:[%s1690 + $0x60] sm:$0xff]
      %v1704 = vld [vmem:[%s1690 + $0x68] sm:$0xff]
      %v1705 = vld [vmem:[%s1690 + $0x70] sm:$0xff]
      %v1706 = vld [vmem:[%s1690 + $0x78] sm:$0xff]
      %v1707 = vld [vmem:[%s1690 + $0x80] sm:$0xff]
      %v1708 = vld [vmem:[%s1690 + $0x88] sm:$0xff]
      %v1709 = vld [vmem:[%s1690 + $0x90] sm:$0xff]
      %v1710 = vld [vmem:[%s1690 + $0x98] sm:$0xff]
      %v1711 = vld [vmem:[%s1690 + $0xa0] sm:$0xff]
      %v1712 = vld [vmem:[%s1690 + $0xa8] sm:$0xff]
      %v1713 = vld [vmem:[%s1690 + $0xb0] sm:$0xff]
      %v1714 = vld [vmem:[%s1690 + $0xb8] sm:$0xff]
      %v1715 = vld [vmem:[%s1690 + $0xc0] sm:$0xff]
      %v1716 = vld [vmem:[%s1690 + $0xc8] sm:$0xff]
      %v1717 = vld [vmem:[%s1690 + $0xd0] sm:$0xff]
      %v1718 = vld [vmem:[%s1690 + $0xd8] sm:$0xff]
      %v1719 = vld [vmem:[%s1690 + $0xe0] sm:$0xff]
      %v1720 = vld [vmem:[%s1690 + $0xe8] sm:$0xff]
      %v1721 = vld [vmem:[%s1690 + $0xf0] sm:$0xff]
      %v1722 = vld [vmem:[%s1690 + $0xf8] sm:$0xff]
      %v1723 = vrot.slane %v1691, 7
      %v1724 = vrot.slane %v1692, 7
      %v1725 = vrot.slane %v1693, 7
      %v1726 = vrot.slane %v1694, 7
      %v1727 = vrot.slane %v1695, 7
      %v1728 = vrot.slane %v1696, 7
      %v1729 = vrot.slane %v1697, 7
      %v1730 = vrot.slane %v1698, 7
      %v1731 = vrot.slane %v1699, 7
      %v1732 = vrot.slane %v1700, 7
      %v1733 = vrot.slane %v1701, 7
      %v1734 = vrot.slane %v1702, 7
      %v1735 = vrot.slane %v1703, 7
      %v1736 = vrot.slane %v1704, 7
      %v1737 = vrot.slane %v1705, 7
      %v1738 = vrot.slane %v1706, 7
      %v1739 = vrot.slane %v1707, 7
      %v1740 = vrot.slane %v1708, 7
      %v1741 = vrot.slane %v1709, 7
      %v1742 = vrot.slane %v1710, 7
      %v1743 = vrot.slane %v1711, 7
      %v1744 = vrot.slane %v1712, 7
      %v1745 = vrot.slane %v1713, 7
      %v1746 = vrot.slane %v1714, 7
      %v1747 = vrot.slane %v1715, 7
      %v1748 = vrot.slane %v1716, 7
      %v1749 = vrot.slane %v1717, 7
      %v1750 = vrot.slane %v1718, 7
      %v1751 = vrot.slane %v1719, 7
      %v1752 = vrot.slane %v1720, 7
      %v1753 = vrot.slane %v1721, 7
      %v1754 = vrot.slane %v1722, 7
      %v1755 = vsel %vm825, %v1753, %v1754
      %v1756 = vsel %vm825, %v1752, %v1753
      %v1757 = vsel %vm825, %v1751, %v1752
      %v1758 = vsel %vm825, %v1750, %v1751
      %v1759 = vsel %vm825, %v1749, %v1750
      %v1760 = vsel %vm825, %v1748, %v1749
      %v1761 = vsel %vm825, %v1747, %v1748
      %v1762 = vsel %vm825, %v1746, %v1747
      %v1763 = vsel %vm825, %v1745, %v1746
      %v1764 = vsel %vm825, %v1744, %v1745
      %v1765 = vsel %vm825, %v1743, %v1744
      %v1766 = vsel %vm825, %v1742, %v1743
      %v1767 = vsel %vm825, %v1741, %v1742
      %v1768 = vsel %vm825, %v1740, %v1741
      %v1769 = vsel %vm825, %v1739, %v1740
      %v1770 = vsel %vm825, %v1738, %v1739
      %v1771 = vsel %vm825, %v1737, %v1738
      %v1772 = vsel %vm825, %v1736, %v1737
      %v1773 = vsel %vm825, %v1735, %v1736
      %v1774 = vsel %vm825, %v1734, %v1735
      %v1775 = vsel %vm825, %v1733, %v1734
      %v1776 = vsel %vm825, %v1732, %v1733
      %v1777 = vsel %vm825, %v1731, %v1732
      %v1778 = vsel %vm825, %v1730, %v1731
      %v1779 = vsel %vm825, %v1729, %v1730
      %v1780 = vsel %vm825, %v1728, %v1729
      %v1781 = vsel %vm825, %v1727, %v1728
      %v1782 = vsel %vm825, %v1726, %v1727
      %v1783 = vsel %vm825, %v1725, %v1726
      %v1784 = vsel %vm825, %v1724, %v1725
      %v1785 = vsel %vm825, %v1723, %v1724
      %v1786 = vsel %vm825, %v1754, %v1723
      %v1787 = vsel %vm890, %v1786, 0.0
      %v1788 = vsel %vm891, %v1785, 0.0
      %v1789 = vsel %vm892, %v1784, 0.0
      %v1790 = vsel %vm893, %v1783, 0.0
      %v1791 = vsel %vm894, %v1782, 0.0
      %v1792 = vsel %vm895, %v1781, 0.0
      %v1793 = vsel %vm896, %v1780, 0.0
      %v1794 = vsel %vm897, %v1779, 0.0
      %v1795 = vsel %vm898, %v1778, 0.0
      %v1796 = vsel %vm899, %v1777, 0.0
      %v1797 = vsel %vm900, %v1776, 0.0
      %v1798 = vsel %vm901, %v1775, 0.0
      %v1799 = vsel %vm902, %v1774, 0.0
      %v1800 = vsel %vm903, %v1773, 0.0
      %v1801 = vsel %vm904, %v1772, 0.0
      %v1802 = vsel %vm905, %v1771, 0.0
      %v1803 = vsel %vm906, %v1770, 0.0
      %v1804 = vsel %vm907, %v1769, 0.0
      %v1805 = vsel %vm908, %v1768, 0.0
      %v1806 = vsel %vm909, %v1767, 0.0
      %v1807 = vsel %vm910, %v1766, 0.0
      %v1808 = vsel %vm911, %v1765, 0.0
      %v1809 = vsel %vm912, %v1764, 0.0
      %v1810 = vsel %vm913, %v1763, 0.0
      %v1811 = vsel %vm914, %v1762, 0.0
      %v1812 = vsel %vm915, %v1761, 0.0
      %v1813 = vsel %vm916, %v1760, 0.0
      %v1814 = vsel %vm917, %v1759, 0.0
      %v1815 = vsel %vm918, %v1758, 0.0
      %v1816 = vsel %vm919, %v1757, 0.0
      %v1817 = vsel %vm920, %v1756, 0.0
      %v1818 = vsel %vm921, %v1755, 0.0
      %v1819 = vpack.c.bf16 %v1788, %v1787
      %v1820 = vpack.c.bf16 %v1790, %v1789
      %v1821 = vpack.c.bf16 %v1792, %v1791
      %v1822 = vpack.c.bf16 %v1794, %v1793
      %v1823 = vpack.c.bf16 %v1796, %v1795
      %v1824 = vpack.c.bf16 %v1798, %v1797
      %v1825 = vpack.c.bf16 %v1800, %v1799
      %v1826 = vpack.c.bf16 %v1802, %v1801
      %v1827 = vpack.c.bf16 %v1804, %v1803
      %v1828 = vpack.c.bf16 %v1806, %v1805
      %v1829 = vpack.c.bf16 %v1808, %v1807
      %v1830 = vpack.c.bf16 %v1810, %v1809
      %v1831 = vpack.c.bf16 %v1812, %v1811
      %v1832 = vpack.c.bf16 %v1814, %v1813
      %v1833 = vpack.c.bf16 %v1816, %v1815
      %v1834 = vpack.c.bf16 %v1818, %v1817
      %s1835 = scalar_lea.vmem %s261, 192
      %v1836 = vld [vmem:[%s1835] sm:$0xf]
      %v1837 = vld [vmem:[%s1835 + $0x4] sm:$0xf]
      %v1838 = vld [vmem:[%s1835 + $0x8] sm:$0xf]
      %v1839 = vld [vmem:[%s1835 + $0xc] sm:$0xf]
      %v1840 = vld [vmem:[%s1835 + $0x10] sm:$0xf]
      %v1841 = vld [vmem:[%s1835 + $0x14] sm:$0xf]
      %v1842 = vld [vmem:[%s1835 + $0x18] sm:$0xf]
      %v1843 = vld [vmem:[%s1835 + $0x1c] sm:$0xf]
      %v1844 = vld [vmem:[%s1835 + $0x20] sm:$0xf]
      %v1845 = vld [vmem:[%s1835 + $0x24] sm:$0xf]
      %v1846 = vld [vmem:[%s1835 + $0x28] sm:$0xf]
      %v1847 = vld [vmem:[%s1835 + $0x2c] sm:$0xf]
      %v1848 = vld [vmem:[%s1835 + $0x30] sm:$0xf]
      %v1849 = vld [vmem:[%s1835 + $0x34] sm:$0xf]
      %v1850 = vld [vmem:[%s1835 + $0x38] sm:$0xf]
      %v1851 = vld [vmem:[%s1835 + $0x3c] sm:$0xf]
      %v1868 = vunpack.c.l.b16 %v1836
      %v1869 = vunpack.c.l.b16 %v1837
      %v1870 = vunpack.c.l.b16 %v1838
      %v1871 = vunpack.c.l.b16 %v1839
      %v1872 = vunpack.c.l.b16 %v1840
      %v1873 = vunpack.c.l.b16 %v1841
      %v1874 = vunpack.c.l.b16 %v1842
      %v1875 = vunpack.c.l.b16 %v1843
      %v1876 = vunpack.c.l.b16 %v1844
      %v1877 = vunpack.c.l.b16 %v1845
      %v1878 = vunpack.c.l.b16 %v1846
      %v1879 = vunpack.c.l.b16 %v1847
      %v1880 = vunpack.c.l.b16 %v1848
      %v1881 = vunpack.c.l.b16 %v1849
      %v1882 = vunpack.c.l.b16 %v1850
      %v1883 = vunpack.c.l.b16 %v1851
      %v1884 = vpack.c.b16 %v1869, %v1868
      %v1885 = vpack.c.b16 %v1871, %v1870
      %v1886 = vpack.c.b16 %v1873, %v1872
      %v1887 = vpack.c.b16 %v1875, %v1874
      %v1888 = vpack.c.b16 %v1877, %v1876
      %v1889 = vpack.c.b16 %v1879, %v1878
      %v1890 = vpack.c.b16 %v1881, %v1880
      %v1891 = vpack.c.b16 %v1883, %v1882
      %1900 = vmatpush.bf16.msra.mxu0 %v1891
      %1901 = vmatpush.bf16.msra.mxu0 %v1890
      %1902 = vmatpush.bf16.msra.mxu0 %v1889
      %1903 = vmatpush.bf16.msra.mxu0 %v1888
      %1904 = vmatpush.bf16.msra.mxu0 %v1887
      %1905 = vmatpush.bf16.msra.mxu0 %v1886
      %1906 = vmatpush.bf16.msra.mxu0 %v1885
      %1907 = vmatpush.bf16.msra.mxu0 %v1884
      %1908 = vmatmul.bf16.gmra.mxu0 %v1819
      %v1909 = vpop.f32.mrf.mxu0
      %v1910 = vadd.f32 0.0, %v1909
      %v1911 = vpop.f32.mrf.mxu0
      %v1912 = vadd.f32 0.0, %v1911
      %1913 = vmatmul.bf16.gmra.mxu0 %v1820
      %v1914 = vpop.f32.mrf.mxu0
      %v1915 = vadd.f32 0.0, %v1914
      %v1916 = vpop.f32.mrf.mxu0
      %v1917 = vadd.f32 0.0, %v1916
      %1918 = vmatmul.bf16.gmra.mxu0 %v1821
      %v1919 = vpop.f32.mrf.mxu0
      %v1920 = vadd.f32 0.0, %v1919
      %v1921 = vpop.f32.mrf.mxu0
      %v1922 = vadd.f32 0.0, %v1921
      %1923 = vmatmul.bf16.gmra.mxu0 %v1822
      %v1924 = vpop.f32.mrf.mxu0
      %v1925 = vadd.f32 0.0, %v1924
      %v1926 = vpop.f32.mrf.mxu0
      %v1927 = vadd.f32 0.0, %v1926
      %1928 = vmatmul.bf16.gmra.mxu0 %v1823
      %v1929 = vpop.f32.mrf.mxu0
      %v1930 = vadd.f32 0.0, %v1929
      %v1931 = vpop.f32.mrf.mxu0
      %v1932 = vadd.f32 0.0, %v1931
      %1933 = vmatmul.bf16.gmra.mxu0 %v1824
      %v1934 = vpop.f32.mrf.mxu0
      %v1935 = vadd.f32 0.0, %v1934
      %v1936 = vpop.f32.mrf.mxu0
      %v1937 = vadd.f32 0.0, %v1936
      %1938 = vmatmul.bf16.gmra.mxu0 %v1825
      %v1939 = vpop.f32.mrf.mxu0
      %v1940 = vadd.f32 0.0, %v1939
      %v1941 = vpop.f32.mrf.mxu0
      %v1942 = vadd.f32 0.0, %v1941
      %1943 = vmatmul.bf16.gmra.mxu0 %v1826
      %v1944 = vpop.f32.mrf.mxu0
      %v1945 = vadd.f32 0.0, %v1944
      %v1946 = vpop.f32.mrf.mxu0
      %v1947 = vadd.f32 0.0, %v1946
      %1948 = vmatmul.bf16.gmra.mxu0 %v1827
      %v1949 = vpop.f32.mrf.mxu0
      %v1950 = vadd.f32 0.0, %v1949
      %v1951 = vpop.f32.mrf.mxu0
      %v1952 = vadd.f32 0.0, %v1951
      %1953 = vmatmul.bf16.gmra.mxu0 %v1828
      %v1954 = vpop.f32.mrf.mxu0
      %v1955 = vadd.f32 0.0, %v1954
      %v1956 = vpop.f32.mrf.mxu0
      %v1957 = vadd.f32 0.0, %v1956
      %1958 = vmatmul.bf16.gmra.mxu0 %v1829
      %v1959 = vpop.f32.mrf.mxu0
      %v1960 = vadd.f32 0.0, %v1959
      %v1961 = vpop.f32.mrf.mxu0
      %v1962 = vadd.f32 0.0, %v1961
      %1963 = vmatmul.bf16.gmra.mxu0 %v1830
      %v1964 = vpop.f32.mrf.mxu0
      %v1965 = vadd.f32 0.0, %v1964
      %v1966 = vpop.f32.mrf.mxu0
      %v1967 = vadd.f32 0.0, %v1966
      %1968 = vmatmul.bf16.gmra.mxu0 %v1831
      %v1969 = vpop.f32.mrf.mxu0
      %v1970 = vadd.f32 0.0, %v1969
      %v1971 = vpop.f32.mrf.mxu0
      %v1972 = vadd.f32 0.0, %v1971
      %1973 = vmatmul.bf16.gmra.mxu0 %v1832
      %v1974 = vpop.f32.mrf.mxu0
      %v1975 = vadd.f32 0.0, %v1974
      %v1976 = vpop.f32.mrf.mxu0
      %v1977 = vadd.f32 0.0, %v1976
      %1978 = vmatmul.bf16.gmra.mxu0 %v1833
      %v1979 = vpop.f32.mrf.mxu0
      %v1980 = vadd.f32 0.0, %v1979
      %v1981 = vpop.f32.mrf.mxu0
      %v1982 = vadd.f32 0.0, %v1981
      %1983 = vmatmul.bf16.gmra.mxu0 %v1834
      %v1984 = vpop.f32.mrf.mxu0
      %v1985 = vadd.f32 0.0, %v1984
      %v1986 = vpop.f32.mrf.mxu0
      %v1987 = vadd.f32 0.0, %v1986
      %1988 = vdwg.mxu0
      %v1989 = vadd.f32 %v1656, %v1910
      %v1990 = vadd.f32 %v1657, %v1912
      %v1991 = vadd.f32 %v1658, %v1915
      %v1992 = vadd.f32 %v1659, %v1917
      %v1993 = vadd.f32 %v1660, %v1920
      %v1994 = vadd.f32 %v1661, %v1922
      %v1995 = vadd.f32 %v1662, %v1925
      %v1996 = vadd.f32 %v1663, %v1927
      %v1997 = vadd.f32 %v1664, %v1930
      %v1998 = vadd.f32 %v1665, %v1932
      %v1999 = vadd.f32 %v1666, %v1935
      %v2000 = vadd.f32 %v1667, %v1937
      %v2001 = vadd.f32 %v1668, %v1940
      %v2002 = vadd.f32 %v1669, %v1942
      %v2003 = vadd.f32 %v1670, %v1945
      %v2004 = vadd.f32 %v1671, %v1947
      %v2005 = vadd.f32 %v1672, %v1950
      %v2006 = vadd.f32 %v1673, %v1952
      %v2007 = vadd.f32 %v1674, %v1955
      %v2008 = vadd.f32 %v1675, %v1957
      %v2009 = vadd.f32 %v1676, %v1960
      %v2010 = vadd.f32 %v1677, %v1962
      %v2011 = vadd.f32 %v1678, %v1965
      %v2012 = vadd.f32 %v1679, %v1967
      %v2013 = vadd.f32 %v1680, %v1970
      %v2014 = vadd.f32 %v1681, %v1972
      %v2015 = vadd.f32 %v1682, %v1975
      %v2016 = vadd.f32 %v1683, %v1977
      %v2017 = vadd.f32 %v1684, %v1980
      %v2018 = vadd.f32 %v1685, %v1982
      %v2019 = vadd.f32 %v1686, %v1985
      %v2020 = vadd.f32 %v1687, %v1987
      %v2021 = vpack.c.bf16 %v1692, %v1691
      %v2022 = vpack.c.bf16 %v1694, %v1693
      %v2023 = vpack.c.bf16 %v1696, %v1695
      %v2024 = vpack.c.bf16 %v1698, %v1697
      %v2025 = vpack.c.bf16 %v1700, %v1699
      %v2026 = vpack.c.bf16 %v1702, %v1701
      %v2027 = vpack.c.bf16 %v1704, %v1703
      %v2028 = vpack.c.bf16 %v1706, %v1705
      %v2029 = vpack.c.bf16 %v1708, %v1707
      %v2030 = vpack.c.bf16 %v1710, %v1709
      %v2031 = vpack.c.bf16 %v1712, %v1711
      %v2032 = vpack.c.bf16 %v1714, %v1713
      %v2033 = vpack.c.bf16 %v1716, %v1715
      %v2034 = vpack.c.bf16 %v1718, %v1717
      %v2035 = vpack.c.bf16 %v1720, %v1719
      %v2036 = vpack.c.bf16 %v1722, %v1721
      %s2037 = scalar_lea.vmem %s261, 256
      %v2038 = vld [vmem:[%s2037] sm:$0xf]
      %v2039 = vld [vmem:[%s2037 + $0x4] sm:$0xf]
      %v2040 = vld [vmem:[%s2037 + $0x8] sm:$0xf]
      %v2041 = vld [vmem:[%s2037 + $0xc] sm:$0xf]
      %v2042 = vld [vmem:[%s2037 + $0x10] sm:$0xf]
      %v2043 = vld [vmem:[%s2037 + $0x14] sm:$0xf]
      %v2044 = vld [vmem:[%s2037 + $0x18] sm:$0xf]
      %v2045 = vld [vmem:[%s2037 + $0x1c] sm:$0xf]
      %v2046 = vld [vmem:[%s2037 + $0x20] sm:$0xf]
      %v2047 = vld [vmem:[%s2037 + $0x24] sm:$0xf]
      %v2048 = vld [vmem:[%s2037 + $0x28] sm:$0xf]
      %v2049 = vld [vmem:[%s2037 + $0x2c] sm:$0xf]
      %v2050 = vld [vmem:[%s2037 + $0x30] sm:$0xf]
      %v2051 = vld [vmem:[%s2037 + $0x34] sm:$0xf]
      %v2052 = vld [vmem:[%s2037 + $0x38] sm:$0xf]
      %v2053 = vld [vmem:[%s2037 + $0x3c] sm:$0xf]
      %v2070 = vunpack.c.l.b16 %v2038
      %v2071 = vunpack.c.l.b16 %v2039
      %v2072 = vunpack.c.l.b16 %v2040
      %v2073 = vunpack.c.l.b16 %v2041
      %v2074 = vunpack.c.l.b16 %v2042
      %v2075 = vunpack.c.l.b16 %v2043
      %v2076 = vunpack.c.l.b16 %v2044
      %v2077 = vunpack.c.l.b16 %v2045
      %v2078 = vunpack.c.l.b16 %v2046
      %v2079 = vunpack.c.l.b16 %v2047
      %v2080 = vunpack.c.l.b16 %v2048
      %v2081 = vunpack.c.l.b16 %v2049
      %v2082 = vunpack.c.l.b16 %v2050
      %v2083 = vunpack.c.l.b16 %v2051
      %v2084 = vunpack.c.l.b16 %v2052
      %v2085 = vunpack.c.l.b16 %v2053
      %v2086 = vpack.c.b16 %v2071, %v2070
      %v2087 = vpack.c.b16 %v2073, %v2072
      %v2088 = vpack.c.b16 %v2075, %v2074
      %v2089 = vpack.c.b16 %v2077, %v2076
      %v2090 = vpack.c.b16 %v2079, %v2078
      %v2091 = vpack.c.b16 %v2081, %v2080
      %v2092 = vpack.c.b16 %v2083, %v2082
      %v2093 = vpack.c.b16 %v2085, %v2084
      %2102 = vmatpush.bf16.msra.mxu0 %v2093
      %2103 = vmatpush.bf16.msra.mxu0 %v2092
      %2104 = vmatpush.bf16.msra.mxu0 %v2091
      %2105 = vmatpush.bf16.msra.mxu0 %v2090
      %2106 = vmatpush.bf16.msra.mxu0 %v2089
      %2107 = vmatpush.bf16.msra.mxu0 %v2088
      %2108 = vmatpush.bf16.msra.mxu0 %v2087
      %2109 = vmatpush.bf16.msra.mxu0 %v2086
      %2110 = vmatmul.bf16.gmra.mxu0 %v2021
      %v2111 = vpop.f32.mrf.mxu0
      %v2112 = vadd.f32 0.0, %v2111
      %v2113 = vpop.f32.mrf.mxu0
      %v2114 = vadd.f32 0.0, %v2113
      %2115 = vmatmul.bf16.gmra.mxu0 %v2022
      %v2116 = vpop.f32.mrf.mxu0
      %v2117 = vadd.f32 0.0, %v2116
      %v2118 = vpop.f32.mrf.mxu0
      %v2119 = vadd.f32 0.0, %v2118
      %2120 = vmatmul.bf16.gmra.mxu0 %v2023
      %v2121 = vpop.f32.mrf.mxu0
      %v2122 = vadd.f32 0.0, %v2121
      %v2123 = vpop.f32.mrf.mxu0
      %v2124 = vadd.f32 0.0, %v2123
      %2125 = vmatmul.bf16.gmra.mxu0 %v2024
      %v2126 = vpop.f32.mrf.mxu0
      %v2127 = vadd.f32 0.0, %v2126
      %v2128 = vpop.f32.mrf.mxu0
      %v2129 = vadd.f32 0.0, %v2128
      %2130 = vmatmul.bf16.gmra.mxu0 %v2025
      %v2131 = vpop.f32.mrf.mxu0
      %v2132 = vadd.f32 0.0, %v2131
      %v2133 = vpop.f32.mrf.mxu0
      %v2134 = vadd.f32 0.0, %v2133
      %2135 = vmatmul.bf16.gmra.mxu0 %v2026
      %v2136 = vpop.f32.mrf.mxu0
      %v2137 = vadd.f32 0.0, %v2136
      %v2138 = vpop.f32.mrf.mxu0
      %v2139 = vadd.f32 0.0, %v2138
      %2140 = vmatmul.bf16.gmra.mxu0 %v2027
      %v2141 = vpop.f32.mrf.mxu0
      %v2142 = vadd.f32 0.0, %v2141
      %v2143 = vpop.f32.mrf.mxu0
      %v2144 = vadd.f32 0.0, %v2143
      %2145 = vmatmul.bf16.gmra.mxu0 %v2028
      %v2146 = vpop.f32.mrf.mxu0
      %v2147 = vadd.f32 0.0, %v2146
      %v2148 = vpop.f32.mrf.mxu0
      %v2149 = vadd.f32 0.0, %v2148
      %2150 = vmatmul.bf16.gmra.mxu0 %v2029
      %v2151 = vpop.f32.mrf.mxu0
      %v2152 = vadd.f32 0.0, %v2151
      %v2153 = vpop.f32.mrf.mxu0
      %v2154 = vadd.f32 0.0, %v2153
      %2155 = vmatmul.bf16.gmra.mxu0 %v2030
      %v2156 = vpop.f32.mrf.mxu0
      %v2157 = vadd.f32 0.0, %v2156
      %v2158 = vpop.f32.mrf.mxu0
      %v2159 = vadd.f32 0.0, %v2158
      %2160 = vmatmul.bf16.gmra.mxu0 %v2031
      %v2161 = vpop.f32.mrf.mxu0
      %v2162 = vadd.f32 0.0, %v2161
      %v2163 = vpop.f32.mrf.mxu0
      %v2164 = vadd.f32 0.0, %v2163
      %2165 = vmatmul.bf16.gmra.mxu0 %v2032
      %v2166 = vpop.f32.mrf.mxu0
      %v2167 = vadd.f32 0.0, %v2166
      %v2168 = vpop.f32.mrf.mxu0
      %v2169 = vadd.f32 0.0, %v2168
      %2170 = vmatmul.bf16.gmra.mxu0 %v2033
      %v2171 = vpop.f32.mrf.mxu0
      %v2172 = vadd.f32 0.0, %v2171
      %v2173 = vpop.f32.mrf.mxu0
      %v2174 = vadd.f32 0.0, %v2173
      %2175 = vmatmul.bf16.gmra.mxu0 %v2034
      %v2176 = vpop.f32.mrf.mxu0
      %v2177 = vadd.f32 0.0, %v2176
      %v2178 = vpop.f32.mrf.mxu0
      %v2179 = vadd.f32 0.0, %v2178
      %2180 = vmatmul.bf16.gmra.mxu0 %v2035
      %v2181 = vpop.f32.mrf.mxu0
      %v2182 = vadd.f32 0.0, %v2181
      %v2183 = vpop.f32.mrf.mxu0
      %v2184 = vadd.f32 0.0, %v2183
      %2185 = vmatmul.bf16.gmra.mxu0 %v2036
      %v2186 = vpop.f32.mrf.mxu0
      %v2187 = vadd.f32 0.0, %v2186
      %v2188 = vpop.f32.mrf.mxu0
      %v2189 = vadd.f32 0.0, %v2188
      %2190 = vdwg.mxu0
      %v2191 = vadd.f32 %v1989, %v2112
      %v2192 = vadd.f32 %v1990, %v2114
      %v2193 = vadd.f32 %v1991, %v2117
      %v2194 = vadd.f32 %v1992, %v2119
      %v2195 = vadd.f32 %v1993, %v2122
      %v2196 = vadd.f32 %v1994, %v2124
      %v2197 = vadd.f32 %v1995, %v2127
      %v2198 = vadd.f32 %v1996, %v2129
      %v2199 = vadd.f32 %v1997, %v2132
      %v2200 = vadd.f32 %v1998, %v2134
      %v2201 = vadd.f32 %v1999, %v2137
      %v2202 = vadd.f32 %v2000, %v2139
      %v2203 = vadd.f32 %v2001, %v2142
      %v2204 = vadd.f32 %v2002, %v2144
      %v2205 = vadd.f32 %v2003, %v2147
      %v2206 = vadd.f32 %v2004, %v2149
      %v2207 = vadd.f32 %v2005, %v2152
      %v2208 = vadd.f32 %v2006, %v2154
      %v2209 = vadd.f32 %v2007, %v2157
      %v2210 = vadd.f32 %v2008, %v2159
      %v2211 = vadd.f32 %v2009, %v2162
      %v2212 = vadd.f32 %v2010, %v2164
      %v2213 = vadd.f32 %v2011, %v2167
      %v2214 = vadd.f32 %v2012, %v2169
      %v2215 = vadd.f32 %v2013, %v2172
      %v2216 = vadd.f32 %v2014, %v2174
      %v2217 = vadd.f32 %v2015, %v2177
      %v2218 = vadd.f32 %v2016, %v2179
      %v2219 = vadd.f32 %v2017, %v2182
      %v2220 = vadd.f32 %v2018, %v2184
      %v2221 = vadd.f32 %v2019, %v2187
      %v2222 = vadd.f32 %v2020, %v2189
      %v2223 = vrot.slane %v1691, 1
      %v2224 = vrot.slane %v1692, 1
      %v2225 = vrot.slane %v1693, 1
      %v2226 = vrot.slane %v1694, 1
      %v2227 = vrot.slane %v1695, 1
      %v2228 = vrot.slane %v1696, 1
      %v2229 = vrot.slane %v1697, 1
      %v2230 = vrot.slane %v1698, 1
      %v2231 = vrot.slane %v1699, 1
      %v2232 = vrot.slane %v1700, 1
      %v2233 = vrot.slane %v1701, 1
      %v2234 = vrot.slane %v1702, 1
      %v2235 = vrot.slane %v1703, 1
      %v2236 = vrot.slane %v1704, 1
      %v2237 = vrot.slane %v1705, 1
      %v2238 = vrot.slane %v1706, 1
      %v2239 = vrot.slane %v1707, 1
      %v2240 = vrot.slane %v1708, 1
      %v2241 = vrot.slane %v1709, 1
      %v2242 = vrot.slane %v1710, 1
      %v2243 = vrot.slane %v1711, 1
      %v2244 = vrot.slane %v1712, 1
      %v2245 = vrot.slane %v1713, 1
      %v2246 = vrot.slane %v1714, 1
      %v2247 = vrot.slane %v1715, 1
      %v2248 = vrot.slane %v1716, 1
      %v2249 = vrot.slane %v1717, 1
      %v2250 = vrot.slane %v1718, 1
      %v2251 = vrot.slane %v1719, 1
      %v2252 = vrot.slane %v1720, 1
      %v2253 = vrot.slane %v1721, 1
      %v2254 = vrot.slane %v1722, 1
      %v2255 = vsel %vm1357, %v2253, %v2254
      %v2256 = vsel %vm1357, %v2252, %v2253
      %v2257 = vsel %vm1357, %v2251, %v2252
      %v2258 = vsel %vm1357, %v2250, %v2251
      %v2259 = vsel %vm1357, %v2249, %v2250
      %v2260 = vsel %vm1357, %v2248, %v2249
      %v2261 = vsel %vm1357, %v2247, %v2248
      %v2262 = vsel %vm1357, %v2246, %v2247
      %v2263 = vsel %vm1357, %v2245, %v2246
      %v2264 = vsel %vm1357, %v2244, %v2245
      %v2265 = vsel %vm1357, %v2243, %v2244
      %v2266 = vsel %vm1357, %v2242, %v2243
      %v2267 = vsel %vm1357, %v2241, %v2242
      %v2268 = vsel %vm1357, %v2240, %v2241
      %v2269 = vsel %vm1357, %v2239, %v2240
      %v2270 = vsel %vm1357, %v2238, %v2239
      %v2271 = vsel %vm1357, %v2237, %v2238
      %v2272 = vsel %vm1357, %v2236, %v2237
      %v2273 = vsel %vm1357, %v2235, %v2236
      %v2274 = vsel %vm1357, %v2234, %v2235
      %v2275 = vsel %vm1357, %v2233, %v2234
      %v2276 = vsel %vm1357, %v2232, %v2233
      %v2277 = vsel %vm1357, %v2231, %v2232
      %v2278 = vsel %vm1357, %v2230, %v2231
      %v2279 = vsel %vm1357, %v2229, %v2230
      %v2280 = vsel %vm1357, %v2228, %v2229
      %v2281 = vsel %vm1357, %v2227, %v2228
      %v2282 = vsel %vm1357, %v2226, %v2227
      %v2283 = vsel %vm1357, %v2225, %v2226
      %v2284 = vsel %vm1357, %v2224, %v2225
      %v2285 = vsel %vm1357, %v2223, %v2224
      %v2286 = vsel %vm1357, %v2254, %v2223
      %v2287 = vsel %vm1422, %v2285, 0.0
      %v2288 = vsel %vm1423, %v2284, 0.0
      %v2289 = vsel %vm1424, %v2283, 0.0
      %v2290 = vsel %vm1425, %v2282, 0.0
      %v2291 = vsel %vm1426, %v2281, 0.0
      %v2292 = vsel %vm1427, %v2280, 0.0
      %v2293 = vsel %vm1428, %v2279, 0.0
      %v2294 = vsel %vm1429, %v2278, 0.0
      %v2295 = vsel %vm1430, %v2277, 0.0
      %v2296 = vsel %vm1431, %v2276, 0.0
      %v2297 = vsel %vm1432, %v2275, 0.0
      %v2298 = vsel %vm1433, %v2274, 0.0
      %v2299 = vsel %vm1434, %v2273, 0.0
      %v2300 = vsel %vm1435, %v2272, 0.0
      %v2301 = vsel %vm1436, %v2271, 0.0
      %v2302 = vsel %vm1437, %v2270, 0.0
      %v2303 = vsel %vm1438, %v2269, 0.0
      %v2304 = vsel %vm1439, %v2268, 0.0
      %v2305 = vsel %vm1440, %v2267, 0.0
      %v2306 = vsel %vm1441, %v2266, 0.0
      %v2307 = vsel %vm1442, %v2265, 0.0
      %v2308 = vsel %vm1443, %v2264, 0.0
      %v2309 = vsel %vm1444, %v2263, 0.0
      %v2310 = vsel %vm1445, %v2262, 0.0
      %v2311 = vsel %vm1446, %v2261, 0.0
      %v2312 = vsel %vm1447, %v2260, 0.0
      %v2313 = vsel %vm1448, %v2259, 0.0
      %v2314 = vsel %vm1449, %v2258, 0.0
      %v2315 = vsel %vm1450, %v2257, 0.0
      %v2316 = vsel %vm1451, %v2256, 0.0
      %v2317 = vsel %vm1452, %v2255, 0.0
      %v2318 = vsel %vm1453, %v2286, 0.0
      %v2319 = vpack.c.bf16 %v2288, %v2287
      %v2320 = vpack.c.bf16 %v2290, %v2289
      %v2321 = vpack.c.bf16 %v2292, %v2291
      %v2322 = vpack.c.bf16 %v2294, %v2293
      %v2323 = vpack.c.bf16 %v2296, %v2295
      %v2324 = vpack.c.bf16 %v2298, %v2297
      %v2325 = vpack.c.bf16 %v2300, %v2299
      %v2326 = vpack.c.bf16 %v2302, %v2301
      %v2327 = vpack.c.bf16 %v2304, %v2303
      %v2328 = vpack.c.bf16 %v2306, %v2305
      %v2329 = vpack.c.bf16 %v2308, %v2307
      %v2330 = vpack.c.bf16 %v2310, %v2309
      %v2331 = vpack.c.bf16 %v2312, %v2311
      %v2332 = vpack.c.bf16 %v2314, %v2313
      %v2333 = vpack.c.bf16 %v2316, %v2315
      %v2334 = vpack.c.bf16 %v2318, %v2317
      %s2335 = scalar_lea.vmem %s261, 320
      %v2336 = vld [vmem:[%s2335] sm:$0xf]
      %v2337 = vld [vmem:[%s2335 + $0x4] sm:$0xf]
      %v2338 = vld [vmem:[%s2335 + $0x8] sm:$0xf]
      %v2339 = vld [vmem:[%s2335 + $0xc] sm:$0xf]
      %v2340 = vld [vmem:[%s2335 + $0x10] sm:$0xf]
      %v2341 = vld [vmem:[%s2335 + $0x14] sm:$0xf]
      %v2342 = vld [vmem:[%s2335 + $0x18] sm:$0xf]
      %v2343 = vld [vmem:[%s2335 + $0x1c] sm:$0xf]
      %v2344 = vld [vmem:[%s2335 + $0x20] sm:$0xf]
      %v2345 = vld [vmem:[%s2335 + $0x24] sm:$0xf]
      %v2346 = vld [vmem:[%s2335 + $0x28] sm:$0xf]
      %v2347 = vld [vmem:[%s2335 + $0x2c] sm:$0xf]
      %v2348 = vld [vmem:[%s2335 + $0x30] sm:$0xf]
      %v2349 = vld [vmem:[%s2335 + $0x34] sm:$0xf]
      %v2350 = vld [vmem:[%s2335 + $0x38] sm:$0xf]
      %v2351 = vld [vmem:[%s2335 + $0x3c] sm:$0xf]
      %v2368 = vunpack.c.l.b16 %v2336
      %v2369 = vunpack.c.l.b16 %v2337
      %v2370 = vunpack.c.l.b16 %v2338
      %v2371 = vunpack.c.l.b16 %v2339
      %v2372 = vunpack.c.l.b16 %v2340
      %v2373 = vunpack.c.l.b16 %v2341
      %v2374 = vunpack.c.l.b16 %v2342
      %v2375 = vunpack.c.l.b16 %v2343
      %v2376 = vunpack.c.l.b16 %v2344
      %v2377 = vunpack.c.l.b16 %v2345
      %v2378 = vunpack.c.l.b16 %v2346
      %v2379 = vunpack.c.l.b16 %v2347
      %v2380 = vunpack.c.l.b16 %v2348
      %v2381 = vunpack.c.l.b16 %v2349
      %v2382 = vunpack.c.l.b16 %v2350
      %v2383 = vunpack.c.l.b16 %v2351
      %v2384 = vpack.c.b16 %v2369, %v2368
      %v2385 = vpack.c.b16 %v2371, %v2370
      %v2386 = vpack.c.b16 %v2373, %v2372
      %v2387 = vpack.c.b16 %v2375, %v2374
      %v2388 = vpack.c.b16 %v2377, %v2376
      %v2389 = vpack.c.b16 %v2379, %v2378
      %v2390 = vpack.c.b16 %v2381, %v2380
      %v2391 = vpack.c.b16 %v2383, %v2382
      %2400 = vmatpush.bf16.msra.mxu0 %v2391
      %2401 = vmatpush.bf16.msra.mxu0 %v2390
      %2402 = vmatpush.bf16.msra.mxu0 %v2389
      %2403 = vmatpush.bf16.msra.mxu0 %v2388
      %2404 = vmatpush.bf16.msra.mxu0 %v2387
      %2405 = vmatpush.bf16.msra.mxu0 %v2386
      %2406 = vmatpush.bf16.msra.mxu0 %v2385
      %2407 = vmatpush.bf16.msra.mxu0 %v2384
      %2408 = vmatmul.bf16.gmra.mxu0 %v2319
      %v2409 = vpop.f32.mrf.mxu0
      %v2410 = vadd.f32 0.0, %v2409
      %v2411 = vpop.f32.mrf.mxu0
      %v2412 = vadd.f32 0.0, %v2411
      %2413 = vmatmul.bf16.gmra.mxu0 %v2320
      %v2414 = vpop.f32.mrf.mxu0
      %v2415 = vadd.f32 0.0, %v2414
      %v2416 = vpop.f32.mrf.mxu0
      %v2417 = vadd.f32 0.0, %v2416
      %2418 = vmatmul.bf16.gmra.mxu0 %v2321
      %v2419 = vpop.f32.mrf.mxu0
      %v2420 = vadd.f32 0.0, %v2419
      %v2421 = vpop.f32.mrf.mxu0
      %v2422 = vadd.f32 0.0, %v2421
      %2423 = vmatmul.bf16.gmra.mxu0 %v2322
      %v2424 = vpop.f32.mrf.mxu0
      %v2425 = vadd.f32 0.0, %v2424
      %v2426 = vpop.f32.mrf.mxu0
      %v2427 = vadd.f32 0.0, %v2426
      %2428 = vmatmul.bf16.gmra.mxu0 %v2323
      %v2429 = vpop.f32.mrf.mxu0
      %v2430 = vadd.f32 0.0, %v2429
      %v2431 = vpop.f32.mrf.mxu0
      %v2432 = vadd.f32 0.0, %v2431
      %2433 = vmatmul.bf16.gmra.mxu0 %v2324
      %v2434 = vpop.f32.mrf.mxu0
      %v2435 = vadd.f32 0.0, %v2434
      %v2436 = vpop.f32.mrf.mxu0
      %v2437 = vadd.f32 0.0, %v2436
      %2438 = vmatmul.bf16.gmra.mxu0 %v2325
      %v2439 = vpop.f32.mrf.mxu0
      %v2440 = vadd.f32 0.0, %v2439
      %v2441 = vpop.f32.mrf.mxu0
      %v2442 = vadd.f32 0.0, %v2441
      %2443 = vmatmul.bf16.gmra.mxu0 %v2326
      %v2444 = vpop.f32.mrf.mxu0
      %v2445 = vadd.f32 0.0, %v2444
      %v2446 = vpop.f32.mrf.mxu0
      %v2447 = vadd.f32 0.0, %v2446
      %2448 = vmatmul.bf16.gmra.mxu0 %v2327
      %v2449 = vpop.f32.mrf.mxu0
      %v2450 = vadd.f32 0.0, %v2449
      %v2451 = vpop.f32.mrf.mxu0
      %v2452 = vadd.f32 0.0, %v2451
      %2453 = vmatmul.bf16.gmra.mxu0 %v2328
      %v2454 = vpop.f32.mrf.mxu0
      %v2455 = vadd.f32 0.0, %v2454
      %v2456 = vpop.f32.mrf.mxu0
      %v2457 = vadd.f32 0.0, %v2456
      %2458 = vmatmul.bf16.gmra.mxu0 %v2329
      %v2459 = vpop.f32.mrf.mxu0
      %v2460 = vadd.f32 0.0, %v2459
      %v2461 = vpop.f32.mrf.mxu0
      %v2462 = vadd.f32 0.0, %v2461
      %2463 = vmatmul.bf16.gmra.mxu0 %v2330
      %v2464 = vpop.f32.mrf.mxu0
      %v2465 = vadd.f32 0.0, %v2464
      %v2466 = vpop.f32.mrf.mxu0
      %v2467 = vadd.f32 0.0, %v2466
      %2468 = vmatmul.bf16.gmra.mxu0 %v2331
      %v2469 = vpop.f32.mrf.mxu0
      %v2470 = vadd.f32 0.0, %v2469
      %v2471 = vpop.f32.mrf.mxu0
      %v2472 = vadd.f32 0.0, %v2471
      %2473 = vmatmul.bf16.gmra.mxu0 %v2332
      %v2474 = vpop.f32.mrf.mxu0
      %v2475 = vadd.f32 0.0, %v2474
      %v2476 = vpop.f32.mrf.mxu0
      %v2477 = vadd.f32 0.0, %v2476
      %2478 = vmatmul.bf16.gmra.mxu0 %v2333
      %v2479 = vpop.f32.mrf.mxu0
      %v2480 = vadd.f32 0.0, %v2479
      %v2481 = vpop.f32.mrf.mxu0
      %v2482 = vadd.f32 0.0, %v2481
      %2483 = vmatmul.bf16.gmra.mxu0 %v2334
      %v2484 = vpop.f32.mrf.mxu0
      %v2485 = vadd.f32 0.0, %v2484
      %v2486 = vpop.f32.mrf.mxu0
      %v2487 = vadd.f32 0.0, %v2486
      %2488 = vdwg.mxu0
      %v2489 = vadd.f32 %v2191, %v2410
      %v2490 = vadd.f32 %v2192, %v2412
      %v2491 = vadd.f32 %v2193, %v2415
      %v2492 = vadd.f32 %v2194, %v2417
      %v2493 = vadd.f32 %v2195, %v2420
      %v2494 = vadd.f32 %v2196, %v2422
      %v2495 = vadd.f32 %v2197, %v2425
      %v2496 = vadd.f32 %v2198, %v2427
      %v2497 = vadd.f32 %v2199, %v2430
      %v2498 = vadd.f32 %v2200, %v2432
      %v2499 = vadd.f32 %v2201, %v2435
      %v2500 = vadd.f32 %v2202, %v2437
      %v2501 = vadd.f32 %v2203, %v2440
      %v2502 = vadd.f32 %v2204, %v2442
      %v2503 = vadd.f32 %v2205, %v2445
      %v2504 = vadd.f32 %v2206, %v2447
      %v2505 = vadd.f32 %v2207, %v2450
      %v2506 = vadd.f32 %v2208, %v2452
      %v2507 = vadd.f32 %v2209, %v2455
      %v2508 = vadd.f32 %v2210, %v2457
      %v2509 = vadd.f32 %v2211, %v2460
      %v2510 = vadd.f32 %v2212, %v2462
      %v2511 = vadd.f32 %v2213, %v2465
      %v2512 = vadd.f32 %v2214, %v2467
      %v2513 = vadd.f32 %v2215, %v2470
      %v2514 = vadd.f32 %v2216, %v2472
      %v2515 = vadd.f32 %v2217, %v2475
      %v2516 = vadd.f32 %v2218, %v2477
      %v2517 = vadd.f32 %v2219, %v2480
      %v2518 = vadd.f32 %v2220, %v2482
      %v2519 = vadd.f32 %v2221, %v2485
      %v2520 = vadd.f32 %v2222, %v2487
      %s2521 = sadd.s32 %s309, 2
      %s2522 = smul.u32 %s2521, 16
      %s2523 = scalar_lea.vmem [#allocation2], %s2522
      %v2524 = vld [vmem:[%s2523] sm:$0xff]
      %v2525 = vld [vmem:[%s2523 + $0x8] sm:$0xff]
      %v2526 = vld [vmem:[%s2523 + $0x10] sm:$0xff]
      %v2527 = vld [vmem:[%s2523 + $0x18] sm:$0xff]
      %v2528 = vld [vmem:[%s2523 + $0x20] sm:$0xff]
      %v2529 = vld [vmem:[%s2523 + $0x28] sm:$0xff]
      %v2530 = vld [vmem:[%s2523 + $0x30] sm:$0xff]
      %v2531 = vld [vmem:[%s2523 + $0x38] sm:$0xff]
      %v2532 = vld [vmem:[%s2523 + $0x40] sm:$0xff]
      %v2533 = vld [vmem:[%s2523 + $0x48] sm:$0xff]
      %v2534 = vld [vmem:[%s2523 + $0x50] sm:$0xff]
      %v2535 = vld [vmem:[%s2523 + $0x58] sm:$0xff]
      %v2536 = vld [vmem:[%s2523 + $0x60] sm:$0xff]
      %v2537 = vld [vmem:[%s2523 + $0x68] sm:$0xff]
      %v2538 = vld [vmem:[%s2523 + $0x70] sm:$0xff]
      %v2539 = vld [vmem:[%s2523 + $0x78] sm:$0xff]
      %v2540 = vld [vmem:[%s2523 + $0x80] sm:$0xff]
      %v2541 = vld [vmem:[%s2523 + $0x88] sm:$0xff]
      %v2542 = vld [vmem:[%s2523 + $0x90] sm:$0xff]
      %v2543 = vld [vmem:[%s2523 + $0x98] sm:$0xff]
      %v2544 = vld [vmem:[%s2523 + $0xa0] sm:$0xff]
      %v2545 = vld [vmem:[%s2523 + $0xa8] sm:$0xff]
      %v2546 = vld [vmem:[%s2523 + $0xb0] sm:$0xff]
      %v2547 = vld [vmem:[%s2523 + $0xb8] sm:$0xff]
      %v2548 = vld [vmem:[%s2523 + $0xc0] sm:$0xff]
      %v2549 = vld [vmem:[%s2523 + $0xc8] sm:$0xff]
      %v2550 = vld [vmem:[%s2523 + $0xd0] sm:$0xff]
      %v2551 = vld [vmem:[%s2523 + $0xd8] sm:$0xff]
      %v2552 = vld [vmem:[%s2523 + $0xe0] sm:$0xff]
      %v2553 = vld [vmem:[%s2523 + $0xe8] sm:$0xff]
      %v2554 = vld [vmem:[%s2523 + $0xf0] sm:$0xff]
      %v2555 = vld [vmem:[%s2523 + $0xf8] sm:$0xff]
      %v2556 = vrot.slane %v2524, 7
      %v2557 = vrot.slane %v2525, 7
      %v2558 = vrot.slane %v2526, 7
      %v2559 = vrot.slane %v2527, 7
      %v2560 = vrot.slane %v2528, 7
      %v2561 = vrot.slane %v2529, 7
      %v2562 = vrot.slane %v2530, 7
      %v2563 = vrot.slane %v2531, 7
      %v2564 = vrot.slane %v2532, 7
      %v2565 = vrot.slane %v2533, 7
      %v2566 = vrot.slane %v2534, 7
      %v2567 = vrot.slane %v2535, 7
      %v2568 = vrot.slane %v2536, 7
      %v2569 = vrot.slane %v2537, 7
      %v2570 = vrot.slane %v2538, 7
      %v2571 = vrot.slane %v2539, 7
      %v2572 = vrot.slane %v2540, 7
      %v2573 = vrot.slane %v2541, 7
      %v2574 = vrot.slane %v2542, 7
      %v2575 = vrot.slane %v2543, 7
      %v2576 = vrot.slane %v2544, 7
      %v2577 = vrot.slane %v2545, 7
      %v2578 = vrot.slane %v2546, 7
      %v2579 = vrot.slane %v2547, 7
      %v2580 = vrot.slane %v2548, 7
      %v2581 = vrot.slane %v2549, 7
      %v2582 = vrot.slane %v2550, 7
      %v2583 = vrot.slane %v2551, 7
      %v2584 = vrot.slane %v2552, 7
      %v2585 = vrot.slane %v2553, 7
      %v2586 = vrot.slane %v2554, 7
      %v2587 = vrot.slane %v2555, 7
      %v2588 = vsel %vm825, %v2586, %v2587
      %v2589 = vsel %vm825, %v2585, %v2586
      %v2590 = vsel %vm825, %v2584, %v2585
      %v2591 = vsel %vm825, %v2583, %v2584
      %v2592 = vsel %vm825, %v2582, %v2583
      %v2593 = vsel %vm825, %v2581, %v2582
      %v2594 = vsel %vm825, %v2580, %v2581
      %v2595 = vsel %vm825, %v2579, %v2580
      %v2596 = vsel %vm825, %v2578, %v2579
      %v2597 = vsel %vm825, %v2577, %v2578
      %v2598 = vsel %vm825, %v2576, %v2577
      %v2599 = vsel %vm825, %v2575, %v2576
      %v2600 = vsel %vm825, %v2574, %v2575
      %v2601 = vsel %vm825, %v2573, %v2574
      %v2602 = vsel %vm825, %v2572, %v2573
      %v2603 = vsel %vm825, %v2571, %v2572
      %v2604 = vsel %vm825, %v2570, %v2571
      %v2605 = vsel %vm825, %v2569, %v2570
      %v2606 = vsel %vm825, %v2568, %v2569
      %v2607 = vsel %vm825, %v2567, %v2568
      %v2608 = vsel %vm825, %v2566, %v2567
      %v2609 = vsel %vm825, %v2565, %v2566
      %v2610 = vsel %vm825, %v2564, %v2565
      %v2611 = vsel %vm825, %v2563, %v2564
      %v2612 = vsel %vm825, %v2562, %v2563
      %v2613 = vsel %vm825, %v2561, %v2562
      %v2614 = vsel %vm825, %v2560, %v2561
      %v2615 = vsel %vm825, %v2559, %v2560
      %v2616 = vsel %vm825, %v2558, %v2559
      %v2617 = vsel %vm825, %v2557, %v2558
      %v2618 = vsel %vm825, %v2556, %v2557
      %v2619 = vsel %vm825, %v2587, %v2556
      %v2620 = vsel %vm890, %v2619, 0.0
      %v2621 = vsel %vm891, %v2618, 0.0
      %v2622 = vsel %vm892, %v2617, 0.0
      %v2623 = vsel %vm893, %v2616, 0.0
      %v2624 = vsel %vm894, %v2615, 0.0
      %v2625 = vsel %vm895, %v2614, 0.0
      %v2626 = vsel %vm896, %v2613, 0.0
      %v2627 = vsel %vm897, %v2612, 0.0
      %v2628 = vsel %vm898, %v2611, 0.0
      %v2629 = vsel %vm899, %v2610, 0.0
      %v2630 = vsel %vm900, %v2609, 0.0
      %v2631 = vsel %vm901, %v2608, 0.0
      %v2632 = vsel %vm902, %v2607, 0.0
      %v2633 = vsel %vm903, %v2606, 0.0
      %v2634 = vsel %vm904, %v2605, 0.0
      %v2635 = vsel %vm905, %v2604, 0.0
      %v2636 = vsel %vm906, %v2603, 0.0
      %v2637 = vsel %vm907, %v2602, 0.0
      %v2638 = vsel %vm908, %v2601, 0.0
      %v2639 = vsel %vm909, %v2600, 0.0
      %v2640 = vsel %vm910, %v2599, 0.0
      %v2641 = vsel %vm911, %v2598, 0.0
      %v2642 = vsel %vm912, %v2597, 0.0
      %v2643 = vsel %vm913, %v2596, 0.0
      %v2644 = vsel %vm914, %v2595, 0.0
      %v2645 = vsel %vm915, %v2594, 0.0
      %v2646 = vsel %vm916, %v2593, 0.0
      %v2647 = vsel %vm917, %v2592, 0.0
      %v2648 = vsel %vm918, %v2591, 0.0
      %v2649 = vsel %vm919, %v2590, 0.0
      %v2650 = vsel %vm920, %v2589, 0.0
      %v2651 = vsel %vm921, %v2588, 0.0
      %v2652 = vpack.c.bf16 %v2621, %v2620
      %v2653 = vpack.c.bf16 %v2623, %v2622
      %v2654 = vpack.c.bf16 %v2625, %v2624
      %v2655 = vpack.c.bf16 %v2627, %v2626
      %v2656 = vpack.c.bf16 %v2629, %v2628
      %v2657 = vpack.c.bf16 %v2631, %v2630
      %v2658 = vpack.c.bf16 %v2633, %v2632
      %v2659 = vpack.c.bf16 %v2635, %v2634
      %v2660 = vpack.c.bf16 %v2637, %v2636
      %v2661 = vpack.c.bf16 %v2639, %v2638
      %v2662 = vpack.c.bf16 %v2641, %v2640
      %v2663 = vpack.c.bf16 %v2643, %v2642
      %v2664 = vpack.c.bf16 %v2645, %v2644
      %v2665 = vpack.c.bf16 %v2647, %v2646
      %v2666 = vpack.c.bf16 %v2649, %v2648
      %v2667 = vpack.c.bf16 %v2651, %v2650
      %s2668 = scalar_lea.vmem %s261, 384
      %v2669 = vld [vmem:[%s2668] sm:$0xf]
      %v2670 = vld [vmem:[%s2668 + $0x4] sm:$0xf]
      %v2671 = vld [vmem:[%s2668 + $0x8] sm:$0xf]
      %v2672 = vld [vmem:[%s2668 + $0xc] sm:$0xf]
      %v2673 = vld [vmem:[%s2668 + $0x10] sm:$0xf]
      %v2674 = vld [vmem:[%s2668 + $0x14] sm:$0xf]
      %v2675 = vld [vmem:[%s2668 + $0x18] sm:$0xf]
      %v2676 = vld [vmem:[%s2668 + $0x1c] sm:$0xf]
      %v2677 = vld [vmem:[%s2668 + $0x20] sm:$0xf]
      %v2678 = vld [vmem:[%s2668 + $0x24] sm:$0xf]
      %v2679 = vld [vmem:[%s2668 + $0x28] sm:$0xf]
      %v2680 = vld [vmem:[%s2668 + $0x2c] sm:$0xf]
      %v2681 = vld [vmem:[%s2668 + $0x30] sm:$0xf]
      %v2682 = vld [vmem:[%s2668 + $0x34] sm:$0xf]
      %v2683 = vld [vmem:[%s2668 + $0x38] sm:$0xf]
      %v2684 = vld [vmem:[%s2668 + $0x3c] sm:$0xf]
      %v2701 = vunpack.c.l.b16 %v2669
      %v2702 = vunpack.c.l.b16 %v2670
      %v2703 = vunpack.c.l.b16 %v2671
      %v2704 = vunpack.c.l.b16 %v2672
      %v2705 = vunpack.c.l.b16 %v2673
      %v2706 = vunpack.c.l.b16 %v2674
      %v2707 = vunpack.c.l.b16 %v2675
      %v2708 = vunpack.c.l.b16 %v2676
      %v2709 = vunpack.c.l.b16 %v2677
      %v2710 = vunpack.c.l.b16 %v2678
      %v2711 = vunpack.c.l.b16 %v2679
      %v2712 = vunpack.c.l.b16 %v2680
      %v2713 = vunpack.c.l.b16 %v2681
      %v2714 = vunpack.c.l.b16 %v2682
      %v2715 = vunpack.c.l.b16 %v2683
      %v2716 = vunpack.c.l.b16 %v2684
      %v2717 = vpack.c.b16 %v2702, %v2701
      %v2718 = vpack.c.b16 %v2704, %v2703
      %v2719 = vpack.c.b16 %v2706, %v2705
      %v2720 = vpack.c.b16 %v2708, %v2707
      %v2721 = vpack.c.b16 %v2710, %v2709
      %v2722 = vpack.c.b16 %v2712, %v2711
      %v2723 = vpack.c.b16 %v2714, %v2713
      %v2724 = vpack.c.b16 %v2716, %v2715
      %2733 = vmatpush.bf16.msra.mxu0 %v2724
      %2734 = vmatpush.bf16.msra.mxu0 %v2723
      %2735 = vmatpush.bf16.msra.mxu0 %v2722
      %2736 = vmatpush.bf16.msra.mxu0 %v2721
      %2737 = vmatpush.bf16.msra.mxu0 %v2720
      %2738 = vmatpush.bf16.msra.mxu0 %v2719
      %2739 = vmatpush.bf16.msra.mxu0 %v2718
      %2740 = vmatpush.bf16.msra.mxu0 %v2717
      %2741 = vmatmul.bf16.gmra.mxu0 %v2652
      %v2742 = vpop.f32.mrf.mxu0
      %v2743 = vadd.f32 0.0, %v2742
      %v2744 = vpop.f32.mrf.mxu0
      %v2745 = vadd.f32 0.0, %v2744
      %2746 = vmatmul.bf16.gmra.mxu0 %v2653
      %v2747 = vpop.f32.mrf.mxu0
      %v2748 = vadd.f32 0.0, %v2747
      %v2749 = vpop.f32.mrf.mxu0
      %v2750 = vadd.f32 0.0, %v2749
      %2751 = vmatmul.bf16.gmra.mxu0 %v2654
      %v2752 = vpop.f32.mrf.mxu0
      %v2753 = vadd.f32 0.0, %v2752
      %v2754 = vpop.f32.mrf.mxu0
      %v2755 = vadd.f32 0.0, %v2754
      %2756 = vmatmul.bf16.gmra.mxu0 %v2655
      %v2757 = vpop.f32.mrf.mxu0
      %v2758 = vadd.f32 0.0, %v2757
      %v2759 = vpop.f32.mrf.mxu0
      %v2760 = vadd.f32 0.0, %v2759
      %2761 = vmatmul.bf16.gmra.mxu0 %v2656
      %v2762 = vpop.f32.mrf.mxu0
      %v2763 = vadd.f32 0.0, %v2762
      %v2764 = vpop.f32.mrf.mxu0
      %v2765 = vadd.f32 0.0, %v2764
      %2766 = vmatmul.bf16.gmra.mxu0 %v2657
      %v2767 = vpop.f32.mrf.mxu0
      %v2768 = vadd.f32 0.0, %v2767
      %v2769 = vpop.f32.mrf.mxu0
      %v2770 = vadd.f32 0.0, %v2769
      %2771 = vmatmul.bf16.gmra.mxu0 %v2658
      %v2772 = vpop.f32.mrf.mxu0
      %v2773 = vadd.f32 0.0, %v2772
      %v2774 = vpop.f32.mrf.mxu0
      %v2775 = vadd.f32 0.0, %v2774
      %2776 = vmatmul.bf16.gmra.mxu0 %v2659
      %v2777 = vpop.f32.mrf.mxu0
      %v2778 = vadd.f32 0.0, %v2777
      %v2779 = vpop.f32.mrf.mxu0
      %v2780 = vadd.f32 0.0, %v2779
      %2781 = vmatmul.bf16.gmra.mxu0 %v2660
      %v2782 = vpop.f32.mrf.mxu0
      %v2783 = vadd.f32 0.0, %v2782
      %v2784 = vpop.f32.mrf.mxu0
      %v2785 = vadd.f32 0.0, %v2784
      %2786 = vmatmul.bf16.gmra.mxu0 %v2661
      %v2787 = vpop.f32.mrf.mxu0
      %v2788 = vadd.f32 0.0, %v2787
      %v2789 = vpop.f32.mrf.mxu0
      %v2790 = vadd.f32 0.0, %v2789
      %2791 = vmatmul.bf16.gmra.mxu0 %v2662
      %v2792 = vpop.f32.mrf.mxu0
      %v2793 = vadd.f32 0.0, %v2792
      %v2794 = vpop.f32.mrf.mxu0
      %v2795 = vadd.f32 0.0, %v2794
      %2796 = vmatmul.bf16.gmra.mxu0 %v2663
      %v2797 = vpop.f32.mrf.mxu0
      %v2798 = vadd.f32 0.0, %v2797
      %v2799 = vpop.f32.mrf.mxu0
      %v2800 = vadd.f32 0.0, %v2799
      %2801 = vmatmul.bf16.gmra.mxu0 %v2664
      %v2802 = vpop.f32.mrf.mxu0
      %v2803 = vadd.f32 0.0, %v2802
      %v2804 = vpop.f32.mrf.mxu0
      %v2805 = vadd.f32 0.0, %v2804
      %2806 = vmatmul.bf16.gmra.mxu0 %v2665
      %v2807 = vpop.f32.mrf.mxu0
      %v2808 = vadd.f32 0.0, %v2807
      %v2809 = vpop.f32.mrf.mxu0
      %v2810 = vadd.f32 0.0, %v2809
      %2811 = vmatmul.bf16.gmra.mxu0 %v2666
      %v2812 = vpop.f32.mrf.mxu0
      %v2813 = vadd.f32 0.0, %v2812
      %v2814 = vpop.f32.mrf.mxu0
      %v2815 = vadd.f32 0.0, %v2814
      %2816 = vmatmul.bf16.gmra.mxu0 %v2667
      %v2817 = vpop.f32.mrf.mxu0
      %v2818 = vadd.f32 0.0, %v2817
      %v2819 = vpop.f32.mrf.mxu0
      %v2820 = vadd.f32 0.0, %v2819
      %2821 = vdwg.mxu0
      %v2822 = vadd.f32 %v2489, %v2743
      %v2823 = vadd.f32 %v2490, %v2745
      %v2824 = vadd.f32 %v2491, %v2748
      %v2825 = vadd.f32 %v2492, %v2750
      %v2826 = vadd.f32 %v2493, %v2753
      %v2827 = vadd.f32 %v2494, %v2755
      %v2828 = vadd.f32 %v2495, %v2758
      %v2829 = vadd.f32 %v2496, %v2760
      %v2830 = vadd.f32 %v2497, %v2763
      %v2831 = vadd.f32 %v2498, %v2765
      %v2832 = vadd.f32 %v2499, %v2768
      %v2833 = vadd.f32 %v2500, %v2770
      %v2834 = vadd.f32 %v2501, %v2773
      %v2835 = vadd.f32 %v2502, %v2775
      %v2836 = vadd.f32 %v2503, %v2778
      %v2837 = vadd.f32 %v2504, %v2780
      %v2838 = vadd.f32 %v2505, %v2783
      %v2839 = vadd.f32 %v2506, %v2785
      %v2840 = vadd.f32 %v2507, %v2788
      %v2841 = vadd.f32 %v2508, %v2790
      %v2842 = vadd.f32 %v2509, %v2793
      %v2843 = vadd.f32 %v2510, %v2795
      %v2844 = vadd.f32 %v2511, %v2798
      %v2845 = vadd.f32 %v2512, %v2800
      %v2846 = vadd.f32 %v2513, %v2803
      %v2847 = vadd.f32 %v2514, %v2805
      %v2848 = vadd.f32 %v2515, %v2808
      %v2849 = vadd.f32 %v2516, %v2810
      %v2850 = vadd.f32 %v2517, %v2813
      %v2851 = vadd.f32 %v2518, %v2815
      %v2852 = vadd.f32 %v2519, %v2818
      %v2853 = vadd.f32 %v2520, %v2820
      %v2854 = vpack.c.bf16 %v2525, %v2524
      %v2855 = vpack.c.bf16 %v2527, %v2526
      %v2856 = vpack.c.bf16 %v2529, %v2528
      %v2857 = vpack.c.bf16 %v2531, %v2530
      %v2858 = vpack.c.bf16 %v2533, %v2532
      %v2859 = vpack.c.bf16 %v2535, %v2534
      %v2860 = vpack.c.bf16 %v2537, %v2536
      %v2861 = vpack.c.bf16 %v2539, %v2538
      %v2862 = vpack.c.bf16 %v2541, %v2540
      %v2863 = vpack.c.bf16 %v2543, %v2542
      %v2864 = vpack.c.bf16 %v2545, %v2544
      %v2865 = vpack.c.bf16 %v2547, %v2546
      %v2866 = vpack.c.bf16 %v2549, %v2548
      %v2867 = vpack.c.bf16 %v2551, %v2550
      %v2868 = vpack.c.bf16 %v2553, %v2552
      %v2869 = vpack.c.bf16 %v2555, %v2554
      %s2870 = scalar_lea.vmem %s261, 448
      %v2871 = vld [vmem:[%s2870] sm:$0xf]
      %v2872 = vld [vmem:[%s2870 + $0x4] sm:$0xf]
      %v2873 = vld [vmem:[%s2870 + $0x8] sm:$0xf]
      %v2874 = vld [vmem:[%s2870 + $0xc] sm:$0xf]
      %v2875 = vld [vmem:[%s2870 + $0x10] sm:$0xf]
      %v2876 = vld [vmem:[%s2870 + $0x14] sm:$0xf]
      %v2877 = vld [vmem:[%s2870 + $0x18] sm:$0xf]
      %v2878 = vld [vmem:[%s2870 + $0x1c] sm:$0xf]
      %v2879 = vld [vmem:[%s2870 + $0x20] sm:$0xf]
      %v2880 = vld [vmem:[%s2870 + $0x24] sm:$0xf]
      %v2881 = vld [vmem:[%s2870 + $0x28] sm:$0xf]
      %v2882 = vld [vmem:[%s2870 + $0x2c] sm:$0xf]
      %v2883 = vld [vmem:[%s2870 + $0x30] sm:$0xf]
      %v2884 = vld [vmem:[%s2870 + $0x34] sm:$0xf]
      %v2885 = vld [vmem:[%s2870 + $0x38] sm:$0xf]
      %v2886 = vld [vmem:[%s2870 + $0x3c] sm:$0xf]
      %v2903 = vunpack.c.l.b16 %v2871
      %v2904 = vunpack.c.l.b16 %v2872
      %v2905 = vunpack.c.l.b16 %v2873
      %v2906 = vunpack.c.l.b16 %v2874
      %v2907 = vunpack.c.l.b16 %v2875
      %v2908 = vunpack.c.l.b16 %v2876
      %v2909 = vunpack.c.l.b16 %v2877
      %v2910 = vunpack.c.l.b16 %v2878
      %v2911 = vunpack.c.l.b16 %v2879
      %v2912 = vunpack.c.l.b16 %v2880
      %v2913 = vunpack.c.l.b16 %v2881
      %v2914 = vunpack.c.l.b16 %v2882
      %v2915 = vunpack.c.l.b16 %v2883
      %v2916 = vunpack.c.l.b16 %v2884
      %v2917 = vunpack.c.l.b16 %v2885
      %v2918 = vunpack.c.l.b16 %v2886
      %v2919 = vpack.c.b16 %v2904, %v2903
      %v2920 = vpack.c.b16 %v2906, %v2905
      %v2921 = vpack.c.b16 %v2908, %v2907
      %v2922 = vpack.c.b16 %v2910, %v2909
      %v2923 = vpack.c.b16 %v2912, %v2911
      %v2924 = vpack.c.b16 %v2914, %v2913
      %v2925 = vpack.c.b16 %v2916, %v2915
      %v2926 = vpack.c.b16 %v2918, %v2917
      %2935 = vmatpush.bf16.msra.mxu0 %v2926
      %2936 = vmatpush.bf16.msra.mxu0 %v2925
      %2937 = vmatpush.bf16.msra.mxu0 %v2924
      %2938 = vmatpush.bf16.msra.mxu0 %v2923
      %2939 = vmatpush.bf16.msra.mxu0 %v2922
      %2940 = vmatpush.bf16.msra.mxu0 %v2921
      %2941 = vmatpush.bf16.msra.mxu0 %v2920
      %2942 = vmatpush.bf16.msra.mxu0 %v2919
      %2943 = vmatmul.bf16.gmra.mxu0 %v2854
      %v2944 = vpop.f32.mrf.mxu0
      %v2945 = vadd.f32 0.0, %v2944
      %v2946 = vpop.f32.mrf.mxu0
      %v2947 = vadd.f32 0.0, %v2946
      %2948 = vmatmul.bf16.gmra.mxu0 %v2855
      %v2949 = vpop.f32.mrf.mxu0
      %v2950 = vadd.f32 0.0, %v2949
      %v2951 = vpop.f32.mrf.mxu0
      %v2952 = vadd.f32 0.0, %v2951
      %2953 = vmatmul.bf16.gmra.mxu0 %v2856
      %v2954 = vpop.f32.mrf.mxu0
      %v2955 = vadd.f32 0.0, %v2954
      %v2956 = vpop.f32.mrf.mxu0
      %v2957 = vadd.f32 0.0, %v2956
      %2958 = vmatmul.bf16.gmra.mxu0 %v2857
      %v2959 = vpop.f32.mrf.mxu0
      %v2960 = vadd.f32 0.0, %v2959
      %v2961 = vpop.f32.mrf.mxu0
      %v2962 = vadd.f32 0.0, %v2961
      %2963 = vmatmul.bf16.gmra.mxu0 %v2858
      %v2964 = vpop.f32.mrf.mxu0
      %v2965 = vadd.f32 0.0, %v2964
      %v2966 = vpop.f32.mrf.mxu0
      %v2967 = vadd.f32 0.0, %v2966
      %2968 = vmatmul.bf16.gmra.mxu0 %v2859
      %v2969 = vpop.f32.mrf.mxu0
      %v2970 = vadd.f32 0.0, %v2969
      %v2971 = vpop.f32.mrf.mxu0
      %v2972 = vadd.f32 0.0, %v2971
      %2973 = vmatmul.bf16.gmra.mxu0 %v2860
      %v2974 = vpop.f32.mrf.mxu0
      %v2975 = vadd.f32 0.0, %v2974
      %v2976 = vpop.f32.mrf.mxu0
      %v2977 = vadd.f32 0.0, %v2976
      %2978 = vmatmul.bf16.gmra.mxu0 %v2861
      %v2979 = vpop.f32.mrf.mxu0
      %v2980 = vadd.f32 0.0, %v2979
      %v2981 = vpop.f32.mrf.mxu0
      %v2982 = vadd.f32 0.0, %v2981
      %2983 = vmatmul.bf16.gmra.mxu0 %v2862
      %v2984 = vpop.f32.mrf.mxu0
      %v2985 = vadd.f32 0.0, %v2984
      %v2986 = vpop.f32.mrf.mxu0
      %v2987 = vadd.f32 0.0, %v2986
      %2988 = vmatmul.bf16.gmra.mxu0 %v2863
      %v2989 = vpop.f32.mrf.mxu0
      %v2990 = vadd.f32 0.0, %v2989
      %v2991 = vpop.f32.mrf.mxu0
      %v2992 = vadd.f32 0.0, %v2991
      %2993 = vmatmul.bf16.gmra.mxu0 %v2864
      %v2994 = vpop.f32.mrf.mxu0
      %v2995 = vadd.f32 0.0, %v2994
      %v2996 = vpop.f32.mrf.mxu0
      %v2997 = vadd.f32 0.0, %v2996
      %2998 = vmatmul.bf16.gmra.mxu0 %v2865
      %v2999 = vpop.f32.mrf.mxu0
      %v3000 = vadd.f32 0.0, %v2999
      %v3001 = vpop.f32.mrf.mxu0
      %v3002 = vadd.f32 0.0, %v3001
      %3003 = vmatmul.bf16.gmra.mxu0 %v2866
      %v3004 = vpop.f32.mrf.mxu0
      %v3005 = vadd.f32 0.0, %v3004
      %v3006 = vpop.f32.mrf.mxu0
      %v3007 = vadd.f32 0.0, %v3006
      %3008 = vmatmul.bf16.gmra.mxu0 %v2867
      %v3009 = vpop.f32.mrf.mxu0
      %v3010 = vadd.f32 0.0, %v3009
      %v3011 = vpop.f32.mrf.mxu0
      %v3012 = vadd.f32 0.0, %v3011
      %3013 = vmatmul.bf16.gmra.mxu0 %v2868
      %v3014 = vpop.f32.mrf.mxu0
      %v3015 = vadd.f32 0.0, %v3014
      %v3016 = vpop.f32.mrf.mxu0
      %v3017 = vadd.f32 0.0, %v3016
      %3018 = vmatmul.bf16.gmra.mxu0 %v2869
      %v3019 = vpop.f32.mrf.mxu0
      %v3020 = vadd.f32 0.0, %v3019
      %v3021 = vpop.f32.mrf.mxu0
      %v3022 = vadd.f32 0.0, %v3021
      %3023 = vdwg.mxu0
      %v3024 = vadd.f32 %v2822, %v2945
      %v3025 = vadd.f32 %v2823, %v2947
      %v3026 = vadd.f32 %v2824, %v2950
      %v3027 = vadd.f32 %v2825, %v2952
      %v3028 = vadd.f32 %v2826, %v2955
      %v3029 = vadd.f32 %v2827, %v2957
      %v3030 = vadd.f32 %v2828, %v2960
      %v3031 = vadd.f32 %v2829, %v2962
      %v3032 = vadd.f32 %v2830, %v2965
      %v3033 = vadd.f32 %v2831, %v2967
      %v3034 = vadd.f32 %v2832, %v2970
      %v3035 = vadd.f32 %v2833, %v2972
      %v3036 = vadd.f32 %v2834, %v2975
      %v3037 = vadd.f32 %v2835, %v2977
      %v3038 = vadd.f32 %v2836, %v2980
      %v3039 = vadd.f32 %v2837, %v2982
      %v3040 = vadd.f32 %v2838, %v2985
      %v3041 = vadd.f32 %v2839, %v2987
      %v3042 = vadd.f32 %v2840, %v2990
      %v3043 = vadd.f32 %v2841, %v2992
      %v3044 = vadd.f32 %v2842, %v2995
      %v3045 = vadd.f32 %v2843, %v2997
      %v3046 = vadd.f32 %v2844, %v3000
      %v3047 = vadd.f32 %v2845, %v3002
      %v3048 = vadd.f32 %v2846, %v3005
      %v3049 = vadd.f32 %v2847, %v3007
      %v3050 = vadd.f32 %v2848, %v3010
      %v3051 = vadd.f32 %v2849, %v3012
      %v3052 = vadd.f32 %v2850, %v3015
      %v3053 = vadd.f32 %v2851, %v3017
      %v3054 = vadd.f32 %v2852, %v3020
      %v3055 = vadd.f32 %v2853, %v3022
      %v3056 = vrot.slane %v2524, 1
      %v3057 = vrot.slane %v2525, 1
      %v3058 = vrot.slane %v2526, 1
      %v3059 = vrot.slane %v2527, 1
      %v3060 = vrot.slane %v2528, 1
      %v3061 = vrot.slane %v2529, 1
      %v3062 = vrot.slane %v2530, 1
      %v3063 = vrot.slane %v2531, 1
      %v3064 = vrot.slane %v2532, 1
      %v3065 = vrot.slane %v2533, 1
      %v3066 = vrot.slane %v2534, 1
      %v3067 = vrot.slane %v2535, 1
      %v3068 = vrot.slane %v2536, 1
      %v3069 = vrot.slane %v2537, 1
      %v3070 = vrot.slane %v2538, 1
      %v3071 = vrot.slane %v2539, 1
      %v3072 = vrot.slane %v2540, 1
      %v3073 = vrot.slane %v2541, 1
      %v3074 = vrot.slane %v2542, 1
      %v3075 = vrot.slane %v2543, 1
      %v3076 = vrot.slane %v2544, 1
      %v3077 = vrot.slane %v2545, 1
      %v3078 = vrot.slane %v2546, 1
      %v3079 = vrot.slane %v2547, 1
      %v3080 = vrot.slane %v2548, 1
      %v3081 = vrot.slane %v2549, 1
      %v3082 = vrot.slane %v2550, 1
      %v3083 = vrot.slane %v2551, 1
      %v3084 = vrot.slane %v2552, 1
      %v3085 = vrot.slane %v2553, 1
      %v3086 = vrot.slane %v2554, 1
      %v3087 = vrot.slane %v2555, 1
      %v3088 = vsel %vm1357, %v3086, %v3087
      %v3089 = vsel %vm1357, %v3085, %v3086
      %v3090 = vsel %vm1357, %v3084, %v3085
      %v3091 = vsel %vm1357, %v3083, %v3084
      %v3092 = vsel %vm1357, %v3082, %v3083
      %v3093 = vsel %vm1357, %v3081, %v3082
      %v3094 = vsel %vm1357, %v3080, %v3081
      %v3095 = vsel %vm1357, %v3079, %v3080
      %v3096 = vsel %vm1357, %v3078, %v3079
      %v3097 = vsel %vm1357, %v3077, %v3078
      %v3098 = vsel %vm1357, %v3076, %v3077
      %v3099 = vsel %vm1357, %v3075, %v3076
      %v3100 = vsel %vm1357, %v3074, %v3075
      %v3101 = vsel %vm1357, %v3073, %v3074
      %v3102 = vsel %vm1357, %v3072, %v3073
      %v3103 = vsel %vm1357, %v3071, %v3072
      %v3104 = vsel %vm1357, %v3070, %v3071
      %v3105 = vsel %vm1357, %v3069, %v3070
      %v3106 = vsel %vm1357, %v3068, %v3069
      %v3107 = vsel %vm1357, %v3067, %v3068
      %v3108 = vsel %vm1357, %v3066, %v3067
      %v3109 = vsel %vm1357, %v3065, %v3066
      %v3110 = vsel %vm1357, %v3064, %v3065
      %v3111 = vsel %vm1357, %v3063, %v3064
      %v3112 = vsel %vm1357, %v3062, %v3063
      %v3113 = vsel %vm1357, %v3061, %v3062
      %v3114 = vsel %vm1357, %v3060, %v3061
      %v3115 = vsel %vm1357, %v3059, %v3060
      %v3116 = vsel %vm1357, %v3058, %v3059
      %v3117 = vsel %vm1357, %v3057, %v3058
      %v3118 = vsel %vm1357, %v3056, %v3057
      %v3119 = vsel %vm1357, %v3087, %v3056
      %v3120 = vsel %vm1422, %v3118, 0.0
      %v3121 = vsel %vm1423, %v3117, 0.0
      %v3122 = vsel %vm1424, %v3116, 0.0
      %v3123 = vsel %vm1425, %v3115, 0.0
      %v3124 = vsel %vm1426, %v3114, 0.0
      %v3125 = vsel %vm1427, %v3113, 0.0
      %v3126 = vsel %vm1428, %v3112, 0.0
      %v3127 = vsel %vm1429, %v3111, 0.0
      %v3128 = vsel %vm1430, %v3110, 0.0
      %v3129 = vsel %vm1431, %v3109, 0.0
      %v3130 = vsel %vm1432, %v3108, 0.0
      %v3131 = vsel %vm1433, %v3107, 0.0
      %v3132 = vsel %vm1434, %v3106, 0.0
      %v3133 = vsel %vm1435, %v3105, 0.0
      %v3134 = vsel %vm1436, %v3104, 0.0
      %v3135 = vsel %vm1437, %v3103, 0.0
      %v3136 = vsel %vm1438, %v3102, 0.0
      %v3137 = vsel %vm1439, %v3101, 0.0
      %v3138 = vsel %vm1440, %v3100, 0.0
      %v3139 = vsel %vm1441, %v3099, 0.0
      %v3140 = vsel %vm1442, %v3098, 0.0
      %v3141 = vsel %vm1443, %v3097, 0.0
      %v3142 = vsel %vm1444, %v3096, 0.0
      %v3143 = vsel %vm1445, %v3095, 0.0
      %v3144 = vsel %vm1446, %v3094, 0.0
      %v3145 = vsel %vm1447, %v3093, 0.0
      %v3146 = vsel %vm1448, %v3092, 0.0
      %v3147 = vsel %vm1449, %v3091, 0.0
      %v3148 = vsel %vm1450, %v3090, 0.0
      %v3149 = vsel %vm1451, %v3089, 0.0
      %v3150 = vsel %vm1452, %v3088, 0.0
      %v3151 = vsel %vm1453, %v3119, 0.0
      %v3152 = vpack.c.bf16 %v3121, %v3120
      %v3153 = vpack.c.bf16 %v3123, %v3122
      %v3154 = vpack.c.bf16 %v3125, %v3124
      %v3155 = vpack.c.bf16 %v3127, %v3126
      %v3156 = vpack.c.bf16 %v3129, %v3128
      %v3157 = vpack.c.bf16 %v3131, %v3130
      %v3158 = vpack.c.bf16 %v3133, %v3132
      %v3159 = vpack.c.bf16 %v3135, %v3134
      %v3160 = vpack.c.bf16 %v3137, %v3136
      %v3161 = vpack.c.bf16 %v3139, %v3138
      %v3162 = vpack.c.bf16 %v3141, %v3140
      %v3163 = vpack.c.bf16 %v3143, %v3142
      %v3164 = vpack.c.bf16 %v3145, %v3144
      %v3165 = vpack.c.bf16 %v3147, %v3146
      %v3166 = vpack.c.bf16 %v3149, %v3148
      %v3167 = vpack.c.bf16 %v3151, %v3150
      %s3168 = scalar_lea.vmem %s261, 512
      %v3169 = vld [vmem:[%s3168] sm:$0xf]
      %v3170 = vld [vmem:[%s3168 + $0x4] sm:$0xf]
      %v3171 = vld [vmem:[%s3168 + $0x8] sm:$0xf]
      %v3172 = vld [vmem:[%s3168 + $0xc] sm:$0xf]
      %v3173 = vld [vmem:[%s3168 + $0x10] sm:$0xf]
      %v3174 = vld [vmem:[%s3168 + $0x14] sm:$0xf]
      %v3175 = vld [vmem:[%s3168 + $0x18] sm:$0xf]
      %v3176 = vld [vmem:[%s3168 + $0x1c] sm:$0xf]
      %v3177 = vld [vmem:[%s3168 + $0x20] sm:$0xf]
      %v3178 = vld [vmem:[%s3168 + $0x24] sm:$0xf]
      %v3179 = vld [vmem:[%s3168 + $0x28] sm:$0xf]
      %v3180 = vld [vmem:[%s3168 + $0x2c] sm:$0xf]
      %v3181 = vld [vmem:[%s3168 + $0x30] sm:$0xf]
      %v3182 = vld [vmem:[%s3168 + $0x34] sm:$0xf]
      %v3183 = vld [vmem:[%s3168 + $0x38] sm:$0xf]
      %v3184 = vld [vmem:[%s3168 + $0x3c] sm:$0xf]
      %v3201 = vunpack.c.l.b16 %v3169
      %v3202 = vunpack.c.l.b16 %v3170
      %v3203 = vunpack.c.l.b16 %v3171
      %v3204 = vunpack.c.l.b16 %v3172
      %v3205 = vunpack.c.l.b16 %v3173
      %v3206 = vunpack.c.l.b16 %v3174
      %v3207 = vunpack.c.l.b16 %v3175
      %v3208 = vunpack.c.l.b16 %v3176
      %v3209 = vunpack.c.l.b16 %v3177
      %v3210 = vunpack.c.l.b16 %v3178
      %v3211 = vunpack.c.l.b16 %v3179
      %v3212 = vunpack.c.l.b16 %v3180
      %v3213 = vunpack.c.l.b16 %v3181
      %v3214 = vunpack.c.l.b16 %v3182
      %v3215 = vunpack.c.l.b16 %v3183
      %v3216 = vunpack.c.l.b16 %v3184
      %v3217 = vpack.c.b16 %v3202, %v3201
      %v3218 = vpack.c.b16 %v3204, %v3203
      %v3219 = vpack.c.b16 %v3206, %v3205
      %v3220 = vpack.c.b16 %v3208, %v3207
      %v3221 = vpack.c.b16 %v3210, %v3209
      %v3222 = vpack.c.b16 %v3212, %v3211
      %v3223 = vpack.c.b16 %v3214, %v3213
      %v3224 = vpack.c.b16 %v3216, %v3215
      %3233 = vmatpush.bf16.msra.mxu0 %v3224
      %3234 = vmatpush.bf16.msra.mxu0 %v3223
      %3235 = vmatpush.bf16.msra.mxu0 %v3222
      %3236 = vmatpush.bf16.msra.mxu0 %v3221
      %3237 = vmatpush.bf16.msra.mxu0 %v3220
      %3238 = vmatpush.bf16.msra.mxu0 %v3219
      %3239 = vmatpush.bf16.msra.mxu0 %v3218
      %3240 = vmatpush.bf16.msra.mxu0 %v3217
      %3241 = vmatmul.bf16.gmra.mxu0 %v3152
      %v3242 = vpop.f32.mrf.mxu0
      %v3243 = vadd.f32 0.0, %v3242
      %v3244 = vpop.f32.mrf.mxu0
      %v3245 = vadd.f32 0.0, %v3244
      %3246 = vmatmul.bf16.gmra.mxu0 %v3153
      %v3247 = vpop.f32.mrf.mxu0
      %v3248 = vadd.f32 0.0, %v3247
      %v3249 = vpop.f32.mrf.mxu0
      %v3250 = vadd.f32 0.0, %v3249
      %3251 = vmatmul.bf16.gmra.mxu0 %v3154
      %v3252 = vpop.f32.mrf.mxu0
      %v3253 = vadd.f32 0.0, %v3252
      %v3254 = vpop.f32.mrf.mxu0
      %v3255 = vadd.f32 0.0, %v3254
      %3256 = vmatmul.bf16.gmra.mxu0 %v3155
      %v3257 = vpop.f32.mrf.mxu0
      %v3258 = vadd.f32 0.0, %v3257
      %v3259 = vpop.f32.mrf.mxu0
      %v3260 = vadd.f32 0.0, %v3259
      %3261 = vmatmul.bf16.gmra.mxu0 %v3156
      %v3262 = vpop.f32.mrf.mxu0
      %v3263 = vadd.f32 0.0, %v3262
      %v3264 = vpop.f32.mrf.mxu0
      %v3265 = vadd.f32 0.0, %v3264
      %3266 = vmatmul.bf16.gmra.mxu0 %v3157
      %v3267 = vpop.f32.mrf.mxu0
      %v3268 = vadd.f32 0.0, %v3267
      %v3269 = vpop.f32.mrf.mxu0
      %v3270 = vadd.f32 0.0, %v3269
      %3271 = vmatmul.bf16.gmra.mxu0 %v3158
      %v3272 = vpop.f32.mrf.mxu0
      %v3273 = vadd.f32 0.0, %v3272
      %v3274 = vpop.f32.mrf.mxu0
      %v3275 = vadd.f32 0.0, %v3274
      %3276 = vmatmul.bf16.gmra.mxu0 %v3159
      %v3277 = vpop.f32.mrf.mxu0
      %v3278 = vadd.f32 0.0, %v3277
      %v3279 = vpop.f32.mrf.mxu0
      %v3280 = vadd.f32 0.0, %v3279
      %3281 = vmatmul.bf16.gmra.mxu0 %v3160
      %v3282 = vpop.f32.mrf.mxu0
      %v3283 = vadd.f32 0.0, %v3282
      %v3284 = vpop.f32.mrf.mxu0
      %v3285 = vadd.f32 0.0, %v3284
      %3286 = vmatmul.bf16.gmra.mxu0 %v3161
      %v3287 = vpop.f32.mrf.mxu0
      %v3288 = vadd.f32 0.0, %v3287
      %v3289 = vpop.f32.mrf.mxu0
      %v3290 = vadd.f32 0.0, %v3289
      %3291 = vmatmul.bf16.gmra.mxu0 %v3162
      %v3292 = vpop.f32.mrf.mxu0
      %v3293 = vadd.f32 0.0, %v3292
      %v3294 = vpop.f32.mrf.mxu0
      %v3295 = vadd.f32 0.0, %v3294
      %3296 = vmatmul.bf16.gmra.mxu0 %v3163
      %v3297 = vpop.f32.mrf.mxu0
      %v3298 = vadd.f32 0.0, %v3297
      %v3299 = vpop.f32.mrf.mxu0
      %v3300 = vadd.f32 0.0, %v3299
      %3301 = vmatmul.bf16.gmra.mxu0 %v3164
      %v3302 = vpop.f32.mrf.mxu0
      %v3303 = vadd.f32 0.0, %v3302
      %v3304 = vpop.f32.mrf.mxu0
      %v3305 = vadd.f32 0.0, %v3304
      %3306 = vmatmul.bf16.gmra.mxu0 %v3165
      %v3307 = vpop.f32.mrf.mxu0
      %v3308 = vadd.f32 0.0, %v3307
      %v3309 = vpop.f32.mrf.mxu0
      %v3310 = vadd.f32 0.0, %v3309
      %3311 = vmatmul.bf16.gmra.mxu0 %v3166
      %v3312 = vpop.f32.mrf.mxu0
      %v3313 = vadd.f32 0.0, %v3312
      %v3314 = vpop.f32.mrf.mxu0
      %v3315 = vadd.f32 0.0, %v3314
      %3316 = vmatmul.bf16.gmra.mxu0 %v3167
      %v3317 = vpop.f32.mrf.mxu0
      %v3318 = vadd.f32 0.0, %v3317
      %v3319 = vpop.f32.mrf.mxu0
      %v3320 = vadd.f32 0.0, %v3319
      %3321 = vdwg.mxu0
      %v3322 = vadd.f32 %v3024, %v3243
      %v3323 = vadd.f32 %v3025, %v3245
      %v3324 = vadd.f32 %v3026, %v3248
      %v3325 = vadd.f32 %v3027, %v3250
      %v3326 = vadd.f32 %v3028, %v3253
      %v3327 = vadd.f32 %v3029, %v3255
      %v3328 = vadd.f32 %v3030, %v3258
      %v3329 = vadd.f32 %v3031, %v3260
      %v3330 = vadd.f32 %v3032, %v3263
      %v3331 = vadd.f32 %v3033, %v3265
      %v3332 = vadd.f32 %v3034, %v3268
      %v3333 = vadd.f32 %v3035, %v3270
      %v3334 = vadd.f32 %v3036, %v3273
      %v3335 = vadd.f32 %v3037, %v3275
      %v3336 = vadd.f32 %v3038, %v3278
      %v3337 = vadd.f32 %v3039, %v3280
      %v3338 = vadd.f32 %v3040, %v3283
      %v3339 = vadd.f32 %v3041, %v3285
      %v3340 = vadd.f32 %v3042, %v3288
      %v3341 = vadd.f32 %v3043, %v3290
      %v3342 = vadd.f32 %v3044, %v3293
      %v3343 = vadd.f32 %v3045, %v3295
      %v3344 = vadd.f32 %v3046, %v3298
      %v3345 = vadd.f32 %v3047, %v3300
      %v3346 = vadd.f32 %v3048, %v3303
      %v3347 = vadd.f32 %v3049, %v3305
      %v3348 = vadd.f32 %v3050, %v3308
      %v3349 = vadd.f32 %v3051, %v3310
      %v3350 = vadd.f32 %v3052, %v3313
      %v3351 = vadd.f32 %v3053, %v3315
      %v3352 = vadd.f32 %v3054, %v3318
      %v3353 = vadd.f32 %v3055, %v3320
      %v3354 = vld [vmem:[%s264] sm:$0x1]
      %v3356 = vperm.slane %v3354, 0
      %v3358 = vmul.f32 %v3322, %v3356
      %v3359 = vmul.f32 %v3323, %v3356
      %v3360 = vmul.f32 %v3324, %v3356
      %v3361 = vmul.f32 %v3325, %v3356
      %v3362 = vmul.f32 %v3326, %v3356
      %v3363 = vmul.f32 %v3327, %v3356
      %v3364 = vmul.f32 %v3328, %v3356
      %v3365 = vmul.f32 %v3329, %v3356
      %v3366 = vmul.f32 %v3330, %v3356
      %v3367 = vmul.f32 %v3331, %v3356
      %v3368 = vmul.f32 %v3332, %v3356
      %v3369 = vmul.f32 %v3333, %v3356
      %v3370 = vmul.f32 %v3334, %v3356
      %v3371 = vmul.f32 %v3335, %v3356
      %v3372 = vmul.f32 %v3336, %v3356
      %v3373 = vmul.f32 %v3337, %v3356
      %v3374 = vmul.f32 %v3338, %v3356
      %v3375 = vmul.f32 %v3339, %v3356
      %v3376 = vmul.f32 %v3340, %v3356
      %v3377 = vmul.f32 %v3341, %v3356
      %v3378 = vmul.f32 %v3342, %v3356
      %v3379 = vmul.f32 %v3343, %v3356
      %v3380 = vmul.f32 %v3344, %v3356
      %v3381 = vmul.f32 %v3345, %v3356
      %v3382 = vmul.f32 %v3346, %v3356
      %v3383 = vmul.f32 %v3347, %v3356
      %v3384 = vmul.f32 %v3348, %v3356
      %v3385 = vmul.f32 %v3349, %v3356
      %v3386 = vmul.f32 %v3350, %v3356
      %v3387 = vmul.f32 %v3351, %v3356
      %v3388 = vmul.f32 %v3352, %v3356
      %v3389 = vmul.f32 %v3353, %v3356
      %v3390 = vld [vmem:[%s267] sm:$0x1]
      %v3392 = vperm.slane %v3390, 0
      %v3394 = vadd.f32 %v3358, %v3392
      %v3395 = vadd.f32 %v3359, %v3392
      %v3396 = vadd.f32 %v3360, %v3392
      %v3397 = vadd.f32 %v3361, %v3392
      %v3398 = vadd.f32 %v3362, %v3392
      %v3399 = vadd.f32 %v3363, %v3392
      %v3400 = vadd.f32 %v3364, %v3392
      %v3401 = vadd.f32 %v3365, %v3392
      %v3402 = vadd.f32 %v3366, %v3392
      %v3403 = vadd.f32 %v3367, %v3392
      %v3404 = vadd.f32 %v3368, %v3392
      %v3405 = vadd.f32 %v3369, %v3392
      %v3406 = vadd.f32 %v3370, %v3392
      %v3407 = vadd.f32 %v3371, %v3392
      %v3408 = vadd.f32 %v3372, %v3392
      %v3409 = vadd.f32 %v3373, %v3392
      %v3410 = vadd.f32 %v3374, %v3392
      %v3411 = vadd.f32 %v3375, %v3392
      %v3412 = vadd.f32 %v3376, %v3392
      %v3413 = vadd.f32 %v3377, %v3392
      %v3414 = vadd.f32 %v3378, %v3392
      %v3415 = vadd.f32 %v3379, %v3392
      %v3416 = vadd.f32 %v3380, %v3392
      %v3417 = vadd.f32 %v3381, %v3392
      %v3418 = vadd.f32 %v3382, %v3392
      %v3419 = vadd.f32 %v3383, %v3392
      %v3420 = vadd.f32 %v3384, %v3392
      %v3421 = vadd.f32 %v3385, %v3392
      %v3422 = vadd.f32 %v3386, %v3392
      %v3423 = vadd.f32 %v3387, %v3392
      %v3424 = vadd.f32 %v3388, %v3392
      %v3425 = vadd.f32 %v3389, %v3392
      %v3426 = vmax.f32 %v3394, 0.0
      %v3427 = vmax.f32 %v3395, 0.0
      %v3428 = vmax.f32 %v3396, 0.0
      %v3429 = vmax.f32 %v3397, 0.0
      %v3430 = vmax.f32 %v3398, 0.0
      %v3431 = vmax.f32 %v3399, 0.0
      %v3432 = vmax.f32 %v3400, 0.0
      %v3433 = vmax.f32 %v3401, 0.0
      %v3434 = vmax.f32 %v3402, 0.0
      %v3435 = vmax.f32 %v3403, 0.0
      %v3436 = vmax.f32 %v3404, 0.0
      %v3437 = vmax.f32 %v3405, 0.0
      %v3438 = vmax.f32 %v3406, 0.0
      %v3439 = vmax.f32 %v3407, 0.0
      %v3440 = vmax.f32 %v3408, 0.0
      %v3441 = vmax.f32 %v3409, 0.0
      %v3442 = vmax.f32 %v3410, 0.0
      %v3443 = vmax.f32 %v3411, 0.0
      %v3444 = vmax.f32 %v3412, 0.0
      %v3445 = vmax.f32 %v3413, 0.0
      %v3446 = vmax.f32 %v3414, 0.0
      %v3447 = vmax.f32 %v3415, 0.0
      %v3448 = vmax.f32 %v3416, 0.0
      %v3449 = vmax.f32 %v3417, 0.0
      %v3450 = vmax.f32 %v3418, 0.0
      %v3451 = vmax.f32 %v3419, 0.0
      %v3452 = vmax.f32 %v3420, 0.0
      %v3453 = vmax.f32 %v3421, 0.0
      %v3454 = vmax.f32 %v3422, 0.0
      %v3455 = vmax.f32 %v3423, 0.0
      %v3456 = vmax.f32 %v3424, 0.0
      %v3457 = vmax.f32 %v3425, 0.0
      %v3458 = vpack.c.bf16 %v3426, %v3426
      %v3459 = vpack.c.bf16 %v3427, %v3427
      %v3460 = vpack.c.bf16 %v3428, %v3428
      %v3461 = vpack.c.bf16 %v3429, %v3429
      %v3462 = vpack.c.bf16 %v3430, %v3430
      %v3463 = vpack.c.bf16 %v3431, %v3431
      %v3464 = vpack.c.bf16 %v3432, %v3432
      %v3465 = vpack.c.bf16 %v3433, %v3433
      %v3466 = vpack.c.bf16 %v3434, %v3434
      %v3467 = vpack.c.bf16 %v3435, %v3435
      %v3468 = vpack.c.bf16 %v3436, %v3436
      %v3469 = vpack.c.bf16 %v3437, %v3437
      %v3470 = vpack.c.bf16 %v3438, %v3438
      %v3471 = vpack.c.bf16 %v3439, %v3439
      %v3472 = vpack.c.bf16 %v3440, %v3440
      %v3473 = vpack.c.bf16 %v3441, %v3441
      %v3474 = vpack.c.bf16 %v3442, %v3442
      %v3475 = vpack.c.bf16 %v3443, %v3443
      %v3476 = vpack.c.bf16 %v3444, %v3444
      %v3477 = vpack.c.bf16 %v3445, %v3445
      %v3478 = vpack.c.bf16 %v3446, %v3446
      %v3479 = vpack.c.bf16 %v3447, %v3447
      %v3480 = vpack.c.bf16 %v3448, %v3448
      %v3481 = vpack.c.bf16 %v3449, %v3449
      %v3482 = vpack.c.bf16 %v3450, %v3450
      %v3483 = vpack.c.bf16 %v3451, %v3451
      %v3484 = vpack.c.bf16 %v3452, %v3452
      %v3485 = vpack.c.bf16 %v3453, %v3453
      %v3486 = vpack.c.bf16 %v3454, %v3454
      %v3487 = vpack.c.bf16 %v3455, %v3455
      %v3488 = vpack.c.bf16 %v3456, %v3456
      %v3489 = vpack.c.bf16 %v3457, %v3457
      %3490 = vst [vmem:[%s279] sm:$0xf] %v3458
      %3491 = vst [vmem:[%s279 + $0x4] sm:$0xf] %v3459
      %3492 = vst [vmem:[%s279 + $0x8] sm:$0xf] %v3460
      %3493 = vst [vmem:[%s279 + $0xc] sm:$0xf] %v3461
      %3494 = vst [vmem:[%s279 + $0x10] sm:$0xf] %v3462
      %3495 = vst [vmem:[%s279 + $0x14] sm:$0xf] %v3463
      %3496 = vst [vmem:[%s279 + $0x18] sm:$0xf] %v3464
      %3497 = vst [vmem:[%s279 + $0x1c] sm:$0xf] %v3465
      %3498 = vst [vmem:[%s279 + $0x20] sm:$0xf] %v3466
      %3499 = vst [vmem:[%s279 + $0x24] sm:$0xf] %v3467
      %3500 = vst [vmem:[%s279 + $0x28] sm:$0xf] %v3468
      %3501 = vst [vmem:[%s279 + $0x2c] sm:$0xf] %v3469
      %3502 = vst [vmem:[%s279 + $0x30] sm:$0xf] %v3470
      %3503 = vst [vmem:[%s279 + $0x34] sm:$0xf] %v3471
      %3504 = vst [vmem:[%s279 + $0x38] sm:$0xf] %v3472
      %3505 = vst [vmem:[%s279 + $0x3c] sm:$0xf] %v3473
      %3506 = vst [vmem:[%s279 + $0x40] sm:$0xf] %v3474
      %3507 = vst [vmem:[%s279 + $0x44] sm:$0xf] %v3475
      %3508 = vst [vmem:[%s279 + $0x48] sm:$0xf] %v3476
      %3509 = vst [vmem:[%s279 + $0x4c] sm:$0xf] %v3477
      %3510 = vst [vmem:[%s279 + $0x50] sm:$0xf] %v3478
      %3511 = vst [vmem:[%s279 + $0x54] sm:$0xf] %v3479
      %3512 = vst [vmem:[%s279 + $0x58] sm:$0xf] %v3480
      %3513 = vst [vmem:[%s279 + $0x5c] sm:$0xf] %v3481
      %3514 = vst [vmem:[%s279 + $0x60] sm:$0xf] %v3482
      %3515 = vst [vmem:[%s279 + $0x64] sm:$0xf] %v3483
      %3516 = vst [vmem:[%s279 + $0x68] sm:$0xf] %v3484
      %3517 = vst [vmem:[%s279 + $0x6c] sm:$0xf] %v3485
      %3518 = vst [vmem:[%s279 + $0x70] sm:$0xf] %v3486
      %3519 = vst [vmem:[%s279 + $0x74] sm:$0xf] %v3487
      %3520 = vst [vmem:[%s279 + $0x78] sm:$0xf] %v3488
      %3521 = vst [vmem:[%s279 + $0x7c] sm:$0xf] %v3489
      %s3522 = smul.u32 32, %s21
      %p3523 = scmp.lt.s32.totalorder %s20, 1
      %s3524 = scalar_select %p3523, %s20, 1
      %p3525 = scmp.lt.s32.totalorder %s3522, 31
      %s3526 = scalar_select %p3525, %s3522, 31
      %p3527 = scmp.lt.s32.totalorder %s22, 0
      %s3528 = scalar_select %p3527, %s22, 0
      %s3529 = sadd.s32 %s3528, %s3526
      %s3530 = smul.addr %s3524, 32
      %s3531 = sadd.s32 %s3529, %s3530
      %s3532 = smul.addr %s3531, 4
      %s3533 = scalar_lea.vmem %s4, %s3532
      // Predicated region
      $region48: #{_lambda_.20} parent=35 // pred_check
        %p3534 = pneg %p160
      $region49: #{_lambda_.20} parent=35 // pred_check_branch
        %3536 = sbr.rel (%p3534) target = $region51
      $region50: #{_lambda_.20} parent=35 // pred_region
        %s3537 = smul.u32 32, %s21
      $region51: #{_lambda_.20} parent=35 // pred_fallthru
        _
    $region36: #{_lambda_.20} parent=5 // pred_fallthru
      _
    %p3538 = scmp.le.s32.totalorder 2, %s10
    // Predicated region
    $region52: #{_lambda_.20} parent=5 // pred_check
      %p3539 = pneg %p3538
    $region53: #{_lambda_.20} parent=5 // pred_check_branch
      %3541 = sbr.rel (%p3539) target = $region55
    $region54: #{_lambda_.20} parent=5 // pred_region
      %s3542 = ssub.s32 %s10, 2
      // Predicated region
      $region56: #{_lambda_.20} parent=54 // pred_check
        %p3543 = pneg %p166
      $region57: #{_lambda_.20} parent=54 // pred_check_branch
        %3545 = sbr.rel (%p3543) target = $region59
      $region58: #{_lambda_.20} parent=54 // pred_region
        %s3546 = smul.u32 32, %s24
        %p3547 = scmp.lt.s32.totalorder %s23, 1
        %s3548 = scalar_select %p3547, %s23, 1
        %p3549 = scmp.lt.s32.totalorder %s3546, 31
        %s3550 = scalar_select %p3549, %s3546, 31
        %p3551 = scmp.lt.s32.totalorder %s25, 0
        %s3552 = scalar_select %p3551, %s25, 0
        %s3553 = sadd.s32 %s3552, %s3550
        %s3554 = smul.addr %s3548, 32
        %s3555 = sadd.s32 %s3553, %s3554
        %s3556 = smul.addr %s3555, 4
        %s3557 = scalar_lea.vmem %s4, %s3556
      $region59: #{_lambda_.20} parent=54 // pred_fallthru
        _
    $region55: #{_lambda_.20} parent=5 // pred_fallthru
      _
  $region6: #{_lambda_.20} parent=0 // loop_footer
    %s14 = sadd.s32 1, %s10
  $region7: #{_lambda_.20} parent=0 // loop_footer_branch
    %9 = sbr.rel target = $region3
  $region8: #{_lambda_.20} parent=0 // loop_exit
    _

// kernel: _lambda_.24
$region0: #{_lambda_.24}
  #allocation0 [shape = 'u32[]', space=smem, size = 0x4, offset = 0x4, fixed_abs, tag = 'smem constant byte address 0x4 - core index']
  #allocation1 [shape = 'u32[72,128]{1,0:T(1,128)}', space=vmem, size = 0x9000, scoped, tag = 'internal scratch']
  %s0 = inlined_call_operand.vmem [shape: bf16[128,128], index: 0, kind: input, shape index: {}]
  %s1 = inlined_call_operand.vmem [shape: bf16[128,128], index: 1, kind: input, shape index: {}]
  %s2 = inlined_call_operand.vmem [shape: f32[1,128], index: 2, kind: input, shape index: {}]
  %s3 = inlined_call_operand.vmem [shape: f32[1,128], index: 3, kind: input, shape index: {}]
  %s4 = inlined_call_operand.vmem [shape: bf16[128,128], index: 4, kind: output, shape index: {}]
  %s5 = sld [smem:[#allocation0]]
  $region26: #{_lambda_.24} parent=0
    _
  %s7 = ssub.s32 1, %s5
  %s8 = scalar_select 0, %s7, %s5
  // Predicated region
  $region2: #{_lambda_.24} parent=0 // pred_check
    _
  $region3: #{_lambda_.24} parent=0 // pred_check_branch
    %10 = sbr.rel (0) target = $region5
  $region4: #{_lambda_.24} parent=0 // pred_region
    _
  $region5: #{_lambda_.24} parent=0 // pred_fallthru
    _
  // Predicated region
  $region6: #{_lambda_.24} parent=0 // pred_check
    _
  $region7: #{_lambda_.24} parent=0 // pred_check_branch
    %12 = sbr.rel (0) target = $region9
  $region8: #{_lambda_.24} parent=0 // pred_region
    _
  $region9: #{_lambda_.24} parent=0 // pred_fallthru
    _
  // Predicated region
  $region10: #{_lambda_.24} parent=0 // pred_check
    _
  $region11: #{_lambda_.24} parent=0 // pred_check_branch
    %14 = sbr.rel (0) target = $region13
  $region12: #{_lambda_.24} parent=0 // pred_region
    _
  $region13: #{_lambda_.24} parent=0 // pred_fallthru
    _
  // Predicated region
  $region14: #{_lambda_.24} parent=0 // pred_check
    _
  $region15: #{_lambda_.24} parent=0 // pred_check_branch
    %16 = sbr.rel (0) target = $region17
  $region16: #{_lambda_.24} parent=0 // pred_region
    _
  $region17: #{_lambda_.24} parent=0 // pred_fallthru
    _
  %v17 = vld [vmem:[%s0] sm:$0xf]
  %v18 = vld [vmem:[%s0 + $0x4] sm:$0xf]
  %v19 = vld [vmem:[%s0 + $0x8] sm:$0xf]
  %v20 = vld [vmem:[%s0 + $0xc] sm:$0xf]
  %v21 = vld [vmem:[%s0 + $0x10] sm:$0xf]
  %v22 = vld [vmem:[%s0 + $0x14] sm:$0xf]
  %v23 = vld [vmem:[%s0 + $0x18] sm:$0xf]
  %v24 = vld [vmem:[%s0 + $0x1c] sm:$0xf]
  %v25 = vld [vmem:[%s0 + $0x20] sm:$0xf]
  %v26 = vld [vmem:[%s0 + $0x24] sm:$0xf]
  %v27 = vld [vmem:[%s0 + $0x28] sm:$0xf]
  %v28 = vld [vmem:[%s0 + $0x2c] sm:$0xf]
  %v29 = vld [vmem:[%s0 + $0x30] sm:$0xf]
  %v30 = vld [vmem:[%s0 + $0x34] sm:$0xf]
  %v31 = vld [vmem:[%s0 + $0x38] sm:$0xf]
  %v32 = vld [vmem:[%s0 + $0x3c] sm:$0xf]
  %v33 = vld [vmem:[%s1] sm:$0xf]
  %v34 = vld [vmem:[%s1 + $0x4] sm:$0xf]
  %v35 = vld [vmem:[%s1 + $0x8] sm:$0xf]
  %v36 = vld [vmem:[%s1 + $0xc] sm:$0xf]
  %v37 = vld [vmem:[%s1 + $0x10] sm:$0xf]
  %v38 = vld [vmem:[%s1 + $0x14] sm:$0xf]
  %v39 = vld [vmem:[%s1 + $0x18] sm:$0xf]
  %v40 = vld [vmem:[%s1 + $0x1c] sm:$0xf]
  %v41 = vld [vmem:[%s1 + $0x20] sm:$0xf]
  %v42 = vld [vmem:[%s1 + $0x24] sm:$0xf]
  %v43 = vld [vmem:[%s1 + $0x28] sm:$0xf]
  %v44 = vld [vmem:[%s1 + $0x2c] sm:$0xf]
  %v45 = vld [vmem:[%s1 + $0x30] sm:$0xf]
  %v46 = vld [vmem:[%s1 + $0x34] sm:$0xf]
  %v47 = vld [vmem:[%s1 + $0x38] sm:$0xf]
  %v48 = vld [vmem:[%s1 + $0x3c] sm:$0xf]
  %v65 = vunpack.c.l.b16 %v17
  %v66 = vunpack.c.l.b16 %v18
  %v67 = vunpack.c.l.b16 %v19
  %v68 = vunpack.c.l.b16 %v20
  %v69 = vunpack.c.l.b16 %v21
  %v70 = vunpack.c.l.b16 %v22
  %v71 = vunpack.c.l.b16 %v23
  %v72 = vunpack.c.l.b16 %v24
  %v73 = vunpack.c.l.b16 %v25
  %v74 = vunpack.c.l.b16 %v26
  %v75 = vunpack.c.l.b16 %v27
  %v76 = vunpack.c.l.b16 %v28
  %v77 = vunpack.c.l.b16 %v29
  %v78 = vunpack.c.l.b16 %v30
  %v79 = vunpack.c.l.b16 %v31
  %v80 = vunpack.c.l.b16 %v32
  %v81 = vpack.c.b16 %v66, %v65
  %v82 = vpack.c.b16 %v68, %v67
  %v83 = vpack.c.b16 %v70, %v69
  %v84 = vpack.c.b16 %v72, %v71
  %v85 = vpack.c.b16 %v74, %v73
  %v86 = vpack.c.b16 %v76, %v75
  %v87 = vpack.c.b16 %v78, %v77
  %v88 = vpack.c.b16 %v80, %v79
  %v113 = vunpack.c.l.b16 %v33
  %v114 = vunpack.c.l.b16 %v34
  %v115 = vunpack.c.l.b16 %v35
  %v116 = vunpack.c.l.b16 %v36
  %v117 = vunpack.c.l.b16 %v37
  %v118 = vunpack.c.l.b16 %v38
  %v119 = vunpack.c.l.b16 %v39
  %v120 = vunpack.c.l.b16 %v40
  %v121 = vunpack.c.l.b16 %v41
  %v122 = vunpack.c.l.b16 %v42
  %v123 = vunpack.c.l.b16 %v43
  %v124 = vunpack.c.l.b16 %v44
  %v125 = vunpack.c.l.b16 %v45
  %v126 = vunpack.c.l.b16 %v46
  %v127 = vunpack.c.l.b16 %v47
  %v128 = vunpack.c.l.b16 %v48
  %v129 = vpack.c.b16 %v114, %v113
  %v130 = vpack.c.b16 %v116, %v115
  %v131 = vpack.c.b16 %v118, %v117
  %v132 = vpack.c.b16 %v120, %v119
  %v133 = vpack.c.b16 %v122, %v121
  %v134 = vpack.c.b16 %v124, %v123
  %v135 = vpack.c.b16 %v126, %v125
  %v136 = vpack.c.b16 %v128, %v127
  %145 = vmatpush.bf16.msra.mxu0 %v136
  %146 = vmatpush.bf16.msra.mxu0 %v135
  %147 = vmatpush.bf16.msra.mxu0 %v134
  %148 = vmatpush.bf16.msra.mxu0 %v133
  %149 = vmatpush.bf16.msra.mxu0 %v132
  %150 = vmatpush.bf16.msra.mxu0 %v131
  %151 = vmatpush.bf16.msra.mxu0 %v130
  %152 = vmatpush.bf16.msra.mxu0 %v129
  %153 = vmatmul.bf16.gmra.mxu0 %v81
  %v154 = vpop.f32.mrf.mxu0
  %v155 = vadd.f32 0.0, %v154
  %v156 = vpop.f32.mrf.mxu0
  %v157 = vadd.f32 0.0, %v156
  %158 = vmatmul.bf16.gmra.mxu0 %v82
  %v159 = vpop.f32.mrf.mxu0
  %v160 = vadd.f32 0.0, %v159
  %v161 = vpop.f32.mrf.mxu0
  %v162 = vadd.f32 0.0, %v161
  %163 = vmatmul.bf16.gmra.mxu0 %v83
  %v164 = vpop.f32.mrf.mxu0
  %v165 = vadd.f32 0.0, %v164
  %v166 = vpop.f32.mrf.mxu0
  %v167 = vadd.f32 0.0, %v166
  %168 = vmatmul.bf16.gmra.mxu0 %v84
  %v169 = vpop.f32.mrf.mxu0
  %v170 = vadd.f32 0.0, %v169
  %v171 = vpop.f32.mrf.mxu0
  %v172 = vadd.f32 0.0, %v171
  %173 = vmatmul.bf16.gmra.mxu0 %v85
  %v174 = vpop.f32.mrf.mxu0
  %v175 = vadd.f32 0.0, %v174
  %v176 = vpop.f32.mrf.mxu0
  %v177 = vadd.f32 0.0, %v176
  %178 = vmatmul.bf16.gmra.mxu0 %v86
  %v179 = vpop.f32.mrf.mxu0
  %v180 = vadd.f32 0.0, %v179
  %v181 = vpop.f32.mrf.mxu0
  %v182 = vadd.f32 0.0, %v181
  %183 = vmatmul.bf16.gmra.mxu0 %v87
  %v184 = vpop.f32.mrf.mxu0
  %v185 = vadd.f32 0.0, %v184
  %v186 = vpop.f32.mrf.mxu0
  %v187 = vadd.f32 0.0, %v186
  %188 = vmatmul.bf16.gmra.mxu0 %v88
  %v189 = vpop.f32.mrf.mxu0
  %v190 = vadd.f32 0.0, %v189
  %v191 = vpop.f32.mrf.mxu0
  %v192 = vadd.f32 0.0, %v191
  %193 = vdwg.mxu0
  %v194 = vld [vmem:[%s2] sm:$0x1]
  %v196 = vperm.slane %v194, 0
  %v198 = vmul.f32 %v155, %v196
  %v199 = vmul.f32 %v157, %v196
  %v200 = vmul.f32 %v160, %v196
  %v201 = vmul.f32 %v162, %v196
  %v202 = vmul.f32 %v165, %v196
  %v203 = vmul.f32 %v167, %v196
  %v204 = vmul.f32 %v170, %v196
  %v205 = vmul.f32 %v172, %v196
  %v206 = vmul.f32 %v175, %v196
  %v207 = vmul.f32 %v177, %v196
  %v208 = vmul.f32 %v180, %v196
  %v209 = vmul.f32 %v182, %v196
  %v210 = vmul.f32 %v185, %v196
  %v211 = vmul.f32 %v187, %v196
  %v212 = vmul.f32 %v190, %v196
  %v213 = vmul.f32 %v192, %v196
  %v214 = vld [vmem:[%s3] sm:$0x1]
  %v216 = vperm.slane %v214, 0
  %v218 = vadd.f32 %v198, %v216
  %v219 = vadd.f32 %v199, %v216
  %v220 = vadd.f32 %v200, %v216
  %v221 = vadd.f32 %v201, %v216
  %v222 = vadd.f32 %v202, %v216
  %v223 = vadd.f32 %v203, %v216
  %v224 = vadd.f32 %v204, %v216
  %v225 = vadd.f32 %v205, %v216
  %v226 = vadd.f32 %v206, %v216
  %v227 = vadd.f32 %v207, %v216
  %v228 = vadd.f32 %v208, %v216
  %v229 = vadd.f32 %v209, %v216
  %v230 = vadd.f32 %v210, %v216
  %v231 = vadd.f32 %v211, %v216
  %v232 = vadd.f32 %v212, %v216
  %v233 = vadd.f32 %v213, %v216
  %v234 = vpack.c.bf16 %v218, %v218
  %v235 = vpack.c.bf16 %v219, %v219
  %v236 = vpack.c.bf16 %v220, %v220
  %v237 = vpack.c.bf16 %v221, %v221
  %v238 = vpack.c.bf16 %v222, %v222
  %v239 = vpack.c.bf16 %v223, %v223
  %v240 = vpack.c.bf16 %v224, %v224
  %v241 = vpack.c.bf16 %v225, %v225
  %v242 = vpack.c.bf16 %v226, %v226
  %v243 = vpack.c.bf16 %v227, %v227
  %v244 = vpack.c.bf16 %v228, %v228
  %v245 = vpack.c.bf16 %v229, %v229
  %v246 = vpack.c.bf16 %v230, %v230
  %v247 = vpack.c.bf16 %v231, %v231
  %v248 = vpack.c.bf16 %v232, %v232
  %v249 = vpack.c.bf16 %v233, %v233
  %250 = vst [vmem:[%s4] sm:$0xf] %v234
  %251 = vst [vmem:[%s4 + $0x4] sm:$0xf] %v235
  %252 = vst [vmem:[%s4 + $0x8] sm:$0xf] %v236
  %253 = vst [vmem:[%s4 + $0xc] sm:$0xf] %v237
  %254 = vst [vmem:[%s4 + $0x10] sm:$0xf] %v238
  %255 = vst [vmem:[%s4 + $0x14] sm:$0xf] %v239
  %256 = vst [vmem:[%s4 + $0x18] sm:$0xf] %v240
  %257 = vst [vmem:[%s4 + $0x1c] sm:$0xf] %v241
  %258 = vst [vmem:[%s4 + $0x20] sm:$0xf] %v242
  %259 = vst [vmem:[%s4 + $0x24] sm:$0xf] %v243
  %260 = vst [vmem:[%s4 + $0x28] sm:$0xf] %v244
  %261 = vst [vmem:[%s4 + $0x2c] sm:$0xf] %v245
  %262 = vst [vmem:[%s4 + $0x30] sm:$0xf] %v246
  %263 = vst [vmem:[%s4 + $0x34] sm:$0xf] %v247
  %264 = vst [vmem:[%s4 + $0x38] sm:$0xf] %v248
  %265 = vst [vmem:[%s4 + $0x3c] sm:$0xf] %v249
  // Predicated region
  $region18: #{_lambda_.24} parent=0 // pred_check
    _
  $region19: #{_lambda_.24} parent=0 // pred_check_branch
    %267 = sbr.rel (0) target = $region21
  $region20: #{_lambda_.24} parent=0 // pred_region
    _
  $region21: #{_lambda_.24} parent=0 // pred_fallthru
    _
  // Predicated region
  $region22: #{_lambda_.24} parent=0 // pred_check
    _
  $region23: #{_lambda_.24} parent=0 // pred_check_branch
    %269 = sbr.rel (0) target = $region25
  $region24: #{_lambda_.24} parent=0 // pred_region
    _
  $region25: #{_lambda_.24} parent=0 // pred_fallthru
    _

// kernel: _lambda_.25
$region0: #{_lambda_.25}
  #allocation0 [shape = 'u32[]', space=smem, size = 0x4, offset = 0x4, fixed_abs, tag = 'smem constant byte address 0x4 - core index']
  #allocation1 [shape = 'u32[72,128]{1,0:T(1,128)}', space=vmem, size = 0x9000, scoped, tag = 'internal scratch']
  %s0 = inlined_call_operand.vmem [shape: bf16[128,128], index: 0, kind: input, shape index: {}]
  %s1 = inlined_call_operand.vmem [shape: bf16[128,128], index: 1, kind: input, shape index: {}]
  %s2 = inlined_call_operand.vmem [shape: f32[1,128], index: 2, kind: input, shape index: {}]
  %s3 = inlined_call_operand.vmem [shape: f32[1,128], index: 3, kind: input, shape index: {}]
  %s4 = inlined_call_operand.vmem [shape: bf16[128,128], index: 4, kind: input, shape index: {}]
  %s5 = inlined_call_operand.vmem [shape: bf16[128,128], index: 5, kind: output, shape index: {}]
  %s6 = sld [smem:[#allocation0]]
  $region30: #{_lambda_.25} parent=0
    _
  %s8 = ssub.s32 1, %s6
  %s9 = scalar_select 0, %s8, %s6
  // Predicated region
  $region2: #{_lambda_.25} parent=0 // pred_check
    _
  $region3: #{_lambda_.25} parent=0 // pred_check_branch
    %11 = sbr.rel (0) target = $region5
  $region4: #{_lambda_.25} parent=0 // pred_region
    _
  $region5: #{_lambda_.25} parent=0 // pred_fallthru
    _
  // Predicated region
  $region6: #{_lambda_.25} parent=0 // pred_check
    _
  $region7: #{_lambda_.25} parent=0 // pred_check_branch
    %13 = sbr.rel (0) target = $region9
  $region8: #{_lambda_.25} parent=0 // pred_region
    _
  $region9: #{_lambda_.25} parent=0 // pred_fallthru
    _
  // Predicated region
  $region10: #{_lambda_.25} parent=0 // pred_check
    _
  $region11: #{_lambda_.25} parent=0 // pred_check_branch
    %15 = sbr.rel (0) target = $region13
  $region12: #{_lambda_.25} parent=0 // pred_region
    _
  $region13: #{_lambda_.25} parent=0 // pred_fallthru
    _
  // Predicated region
  $region14: #{_lambda_.25} parent=0 // pred_check
    _
  $region15: #{_lambda_.25} parent=0 // pred_check_branch
    %17 = sbr.rel (0) target = $region17
  $region16: #{_lambda_.25} parent=0 // pred_region
    _
  $region17: #{_lambda_.25} parent=0 // pred_fallthru
    _
  // Predicated region
  $region18: #{_lambda_.25} parent=0 // pred_check
    _
  $region19: #{_lambda_.25} parent=0 // pred_check_branch
    %19 = sbr.rel (0) target = $region21
  $region20: #{_lambda_.25} parent=0 // pred_region
    _
  $region21: #{_lambda_.25} parent=0 // pred_fallthru
    _
  %v20 = vld [vmem:[%s0] sm:$0xf]
  %v21 = vld [vmem:[%s0 + $0x4] sm:$0xf]
  %v22 = vld [vmem:[%s0 + $0x8] sm:$0xf]
  %v23 = vld [vmem:[%s0 + $0xc] sm:$0xf]
  %v24 = vld [vmem:[%s0 + $0x10] sm:$0xf]
  %v25 = vld [vmem:[%s0 + $0x14] sm:$0xf]
  %v26 = vld [vmem:[%s0 + $0x18] sm:$0xf]
  %v27 = vld [vmem:[%s0 + $0x1c] sm:$0xf]
  %v28 = vld [vmem:[%s0 + $0x20] sm:$0xf]
  %v29 = vld [vmem:[%s0 + $0x24] sm:$0xf]
  %v30 = vld [vmem:[%s0 + $0x28] sm:$0xf]
  %v31 = vld [vmem:[%s0 + $0x2c] sm:$0xf]
  %v32 = vld [vmem:[%s0 + $0x30] sm:$0xf]
  %v33 = vld [vmem:[%s0 + $0x34] sm:$0xf]
  %v34 = vld [vmem:[%s0 + $0x38] sm:$0xf]
  %v35 = vld [vmem:[%s0 + $0x3c] sm:$0xf]
  %v36 = vld [vmem:[%s1] sm:$0xf]
  %v37 = vld [vmem:[%s1 + $0x4] sm:$0xf]
  %v38 = vld [vmem:[%s1 + $0x8] sm:$0xf]
  %v39 = vld [vmem:[%s1 + $0xc] sm:$0xf]
  %v40 = vld [vmem:[%s1 + $0x10] sm:$0xf]
  %v41 = vld [vmem:[%s1 + $0x14] sm:$0xf]
  %v42 = vld [vmem:[%s1 + $0x18] sm:$0xf]
  %v43 = vld [vmem:[%s1 + $0x1c] sm:$0xf]
  %v44 = vld [vmem:[%s1 + $0x20] sm:$0xf]
  %v45 = vld [vmem:[%s1 + $0x24] sm:$0xf]
  %v46 = vld [vmem:[%s1 + $0x28] sm:$0xf]
  %v47 = vld [vmem:[%s1 + $0x2c] sm:$0xf]
  %v48 = vld [vmem:[%s1 + $0x30] sm:$0xf]
  %v49 = vld [vmem:[%s1 + $0x34] sm:$0xf]
  %v50 = vld [vmem:[%s1 + $0x38] sm:$0xf]
  %v51 = vld [vmem:[%s1 + $0x3c] sm:$0xf]
  %v68 = vunpack.c.l.b16 %v20
  %v69 = vunpack.c.l.b16 %v21
  %v70 = vunpack.c.l.b16 %v22
  %v71 = vunpack.c.l.b16 %v23
  %v72 = vunpack.c.l.b16 %v24
  %v73 = vunpack.c.l.b16 %v25
  %v74 = vunpack.c.l.b16 %v26
  %v75 = vunpack.c.l.b16 %v27
  %v76 = vunpack.c.l.b16 %v28
  %v77 = vunpack.c.l.b16 %v29
  %v78 = vunpack.c.l.b16 %v30
  %v79 = vunpack.c.l.b16 %v31
  %v80 = vunpack.c.l.b16 %v32
  %v81 = vunpack.c.l.b16 %v33
  %v82 = vunpack.c.l.b16 %v34
  %v83 = vunpack.c.l.b16 %v35
  %v84 = vpack.c.b16 %v69, %v68
  %v85 = vpack.c.b16 %v71, %v70
  %v86 = vpack.c.b16 %v73, %v72
  %v87 = vpack.c.b16 %v75, %v74
  %v88 = vpack.c.b16 %v77, %v76
  %v89 = vpack.c.b16 %v79, %v78
  %v90 = vpack.c.b16 %v81, %v80
  %v91 = vpack.c.b16 %v83, %v82
  %v116 = vunpack.c.l.b16 %v36
  %v117 = vunpack.c.l.b16 %v37
  %v118 = vunpack.c.l.b16 %v38
  %v119 = vunpack.c.l.b16 %v39
  %v120 = vunpack.c.l.b16 %v40
  %v121 = vunpack.c.l.b16 %v41
  %v122 = vunpack.c.l.b16 %v42
  %v123 = vunpack.c.l.b16 %v43
  %v124 = vunpack.c.l.b16 %v44
  %v125 = vunpack.c.l.b16 %v45
  %v126 = vunpack.c.l.b16 %v46
  %v127 = vunpack.c.l.b16 %v47
  %v128 = vunpack.c.l.b16 %v48
  %v129 = vunpack.c.l.b16 %v49
  %v130 = vunpack.c.l.b16 %v50
  %v131 = vunpack.c.l.b16 %v51
  %v132 = vpack.c.b16 %v117, %v116
  %v133 = vpack.c.b16 %v119, %v118
  %v134 = vpack.c.b16 %v121, %v120
  %v135 = vpack.c.b16 %v123, %v122
  %v136 = vpack.c.b16 %v125, %v124
  %v137 = vpack.c.b16 %v127, %v126
  %v138 = vpack.c.b16 %v129, %v128
  %v139 = vpack.c.b16 %v131, %v130
  %148 = vmatpush.bf16.msra.mxu0 %v139
  %149 = vmatpush.bf16.msra.mxu0 %v138
  %150 = vmatpush.bf16.msra.mxu0 %v137
  %151 = vmatpush.bf16.msra.mxu0 %v136
  %152 = vmatpush.bf16.msra.mxu0 %v135
  %153 = vmatpush.bf16.msra.mxu0 %v134
  %154 = vmatpush.bf16.msra.mxu0 %v133
  %155 = vmatpush.bf16.msra.mxu0 %v132
  %156 = vmatmul.bf16.gmra.mxu0 %v84
  %v157 = vpop.f32.mrf.mxu0
  %v158 = vadd.f32 0.0, %v157
  %v159 = vpop.f32.mrf.mxu0
  %v160 = vadd.f32 0.0, %v159
  %161 = vmatmul.bf16.gmra.mxu0 %v85
  %v162 = vpop.f32.mrf.mxu0
  %v163 = vadd.f32 0.0, %v162
  %v164 = vpop.f32.mrf.mxu0
  %v165 = vadd.f32 0.0, %v164
  %166 = vmatmul.bf16.gmra.mxu0 %v86
  %v167 = vpop.f32.mrf.mxu0
  %v168 = vadd.f32 0.0, %v167
  %v169 = vpop.f32.mrf.mxu0
  %v170 = vadd.f32 0.0, %v169
  %171 = vmatmul.bf16.gmra.mxu0 %v87
  %v172 = vpop.f32.mrf.mxu0
  %v173 = vadd.f32 0.0, %v172
  %v174 = vpop.f32.mrf.mxu0
  %v175 = vadd.f32 0.0, %v174
  %176 = vmatmul.bf16.gmra.mxu0 %v88
  %v177 = vpop.f32.mrf.mxu0
  %v178 = vadd.f32 0.0, %v177
  %v179 = vpop.f32.mrf.mxu0
  %v180 = vadd.f32 0.0, %v179
  %181 = vmatmul.bf16.gmra.mxu0 %v89
  %v182 = vpop.f32.mrf.mxu0
  %v183 = vadd.f32 0.0, %v182
  %v184 = vpop.f32.mrf.mxu0
  %v185 = vadd.f32 0.0, %v184
  %186 = vmatmul.bf16.gmra.mxu0 %v90
  %v187 = vpop.f32.mrf.mxu0
  %v188 = vadd.f32 0.0, %v187
  %v189 = vpop.f32.mrf.mxu0
  %v190 = vadd.f32 0.0, %v189
  %191 = vmatmul.bf16.gmra.mxu0 %v91
  %v192 = vpop.f32.mrf.mxu0
  %v193 = vadd.f32 0.0, %v192
  %v194 = vpop.f32.mrf.mxu0
  %v195 = vadd.f32 0.0, %v194
  %196 = vdwg.mxu0
  %v197 = vld [vmem:[%s2] sm:$0x1]
  %v199 = vperm.slane %v197, 0
  %v201 = vmul.f32 %v158, %v199
  %v202 = vmul.f32 %v160, %v199
  %v203 = vmul.f32 %v163, %v199
  %v204 = vmul.f32 %v165, %v199
  %v205 = vmul.f32 %v168, %v199
  %v206 = vmul.f32 %v170, %v199
  %v207 = vmul.f32 %v173, %v199
  %v208 = vmul.f32 %v175, %v199
  %v209 = vmul.f32 %v178, %v199
  %v210 = vmul.f32 %v180, %v199
  %v211 = vmul.f32 %v183, %v199
  %v212 = vmul.f32 %v185, %v199
  %v213 = vmul.f32 %v188, %v199
  %v214 = vmul.f32 %v190, %v199
  %v215 = vmul.f32 %v193, %v199
  %v216 = vmul.f32 %v195, %v199
  %v217 = vld [vmem:[%s3] sm:$0x1]
  %v219 = vperm.slane %v217, 0
  %v221 = vadd.f32 %v201, %v219
  %v222 = vadd.f32 %v202, %v219
  %v223 = vadd.f32 %v203, %v219
  %v224 = vadd.f32 %v204, %v219
  %v225 = vadd.f32 %v205, %v219
  %v226 = vadd.f32 %v206, %v219
  %v227 = vadd.f32 %v207, %v219
  %v228 = vadd.f32 %v208, %v219
  %v229 = vadd.f32 %v209, %v219
  %v230 = vadd.f32 %v210, %v219
  %v231 = vadd.f32 %v211, %v219
  %v232 = vadd.f32 %v212, %v219
  %v233 = vadd.f32 %v213, %v219
  %v234 = vadd.f32 %v214, %v219
  %v235 = vadd.f32 %v215, %v219
  %v236 = vadd.f32 %v216, %v219
  %v237 = vld [vmem:[%s4] sm:$0xf]
  %v238 = vld [vmem:[%s4 + $0x4] sm:$0xf]
  %v239 = vld [vmem:[%s4 + $0x8] sm:$0xf]
  %v240 = vld [vmem:[%s4 + $0xc] sm:$0xf]
  %v241 = vld [vmem:[%s4 + $0x10] sm:$0xf]
  %v242 = vld [vmem:[%s4 + $0x14] sm:$0xf]
  %v243 = vld [vmem:[%s4 + $0x18] sm:$0xf]
  %v244 = vld [vmem:[%s4 + $0x1c] sm:$0xf]
  %v245 = vld [vmem:[%s4 + $0x20] sm:$0xf]
  %v246 = vld [vmem:[%s4 + $0x24] sm:$0xf]
  %v247 = vld [vmem:[%s4 + $0x28] sm:$0xf]
  %v248 = vld [vmem:[%s4 + $0x2c] sm:$0xf]
  %v249 = vld [vmem:[%s4 + $0x30] sm:$0xf]
  %v250 = vld [vmem:[%s4 + $0x34] sm:$0xf]
  %v251 = vld [vmem:[%s4 + $0x38] sm:$0xf]
  %v252 = vld [vmem:[%s4 + $0x3c] sm:$0xf]
  %v253 = vunpack.c.l.bf16 %v237
  %v254 = vunpack.c.l.bf16 %v238
  %v255 = vunpack.c.l.bf16 %v239
  %v256 = vunpack.c.l.bf16 %v240
  %v257 = vunpack.c.l.bf16 %v241
  %v258 = vunpack.c.l.bf16 %v242
  %v259 = vunpack.c.l.bf16 %v243
  %v260 = vunpack.c.l.bf16 %v244
  %v261 = vunpack.c.l.bf16 %v245
  %v262 = vunpack.c.l.bf16 %v246
  %v263 = vunpack.c.l.bf16 %v247
  %v264 = vunpack.c.l.bf16 %v248
  %v265 = vunpack.c.l.bf16 %v249
  %v266 = vunpack.c.l.bf16 %v250
  %v267 = vunpack.c.l.bf16 %v251
  %v268 = vunpack.c.l.bf16 %v252
  %v269 = vadd.f32 %v221, %v253
  %v270 = vadd.f32 %v222, %v254
  %v271 = vadd.f32 %v223, %v255
  %v272 = vadd.f32 %v224, %v256
  %v273 = vadd.f32 %v225, %v257
  %v274 = vadd.f32 %v226, %v258
  %v275 = vadd.f32 %v227, %v259
  %v276 = vadd.f32 %v228, %v260
  %v277 = vadd.f32 %v229, %v261
  %v278 = vadd.f32 %v230, %v262
  %v279 = vadd.f32 %v231, %v263
  %v280 = vadd.f32 %v232, %v264
  %v281 = vadd.f32 %v233, %v265
  %v282 = vadd.f32 %v234, %v266
  %v283 = vadd.f32 %v235, %v267
  %v284 = vadd.f32 %v236, %v268
  %v285 = vmax.f32 %v269, 0.0
  %v286 = vmax.f32 %v270, 0.0
  %v287 = vmax.f32 %v271, 0.0
  %v288 = vmax.f32 %v272, 0.0
  %v289 = vmax.f32 %v273, 0.0
  %v290 = vmax.f32 %v274, 0.0
  %v291 = vmax.f32 %v275, 0.0
  %v292 = vmax.f32 %v276, 0.0
  %v293 = vmax.f32 %v277, 0.0
  %v294 = vmax.f32 %v278, 0.0
  %v295 = vmax.f32 %v279, 0.0
  %v296 = vmax.f32 %v280, 0.0
  %v297 = vmax.f32 %v281, 0.0
  %v298 = vmax.f32 %v282, 0.0
  %v299 = vmax.f32 %v283, 0.0
  %v300 = vmax.f32 %v284, 0.0
  %v301 = vpack.c.bf16 %v285, %v285
  %v302 = vpack.c.bf16 %v286, %v286
  %v303 = vpack.c.bf16 %v287, %v287
  %v304 = vpack.c.bf16 %v288, %v288
  %v305 = vpack.c.bf16 %v289, %v289
  %v306 = vpack.c.bf16 %v290, %v290
  %v307 = vpack.c.bf16 %v291, %v291
  %v308 = vpack.c.bf16 %v292, %v292
  %v309 = vpack.c.bf16 %v293, %v293
  %v310 = vpack.c.bf16 %v294, %v294
  %v311 = vpack.c.bf16 %v295, %v295
  %v312 = vpack.c.bf16 %v296, %v296
  %v313 = vpack.c.bf16 %v297, %v297
  %v314 = vpack.c.bf16 %v298, %v298
  %v315 = vpack.c.bf16 %v299, %v299
  %v316 = vpack.c.bf16 %v300, %v300
  %317 = vst [vmem:[%s5] sm:$0xf] %v301
  %318 = vst [vmem:[%s5 + $0x4] sm:$0xf] %v302
  %319 = vst [vmem:[%s5 + $0x8] sm:$0xf] %v303
  %320 = vst [vmem:[%s5 + $0xc] sm:$0xf] %v304
  %321 = vst [vmem:[%s5 + $0x10] sm:$0xf] %v305
  %322 = vst [vmem:[%s5 + $0x14] sm:$0xf] %v306
  %323 = vst [vmem:[%s5 + $0x18] sm:$0xf] %v307
  %324 = vst [vmem:[%s5 + $0x1c] sm:$0xf] %v308
  %325 = vst [vmem:[%s5 + $0x20] sm:$0xf] %v309
  %326 = vst [vmem:[%s5 + $0x24] sm:$0xf] %v310
  %327 = vst [vmem:[%s5 + $0x28] sm:$0xf] %v311
  %328 = vst [vmem:[%s5 + $0x2c] sm:$0xf] %v312
  %329 = vst [vmem:[%s5 + $0x30] sm:$0xf] %v313
  %330 = vst [vmem:[%s5 + $0x34] sm:$0xf] %v314
  %331 = vst [vmem:[%s5 + $0x38] sm:$0xf] %v315
  %332 = vst [vmem:[%s5 + $0x3c] sm:$0xf] %v316
  // Predicated region
  $region22: #{_lambda_.25} parent=0 // pred_check
    _
  $region23: #{_lambda_.25} parent=0 // pred_check_branch
    %334 = sbr.rel (0) target = $region25
  $region24: #{_lambda_.25} parent=0 // pred_region
    _
  $region25: #{_lambda_.25} parent=0 // pred_fallthru
    _
  // Predicated region
  $region26: #{_lambda_.25} parent=0 // pred_check
    _
  $region27: #{_lambda_.25} parent=0 // pred_check_branch
    %336 = sbr.rel (0) target = $region29
  $region28: #{_lambda_.25} parent=0 // pred_region
    _
  $region29: #{_lambda_.25} parent=0 // pred_fallthru
    _

// kernel: _lambda_.23
$region0: #{_lambda_.23}
  #allocation0 [shape = 'u32[]', space=smem, size = 0x4, offset = 0x4, fixed_abs, tag = 'smem constant byte address 0x4 - core index']
  #allocation1 [shape = 'u32[72,128]{1,0:T(1,128)}', space=vmem, size = 0x9000, scoped, tag = 'internal scratch']
  #allocation2 [shape = 'f32[80,128]{1,0:T(8,128)}', space=vmem, size = 0xa000, scoped, tag = 'scratch operand']
  %s0 = inlined_call_operand.vmem [shape: bf16[2,8,8,128], index: 0, kind: input, shape index: {}]
  %s1 = inlined_call_operand.vmem [shape: bf16[3,3,128,128], index: 1, kind: input, shape index: {}]
  %s2 = inlined_call_operand.vmem [shape: f32[1,128], index: 2, kind: input, shape index: {}]
  %s3 = inlined_call_operand.vmem [shape: f32[1,128], index: 3, kind: input, shape index: {}]
  %s4 = inlined_call_operand.vmem [shape: bf16[2,64,128], index: 4, kind: output, shape index: {}]
  %s5 = sld [smem:[#allocation0]]
  $region60: #{_lambda_.23} parent=0
    _
  %s7 = ssub.s32 1, %s5
  %s8 = scalar_select 0, %s7, %s5
  loop: start=0, step=1, limit=4
  $region2: #{_lambda_.23} parent=0 // loop_pre_header
    _
  $region3: #{_lambda_.23} parent=0 // loop_header
    %s10 = sphi 0, %s14
    %p11 = scmp.ge.s32.totalorder %s10, 4
    %s17 = sphi 0, %s36
    %s18 = sphi 0, %s32
    %s19 = sphi 0, %s28
    %s20 = sphi 0, %s17
    %s21 = sphi 0, %s18
    %s22 = sphi 0, %s19
    %s23 = sphi 0, %s20
    %s24 = sphi 0, %s21
    %s25 = sphi 0, %s22
    %s39 = sphi 0, %s41
    %s42 = sphi 0, %s39
    %s43 = sphi 0, %s42
    %s59 = sphi 0, %s43
    %s65 = sphi 0, %s67
    %s68 = sphi 0, %s65
    %s69 = sphi 0, %s68
    %s85 = sphi 0, %s69
    %s91 = sphi 0, %s93
    %s94 = sphi 0, %s91
    %s95 = sphi 0, %s94
    %s111 = sphi 0, %s95
    %s117 = sphi 0, %s119
    %s120 = sphi 0, %s117
    %s121 = sphi 0, %s120
    %s137 = sphi 0, %s121
    %s147 = sphi 0, %s149
    %s150 = sphi 0, %s147
    %s151 = sphi 0, %s150
    %s167 = sphi 0, %s151
  $region4: #{_lambda_.23} parent=0 // loop_header_branch
    %13 = sbr.rel (%p11) target = $region8
  $region5: #{_lambda_.23} parent=0 // loop_body
    %s15 = ssub.s32 %s10, 1
    %s16 = ssub.s32 %s10, 2
    %s26 = sadd.s32 1, %s19
    %p27 = scmp.ge.s32.totalorder %s26, 1
    %s28 = scalar_select %p27, 0, %s26
    %s29 = sadd.s32 1, %s18
    %s30 = scalar_select %p27, %s29, %s18
    %p31 = scmp.ge.s32.totalorder %s30, 1
    %s32 = scalar_select %p31, 0, %s30
    %s33 = sadd.s32 1, %s17
    %s34 = scalar_select %p31, %s33, %s17
    %p35 = scmp.ge.s32.totalorder %s34, 2
    %s36 = scalar_select %p35, 0, %s34
    %s37 = ssub.s32 %s17, %s36
    %p38 = scmp.eq.s32.totalorder %s37, 0
    %s40 = sadd.s32 %s39, 1
    %s41 = scalar_select %p38, %s39, %s40
    %p44 = pneg %p38
    %p45 = scmp.eq.s32.totalorder %s10, 1
    %p46 = por %p44, %p45
    %p47 = scmp.ne.s32.totalorder %s39, %s42
    %p48 = scmp.eq.s32.totalorder %s10, 0
    %p49 = por %p47, %p48
    %p50 = scmp.ne.s32.totalorder %s39, %s42
    %p51 = scmp.eq.s32.totalorder %s15, 1
    %p52 = por %p50, %p51
    %p53 = scmp.ne.s32.totalorder %s42, %s43
    %p54 = scmp.eq.s32.totalorder %s15, 0
    %p55 = por %p53, %p54
    %p56 = scmp.ne.s32.totalorder %s42, %s43
    %p57 = scmp.eq.s32.totalorder %s16, 1
    %p58 = por %p56, %p57
    %p60 = scmp.ne.s32.totalorder %s43, %s59
    %p61 = scmp.eq.s32.totalorder %s16, 0
    %p62 = por %p60, %p61
    %s63 = ssub.s32 %s19, %s28
    %p64 = scmp.eq.s32.totalorder %s63, 0
    %s66 = sadd.s32 %s65, 1
    %s67 = scalar_select %p64, %s65, %s66
    %p70 = pneg %p64
    %p71 = scmp.eq.s32.totalorder %s10, 1
    %p72 = por %p70, %p71
    %p73 = scmp.ne.s32.totalorder %s65, %s68
    %p74 = scmp.eq.s32.totalorder %s10, 0
    %p75 = por %p73, %p74
    %p76 = scmp.ne.s32.totalorder %s65, %s68
    %p77 = scmp.eq.s32.totalorder %s15, 1
    %p78 = por %p76, %p77
    %p79 = scmp.ne.s32.totalorder %s68, %s69
    %p80 = scmp.eq.s32.totalorder %s15, 0
    %p81 = por %p79, %p80
    %p82 = scmp.ne.s32.totalorder %s68, %s69
    %p83 = scmp.eq.s32.totalorder %s16, 1
    %p84 = por %p82, %p83
    %p86 = scmp.ne.s32.totalorder %s69, %s85
    %p87 = scmp.eq.s32.totalorder %s16, 0
    %p88 = por %p86, %p87
    %s89 = ssub.s32 %s19, %s28
    %p90 = scmp.eq.s32.totalorder %s89, 0
    %s92 = sadd.s32 %s91, 1
    %s93 = scalar_select %p90, %s91, %s92
    %p96 = pneg %p90
    %p97 = scmp.eq.s32.totalorder %s10, 1
    %p98 = por %p96, %p97
    %p99 = scmp.ne.s32.totalorder %s91, %s94
    %p100 = scmp.eq.s32.totalorder %s10, 0
    %p101 = por %p99, %p100
    %p102 = scmp.ne.s32.totalorder %s91, %s94
    %p103 = scmp.eq.s32.totalorder %s15, 1
    %p104 = por %p102, %p103
    %p105 = scmp.ne.s32.totalorder %s94, %s95
    %p106 = scmp.eq.s32.totalorder %s15, 0
    %p107 = por %p105, %p106
    %p108 = scmp.ne.s32.totalorder %s94, %s95
    %p109 = scmp.eq.s32.totalorder %s16, 1
    %p110 = por %p108, %p109
    %p112 = scmp.ne.s32.totalorder %s95, %s111
    %p113 = scmp.eq.s32.totalorder %s16, 0
    %p114 = por %p112, %p113
    %s115 = ssub.s32 %s19, %s28
    %p116 = scmp.eq.s32.totalorder %s115, 0
    %s118 = sadd.s32 %s117, 1
    %s119 = scalar_select %p116, %s117, %s118
    %p122 = pneg %p116
    %p123 = scmp.eq.s32.totalorder %s10, 1
    %p124 = por %p122, %p123
    %p125 = scmp.ne.s32.totalorder %s117, %s120
    %p126 = scmp.eq.s32.totalorder %s10, 0
    %p127 = por %p125, %p126
    %p128 = scmp.ne.s32.totalorder %s117, %s120
    %p129 = scmp.eq.s32.totalorder %s15, 1
    %p130 = por %p128, %p129
    %p131 = scmp.ne.s32.totalorder %s120, %s121
    %p132 = scmp.eq.s32.totalorder %s15, 0
    %p133 = por %p131, %p132
    %p134 = scmp.ne.s32.totalorder %s120, %s121
    %p135 = scmp.eq.s32.totalorder %s16, 1
    %p136 = por %p134, %p135
    %p138 = scmp.ne.s32.totalorder %s121, %s137
    %p139 = scmp.eq.s32.totalorder %s16, 0
    %p140 = por %p138, %p139
    %s141 = ssub.s32 %s17, %s36
    %s142 = ssub.s32 %s18, %s32
    %s143 = sor.u32 %s141, %s142
    %s144 = ssub.s32 %s19, %s28
    %s145 = sor.u32 %s143, %s144
    %p146 = scmp.eq.s32.totalorder %s145, 0
    %s148 = sadd.s32 %s147, 1
    %s149 = scalar_select %p146, %s147, %s148
    %p152 = pneg %p146
    %p153 = scmp.eq.s32.totalorder %s10, 1
    %p154 = por %p152, %p153
    %p155 = scmp.ne.s32.totalorder %s147, %s150
    %p156 = scmp.eq.s32.totalorder %s10, 0
    %p157 = por %p155, %p156
    %p158 = scmp.ne.s32.totalorder %s147, %s150
    %p159 = scmp.eq.s32.totalorder %s15, 1
    %p160 = por %p158, %p159
    %p161 = scmp.ne.s32.totalorder %s150, %s151
    %p162 = scmp.eq.s32.totalorder %s15, 0
    %p163 = por %p161, %p162
    %p164 = scmp.ne.s32.totalorder %s150, %s151
    %p165 = scmp.eq.s32.totalorder %s16, 1
    %p166 = por %p164, %p165
    %p168 = scmp.ne.s32.totalorder %s151, %s167
    %p169 = scmp.eq.s32.totalorder %s16, 0
    %p170 = por %p168, %p169
    %p171 = scmp.le.s32.totalorder 1, %s10
    %p172 = scmp.lt.s32.totalorder %s10, 3
    %p173 = pnand %p171, %p172
    %p174 = pneg %p173
    // Predicated region
    $region9: #{_lambda_.23} parent=5 // pred_check
      _
    $region10: #{_lambda_.23} parent=5 // pred_check_branch
      %176 = sbr.rel (%p173) target = $region12
    $region11: #{_lambda_.23} parent=5 // pred_region
      %s177 = ssub.s32 %s10, 1
      // Predicated region
      $region13: #{_lambda_.23} parent=11 // pred_check
        %p178 = pneg %p81
      $region14: #{_lambda_.23} parent=11 // pred_check_branch
        %180 = sbr.rel (%p178) target = $region16
      $region15: #{_lambda_.23} parent=11 // pred_region
        %p181 = scmp.lt.s32.totalorder %s22, 0
        %s182 = scalar_select %p181, %s22, 0
        %s183 = smul.addr %s182, 4
        %s184 = scalar_lea.vmem %s1, %s183
      $region16: #{_lambda_.23} parent=11 // pred_fallthru
        _
      // Predicated region
      $region17: #{_lambda_.23} parent=11 // pred_check
        %p185 = pneg %p107
      $region18: #{_lambda_.23} parent=11 // pred_check_branch
        %187 = sbr.rel (%p185) target = $region20
      $region19: #{_lambda_.23} parent=11 // pred_region
        %p188 = scmp.lt.s32.totalorder %s22, 0
        %s189 = scalar_select %p188, %s22, 0
        %s190 = scalar_lea.vmem %s2, %s189
      $region20: #{_lambda_.23} parent=11 // pred_fallthru
        _
      // Predicated region
      $region21: #{_lambda_.23} parent=11 // pred_check
        %p191 = pneg %p133
      $region22: #{_lambda_.23} parent=11 // pred_check_branch
        %193 = sbr.rel (%p191) target = $region24
      $region23: #{_lambda_.23} parent=11 // pred_region
        %p194 = scmp.lt.s32.totalorder %s22, 0
        %s195 = scalar_select %p194, %s22, 0
        %s196 = scalar_lea.vmem %s3, %s195
      $region24: #{_lambda_.23} parent=11 // pred_fallthru
        _
    $region12: #{_lambda_.23} parent=5 // pred_fallthru
      _
    %p197 = scmp.lt.s32.totalorder %s10, 2
    // Predicated region
    $region25: #{_lambda_.23} parent=5 // pred_check
      %p198 = pneg %p197
    $region26: #{_lambda_.23} parent=5 // pred_check_branch
      %200 = sbr.rel (%p198) target = $region28
    $region27: #{_lambda_.23} parent=5 // pred_region
      // Predicated region
      $region29: #{_lambda_.23} parent=27 // pred_check
        %p201 = pneg %p49
      $region30: #{_lambda_.23} parent=27 // pred_check_branch
        %203 = sbr.rel (%p201) target = $region32
      $region31: #{_lambda_.23} parent=27 // pred_region
        %p204 = scmp.lt.s32.totalorder %s17, 1
        %s205 = scalar_select %p204, %s17, 1
        %s206 = smul.addr %s205, 8
        %s207 = smul.addr %s206, 4
        %s208 = scalar_lea.vmem %s0, %s207
      $region32: #{_lambda_.23} parent=27 // pred_fallthru
        _
    $region28: #{_lambda_.23} parent=5 // pred_fallthru
      _
    %p209 = scmp.le.s32.totalorder 1, %s10
    %p210 = scmp.lt.s32.totalorder %s10, 3
    %p211 = pnand %p209, %p210
    %p212 = pneg %p211
    // Predicated region
    $region33: #{_lambda_.23} parent=5 // pred_check
      _
    $region34: #{_lambda_.23} parent=5 // pred_check_branch
      %214 = sbr.rel (%p211) target = $region36
    $region35: #{_lambda_.23} parent=5 // pred_region
      %s215 = ssub.s32 %s10, 1
      %p216 = scmp.lt.s32.totalorder %s20, 1
      %s217 = scalar_select %p216, %s20, 1
      %s218 = smul.addr %s217, 8
      %s219 = smul.addr %s218, 4
      %s220 = scalar_lea.vmem %s0, %s219
      %p221 = pneg %p55
      %p222 = pneg %p52
      %p223 = scmp.lt.s32.totalorder %s22, 0
      %s224 = scalar_select %p223, %s22, 0
      %s225 = smul.addr %s224, 4
      %s226 = scalar_lea.vmem %s1, %s225
      %p227 = pneg %p81
      %p228 = pneg %p78
      %p229 = scmp.lt.s32.totalorder %s22, 0
      %s230 = scalar_select %p229, %s22, 0
      %s231 = scalar_lea.vmem %s2, %s230
      %p232 = pneg %p107
      %p233 = pneg %p104
      %p234 = scmp.lt.s32.totalorder %s22, 0
      %s235 = scalar_select %p234, %s22, 0
      %s236 = scalar_lea.vmem %s3, %s235
      %p237 = pneg %p133
      %p238 = pneg %p130
      %p239 = pneg %p163
      %p240 = pneg %p160
      %s241 = smul.u32 8, %s21
      %p242 = scmp.lt.s32.totalorder %s20, 1
      %s243 = scalar_select %p242, %s20, 1
      %p244 = scmp.lt.s32.totalorder %s241, 7
      %s245 = scalar_select %p244, %s241, 7
      %p246 = scmp.lt.s32.totalorder %s22, 0
      %s247 = scalar_select %p246, %s22, 0
      %s248 = sadd.s32 %s247, %s245
      %s249 = smul.addr %s243, 8
      %s250 = sadd.s32 %s248, %s249
      %s251 = smul.addr %s250, 4
      %s252 = scalar_lea.vmem %s4, %s251
      %p253 = scmp.lt.s32.totalorder %s20, 1
      %s254 = scalar_select %p253, %s20, 1
      %s255 = smul.addr %s254, 8
      %s256 = smul.addr %s255, 4
      %s257 = scalar_lea.vmem %s0, %s256
      %p258 = scmp.lt.s32.totalorder %s22, 0
      %s259 = scalar_select %p258, %s22, 0
      %s260 = smul.addr %s259, 4
      %s261 = scalar_lea.vmem %s1, %s260
      %p262 = scmp.lt.s32.totalorder %s22, 0
      %s263 = scalar_select %p262, %s22, 0
      %s264 = scalar_lea.vmem %s2, %s263
      %p265 = scmp.lt.s32.totalorder %s22, 0
      %s266 = scalar_select %p265, %s22, 0
      %s267 = scalar_lea.vmem %s3, %s266
      %s268 = smul.u32 8, %s21
      %p269 = scmp.lt.s32.totalorder %s20, 1
      %s270 = scalar_select %p269, %s20, 1
      %p271 = scmp.lt.s32.totalorder %s268, 7
      %s272 = scalar_select %p271, %s268, 7
      %p273 = scmp.lt.s32.totalorder %s22, 0
      %s274 = scalar_select %p273, %s22, 0
      %s275 = sadd.s32 %s274, %s272
      %s276 = smul.addr %s270, 8
      %s277 = sadd.s32 %s275, %s276
      %s278 = smul.addr %s277, 4
      %s279 = scalar_lea.vmem %s4, %s278
      %s280 = smul.u32 8, %s21
      %p281 = scmp.eq.s32.totalorder %s21, 0
      %p282 = scmp.eq.s32.totalorder %s22, 0
      %p283 = pnand %p281, %p282
      %p284 = pneg %p283
      // Predicated region
      $region37: #{_lambda_.23} parent=35 // pred_check
        _
      $region38: #{_lambda_.23} parent=35 // pred_check_branch
        %286 = sbr.rel (%p283) target = $region40
      $region39: #{_lambda_.23} parent=35 // pred_region
        %287 = vst [vmem:[#allocation2] sm:$0xff] 0.0
        %288 = vst [vmem:[#allocation2 + $0x48] sm:$0xff] 0.0
        loop: start=0, step=1, limit=8
        $region41: #{_lambda_.23} parent=39 // loop_pre_header
          _
        $region42: #{_lambda_.23} parent=39 // loop_header
          %s290 = sphi 0, %s294
          %p291 = scmp.ge.s32.totalorder %s290, 8
        $region43: #{_lambda_.23} parent=39 // loop_header_branch
          %293 = sbr.rel (%p291) target = $region47
        $region44: #{_lambda_.23} parent=39 // loop_body
          %s295 = sadd.s32 %s290, 1
          %s296 = smul.u32 %s295, 8
          %s297 = smul.addr %s290, 4
          %s298 = scalar_lea.vmem %s257, %s297
          %v299 = vld [vmem:[%s298] sm:$0xf]
          %v300 = vunpack.c.l.bf16 %v299
          %s301 = scalar_lea.vmem [#allocation2], %s296
          %302 = vst [vmem:[%s301] sm:$0xff] %v300
        $region45: #{_lambda_.23} parent=39 // loop_footer
          %s294 = sadd.s32 1, %s290
        $region46: #{_lambda_.23} parent=39 // loop_footer_branch
          %289 = sbr.rel target = $region42
        $region47: #{_lambda_.23} parent=39 // loop_exit
          _
      $region40: #{_lambda_.23} parent=35 // pred_fallthru
        _
      %s303 = smul.u32 %s21, 8
      %v304 = vlaneseq
      %v305 = vshrl.u32 %v304, 7
      %v306 = vadd.s32 %v305, 8
      %v307 = vadd.s32 %v305, 16
      %v308 = vadd.s32 %v305, 24
      %v309 = vadd.s32 %v305, 32
      %v310 = vadd.s32 %v305, 40
      %v311 = vadd.s32 %v305, 48
      %v312 = vadd.s32 %v305, 56
      %vm313 = vcmp.lt.s32.totalorder %v305, 0
      %v314 = vsub.s32 0, %v305
      %v315 = vsel %vm313, %v314, %v305
      %v316 = vshrl.u32 %v315, 3
      %v317 = vand.u32 %v315, 7
      %v318 = vsub.s32 0, %v317
      %v319 = vsel %vm313, %v318, %v317
      %vm320 = vcmp.lt.s32.totalorder %v306, 0
      %v321 = vsub.s32 0, %v306
      %v322 = vsel %vm320, %v321, %v306
      %v323 = vshrl.u32 %v322, 3
      %v324 = vand.u32 %v322, 7
      %v325 = vsub.s32 0, %v324
      %v326 = vsel %vm320, %v325, %v324
      %vm327 = vcmp.lt.s32.totalorder %v307, 0
      %v328 = vsub.s32 0, %v307
      %v329 = vsel %vm327, %v328, %v307
      %v330 = vshrl.u32 %v329, 3
      %v331 = vand.u32 %v329, 7
      %v332 = vsub.s32 0, %v331
      %v333 = vsel %vm327, %v332, %v331
      %vm334 = vcmp.lt.s32.totalorder %v308, 0
      %v335 = vsub.s32 0, %v308
      %v336 = vsel %vm334, %v335, %v308
      %v337 = vshrl.u32 %v336, 3
      %v338 = vand.u32 %v336, 7
      %v339 = vsub.s32 0, %v338
      %v340 = vsel %vm334, %v339, %v338
      %vm341 = vcmp.lt.s32.totalorder %v309, 0
      %v342 = vsub.s32 0, %v309
      %v343 = vsel %vm341, %v342, %v309
      %v344 = vshrl.u32 %v343, 3
      %v345 = vand.u32 %v343, 7
      %v346 = vsub.s32 0, %v345
      %v347 = vsel %vm341, %v346, %v345
      %vm348 = vcmp.lt.s32.totalorder %v310, 0
      %v349 = vsub.s32 0, %v310
      %v350 = vsel %vm348, %v349, %v310
      %v351 = vshrl.u32 %v350, 3
      %v352 = vand.u32 %v350, 7
      %v353 = vsub.s32 0, %v352
      %v354 = vsel %vm348, %v353, %v352
      %vm355 = vcmp.lt.s32.totalorder %v311, 0
      %v356 = vsub.s32 0, %v311
      %v357 = vsel %vm355, %v356, %v311
      %v358 = vshrl.u32 %v357, 3
      %v359 = vand.u32 %v357, 7
      %v360 = vsub.s32 0, %v359
      %v361 = vsel %vm355, %v360, %v359
      %vm362 = vcmp.lt.s32.totalorder %v312, 0
      %v363 = vsub.s32 0, %v312
      %v364 = vsel %vm362, %v363, %v312
      %v365 = vshrl.u32 %v364, 3
      %v366 = vand.u32 %v364, 7
      %v367 = vsub.s32 0, %v366
      %v368 = vsel %vm362, %v367, %v366
      %vm369 = vcmp.ne.s32.totalorder %v319, 0
      %vm370 = vcmp.ne.s32.totalorder %v326, 0
      %vm371 = vcmp.ne.s32.totalorder %v333, 0
      %vm372 = vcmp.ne.s32.totalorder %v340, 0
      %vm373 = vcmp.ne.s32.totalorder %v347, 0
      %vm374 = vcmp.ne.s32.totalorder %v354, 0
      %vm375 = vcmp.ne.s32.totalorder %v361, 0
      %vm376 = vcmp.ne.s32.totalorder %v368, 0
      %vm377 = vcmp.lt.s32.totalorder %v319, 0
      %vm378 = vcmp.lt.s32.totalorder %v326, 0
      %vm379 = vcmp.lt.s32.totalorder %v333, 0
      %vm380 = vcmp.lt.s32.totalorder %v340, 0
      %vm381 = vcmp.lt.s32.totalorder %v347, 0
      %vm382 = vcmp.lt.s32.totalorder %v354, 0
      %vm383 = vcmp.lt.s32.totalorder %v361, 0
      %vm384 = vcmp.lt.s32.totalorder %v368, 0
      %vm385 = vmand %vm377, %vm369
      %vm386 = vmand %vm378, %vm370
      %vm387 = vmand %vm379, %vm371
      %vm388 = vmand %vm380, %vm372
      %vm389 = vmand %vm381, %vm373
      %vm390 = vmand %vm382, %vm374
      %vm391 = vmand %vm383, %vm375
      %vm392 = vmand %vm384, %vm376
      %v393 = vadd.s32 %v319, 8
      %v394 = vadd.s32 %v326, 8
      %v395 = vadd.s32 %v333, 8
      %v396 = vadd.s32 %v340, 8
      %v397 = vadd.s32 %v347, 8
      %v398 = vadd.s32 %v354, 8
      %v399 = vadd.s32 %v361, 8
      %v400 = vadd.s32 %v368, 8
      %v401 = vsel %vm385, %v393, %v319
      %v402 = vsel %vm386, %v394, %v326
      %v403 = vsel %vm387, %v395, %v333
      %v404 = vsel %vm388, %v396, %v340
      %v405 = vsel %vm389, %v397, %v347
      %v406 = vsel %vm390, %v398, %v354
      %v407 = vsel %vm391, %v399, %v361
      %v408 = vsel %vm392, %v400, %v368
      %s409 = smul.u32 %s21, 64
      %s410 = scalar_lea.vmem [#allocation2], %s409
      %v411 = vld [vmem:[%s410] sm:$0xff]
      %v412 = vld [vmem:[%s410 + $0x8] sm:$0xff]
      %v413 = vld [vmem:[%s410 + $0x10] sm:$0xff]
      %v414 = vld [vmem:[%s410 + $0x18] sm:$0xff]
      %v415 = vld [vmem:[%s410 + $0x20] sm:$0xff]
      %v416 = vld [vmem:[%s410 + $0x28] sm:$0xff]
      %v417 = vld [vmem:[%s410 + $0x30] sm:$0xff]
      %v418 = vld [vmem:[%s410 + $0x38] sm:$0xff]
      %vm419 = vcmp.gt.s32.totalorder %v401, 0
      %vm420 = vcmp.gt.s32.totalorder %v402, 0
      %vm421 = vcmp.gt.s32.totalorder %v403, 0
      %vm422 = vcmp.gt.s32.totalorder %v404, 0
      %vm423 = vcmp.gt.s32.totalorder %v405, 0
      %vm424 = vcmp.gt.s32.totalorder %v406, 0
      %vm425 = vcmp.gt.s32.totalorder %v407, 0
      %vm426 = vcmp.gt.s32.totalorder %v408, 0
      %v427 = vrot.slane %v411, 7
      %v428 = vrot.slane %v412, 7
      %v429 = vrot.slane %v413, 7
      %v430 = vrot.slane %v414, 7
      %v431 = vrot.slane %v415, 7
      %v432 = vrot.slane %v416, 7
      %v433 = vrot.slane %v417, 7
      %v434 = vrot.slane %v418, 7
      %vm435 = vcmp.lt.s32.totalorder %v305, 1
      %v436 = vsel %vm435, %v433, %v434
      %v437 = vsel %vm435, %v432, %v433
      %v438 = vsel %vm435, %v431, %v432
      %v439 = vsel %vm435, %v430, %v431
      %v440 = vsel %vm435, %v429, %v430
      %v441 = vsel %vm435, %v428, %v429
      %v442 = vsel %vm435, %v427, %v428
      %v443 = vsel %vm435, %v434, %v427
      %v444 = vsel %vm419, 1, 0
      %v445 = vsel %vm420, 1, 0
      %v446 = vsel %vm421, 1, 0
      %v447 = vsel %vm422, 1, 0
      %v448 = vsel %vm423, 1, 0
      %v449 = vsel %vm424, 1, 0
      %v450 = vsel %vm425, 1, 0
      %v451 = vsel %vm426, 1, 0
      %vm452 = vcmp.eq.s32.totalorder %v444, 1
      %vm453 = vcmp.eq.s32.totalorder %v445, 1
      %vm454 = vcmp.eq.s32.totalorder %v446, 1
      %vm455 = vcmp.eq.s32.totalorder %v447, 1
      %vm456 = vcmp.eq.s32.totalorder %v448, 1
      %vm457 = vcmp.eq.s32.totalorder %v449, 1
      %vm458 = vcmp.eq.s32.totalorder %v450, 1
      %vm459 = vcmp.eq.s32.totalorder %v451, 1
      %v460 = vsel %vm452, %v443, 0.0
      %v461 = vsel %vm453, %v442, 0.0
      %v462 = vsel %vm454, %v441, 0.0
      %v463 = vsel %vm455, %v440, 0.0
      %v464 = vsel %vm456, %v439, 0.0
      %v465 = vsel %vm457, %v438, 0.0
      %v466 = vsel %vm458, %v437, 0.0
      %v467 = vsel %vm459, %v436, 0.0
      %v468 = vpack.c.bf16 %v461, %v460
      %v469 = vpack.c.bf16 %v463, %v462
      %v470 = vpack.c.bf16 %v465, %v464
      %v471 = vpack.c.bf16 %v467, %v466
      %v472 = vld [vmem:[%s261] sm:$0xf]
      %v473 = vld [vmem:[%s261 + $0x4] sm:$0xf]
      %v474 = vld [vmem:[%s261 + $0x8] sm:$0xf]
      %v475 = vld [vmem:[%s261 + $0xc] sm:$0xf]
      %v476 = vld [vmem:[%s261 + $0x10] sm:$0xf]
      %v477 = vld [vmem:[%s261 + $0x14] sm:$0xf]
      %v478 = vld [vmem:[%s261 + $0x18] sm:$0xf]
      %v479 = vld [vmem:[%s261 + $0x1c] sm:$0xf]
      %v480 = vld [vmem:[%s261 + $0x20] sm:$0xf]
      %v481 = vld [vmem:[%s261 + $0x24] sm:$0xf]
      %v482 = vld [vmem:[%s261 + $0x28] sm:$0xf]
      %v483 = vld [vmem:[%s261 + $0x2c] sm:$0xf]
      %v484 = vld [vmem:[%s261 + $0x30] sm:$0xf]
      %v485 = vld [vmem:[%s261 + $0x34] sm:$0xf]
      %v486 = vld [vmem:[%s261 + $0x38] sm:$0xf]
      %v487 = vld [vmem:[%s261 + $0x3c] sm:$0xf]
      %v488 = vpack.c.bf16 %v412, %v411
      %v489 = vpack.c.bf16 %v414, %v413
      %v490 = vpack.c.bf16 %v416, %v415
      %v491 = vpack.c.bf16 %v418, %v417
      %s492 = scalar_lea.vmem %s261, 64
      %v493 = vld [vmem:[%s492] sm:$0xf]
      %v494 = vld [vmem:[%s492 + $0x4] sm:$0xf]
      %v495 = vld [vmem:[%s492 + $0x8] sm:$0xf]
      %v496 = vld [vmem:[%s492 + $0xc] sm:$0xf]
      %v497 = vld [vmem:[%s492 + $0x10] sm:$0xf]
      %v498 = vld [vmem:[%s492 + $0x14] sm:$0xf]
      %v499 = vld [vmem:[%s492 + $0x18] sm:$0xf]
      %v500 = vld [vmem:[%s492 + $0x1c] sm:$0xf]
      %v501 = vld [vmem:[%s492 + $0x20] sm:$0xf]
      %v502 = vld [vmem:[%s492 + $0x24] sm:$0xf]
      %v503 = vld [vmem:[%s492 + $0x28] sm:$0xf]
      %v504 = vld [vmem:[%s492 + $0x2c] sm:$0xf]
      %v505 = vld [vmem:[%s492 + $0x30] sm:$0xf]
      %v506 = vld [vmem:[%s492 + $0x34] sm:$0xf]
      %v507 = vld [vmem:[%s492 + $0x38] sm:$0xf]
      %v508 = vld [vmem:[%s492 + $0x3c] sm:$0xf]
      %v525 = vunpack.c.l.b16 %v493
      %v526 = vunpack.c.l.b16 %v494
      %v527 = vunpack.c.l.b16 %v495
      %v528 = vunpack.c.l.b16 %v496
      %v529 = vunpack.c.l.b16 %v497
      %v530 = vunpack.c.l.b16 %v498
      %v531 = vunpack.c.l.b16 %v499
      %v532 = vunpack.c.l.b16 %v500
      %v533 = vunpack.c.l.b16 %v501
      %v534 = vunpack.c.l.b16 %v502
      %v535 = vunpack.c.l.b16 %v503
      %v536 = vunpack.c.l.b16 %v504
      %v537 = vunpack.c.l.b16 %v505
      %v538 = vunpack.c.l.b16 %v506
      %v539 = vunpack.c.l.b16 %v507
      %v540 = vunpack.c.l.b16 %v508
      %v541 = vpack.c.b16 %v526, %v525
      %v542 = vpack.c.b16 %v528, %v527
      %v543 = vpack.c.b16 %v530, %v529
      %v544 = vpack.c.b16 %v532, %v531
      %v545 = vpack.c.b16 %v534, %v533
      %v546 = vpack.c.b16 %v536, %v535
      %v547 = vpack.c.b16 %v538, %v537
      %v548 = vpack.c.b16 %v540, %v539
      %557 = vmatpush.bf16.msra.mxu0 %v548
      %558 = vmatpush.bf16.msra.mxu0 %v547
      %559 = vmatpush.bf16.msra.mxu0 %v546
      %560 = vmatpush.bf16.msra.mxu0 %v545
      %561 = vmatpush.bf16.msra.mxu0 %v544
      %562 = vmatpush.bf16.msra.mxu0 %v543
      %563 = vmatpush.bf16.msra.mxu0 %v542
      %564 = vmatpush.bf16.msra.mxu0 %v541
      %565 = vmatmul.bf16.gmra.mxu0 %v488
      %v566 = vpop.f32.mrf.mxu0
      %v567 = vadd.f32 0.0, %v566
      %v568 = vpop.f32.mrf.mxu0
      %v569 = vadd.f32 0.0, %v568
      %570 = vmatmul.bf16.gmra.mxu0 %v489
      %v571 = vpop.f32.mrf.mxu0
      %v572 = vadd.f32 0.0, %v571
      %v573 = vpop.f32.mrf.mxu0
      %v574 = vadd.f32 0.0, %v573
      %575 = vmatmul.bf16.gmra.mxu0 %v490
      %v576 = vpop.f32.mrf.mxu0
      %v577 = vadd.f32 0.0, %v576
      %v578 = vpop.f32.mrf.mxu0
      %v579 = vadd.f32 0.0, %v578
      %580 = vmatmul.bf16.gmra.mxu0 %v491
      %v581 = vpop.f32.mrf.mxu0
      %v582 = vadd.f32 0.0, %v581
      %v583 = vpop.f32.mrf.mxu0
      %v584 = vadd.f32 0.0, %v583
      %585 = vdwg.mxu0
      %v602 = vunpack.c.l.b16 %v472
      %v603 = vunpack.c.l.b16 %v473
      %v604 = vunpack.c.l.b16 %v474
      %v605 = vunpack.c.l.b16 %v475
      %v606 = vunpack.c.l.b16 %v476
      %v607 = vunpack.c.l.b16 %v477
      %v608 = vunpack.c.l.b16 %v478
      %v609 = vunpack.c.l.b16 %v479
      %v610 = vunpack.c.l.b16 %v480
      %v611 = vunpack.c.l.b16 %v481
      %v612 = vunpack.c.l.b16 %v482
      %v613 = vunpack.c.l.b16 %v483
      %v614 = vunpack.c.l.b16 %v484
      %v615 = vunpack.c.l.b16 %v485
      %v616 = vunpack.c.l.b16 %v486
      %v617 = vunpack.c.l.b16 %v487
      %v618 = vpack.c.b16 %v603, %v602
      %v619 = vpack.c.b16 %v605, %v604
      %v620 = vpack.c.b16 %v607, %v606
      %v621 = vpack.c.b16 %v609, %v608
      %v622 = vpack.c.b16 %v611, %v610
      %v623 = vpack.c.b16 %v613, %v612
      %v624 = vpack.c.b16 %v615, %v614
      %v625 = vpack.c.b16 %v617, %v616
      %634 = vmatpush.bf16.msra.mxu0 %v625
      %635 = vmatpush.bf16.msra.mxu0 %v624
      %636 = vmatpush.bf16.msra.mxu0 %v623
      %637 = vmatpush.bf16.msra.mxu0 %v622
      %638 = vmatpush.bf16.msra.mxu0 %v621
      %639 = vmatpush.bf16.msra.mxu0 %v620
      %640 = vmatpush.bf16.msra.mxu0 %v619
      %641 = vmatpush.bf16.msra.mxu0 %v618
      %642 = vmatmul.bf16.gmra.mxu0 %v468
      %v643 = vpop.f32.mrf.mxu0
      %v644 = vadd.f32 %v567, %v643
      %v645 = vpop.f32.mrf.mxu0
      %v646 = vadd.f32 %v569, %v645
      %647 = vmatmul.bf16.gmra.mxu0 %v469
      %v648 = vpop.f32.mrf.mxu0
      %v649 = vadd.f32 %v572, %v648
      %v650 = vpop.f32.mrf.mxu0
      %v651 = vadd.f32 %v574, %v650
      %652 = vmatmul.bf16.gmra.mxu0 %v470
      %v653 = vpop.f32.mrf.mxu0
      %v654 = vadd.f32 %v577, %v653
      %v655 = vpop.f32.mrf.mxu0
      %v656 = vadd.f32 %v579, %v655
      %657 = vmatmul.bf16.gmra.mxu0 %v471
      %v658 = vpop.f32.mrf.mxu0
      %v659 = vadd.f32 %v582, %v658
      %v660 = vpop.f32.mrf.mxu0
      %v661 = vadd.f32 %v584, %v660
      %662 = vdwg.mxu0
      %vm663 = vcmp.lt.s32.totalorder %v401, 7
      %vm664 = vcmp.lt.s32.totalorder %v402, 7
      %vm665 = vcmp.lt.s32.totalorder %v403, 7
      %vm666 = vcmp.lt.s32.totalorder %v404, 7
      %vm667 = vcmp.lt.s32.totalorder %v405, 7
      %vm668 = vcmp.lt.s32.totalorder %v406, 7
      %vm669 = vcmp.lt.s32.totalorder %v407, 7
      %vm670 = vcmp.lt.s32.totalorder %v408, 7
      %v671 = vrot.slane %v411, 1
      %v672 = vrot.slane %v412, 1
      %v673 = vrot.slane %v413, 1
      %v674 = vrot.slane %v414, 1
      %v675 = vrot.slane %v415, 1
      %v676 = vrot.slane %v416, 1
      %v677 = vrot.slane %v417, 1
      %v678 = vrot.slane %v418, 1
      %vm679 = vcmp.lt.s32.totalorder %v305, 7
      %v680 = vsel %vm679, %v677, %v678
      %v681 = vsel %vm679, %v676, %v677
      %v682 = vsel %vm679, %v675, %v676
      %v683 = vsel %vm679, %v674, %v675
      %v684 = vsel %vm679, %v673, %v674
      %v685 = vsel %vm679, %v672, %v673
      %v686 = vsel %vm679, %v671, %v672
      %v687 = vsel %vm679, %v678, %v671
      %v688 = vsel %vm663, 1, 0
      %v689 = vsel %vm664, 1, 0
      %v690 = vsel %vm665, 1, 0
      %v691 = vsel %vm666, 1, 0
      %v692 = vsel %vm667, 1, 0
      %v693 = vsel %vm668, 1, 0
      %v694 = vsel %vm669, 1, 0
      %v695 = vsel %vm670, 1, 0
      %vm696 = vcmp.eq.s32.totalorder %v688, 1
      %vm697 = vcmp.eq.s32.totalorder %v689, 1
      %vm698 = vcmp.eq.s32.totalorder %v690, 1
      %vm699 = vcmp.eq.s32.totalorder %v691, 1
      %vm700 = vcmp.eq.s32.totalorder %v692, 1
      %vm701 = vcmp.eq.s32.totalorder %v693, 1
      %vm702 = vcmp.eq.s32.totalorder %v694, 1
      %vm703 = vcmp.eq.s32.totalorder %v695, 1
      %v704 = vsel %vm696, %v686, 0.0
      %v705 = vsel %vm697, %v685, 0.0
      %v706 = vsel %vm698, %v684, 0.0
      %v707 = vsel %vm699, %v683, 0.0
      %v708 = vsel %vm700, %v682, 0.0
      %v709 = vsel %vm701, %v681, 0.0
      %v710 = vsel %vm702, %v680, 0.0
      %v711 = vsel %vm703, %v687, 0.0
      %v712 = vpack.c.bf16 %v705, %v704
      %v713 = vpack.c.bf16 %v707, %v706
      %v714 = vpack.c.bf16 %v709, %v708
      %v715 = vpack.c.bf16 %v711, %v710
      %s716 = scalar_lea.vmem %s261, 128
      %v717 = vld [vmem:[%s716] sm:$0xf]
      %v718 = vld [vmem:[%s716 + $0x4] sm:$0xf]
      %v719 = vld [vmem:[%s716 + $0x8] sm:$0xf]
      %v720 = vld [vmem:[%s716 + $0xc] sm:$0xf]
      %v721 = vld [vmem:[%s716 + $0x10] sm:$0xf]
      %v722 = vld [vmem:[%s716 + $0x14] sm:$0xf]
      %v723 = vld [vmem:[%s716 + $0x18] sm:$0xf]
      %v724 = vld [vmem:[%s716 + $0x1c] sm:$0xf]
      %v725 = vld [vmem:[%s716 + $0x20] sm:$0xf]
      %v726 = vld [vmem:[%s716 + $0x24] sm:$0xf]
      %v727 = vld [vmem:[%s716 + $0x28] sm:$0xf]
      %v728 = vld [vmem:[%s716 + $0x2c] sm:$0xf]
      %v729 = vld [vmem:[%s716 + $0x30] sm:$0xf]
      %v730 = vld [vmem:[%s716 + $0x34] sm:$0xf]
      %v731 = vld [vmem:[%s716 + $0x38] sm:$0xf]
      %v732 = vld [vmem:[%s716 + $0x3c] sm:$0xf]
      %v749 = vunpack.c.l.b16 %v717
      %v750 = vunpack.c.l.b16 %v718
      %v751 = vunpack.c.l.b16 %v719
      %v752 = vunpack.c.l.b16 %v720
      %v753 = vunpack.c.l.b16 %v721
      %v754 = vunpack.c.l.b16 %v722
      %v755 = vunpack.c.l.b16 %v723
      %v756 = vunpack.c.l.b16 %v724
      %v757 = vunpack.c.l.b16 %v725
      %v758 = vunpack.c.l.b16 %v726
      %v759 = vunpack.c.l.b16 %v727
      %v760 = vunpack.c.l.b16 %v728
      %v761 = vunpack.c.l.b16 %v729
      %v762 = vunpack.c.l.b16 %v730
      %v763 = vunpack.c.l.b16 %v731
      %v764 = vunpack.c.l.b16 %v732
      %v765 = vpack.c.b16 %v750, %v749
      %v766 = vpack.c.b16 %v752, %v751
      %v767 = vpack.c.b16 %v754, %v753
      %v768 = vpack.c.b16 %v756, %v755
      %v769 = vpack.c.b16 %v758, %v757
      %v770 = vpack.c.b16 %v760, %v759
      %v771 = vpack.c.b16 %v762, %v761
      %v772 = vpack.c.b16 %v764, %v763
      %781 = vmatpush.bf16.msra.mxu0 %v772
      %782 = vmatpush.bf16.msra.mxu0 %v771
      %783 = vmatpush.bf16.msra.mxu0 %v770
      %784 = vmatpush.bf16.msra.mxu0 %v769
      %785 = vmatpush.bf16.msra.mxu0 %v768
      %786 = vmatpush.bf16.msra.mxu0 %v767
      %787 = vmatpush.bf16.msra.mxu0 %v766
      %788 = vmatpush.bf16.msra.mxu0 %v765
      %789 = vmatmul.bf16.gmra.mxu0 %v712
      %v790 = vpop.f32.mrf.mxu0
      %v791 = vadd.f32 0.0, %v790
      %v792 = vpop.f32.mrf.mxu0
      %v793 = vadd.f32 0.0, %v792
      %794 = vmatmul.bf16.gmra.mxu0 %v713
      %v795 = vpop.f32.mrf.mxu0
      %v796 = vadd.f32 0.0, %v795
      %v797 = vpop.f32.mrf.mxu0
      %v798 = vadd.f32 0.0, %v797
      %799 = vmatmul.bf16.gmra.mxu0 %v714
      %v800 = vpop.f32.mrf.mxu0
      %v801 = vadd.f32 0.0, %v800
      %v802 = vpop.f32.mrf.mxu0
      %v803 = vadd.f32 0.0, %v802
      %804 = vmatmul.bf16.gmra.mxu0 %v715
      %v805 = vpop.f32.mrf.mxu0
      %v806 = vadd.f32 0.0, %v805
      %v807 = vpop.f32.mrf.mxu0
      %v808 = vadd.f32 0.0, %v807
      %809 = vdwg.mxu0
      %v810 = vadd.f32 %v644, %v791
      %v811 = vadd.f32 %v646, %v793
      %v812 = vadd.f32 %v649, %v796
      %v813 = vadd.f32 %v651, %v798
      %v814 = vadd.f32 %v654, %v801
      %v815 = vadd.f32 %v656, %v803
      %v816 = vadd.f32 %v659, %v806
      %v817 = vadd.f32 %v661, %v808
      %s818 = sadd.s32 %s303, 1
      %s819 = smul.u32 %s818, 8
      %s820 = scalar_lea.vmem [#allocation2], %s819
      %v821 = vld [vmem:[%s820] sm:$0xff]
      %v822 = vld [vmem:[%s820 + $0x8] sm:$0xff]
      %v823 = vld [vmem:[%s820 + $0x10] sm:$0xff]
      %v824 = vld [vmem:[%s820 + $0x18] sm:$0xff]
      %v825 = vld [vmem:[%s820 + $0x20] sm:$0xff]
      %v826 = vld [vmem:[%s820 + $0x28] sm:$0xff]
      %v827 = vld [vmem:[%s820 + $0x30] sm:$0xff]
      %v828 = vld [vmem:[%s820 + $0x38] sm:$0xff]
      %v829 = vrot.slane %v821, 7
      %v830 = vrot.slane %v822, 7
      %v831 = vrot.slane %v823, 7
      %v832 = vrot.slane %v824, 7
      %v833 = vrot.slane %v825, 7
      %v834 = vrot.slane %v826, 7
      %v835 = vrot.slane %v827, 7
      %v836 = vrot.slane %v828, 7
      %v837 = vsel %vm435, %v835, %v836
      %v838 = vsel %vm435, %v834, %v835
      %v839 = vsel %vm435, %v833, %v834
      %v840 = vsel %vm435, %v832, %v833
      %v841 = vsel %vm435, %v831, %v832
      %v842 = vsel %vm435, %v830, %v831
      %v843 = vsel %vm435, %v829, %v830
      %v844 = vsel %vm435, %v836, %v829
      %v845 = vsel %vm452, %v844, 0.0
      %v846 = vsel %vm453, %v843, 0.0
      %v847 = vsel %vm454, %v842, 0.0
      %v848 = vsel %vm455, %v841, 0.0
      %v849 = vsel %vm456, %v840, 0.0
      %v850 = vsel %vm457, %v839, 0.0
      %v851 = vsel %vm458, %v838, 0.0
      %v852 = vsel %vm459, %v837, 0.0
      %v853 = vpack.c.bf16 %v846, %v845
      %v854 = vpack.c.bf16 %v848, %v847
      %v855 = vpack.c.bf16 %v850, %v849
      %v856 = vpack.c.bf16 %v852, %v851
      %s857 = scalar_lea.vmem %s261, 192
      %v858 = vld [vmem:[%s857] sm:$0xf]
      %v859 = vld [vmem:[%s857 + $0x4] sm:$0xf]
      %v860 = vld [vmem:[%s857 + $0x8] sm:$0xf]
      %v861 = vld [vmem:[%s857 + $0xc] sm:$0xf]
      %v862 = vld [vmem:[%s857 + $0x10] sm:$0xf]
      %v863 = vld [vmem:[%s857 + $0x14] sm:$0xf]
      %v864 = vld [vmem:[%s857 + $0x18] sm:$0xf]
      %v865 = vld [vmem:[%s857 + $0x1c] sm:$0xf]
      %v866 = vld [vmem:[%s857 + $0x20] sm:$0xf]
      %v867 = vld [vmem:[%s857 + $0x24] sm:$0xf]
      %v868 = vld [vmem:[%s857 + $0x28] sm:$0xf]
      %v869 = vld [vmem:[%s857 + $0x2c] sm:$0xf]
      %v870 = vld [vmem:[%s857 + $0x30] sm:$0xf]
      %v871 = vld [vmem:[%s857 + $0x34] sm:$0xf]
      %v872 = vld [vmem:[%s857 + $0x38] sm:$0xf]
      %v873 = vld [vmem:[%s857 + $0x3c] sm:$0xf]
      %v890 = vunpack.c.l.b16 %v858
      %v891 = vunpack.c.l.b16 %v859
      %v892 = vunpack.c.l.b16 %v860
      %v893 = vunpack.c.l.b16 %v861
      %v894 = vunpack.c.l.b16 %v862
      %v895 = vunpack.c.l.b16 %v863
      %v896 = vunpack.c.l.b16 %v864
      %v897 = vunpack.c.l.b16 %v865
      %v898 = vunpack.c.l.b16 %v866
      %v899 = vunpack.c.l.b16 %v867
      %v900 = vunpack.c.l.b16 %v868
      %v901 = vunpack.c.l.b16 %v869
      %v902 = vunpack.c.l.b16 %v870
      %v903 = vunpack.c.l.b16 %v871
      %v904 = vunpack.c.l.b16 %v872
      %v905 = vunpack.c.l.b16 %v873
      %v906 = vpack.c.b16 %v891, %v890
      %v907 = vpack.c.b16 %v893, %v892
      %v908 = vpack.c.b16 %v895, %v894
      %v909 = vpack.c.b16 %v897, %v896
      %v910 = vpack.c.b16 %v899, %v898
      %v911 = vpack.c.b16 %v901, %v900
      %v912 = vpack.c.b16 %v903, %v902
      %v913 = vpack.c.b16 %v905, %v904
      %922 = vmatpush.bf16.msra.mxu0 %v913
      %923 = vmatpush.bf16.msra.mxu0 %v912
      %924 = vmatpush.bf16.msra.mxu0 %v911
      %925 = vmatpush.bf16.msra.mxu0 %v910
      %926 = vmatpush.bf16.msra.mxu0 %v909
      %927 = vmatpush.bf16.msra.mxu0 %v908
      %928 = vmatpush.bf16.msra.mxu0 %v907
      %929 = vmatpush.bf16.msra.mxu0 %v906
      %930 = vmatmul.bf16.gmra.mxu0 %v853
      %v931 = vpop.f32.mrf.mxu0
      %v932 = vadd.f32 0.0, %v931
      %v933 = vpop.f32.mrf.mxu0
      %v934 = vadd.f32 0.0, %v933
      %935 = vmatmul.bf16.gmra.mxu0 %v854
      %v936 = vpop.f32.mrf.mxu0
      %v937 = vadd.f32 0.0, %v936
      %v938 = vpop.f32.mrf.mxu0
      %v939 = vadd.f32 0.0, %v938
      %940 = vmatmul.bf16.gmra.mxu0 %v855
      %v941 = vpop.f32.mrf.mxu0
      %v942 = vadd.f32 0.0, %v941
      %v943 = vpop.f32.mrf.mxu0
      %v944 = vadd.f32 0.0, %v943
      %945 = vmatmul.bf16.gmra.mxu0 %v856
      %v946 = vpop.f32.mrf.mxu0
      %v947 = vadd.f32 0.0, %v946
      %v948 = vpop.f32.mrf.mxu0
      %v949 = vadd.f32 0.0, %v948
      %950 = vdwg.mxu0
      %v951 = vadd.f32 %v810, %v932
      %v952 = vadd.f32 %v811, %v934
      %v953 = vadd.f32 %v812, %v937
      %v954 = vadd.f32 %v813, %v939
      %v955 = vadd.f32 %v814, %v942
      %v956 = vadd.f32 %v815, %v944
      %v957 = vadd.f32 %v816, %v947
      %v958 = vadd.f32 %v817, %v949
      %v959 = vpack.c.bf16 %v822, %v821
      %v960 = vpack.c.bf16 %v824, %v823
      %v961 = vpack.c.bf16 %v826, %v825
      %v962 = vpack.c.bf16 %v828, %v827
      %s963 = scalar_lea.vmem %s261, 256
      %v964 = vld [vmem:[%s963] sm:$0xf]
      %v965 = vld [vmem:[%s963 + $0x4] sm:$0xf]
      %v966 = vld [vmem:[%s963 + $0x8] sm:$0xf]
      %v967 = vld [vmem:[%s963 + $0xc] sm:$0xf]
      %v968 = vld [vmem:[%s963 + $0x10] sm:$0xf]
      %v969 = vld [vmem:[%s963 + $0x14] sm:$0xf]
      %v970 = vld [vmem:[%s963 + $0x18] sm:$0xf]
      %v971 = vld [vmem:[%s963 + $0x1c] sm:$0xf]
      %v972 = vld [vmem:[%s963 + $0x20] sm:$0xf]
      %v973 = vld [vmem:[%s963 + $0x24] sm:$0xf]
      %v974 = vld [vmem:[%s963 + $0x28] sm:$0xf]
      %v975 = vld [vmem:[%s963 + $0x2c] sm:$0xf]
      %v976 = vld [vmem:[%s963 + $0x30] sm:$0xf]
      %v977 = vld [vmem:[%s963 + $0x34] sm:$0xf]
      %v978 = vld [vmem:[%s963 + $0x38] sm:$0xf]
      %v979 = vld [vmem:[%s963 + $0x3c] sm:$0xf]
      %v996 = vunpack.c.l.b16 %v964
      %v997 = vunpack.c.l.b16 %v965
      %v998 = vunpack.c.l.b16 %v966
      %v999 = vunpack.c.l.b16 %v967
      %v1000 = vunpack.c.l.b16 %v968
      %v1001 = vunpack.c.l.b16 %v969
      %v1002 = vunpack.c.l.b16 %v970
      %v1003 = vunpack.c.l.b16 %v971
      %v1004 = vunpack.c.l.b16 %v972
      %v1005 = vunpack.c.l.b16 %v973
      %v1006 = vunpack.c.l.b16 %v974
      %v1007 = vunpack.c.l.b16 %v975
      %v1008 = vunpack.c.l.b16 %v976
      %v1009 = vunpack.c.l.b16 %v977
      %v1010 = vunpack.c.l.b16 %v978
      %v1011 = vunpack.c.l.b16 %v979
      %v1012 = vpack.c.b16 %v997, %v996
      %v1013 = vpack.c.b16 %v999, %v998
      %v1014 = vpack.c.b16 %v1001, %v1000
      %v1015 = vpack.c.b16 %v1003, %v1002
      %v1016 = vpack.c.b16 %v1005, %v1004
      %v1017 = vpack.c.b16 %v1007, %v1006
      %v1018 = vpack.c.b16 %v1009, %v1008
      %v1019 = vpack.c.b16 %v1011, %v1010
      %1028 = vmatpush.bf16.msra.mxu0 %v1019
      %1029 = vmatpush.bf16.msra.mxu0 %v1018
      %1030 = vmatpush.bf16.msra.mxu0 %v1017
      %1031 = vmatpush.bf16.msra.mxu0 %v1016
      %1032 = vmatpush.bf16.msra.mxu0 %v1015
      %1033 = vmatpush.bf16.msra.mxu0 %v1014
      %1034 = vmatpush.bf16.msra.mxu0 %v1013
      %1035 = vmatpush.bf16.msra.mxu0 %v1012
      %1036 = vmatmul.bf16.gmra.mxu0 %v959
      %v1037 = vpop.f32.mrf.mxu0
      %v1038 = vadd.f32 0.0, %v1037
      %v1039 = vpop.f32.mrf.mxu0
      %v1040 = vadd.f32 0.0, %v1039
      %1041 = vmatmul.bf16.gmra.mxu0 %v960
      %v1042 = vpop.f32.mrf.mxu0
      %v1043 = vadd.f32 0.0, %v1042
      %v1044 = vpop.f32.mrf.mxu0
      %v1045 = vadd.f32 0.0, %v1044
      %1046 = vmatmul.bf16.gmra.mxu0 %v961
      %v1047 = vpop.f32.mrf.mxu0
      %v1048 = vadd.f32 0.0, %v1047
      %v1049 = vpop.f32.mrf.mxu0
      %v1050 = vadd.f32 0.0, %v1049
      %1051 = vmatmul.bf16.gmra.mxu0 %v962
      %v1052 = vpop.f32.mrf.mxu0
      %v1053 = vadd.f32 0.0, %v1052
      %v1054 = vpop.f32.mrf.mxu0
      %v1055 = vadd.f32 0.0, %v1054
      %1056 = vdwg.mxu0
      %v1057 = vadd.f32 %v951, %v1038
      %v1058 = vadd.f32 %v952, %v1040
      %v1059 = vadd.f32 %v953, %v1043
      %v1060 = vadd.f32 %v954, %v1045
      %v1061 = vadd.f32 %v955, %v1048
      %v1062 = vadd.f32 %v956, %v1050
      %v1063 = vadd.f32 %v957, %v1053
      %v1064 = vadd.f32 %v958, %v1055
      %v1065 = vrot.slane %v821, 1
      %v1066 = vrot.slane %v822, 1
      %v1067 = vrot.slane %v823, 1
      %v1068 = vrot.slane %v824, 1
      %v1069 = vrot.slane %v825, 1
      %v1070 = vrot.slane %v826, 1
      %v1071 = vrot.slane %v827, 1
      %v1072 = vrot.slane %v828, 1
      %v1073 = vsel %vm679, %v1071, %v1072
      %v1074 = vsel %vm679, %v1070, %v1071
      %v1075 = vsel %vm679, %v1069, %v1070
      %v1076 = vsel %vm679, %v1068, %v1069
      %v1077 = vsel %vm679, %v1067, %v1068
      %v1078 = vsel %vm679, %v1066, %v1067
      %v1079 = vsel %vm679, %v1065, %v1066
      %v1080 = vsel %vm679, %v1072, %v1065
      %v1081 = vsel %vm696, %v1079, 0.0
      %v1082 = vsel %vm697, %v1078, 0.0
      %v1083 = vsel %vm698, %v1077, 0.0
      %v1084 = vsel %vm699, %v1076, 0.0
      %v1085 = vsel %vm700, %v1075, 0.0
      %v1086 = vsel %vm701, %v1074, 0.0
      %v1087 = vsel %vm702, %v1073, 0.0
      %v1088 = vsel %vm703, %v1080, 0.0
      %v1089 = vpack.c.bf16 %v1082, %v1081
      %v1090 = vpack.c.bf16 %v1084, %v1083
      %v1091 = vpack.c.bf16 %v1086, %v1085
      %v1092 = vpack.c.bf16 %v1088, %v1087
      %s1093 = scalar_lea.vmem %s261, 320
      %v1094 = vld [vmem:[%s1093] sm:$0xf]
      %v1095 = vld [vmem:[%s1093 + $0x4] sm:$0xf]
      %v1096 = vld [vmem:[%s1093 + $0x8] sm:$0xf]
      %v1097 = vld [vmem:[%s1093 + $0xc] sm:$0xf]
      %v1098 = vld [vmem:[%s1093 + $0x10] sm:$0xf]
      %v1099 = vld [vmem:[%s1093 + $0x14] sm:$0xf]
      %v1100 = vld [vmem:[%s1093 + $0x18] sm:$0xf]
      %v1101 = vld [vmem:[%s1093 + $0x1c] sm:$0xf]
      %v1102 = vld [vmem:[%s1093 + $0x20] sm:$0xf]
      %v1103 = vld [vmem:[%s1093 + $0x24] sm:$0xf]
      %v1104 = vld [vmem:[%s1093 + $0x28] sm:$0xf]
      %v1105 = vld [vmem:[%s1093 + $0x2c] sm:$0xf]
      %v1106 = vld [vmem:[%s1093 + $0x30] sm:$0xf]
      %v1107 = vld [vmem:[%s1093 + $0x34] sm:$0xf]
      %v1108 = vld [vmem:[%s1093 + $0x38] sm:$0xf]
      %v1109 = vld [vmem:[%s1093 + $0x3c] sm:$0xf]
      %v1126 = vunpack.c.l.b16 %v1094
      %v1127 = vunpack.c.l.b16 %v1095
      %v1128 = vunpack.c.l.b16 %v1096
      %v1129 = vunpack.c.l.b16 %v1097
      %v1130 = vunpack.c.l.b16 %v1098
      %v1131 = vunpack.c.l.b16 %v1099
      %v1132 = vunpack.c.l.b16 %v1100
      %v1133 = vunpack.c.l.b16 %v1101
      %v1134 = vunpack.c.l.b16 %v1102
      %v1135 = vunpack.c.l.b16 %v1103
      %v1136 = vunpack.c.l.b16 %v1104
      %v1137 = vunpack.c.l.b16 %v1105
      %v1138 = vunpack.c.l.b16 %v1106
      %v1139 = vunpack.c.l.b16 %v1107
      %v1140 = vunpack.c.l.b16 %v1108
      %v1141 = vunpack.c.l.b16 %v1109
      %v1142 = vpack.c.b16 %v1127, %v1126
      %v1143 = vpack.c.b16 %v1129, %v1128
      %v1144 = vpack.c.b16 %v1131, %v1130
      %v1145 = vpack.c.b16 %v1133, %v1132
      %v1146 = vpack.c.b16 %v1135, %v1134
      %v1147 = vpack.c.b16 %v1137, %v1136
      %v1148 = vpack.c.b16 %v1139, %v1138
      %v1149 = vpack.c.b16 %v1141, %v1140
      %1158 = vmatpush.bf16.msra.mxu0 %v1149
      %1159 = vmatpush.bf16.msra.mxu0 %v1148
      %1160 = vmatpush.bf16.msra.mxu0 %v1147
      %1161 = vmatpush.bf16.msra.mxu0 %v1146
      %1162 = vmatpush.bf16.msra.mxu0 %v1145
      %1163 = vmatpush.bf16.msra.mxu0 %v1144
      %1164 = vmatpush.bf16.msra.mxu0 %v1143
      %1165 = vmatpush.bf16.msra.mxu0 %v1142
      %1166 = vmatmul.bf16.gmra.mxu0 %v1089
      %v1167 = vpop.f32.mrf.mxu0
      %v1168 = vadd.f32 0.0, %v1167
      %v1169 = vpop.f32.mrf.mxu0
      %v1170 = vadd.f32 0.0, %v1169
      %1171 = vmatmul.bf16.gmra.mxu0 %v1090
      %v1172 = vpop.f32.mrf.mxu0
      %v1173 = vadd.f32 0.0, %v1172
      %v1174 = vpop.f32.mrf.mxu0
      %v1175 = vadd.f32 0.0, %v1174
      %1176 = vmatmul.bf16.gmra.mxu0 %v1091
      %v1177 = vpop.f32.mrf.mxu0
      %v1178 = vadd.f32 0.0, %v1177
      %v1179 = vpop.f32.mrf.mxu0
      %v1180 = vadd.f32 0.0, %v1179
      %1181 = vmatmul.bf16.gmra.mxu0 %v1092
      %v1182 = vpop.f32.mrf.mxu0
      %v1183 = vadd.f32 0.0, %v1182
      %v1184 = vpop.f32.mrf.mxu0
      %v1185 = vadd.f32 0.0, %v1184
      %1186 = vdwg.mxu0
      %v1187 = vadd.f32 %v1057, %v1168
      %v1188 = vadd.f32 %v1058, %v1170
      %v1189 = vadd.f32 %v1059, %v1173
      %v1190 = vadd.f32 %v1060, %v1175
      %v1191 = vadd.f32 %v1061, %v1178
      %v1192 = vadd.f32 %v1062, %v1180
      %v1193 = vadd.f32 %v1063, %v1183
      %v1194 = vadd.f32 %v1064, %v1185
      %s1195 = sadd.s32 %s303, 2
      %s1196 = smul.u32 %s1195, 8
      %s1197 = scalar_lea.vmem [#allocation2], %s1196
      %v1198 = vld [vmem:[%s1197] sm:$0xff]
      %v1199 = vld [vmem:[%s1197 + $0x8] sm:$0xff]
      %v1200 = vld [vmem:[%s1197 + $0x10] sm:$0xff]
      %v1201 = vld [vmem:[%s1197 + $0x18] sm:$0xff]
      %v1202 = vld [vmem:[%s1197 + $0x20] sm:$0xff]
      %v1203 = vld [vmem:[%s1197 + $0x28] sm:$0xff]
      %v1204 = vld [vmem:[%s1197 + $0x30] sm:$0xff]
      %v1205 = vld [vmem:[%s1197 + $0x38] sm:$0xff]
      %v1206 = vrot.slane %v1198, 7
      %v1207 = vrot.slane %v1199, 7
      %v1208 = vrot.slane %v1200, 7
      %v1209 = vrot.slane %v1201, 7
      %v1210 = vrot.slane %v1202, 7
      %v1211 = vrot.slane %v1203, 7
      %v1212 = vrot.slane %v1204, 7
      %v1213 = vrot.slane %v1205, 7
      %v1214 = vsel %vm435, %v1212, %v1213
      %v1215 = vsel %vm435, %v1211, %v1212
      %v1216 = vsel %vm435, %v1210, %v1211
      %v1217 = vsel %vm435, %v1209, %v1210
      %v1218 = vsel %vm435, %v1208, %v1209
      %v1219 = vsel %vm435, %v1207, %v1208
      %v1220 = vsel %vm435, %v1206, %v1207
      %v1221 = vsel %vm435, %v1213, %v1206
      %v1222 = vsel %vm452, %v1221, 0.0
      %v1223 = vsel %vm453, %v1220, 0.0
      %v1224 = vsel %vm454, %v1219, 0.0
      %v1225 = vsel %vm455, %v1218, 0.0
      %v1226 = vsel %vm456, %v1217, 0.0
      %v1227 = vsel %vm457, %v1216, 0.0
      %v1228 = vsel %vm458, %v1215, 0.0
      %v1229 = vsel %vm459, %v1214, 0.0
      %v1230 = vpack.c.bf16 %v1223, %v1222
      %v1231 = vpack.c.bf16 %v1225, %v1224
      %v1232 = vpack.c.bf16 %v1227, %v1226
      %v1233 = vpack.c.bf16 %v1229, %v1228
      %s1234 = scalar_lea.vmem %s261, 384
      %v1235 = vld [vmem:[%s1234] sm:$0xf]
      %v1236 = vld [vmem:[%s1234 + $0x4] sm:$0xf]
      %v1237 = vld [vmem:[%s1234 + $0x8] sm:$0xf]
      %v1238 = vld [vmem:[%s1234 + $0xc] sm:$0xf]
      %v1239 = vld [vmem:[%s1234 + $0x10] sm:$0xf]
      %v1240 = vld [vmem:[%s1234 + $0x14] sm:$0xf]
      %v1241 = vld [vmem:[%s1234 + $0x18] sm:$0xf]
      %v1242 = vld [vmem:[%s1234 + $0x1c] sm:$0xf]
      %v1243 = vld [vmem:[%s1234 + $0x20] sm:$0xf]
      %v1244 = vld [vmem:[%s1234 + $0x24] sm:$0xf]
      %v1245 = vld [vmem:[%s1234 + $0x28] sm:$0xf]
      %v1246 = vld [vmem:[%s1234 + $0x2c] sm:$0xf]
      %v1247 = vld [vmem:[%s1234 + $0x30] sm:$0xf]
      %v1248 = vld [vmem:[%s1234 + $0x34] sm:$0xf]
      %v1249 = vld [vmem:[%s1234 + $0x38] sm:$0xf]
      %v1250 = vld [vmem:[%s1234 + $0x3c] sm:$0xf]
      %v1267 = vunpack.c.l.b16 %v1235
      %v1268 = vunpack.c.l.b16 %v1236
      %v1269 = vunpack.c.l.b16 %v1237
      %v1270 = vunpack.c.l.b16 %v1238
      %v1271 = vunpack.c.l.b16 %v1239
      %v1272 = vunpack.c.l.b16 %v1240
      %v1273 = vunpack.c.l.b16 %v1241
      %v1274 = vunpack.c.l.b16 %v1242
      %v1275 = vunpack.c.l.b16 %v1243
      %v1276 = vunpack.c.l.b16 %v1244
      %v1277 = vunpack.c.l.b16 %v1245
      %v1278 = vunpack.c.l.b16 %v1246
      %v1279 = vunpack.c.l.b16 %v1247
      %v1280 = vunpack.c.l.b16 %v1248
      %v1281 = vunpack.c.l.b16 %v1249
      %v1282 = vunpack.c.l.b16 %v1250
      %v1283 = vpack.c.b16 %v1268, %v1267
      %v1284 = vpack.c.b16 %v1270, %v1269
      %v1285 = vpack.c.b16 %v1272, %v1271
      %v1286 = vpack.c.b16 %v1274, %v1273
      %v1287 = vpack.c.b16 %v1276, %v1275
      %v1288 = vpack.c.b16 %v1278, %v1277
      %v1289 = vpack.c.b16 %v1280, %v1279
      %v1290 = vpack.c.b16 %v1282, %v1281
      %1299 = vmatpush.bf16.msra.mxu0 %v1290
      %1300 = vmatpush.bf16.msra.mxu0 %v1289
      %1301 = vmatpush.bf16.msra.mxu0 %v1288
      %1302 = vmatpush.bf16.msra.mxu0 %v1287
      %1303 = vmatpush.bf16.msra.mxu0 %v1286
      %1304 = vmatpush.bf16.msra.mxu0 %v1285
      %1305 = vmatpush.bf16.msra.mxu0 %v1284
      %1306 = vmatpush.bf16.msra.mxu0 %v1283
      %1307 = vmatmul.bf16.gmra.mxu0 %v1230
      %v1308 = vpop.f32.mrf.mxu0
      %v1309 = vadd.f32 0.0, %v1308
      %v1310 = vpop.f32.mrf.mxu0
      %v1311 = vadd.f32 0.0, %v1310
      %1312 = vmatmul.bf16.gmra.mxu0 %v1231
      %v1313 = vpop.f32.mrf.mxu0
      %v1314 = vadd.f32 0.0, %v1313
      %v1315 = vpop.f32.mrf.mxu0
      %v1316 = vadd.f32 0.0, %v1315
      %1317 = vmatmul.bf16.gmra.mxu0 %v1232
      %v1318 = vpop.f32.mrf.mxu0
      %v1319 = vadd.f32 0.0, %v1318
      %v1320 = vpop.f32.mrf.mxu0
      %v1321 = vadd.f32 0.0, %v1320
      %1322 = vmatmul.bf16.gmra.mxu0 %v1233
      %v1323 = vpop.f32.mrf.mxu0
      %v1324 = vadd.f32 0.0, %v1323
      %v1325 = vpop.f32.mrf.mxu0
      %v1326 = vadd.f32 0.0, %v1325
      %1327 = vdwg.mxu0
      %v1328 = vadd.f32 %v1187, %v1309
      %v1329 = vadd.f32 %v1188, %v1311
      %v1330 = vadd.f32 %v1189, %v1314
      %v1331 = vadd.f32 %v1190, %v1316
      %v1332 = vadd.f32 %v1191, %v1319
      %v1333 = vadd.f32 %v1192, %v1321
      %v1334 = vadd.f32 %v1193, %v1324
      %v1335 = vadd.f32 %v1194, %v1326
      %v1336 = vpack.c.bf16 %v1199, %v1198
      %v1337 = vpack.c.bf16 %v1201, %v1200
      %v1338 = vpack.c.bf16 %v1203, %v1202
      %v1339 = vpack.c.bf16 %v1205, %v1204
      %s1340 = scalar_lea.vmem %s261, 448
      %v1341 = vld [vmem:[%s1340] sm:$0xf]
      %v1342 = vld [vmem:[%s1340 + $0x4] sm:$0xf]
      %v1343 = vld [vmem:[%s1340 + $0x8] sm:$0xf]
      %v1344 = vld [vmem:[%s1340 + $0xc] sm:$0xf]
      %v1345 = vld [vmem:[%s1340 + $0x10] sm:$0xf]
      %v1346 = vld [vmem:[%s1340 + $0x14] sm:$0xf]
      %v1347 = vld [vmem:[%s1340 + $0x18] sm:$0xf]
      %v1348 = vld [vmem:[%s1340 + $0x1c] sm:$0xf]
      %v1349 = vld [vmem:[%s1340 + $0x20] sm:$0xf]
      %v1350 = vld [vmem:[%s1340 + $0x24] sm:$0xf]
      %v1351 = vld [vmem:[%s1340 + $0x28] sm:$0xf]
      %v1352 = vld [vmem:[%s1340 + $0x2c] sm:$0xf]
      %v1353 = vld [vmem:[%s1340 + $0x30] sm:$0xf]
      %v1354 = vld [vmem:[%s1340 + $0x34] sm:$0xf]
      %v1355 = vld [vmem:[%s1340 + $0x38] sm:$0xf]
      %v1356 = vld [vmem:[%s1340 + $0x3c] sm:$0xf]
      %v1373 = vunpack.c.l.b16 %v1341
      %v1374 = vunpack.c.l.b16 %v1342
      %v1375 = vunpack.c.l.b16 %v1343
      %v1376 = vunpack.c.l.b16 %v1344
      %v1377 = vunpack.c.l.b16 %v1345
      %v1378 = vunpack.c.l.b16 %v1346
      %v1379 = vunpack.c.l.b16 %v1347
      %v1380 = vunpack.c.l.b16 %v1348
      %v1381 = vunpack.c.l.b16 %v1349
      %v1382 = vunpack.c.l.b16 %v1350
      %v1383 = vunpack.c.l.b16 %v1351
      %v1384 = vunpack.c.l.b16 %v1352
      %v1385 = vunpack.c.l.b16 %v1353
      %v1386 = vunpack.c.l.b16 %v1354
      %v1387 = vunpack.c.l.b16 %v1355
      %v1388 = vunpack.c.l.b16 %v1356
      %v1389 = vpack.c.b16 %v1374, %v1373
      %v1390 = vpack.c.b16 %v1376, %v1375
      %v1391 = vpack.c.b16 %v1378, %v1377
      %v1392 = vpack.c.b16 %v1380, %v1379
      %v1393 = vpack.c.b16 %v1382, %v1381
      %v1394 = vpack.c.b16 %v1384, %v1383
      %v1395 = vpack.c.b16 %v1386, %v1385
      %v1396 = vpack.c.b16 %v1388, %v1387
      %1405 = vmatpush.bf16.msra.mxu0 %v1396
      %1406 = vmatpush.bf16.msra.mxu0 %v1395
      %1407 = vmatpush.bf16.msra.mxu0 %v1394
      %1408 = vmatpush.bf16.msra.mxu0 %v1393
      %1409 = vmatpush.bf16.msra.mxu0 %v1392
      %1410 = vmatpush.bf16.msra.mxu0 %v1391
      %1411 = vmatpush.bf16.msra.mxu0 %v1390
      %1412 = vmatpush.bf16.msra.mxu0 %v1389
      %1413 = vmatmul.bf16.gmra.mxu0 %v1336
      %v1414 = vpop.f32.mrf.mxu0
      %v1415 = vadd.f32 0.0, %v1414
      %v1416 = vpop.f32.mrf.mxu0
      %v1417 = vadd.f32 0.0, %v1416
      %1418 = vmatmul.bf16.gmra.mxu0 %v1337
      %v1419 = vpop.f32.mrf.mxu0
      %v1420 = vadd.f32 0.0, %v1419
      %v1421 = vpop.f32.mrf.mxu0
      %v1422 = vadd.f32 0.0, %v1421
      %1423 = vmatmul.bf16.gmra.mxu0 %v1338
      %v1424 = vpop.f32.mrf.mxu0
      %v1425 = vadd.f32 0.0, %v1424
      %v1426 = vpop.f32.mrf.mxu0
      %v1427 = vadd.f32 0.0, %v1426
      %1428 = vmatmul.bf16.gmra.mxu0 %v1339
      %v1429 = vpop.f32.mrf.mxu0
      %v1430 = vadd.f32 0.0, %v1429
      %v1431 = vpop.f32.mrf.mxu0
      %v1432 = vadd.f32 0.0, %v1431
      %1433 = vdwg.mxu0
      %v1434 = vadd.f32 %v1328, %v1415
      %v1435 = vadd.f32 %v1329, %v1417
      %v1436 = vadd.f32 %v1330, %v1420
      %v1437 = vadd.f32 %v1331, %v1422
      %v1438 = vadd.f32 %v1332, %v1425
      %v1439 = vadd.f32 %v1333, %v1427
      %v1440 = vadd.f32 %v1334, %v1430
      %v1441 = vadd.f32 %v1335, %v1432
      %v1442 = vrot.slane %v1198, 1
      %v1443 = vrot.slane %v1199, 1
      %v1444 = vrot.slane %v1200, 1
      %v1445 = vrot.slane %v1201, 1
      %v1446 = vrot.slane %v1202, 1
      %v1447 = vrot.slane %v1203, 1
      %v1448 = vrot.slane %v1204, 1
      %v1449 = vrot.slane %v1205, 1
      %v1450 = vsel %vm679, %v1448, %v1449
      %v1451 = vsel %vm679, %v1447, %v1448
      %v1452 = vsel %vm679, %v1446, %v1447
      %v1453 = vsel %vm679, %v1445, %v1446
      %v1454 = vsel %vm679, %v1444, %v1445
      %v1455 = vsel %vm679, %v1443, %v1444
      %v1456 = vsel %vm679, %v1442, %v1443
      %v1457 = vsel %vm679, %v1449, %v1442
      %v1458 = vsel %vm696, %v1456, 0.0
      %v1459 = vsel %vm697, %v1455, 0.0
      %v1460 = vsel %vm698, %v1454, 0.0
      %v1461 = vsel %vm699, %v1453, 0.0
      %v1462 = vsel %vm700, %v1452, 0.0
      %v1463 = vsel %vm701, %v1451, 0.0
      %v1464 = vsel %vm702, %v1450, 0.0
      %v1465 = vsel %vm703, %v1457, 0.0
      %v1466 = vpack.c.bf16 %v1459, %v1458
      %v1467 = vpack.c.bf16 %v1461, %v1460
      %v1468 = vpack.c.bf16 %v1463, %v1462
      %v1469 = vpack.c.bf16 %v1465, %v1464
      %s1470 = scalar_lea.vmem %s261, 512
      %v1471 = vld [vmem:[%s1470] sm:$0xf]
      %v1472 = vld [vmem:[%s1470 + $0x4] sm:$0xf]
      %v1473 = vld [vmem:[%s1470 + $0x8] sm:$0xf]
      %v1474 = vld [vmem:[%s1470 + $0xc] sm:$0xf]
      %v1475 = vld [vmem:[%s1470 + $0x10] sm:$0xf]
      %v1476 = vld [vmem:[%s1470 + $0x14] sm:$0xf]
      %v1477 = vld [vmem:[%s1470 + $0x18] sm:$0xf]
      %v1478 = vld [vmem:[%s1470 + $0x1c] sm:$0xf]
      %v1479 = vld [vmem:[%s1470 + $0x20] sm:$0xf]
      %v1480 = vld [vmem:[%s1470 + $0x24] sm:$0xf]
      %v1481 = vld [vmem:[%s1470 + $0x28] sm:$0xf]
      %v1482 = vld [vmem:[%s1470 + $0x2c] sm:$0xf]
      %v1483 = vld [vmem:[%s1470 + $0x30] sm:$0xf]
      %v1484 = vld [vmem:[%s1470 + $0x34] sm:$0xf]
      %v1485 = vld [vmem:[%s1470 + $0x38] sm:$0xf]
      %v1486 = vld [vmem:[%s1470 + $0x3c] sm:$0xf]
      %v1503 = vunpack.c.l.b16 %v1471
      %v1504 = vunpack.c.l.b16 %v1472
      %v1505 = vunpack.c.l.b16 %v1473
      %v1506 = vunpack.c.l.b16 %v1474
      %v1507 = vunpack.c.l.b16 %v1475
      %v1508 = vunpack.c.l.b16 %v1476
      %v1509 = vunpack.c.l.b16 %v1477
      %v1510 = vunpack.c.l.b16 %v1478
      %v1511 = vunpack.c.l.b16 %v1479
      %v1512 = vunpack.c.l.b16 %v1480
      %v1513 = vunpack.c.l.b16 %v1481
      %v1514 = vunpack.c.l.b16 %v1482
      %v1515 = vunpack.c.l.b16 %v1483
      %v1516 = vunpack.c.l.b16 %v1484
      %v1517 = vunpack.c.l.b16 %v1485
      %v1518 = vunpack.c.l.b16 %v1486
      %v1519 = vpack.c.b16 %v1504, %v1503
      %v1520 = vpack.c.b16 %v1506, %v1505
      %v1521 = vpack.c.b16 %v1508, %v1507
      %v1522 = vpack.c.b16 %v1510, %v1509
      %v1523 = vpack.c.b16 %v1512, %v1511
      %v1524 = vpack.c.b16 %v1514, %v1513
      %v1525 = vpack.c.b16 %v1516, %v1515
      %v1526 = vpack.c.b16 %v1518, %v1517
      %1535 = vmatpush.bf16.msra.mxu0 %v1526
      %1536 = vmatpush.bf16.msra.mxu0 %v1525
      %1537 = vmatpush.bf16.msra.mxu0 %v1524
      %1538 = vmatpush.bf16.msra.mxu0 %v1523
      %1539 = vmatpush.bf16.msra.mxu0 %v1522
      %1540 = vmatpush.bf16.msra.mxu0 %v1521
      %1541 = vmatpush.bf16.msra.mxu0 %v1520
      %1542 = vmatpush.bf16.msra.mxu0 %v1519
      %1543 = vmatmul.bf16.gmra.mxu0 %v1466
      %v1544 = vpop.f32.mrf.mxu0
      %v1545 = vadd.f32 0.0, %v1544
      %v1546 = vpop.f32.mrf.mxu0
      %v1547 = vadd.f32 0.0, %v1546
      %1548 = vmatmul.bf16.gmra.mxu0 %v1467
      %v1549 = vpop.f32.mrf.mxu0
      %v1550 = vadd.f32 0.0, %v1549
      %v1551 = vpop.f32.mrf.mxu0
      %v1552 = vadd.f32 0.0, %v1551
      %1553 = vmatmul.bf16.gmra.mxu0 %v1468
      %v1554 = vpop.f32.mrf.mxu0
      %v1555 = vadd.f32 0.0, %v1554
      %v1556 = vpop.f32.mrf.mxu0
      %v1557 = vadd.f32 0.0, %v1556
      %1558 = vmatmul.bf16.gmra.mxu0 %v1469
      %v1559 = vpop.f32.mrf.mxu0
      %v1560 = vadd.f32 0.0, %v1559
      %v1561 = vpop.f32.mrf.mxu0
      %v1562 = vadd.f32 0.0, %v1561
      %1563 = vdwg.mxu0
      %v1564 = vadd.f32 %v1434, %v1545
      %v1565 = vadd.f32 %v1435, %v1547
      %v1566 = vadd.f32 %v1436, %v1550
      %v1567 = vadd.f32 %v1437, %v1552
      %v1568 = vadd.f32 %v1438, %v1555
      %v1569 = vadd.f32 %v1439, %v1557
      %v1570 = vadd.f32 %v1440, %v1560
      %v1571 = vadd.f32 %v1441, %v1562
      %v1572 = vld [vmem:[%s264] sm:$0x1]
      %v1574 = vperm.slane %v1572, 0
      %v1576 = vmul.f32 %v1564, %v1574
      %v1577 = vmul.f32 %v1565, %v1574
      %v1578 = vmul.f32 %v1566, %v1574
      %v1579 = vmul.f32 %v1567, %v1574
      %v1580 = vmul.f32 %v1568, %v1574
      %v1581 = vmul.f32 %v1569, %v1574
      %v1582 = vmul.f32 %v1570, %v1574
      %v1583 = vmul.f32 %v1571, %v1574
      %v1584 = vld [vmem:[%s267] sm:$0x1]
      %v1586 = vperm.slane %v1584, 0
      %v1588 = vadd.f32 %v1576, %v1586
      %v1589 = vadd.f32 %v1577, %v1586
      %v1590 = vadd.f32 %v1578, %v1586
      %v1591 = vadd.f32 %v1579, %v1586
      %v1592 = vadd.f32 %v1580, %v1586
      %v1593 = vadd.f32 %v1581, %v1586
      %v1594 = vadd.f32 %v1582, %v1586
      %v1595 = vadd.f32 %v1583, %v1586
      %v1596 = vmax.f32 %v1588, 0.0
      %v1597 = vmax.f32 %v1589, 0.0
      %v1598 = vmax.f32 %v1590, 0.0
      %v1599 = vmax.f32 %v1591, 0.0
      %v1600 = vmax.f32 %v1592, 0.0
      %v1601 = vmax.f32 %v1593, 0.0
      %v1602 = vmax.f32 %v1594, 0.0
      %v1603 = vmax.f32 %v1595, 0.0
      %v1604 = vpack.c.bf16 %v1596, %v1596
      %v1605 = vpack.c.bf16 %v1597, %v1597
      %v1606 = vpack.c.bf16 %v1598, %v1598
      %v1607 = vpack.c.bf16 %v1599, %v1599
      %v1608 = vpack.c.bf16 %v1600, %v1600
      %v1609 = vpack.c.bf16 %v1601, %v1601
      %v1610 = vpack.c.bf16 %v1602, %v1602
      %v1611 = vpack.c.bf16 %v1603, %v1603
      %1612 = vst [vmem:[%s279] sm:$0xf] %v1604
      %1613 = vst [vmem:[%s279 + $0x4] sm:$0xf] %v1605
      %1614 = vst [vmem:[%s279 + $0x8] sm:$0xf] %v1606
      %1615 = vst [vmem:[%s279 + $0xc] sm:$0xf] %v1607
      %1616 = vst [vmem:[%s279 + $0x10] sm:$0xf] %v1608
      %1617 = vst [vmem:[%s279 + $0x14] sm:$0xf] %v1609
      %1618 = vst [vmem:[%s279 + $0x18] sm:$0xf] %v1610
      %1619 = vst [vmem:[%s279 + $0x1c] sm:$0xf] %v1611
      %s1620 = smul.u32 8, %s21
      %p1621 = scmp.lt.s32.totalorder %s20, 1
      %s1622 = scalar_select %p1621, %s20, 1
      %p1623 = scmp.lt.s32.totalorder %s1620, 7
      %s1624 = scalar_select %p1623, %s1620, 7
      %p1625 = scmp.lt.s32.totalorder %s22, 0
      %s1626 = scalar_select %p1625, %s22, 0
      %s1627 = sadd.s32 %s1626, %s1624
      %s1628 = smul.addr %s1622, 8
      %s1629 = sadd.s32 %s1627, %s1628
      %s1630 = smul.addr %s1629, 4
      %s1631 = scalar_lea.vmem %s4, %s1630
      // Predicated region
      $region48: #{_lambda_.23} parent=35 // pred_check
        %p1632 = pneg %p160
      $region49: #{_lambda_.23} parent=35 // pred_check_branch
        %1634 = sbr.rel (%p1632) target = $region51
      $region50: #{_lambda_.23} parent=35 // pred_region
        %s1635 = smul.u32 8, %s21
      $region51: #{_lambda_.23} parent=35 // pred_fallthru
        _
    $region36: #{_lambda_.23} parent=5 // pred_fallthru
      _
    %p1636 = scmp.le.s32.totalorder 2, %s10
    // Predicated region
    $region52: #{_lambda_.23} parent=5 // pred_check
      %p1637 = pneg %p1636
    $region53: #{_lambda_.23} parent=5 // pred_check_branch
      %1639 = sbr.rel (%p1637) target = $region55
    $region54: #{_lambda_.23} parent=5 // pred_region
      %s1640 = ssub.s32 %s10, 2
      // Predicated region
      $region56: #{_lambda_.23} parent=54 // pred_check
        %p1641 = pneg %p166
      $region57: #{_lambda_.23} parent=54 // pred_check_branch
        %1643 = sbr.rel (%p1641) target = $region59
      $region58: #{_lambda_.23} parent=54 // pred_region
        %s1644 = smul.u32 8, %s24
        %p1645 = scmp.lt.s32.totalorder %s23, 1
        %s1646 = scalar_select %p1645, %s23, 1
        %p1647 = scmp.lt.s32.totalorder %s1644, 7
        %s1648 = scalar_select %p1647, %s1644, 7
        %p1649 = scmp.lt.s32.totalorder %s25, 0
        %s1650 = scalar_select %p1649, %s25, 0
        %s1651 = sadd.s32 %s1650, %s1648
        %s1652 = smul.addr %s1646, 8
        %s1653 = sadd.s32 %s1651, %s1652
        %s1654 = smul.addr %s1653, 4
        %s1655 = scalar_lea.vmem %s4, %s1654
      $region59: #{_lambda_.23} parent=54 // pred_fallthru
        _
    $region55: #{_lambda_.23} parent=5 // pred_fallthru
      _
  $region6: #{_lambda_.23} parent=0 // loop_footer
    %s14 = sadd.s32 1, %s10
  $region7: #{_lambda_.23} parent=0 // loop_footer_branch
    %9 = sbr.rel target = $region3
  $region8: #{_lambda_.23} parent=0 // loop_exit
    _

// kernel: _lambda_.28
$region0: #{_lambda_.28}
  #allocation0 [shape = 'u32[]', space=smem, size = 0x4, offset = 0x4, fixed_abs, tag = 'smem constant byte address 0x4 - core index']
  #allocation1 [shape = 'u32[72,128]{1,0:T(1,128)}', space=vmem, size = 0x9000, scoped, tag = 'internal scratch']
  %s0 = inlined_call_operand.vmem [shape: bf16[32,128], index: 0, kind: input, shape index: {}]
  %s1 = inlined_call_operand.vmem [shape: bf16[128,128], index: 1, kind: input, shape index: {}]
  %s2 = inlined_call_operand.vmem [shape: f32[1,128], index: 2, kind: input, shape index: {}]
  %s3 = inlined_call_operand.vmem [shape: f32[1,128], index: 3, kind: input, shape index: {}]
  %s4 = inlined_call_operand.vmem [shape: bf16[32,128], index: 4, kind: output, shape index: {}]
  %s5 = sld [smem:[#allocation0]]
  $region26: #{_lambda_.28} parent=0
    _
  %s7 = ssub.s32 1, %s5
  %s8 = scalar_select 0, %s7, %s5
  // Predicated region
  $region2: #{_lambda_.28} parent=0 // pred_check
    _
  $region3: #{_lambda_.28} parent=0 // pred_check_branch
    %10 = sbr.rel (0) target = $region5
  $region4: #{_lambda_.28} parent=0 // pred_region
    _
  $region5: #{_lambda_.28} parent=0 // pred_fallthru
    _
  // Predicated region
  $region6: #{_lambda_.28} parent=0 // pred_check
    _
  $region7: #{_lambda_.28} parent=0 // pred_check_branch
    %12 = sbr.rel (0) target = $region9
  $region8: #{_lambda_.28} parent=0 // pred_region
    _
  $region9: #{_lambda_.28} parent=0 // pred_fallthru
    _
  // Predicated region
  $region10: #{_lambda_.28} parent=0 // pred_check
    _
  $region11: #{_lambda_.28} parent=0 // pred_check_branch
    %14 = sbr.rel (0) target = $region13
  $region12: #{_lambda_.28} parent=0 // pred_region
    _
  $region13: #{_lambda_.28} parent=0 // pred_fallthru
    _
  // Predicated region
  $region14: #{_lambda_.28} parent=0 // pred_check
    _
  $region15: #{_lambda_.28} parent=0 // pred_check_branch
    %16 = sbr.rel (0) target = $region17
  $region16: #{_lambda_.28} parent=0 // pred_region
    _
  $region17: #{_lambda_.28} parent=0 // pred_fallthru
    _
  %v17 = vld [vmem:[%s0] sm:$0xf]
  %v18 = vld [vmem:[%s0 + $0x4] sm:$0xf]
  %v19 = vld [vmem:[%s0 + $0x8] sm:$0xf]
  %v20 = vld [vmem:[%s0 + $0xc] sm:$0xf]
  %v21 = vld [vmem:[%s1] sm:$0xf]
  %v22 = vld [vmem:[%s1 + $0x4] sm:$0xf]
  %v23 = vld [vmem:[%s1 + $0x8] sm:$0xf]
  %v24 = vld [vmem:[%s1 + $0xc] sm:$0xf]
  %v25 = vld [vmem:[%s1 + $0x10] sm:$0xf]
  %v26 = vld [vmem:[%s1 + $0x14] sm:$0xf]
  %v27 = vld [vmem:[%s1 + $0x18] sm:$0xf]
  %v28 = vld [vmem:[%s1 + $0x1c] sm:$0xf]
  %v29 = vld [vmem:[%s1 + $0x20] sm:$0xf]
  %v30 = vld [vmem:[%s1 + $0x24] sm:$0xf]
  %v31 = vld [vmem:[%s1 + $0x28] sm:$0xf]
  %v32 = vld [vmem:[%s1 + $0x2c] sm:$0xf]
  %v33 = vld [vmem:[%s1 + $0x30] sm:$0xf]
  %v34 = vld [vmem:[%s1 + $0x34] sm:$0xf]
  %v35 = vld [vmem:[%s1 + $0x38] sm:$0xf]
  %v36 = vld [vmem:[%s1 + $0x3c] sm:$0xf]
  %v41 = vunpack.c.l.b16 %v17
  %v42 = vunpack.c.l.b16 %v18
  %v43 = vunpack.c.l.b16 %v19
  %v44 = vunpack.c.l.b16 %v20
  %v45 = vpack.c.b16 %v42, %v41
  %v46 = vpack.c.b16 %v44, %v43
  %v65 = vunpack.c.l.b16 %v21
  %v66 = vunpack.c.l.b16 %v22
  %v67 = vunpack.c.l.b16 %v23
  %v68 = vunpack.c.l.b16 %v24
  %v69 = vunpack.c.l.b16 %v25
  %v70 = vunpack.c.l.b16 %v26
  %v71 = vunpack.c.l.b16 %v27
  %v72 = vunpack.c.l.b16 %v28
  %v73 = vunpack.c.l.b16 %v29
  %v74 = vunpack.c.l.b16 %v30
  %v75 = vunpack.c.l.b16 %v31
  %v76 = vunpack.c.l.b16 %v32
  %v77 = vunpack.c.l.b16 %v33
  %v78 = vunpack.c.l.b16 %v34
  %v79 = vunpack.c.l.b16 %v35
  %v80 = vunpack.c.l.b16 %v36
  %v81 = vpack.c.b16 %v66, %v65
  %v82 = vpack.c.b16 %v68, %v67
  %v83 = vpack.c.b16 %v70, %v69
  %v84 = vpack.c.b16 %v72, %v71
  %v85 = vpack.c.b16 %v74, %v73
  %v86 = vpack.c.b16 %v76, %v75
  %v87 = vpack.c.b16 %v78, %v77
  %v88 = vpack.c.b16 %v80, %v79
  %97 = vmatpush.bf16.msra.mxu0 %v88
  %98 = vmatpush.bf16.msra.mxu0 %v87
  %99 = vmatpush.bf16.msra.mxu0 %v86
  %100 = vmatpush.bf16.msra.mxu0 %v85
  %101 = vmatpush.bf16.msra.mxu0 %v84
  %102 = vmatpush.bf16.msra.mxu0 %v83
  %103 = vmatpush.bf16.msra.mxu0 %v82
  %104 = vmatpush.bf16.msra.mxu0 %v81
  %105 = vmatmul.bf16.gmra.mxu0 %v45
  %v106 = vpop.f32.mrf.mxu0
  %v107 = vadd.f32 0.0, %v106
  %v108 = vpop.f32.mrf.mxu0
  %v109 = vadd.f32 0.0, %v108
  %110 = vmatmul.bf16.gmra.mxu0 %v46
  %v111 = vpop.f32.mrf.mxu0
  %v112 = vadd.f32 0.0, %v111
  %v113 = vpop.f32.mrf.mxu0
  %v114 = vadd.f32 0.0, %v113
  %115 = vdwg.mxu0
  %v116 = vld [vmem:[%s2] sm:$0x1]
  %v118 = vperm.slane %v116, 0
  %v120 = vmul.f32 %v107, %v118
  %v121 = vmul.f32 %v109, %v118
  %v122 = vmul.f32 %v112, %v118
  %v123 = vmul.f32 %v114, %v118
  %v124 = vld [vmem:[%s3] sm:$0x1]
  %v126 = vperm.slane %v124, 0
  %v128 = vadd.f32 %v120, %v126
  %v129 = vadd.f32 %v121, %v126
  %v130 = vadd.f32 %v122, %v126
  %v131 = vadd.f32 %v123, %v126
  %v132 = vpack.c.bf16 %v128, %v128
  %v133 = vpack.c.bf16 %v129, %v129
  %v134 = vpack.c.bf16 %v130, %v130
  %v135 = vpack.c.bf16 %v131, %v131
  %136 = vst [vmem:[%s4] sm:$0xf] %v132
  %137 = vst [vmem:[%s4 + $0x4] sm:$0xf] %v133
  %138 = vst [vmem:[%s4 + $0x8] sm:$0xf] %v134
  %139 = vst [vmem:[%s4 + $0xc] sm:$0xf] %v135
  // Predicated region
  $region18: #{_lambda_.28} parent=0 // pred_check
    _
  $region19: #{_lambda_.28} parent=0 // pred_check_branch
    %141 = sbr.rel (0) target = $region21
  $region20: #{_lambda_.28} parent=0 // pred_region
    _
  $region21: #{_lambda_.28} parent=0 // pred_fallthru
    _
  // Predicated region
  $region22: #{_lambda_.28} parent=0 // pred_check
    _
  $region23: #{_lambda_.28} parent=0 // pred_check_branch
    %143 = sbr.rel (0) target = $region25
  $region24: #{_lambda_.28} parent=0 // pred_region
    _
  $region25: #{_lambda_.28} parent=0 // pred_fallthru
    _

// kernel: _lambda_.29
$region0: #{_lambda_.29}
  #allocation0 [shape = 'u32[]', space=smem, size = 0x4, offset = 0x4, fixed_abs, tag = 'smem constant byte address 0x4 - core index']
  #allocation1 [shape = 'u32[72,128]{1,0:T(1,128)}', space=vmem, size = 0x9000, scoped, tag = 'internal scratch']
  %s0 = inlined_call_operand.vmem [shape: bf16[32,128], index: 0, kind: input, shape index: {}]
  %s1 = inlined_call_operand.vmem [shape: bf16[128,128], index: 1, kind: input, shape index: {}]
  %s2 = inlined_call_operand.vmem [shape: f32[1,128], index: 2, kind: input, shape index: {}]
  %s3 = inlined_call_operand.vmem [shape: f32[1,128], index: 3, kind: input, shape index: {}]
  %s4 = inlined_call_operand.vmem [shape: bf16[32,128], index: 4, kind: input, shape index: {}]
  %s5 = inlined_call_operand.vmem [shape: bf16[32,128], index: 5, kind: output, shape index: {}]
  %s6 = sld [smem:[#allocation0]]
  $region30: #{_lambda_.29} parent=0
    _
  %s8 = ssub.s32 1, %s6
  %s9 = scalar_select 0, %s8, %s6
  // Predicated region
  $region2: #{_lambda_.29} parent=0 // pred_check
    _
  $region3: #{_lambda_.29} parent=0 // pred_check_branch
    %11 = sbr.rel (0) target = $region5
  $region4: #{_lambda_.29} parent=0 // pred_region
    _
  $region5: #{_lambda_.29} parent=0 // pred_fallthru
    _
  // Predicated region
  $region6: #{_lambda_.29} parent=0 // pred_check
    _
  $region7: #{_lambda_.29} parent=0 // pred_check_branch
    %13 = sbr.rel (0) target = $region9
  $region8: #{_lambda_.29} parent=0 // pred_region
    _
  $region9: #{_lambda_.29} parent=0 // pred_fallthru
    _
  // Predicated region
  $region10: #{_lambda_.29} parent=0 // pred_check
    _
  $region11: #{_lambda_.29} parent=0 // pred_check_branch
    %15 = sbr.rel (0) target = $region13
  $region12: #{_lambda_.29} parent=0 // pred_region
    _
  $region13: #{_lambda_.29} parent=0 // pred_fallthru
    _
  // Predicated region
  $region14: #{_lambda_.29} parent=0 // pred_check
    _
  $region15: #{_lambda_.29} parent=0 // pred_check_branch
    %17 = sbr.rel (0) target = $region17
  $region16: #{_lambda_.29} parent=0 // pred_region
    _
  $region17: #{_lambda_.29} parent=0 // pred_fallthru
    _
  // Predicated region
  $region18: #{_lambda_.29} parent=0 // pred_check
    _
  $region19: #{_lambda_.29} parent=0 // pred_check_branch
    %19 = sbr.rel (0) target = $region21
  $region20: #{_lambda_.29} parent=0 // pred_region
    _
  $region21: #{_lambda_.29} parent=0 // pred_fallthru
    _
  %v20 = vld [vmem:[%s0] sm:$0xf]
  %v21 = vld [vmem:[%s0 + $0x4] sm:$0xf]
  %v22 = vld [vmem:[%s0 + $0x8] sm:$0xf]
  %v23 = vld [vmem:[%s0 + $0xc] sm:$0xf]
  %v24 = vld [vmem:[%s1] sm:$0xf]
  %v25 = vld [vmem:[%s1 + $0x4] sm:$0xf]
  %v26 = vld [vmem:[%s1 + $0x8] sm:$0xf]
  %v27 = vld [vmem:[%s1 + $0xc] sm:$0xf]
  %v28 = vld [vmem:[%s1 + $0x10] sm:$0xf]
  %v29 = vld [vmem:[%s1 + $0x14] sm:$0xf]
  %v30 = vld [vmem:[%s1 + $0x18] sm:$0xf]
  %v31 = vld [vmem:[%s1 + $0x1c] sm:$0xf]
  %v32 = vld [vmem:[%s1 + $0x20] sm:$0xf]
  %v33 = vld [vmem:[%s1 + $0x24] sm:$0xf]
  %v34 = vld [vmem:[%s1 + $0x28] sm:$0xf]
  %v35 = vld [vmem:[%s1 + $0x2c] sm:$0xf]
  %v36 = vld [vmem:[%s1 + $0x30] sm:$0xf]
  %v37 = vld [vmem:[%s1 + $0x34] sm:$0xf]
  %v38 = vld [vmem:[%s1 + $0x38] sm:$0xf]
  %v39 = vld [vmem:[%s1 + $0x3c] sm:$0xf]
  %v44 = vunpack.c.l.b16 %v20
  %v45 = vunpack.c.l.b16 %v21
  %v46 = vunpack.c.l.b16 %v22
  %v47 = vunpack.c.l.b16 %v23
  %v48 = vpack.c.b16 %v45, %v44
  %v49 = vpack.c.b16 %v47, %v46
  %v68 = vunpack.c.l.b16 %v24
  %v69 = vunpack.c.l.b16 %v25
  %v70 = vunpack.c.l.b16 %v26
  %v71 = vunpack.c.l.b16 %v27
  %v72 = vunpack.c.l.b16 %v28
  %v73 = vunpack.c.l.b16 %v29
  %v74 = vunpack.c.l.b16 %v30
  %v75 = vunpack.c.l.b16 %v31
  %v76 = vunpack.c.l.b16 %v32
  %v77 = vunpack.c.l.b16 %v33
  %v78 = vunpack.c.l.b16 %v34
  %v79 = vunpack.c.l.b16 %v35
  %v80 = vunpack.c.l.b16 %v36
  %v81 = vunpack.c.l.b16 %v37
  %v82 = vunpack.c.l.b16 %v38
  %v83 = vunpack.c.l.b16 %v39
  %v84 = vpack.c.b16 %v69, %v68
  %v85 = vpack.c.b16 %v71, %v70
  %v86 = vpack.c.b16 %v73, %v72
  %v87 = vpack.c.b16 %v75, %v74
  %v88 = vpack.c.b16 %v77, %v76
  %v89 = vpack.c.b16 %v79, %v78
  %v90 = vpack.c.b16 %v81, %v80
  %v91 = vpack.c.b16 %v83, %v82
  %100 = vmatpush.bf16.msra.mxu0 %v91
  %101 = vmatpush.bf16.msra.mxu0 %v90
  %102 = vmatpush.bf16.msra.mxu0 %v89
  %103 = vmatpush.bf16.msra.mxu0 %v88
  %104 = vmatpush.bf16.msra.mxu0 %v87
  %105 = vmatpush.bf16.msra.mxu0 %v86
  %106 = vmatpush.bf16.msra.mxu0 %v85
  %107 = vmatpush.bf16.msra.mxu0 %v84
  %108 = vmatmul.bf16.gmra.mxu0 %v48
  %v109 = vpop.f32.mrf.mxu0
  %v110 = vadd.f32 0.0, %v109
  %v111 = vpop.f32.mrf.mxu0
  %v112 = vadd.f32 0.0, %v111
  %113 = vmatmul.bf16.gmra.mxu0 %v49
  %v114 = vpop.f32.mrf.mxu0
  %v115 = vadd.f32 0.0, %v114
  %v116 = vpop.f32.mrf.mxu0
  %v117 = vadd.f32 0.0, %v116
  %118 = vdwg.mxu0
  %v119 = vld [vmem:[%s2] sm:$0x1]
  %v121 = vperm.slane %v119, 0
  %v123 = vmul.f32 %v110, %v121
  %v124 = vmul.f32 %v112, %v121
  %v125 = vmul.f32 %v115, %v121
  %v126 = vmul.f32 %v117, %v121
  %v127 = vld [vmem:[%s3] sm:$0x1]
  %v129 = vperm.slane %v127, 0
  %v131 = vadd.f32 %v123, %v129
  %v132 = vadd.f32 %v124, %v129
  %v133 = vadd.f32 %v125, %v129
  %v134 = vadd.f32 %v126, %v129
  %v135 = vld [vmem:[%s4] sm:$0xf]
  %v136 = vld [vmem:[%s4 + $0x4] sm:$0xf]
  %v137 = vld [vmem:[%s4 + $0x8] sm:$0xf]
  %v138 = vld [vmem:[%s4 + $0xc] sm:$0xf]
  %v139 = vunpack.c.l.bf16 %v135
  %v140 = vunpack.c.l.bf16 %v136
  %v141 = vunpack.c.l.bf16 %v137
  %v142 = vunpack.c.l.bf16 %v138
  %v143 = vadd.f32 %v131, %v139
  %v144 = vadd.f32 %v132, %v140
  %v145 = vadd.f32 %v133, %v141
  %v146 = vadd.f32 %v134, %v142
  %v147 = vmax.f32 %v143, 0.0
  %v148 = vmax.f32 %v144, 0.0
  %v149 = vmax.f32 %v145, 0.0
  %v150 = vmax.f32 %v146, 0.0
  %v151 = vpack.c.bf16 %v147, %v147
  %v152 = vpack.c.bf16 %v148, %v148
  %v153 = vpack.c.bf16 %v149, %v149
  %v154 = vpack.c.bf16 %v150, %v150
  %155 = vst [vmem:[%s5] sm:$0xf] %v151
  %156 = vst [vmem:[%s5 + $0x4] sm:$0xf] %v152
  %157 = vst [vmem:[%s5 + $0x8] sm:$0xf] %v153
  %158 = vst [vmem:[%s5 + $0xc] sm:$0xf] %v154
  // Predicated region
  $region22: #{_lambda_.29} parent=0 // pred_check
    _
  $region23: #{_lambda_.29} parent=0 // pred_check_branch
    %160 = sbr.rel (0) target = $region25
  $region24: #{_lambda_.29} parent=0 // pred_region
    _
  $region25: #{_lambda_.29} parent=0 // pred_fallthru
    _
  // Predicated region
  $region26: #{_lambda_.29} parent=0 // pred_check
    _
  $region27: #{_lambda_.29} parent=0 // pred_check_branch
    %162 = sbr.rel (0) target = $region29
  $region28: #{_lambda_.29} parent=0 // pred_region
    _
  $region29: #{_lambda_.29} parent=0 // pred_fallthru
    _

// kernel: _lambda_.30
$region0: #{_lambda_.30}
  #allocation0 [shape = 'u32[]', space=smem, size = 0x4, offset = 0x4, fixed_abs, tag = 'smem constant byte address 0x4 - core index']
  #allocation1 [shape = 'u32[72,128]{1,0:T(1,128)}', space=vmem, size = 0x9000, scoped, tag = 'internal scratch']
  %s0 = inlined_call_operand.vmem [shape: bf16[32,128], index: 0, kind: input, shape index: {}]
  %s1 = inlined_call_operand.vmem [shape: bf16[128,128], index: 1, kind: input, shape index: {}]
  %s2 = inlined_call_operand.vmem [shape: f32[1,128], index: 2, kind: input, shape index: {}]
  %s3 = inlined_call_operand.vmem [shape: f32[1,128], index: 3, kind: input, shape index: {}]
  %s4 = inlined_call_operand.vmem [shape: bf16[32,128], index: 4, kind: output, shape index: {}]
  %s5 = sld [smem:[#allocation0]]
  $region26: #{_lambda_.30} parent=0
    _
  %s7 = ssub.s32 1, %s5
  %s8 = scalar_select 0, %s7, %s5
  // Predicated region
  $region2: #{_lambda_.30} parent=0 // pred_check
    _
  $region3: #{_lambda_.30} parent=0 // pred_check_branch
    %10 = sbr.rel (0) target = $region5
  $region4: #{_lambda_.30} parent=0 // pred_region
    _
  $region5: #{_lambda_.30} parent=0 // pred_fallthru
    _
  // Predicated region
  $region6: #{_lambda_.30} parent=0 // pred_check
    _
  $region7: #{_lambda_.30} parent=0 // pred_check_branch
    %12 = sbr.rel (0) target = $region9
  $region8: #{_lambda_.30} parent=0 // pred_region
    _
  $region9: #{_lambda_.30} parent=0 // pred_fallthru
    _
  // Predicated region
  $region10: #{_lambda_.30} parent=0 // pred_check
    _
  $region11: #{_lambda_.30} parent=0 // pred_check_branch
    %14 = sbr.rel (0) target = $region13
  $region12: #{_lambda_.30} parent=0 // pred_region
    _
  $region13: #{_lambda_.30} parent=0 // pred_fallthru
    _
  // Predicated region
  $region14: #{_lambda_.30} parent=0 // pred_check
    _
  $region15: #{_lambda_.30} parent=0 // pred_check_branch
    %16 = sbr.rel (0) target = $region17
  $region16: #{_lambda_.30} parent=0 // pred_region
    _
  $region17: #{_lambda_.30} parent=0 // pred_fallthru
    _
  %v17 = vld [vmem:[%s0] sm:$0xf]
  %v18 = vld [vmem:[%s0 + $0x4] sm:$0xf]
  %v19 = vld [vmem:[%s0 + $0x8] sm:$0xf]
  %v20 = vld [vmem:[%s0 + $0xc] sm:$0xf]
  %v21 = vld [vmem:[%s1] sm:$0xf]
  %v22 = vld [vmem:[%s1 + $0x4] sm:$0xf]
  %v23 = vld [vmem:[%s1 + $0x8] sm:$0xf]
  %v24 = vld [vmem:[%s1 + $0xc] sm:$0xf]
  %v25 = vld [vmem:[%s1 + $0x10] sm:$0xf]
  %v26 = vld [vmem:[%s1 + $0x14] sm:$0xf]
  %v27 = vld [vmem:[%s1 + $0x18] sm:$0xf]
  %v28 = vld [vmem:[%s1 + $0x1c] sm:$0xf]
  %v29 = vld [vmem:[%s1 + $0x20] sm:$0xf]
  %v30 = vld [vmem:[%s1 + $0x24] sm:$0xf]
  %v31 = vld [vmem:[%s1 + $0x28] sm:$0xf]
  %v32 = vld [vmem:[%s1 + $0x2c] sm:$0xf]
  %v33 = vld [vmem:[%s1 + $0x30] sm:$0xf]
  %v34 = vld [vmem:[%s1 + $0x34] sm:$0xf]
  %v35 = vld [vmem:[%s1 + $0x38] sm:$0xf]
  %v36 = vld [vmem:[%s1 + $0x3c] sm:$0xf]
  %v41 = vunpack.c.l.b16 %v17
  %v42 = vunpack.c.l.b16 %v18
  %v43 = vunpack.c.l.b16 %v19
  %v44 = vunpack.c.l.b16 %v20
  %v45 = vpack.c.b16 %v42, %v41
  %v46 = vpack.c.b16 %v44, %v43
  %v65 = vunpack.c.l.b16 %v21
  %v66 = vunpack.c.l.b16 %v22
  %v67 = vunpack.c.l.b16 %v23
  %v68 = vunpack.c.l.b16 %v24
  %v69 = vunpack.c.l.b16 %v25
  %v70 = vunpack.c.l.b16 %v26
  %v71 = vunpack.c.l.b16 %v27
  %v72 = vunpack.c.l.b16 %v28
  %v73 = vunpack.c.l.b16 %v29
  %v74 = vunpack.c.l.b16 %v30
  %v75 = vunpack.c.l.b16 %v31
  %v76 = vunpack.c.l.b16 %v32
  %v77 = vunpack.c.l.b16 %v33
  %v78 = vunpack.c.l.b16 %v34
  %v79 = vunpack.c.l.b16 %v35
  %v80 = vunpack.c.l.b16 %v36
  %v81 = vpack.c.b16 %v66, %v65
  %v82 = vpack.c.b16 %v68, %v67
  %v83 = vpack.c.b16 %v70, %v69
  %v84 = vpack.c.b16 %v72, %v71
  %v85 = vpack.c.b16 %v74, %v73
  %v86 = vpack.c.b16 %v76, %v75
  %v87 = vpack.c.b16 %v78, %v77
  %v88 = vpack.c.b16 %v80, %v79
  %97 = vmatpush.bf16.msra.mxu0 %v88
  %98 = vmatpush.bf16.msra.mxu0 %v87
  %99 = vmatpush.bf16.msra.mxu0 %v86
  %100 = vmatpush.bf16.msra.mxu0 %v85
  %101 = vmatpush.bf16.msra.mxu0 %v84
  %102 = vmatpush.bf16.msra.mxu0 %v83
  %103 = vmatpush.bf16.msra.mxu0 %v82
  %104 = vmatpush.bf16.msra.mxu0 %v81
  %105 = vmatmul.bf16.gmra.mxu0 %v45
  %v106 = vpop.f32.mrf.mxu0
  %v107 = vadd.f32 0.0, %v106
  %v108 = vpop.f32.mrf.mxu0
  %v109 = vadd.f32 0.0, %v108
  %110 = vmatmul.bf16.gmra.mxu0 %v46
  %v111 = vpop.f32.mrf.mxu0
  %v112 = vadd.f32 0.0, %v111
  %v113 = vpop.f32.mrf.mxu0
  %v114 = vadd.f32 0.0, %v113
  %115 = vdwg.mxu0
  %v116 = vld [vmem:[%s2] sm:$0x1]
  %v118 = vperm.slane %v116, 0
  %v120 = vmul.f32 %v107, %v118
  %v121 = vmul.f32 %v109, %v118
  %v122 = vmul.f32 %v112, %v118
  %v123 = vmul.f32 %v114, %v118
  %v124 = vld [vmem:[%s3] sm:$0x1]
  %v126 = vperm.slane %v124, 0
  %v128 = vadd.f32 %v120, %v126
  %v129 = vadd.f32 %v121, %v126
  %v130 = vadd.f32 %v122, %v126
  %v131 = vadd.f32 %v123, %v126
  %v132 = vmax.f32 %v128, 0.0
  %v133 = vmax.f32 %v129, 0.0
  %v134 = vmax.f32 %v130, 0.0
  %v135 = vmax.f32 %v131, 0.0
  %v136 = vpack.c.bf16 %v132, %v132
  %v137 = vpack.c.bf16 %v133, %v133
  %v138 = vpack.c.bf16 %v134, %v134
  %v139 = vpack.c.bf16 %v135, %v135
  %140 = vst [vmem:[%s4] sm:$0xf] %v136
  %141 = vst [vmem:[%s4 + $0x4] sm:$0xf] %v137
  %142 = vst [vmem:[%s4 + $0x8] sm:$0xf] %v138
  %143 = vst [vmem:[%s4 + $0xc] sm:$0xf] %v139
  // Predicated region
  $region18: #{_lambda_.30} parent=0 // pred_check
    _
  $region19: #{_lambda_.30} parent=0 // pred_check_branch
    %145 = sbr.rel (0) target = $region21
  $region20: #{_lambda_.30} parent=0 // pred_region
    _
  $region21: #{_lambda_.30} parent=0 // pred_fallthru
    _
  // Predicated region
  $region22: #{_lambda_.30} parent=0 // pred_check
    _
  $region23: #{_lambda_.30} parent=0 // pred_check_branch
    %147 = sbr.rel (0) target = $region25
  $region24: #{_lambda_.30} parent=0 // pred_region
    _
  $region25: #{_lambda_.30} parent=0 // pred_fallthru
    _

// kernel: _lambda_.32
$region0: #{_lambda_.32}
  #allocation0 [shape = 'u32[]', space=smem, size = 0x4, offset = 0x4, fixed_abs, tag = 'smem constant byte address 0x4 - core index']
  #allocation1 [shape = 'u32[72,128]{1,0:T(1,128)}', space=vmem, size = 0x9000, scoped, tag = 'internal scratch']
  %s0 = inlined_call_operand.vmem [shape: bf16[16,128], index: 0, kind: input, shape index: {}]
  %s1 = inlined_call_operand.vmem [shape: bf16[128,256], index: 1, kind: input, shape index: {}]
  %s2 = inlined_call_operand.vmem [shape: f32[1,256], index: 2, kind: input, shape index: {}]
  %s3 = inlined_call_operand.vmem [shape: f32[1,256], index: 3, kind: input, shape index: {}]
  %s4 = inlined_call_operand.vmem [shape: bf16[16,256], index: 4, kind: output, shape index: {}]
  %s5 = sld [smem:[#allocation0]]
  $region26: #{_lambda_.32} parent=0
    _
  %s7 = ssub.s32 1, %s5
  %s8 = scalar_select 0, %s7, %s5
  // Predicated region
  $region2: #{_lambda_.32} parent=0 // pred_check
    _
  $region3: #{_lambda_.32} parent=0 // pred_check_branch
    %10 = sbr.rel (0) target = $region5
  $region4: #{_lambda_.32} parent=0 // pred_region
    _
  $region5: #{_lambda_.32} parent=0 // pred_fallthru
    _
  // Predicated region
  $region6: #{_lambda_.32} parent=0 // pred_check
    _
  $region7: #{_lambda_.32} parent=0 // pred_check_branch
    %12 = sbr.rel (0) target = $region9
  $region8: #{_lambda_.32} parent=0 // pred_region
    _
  $region9: #{_lambda_.32} parent=0 // pred_fallthru
    _
  // Predicated region
  $region10: #{_lambda_.32} parent=0 // pred_check
    _
  $region11: #{_lambda_.32} parent=0 // pred_check_branch
    %14 = sbr.rel (0) target = $region13
  $region12: #{_lambda_.32} parent=0 // pred_region
    _
  $region13: #{_lambda_.32} parent=0 // pred_fallthru
    _
  // Predicated region
  $region14: #{_lambda_.32} parent=0 // pred_check
    _
  $region15: #{_lambda_.32} parent=0 // pred_check_branch
    %16 = sbr.rel (0) target = $region17
  $region16: #{_lambda_.32} parent=0 // pred_region
    _
  $region17: #{_lambda_.32} parent=0 // pred_fallthru
    _
  %v17 = vld [vmem:[%s0] sm:$0xf]
  %v18 = vld [vmem:[%s0 + $0x4] sm:$0xf]
  %v19 = vld [vmem:[%s1] sm:$0xff]
  %v20 = vld [vmem:[%s1 + $0x8] sm:$0xff]
  %v21 = vld [vmem:[%s1 + $0x10] sm:$0xff]
  %v22 = vld [vmem:[%s1 + $0x18] sm:$0xff]
  %v23 = vld [vmem:[%s1 + $0x20] sm:$0xff]
  %v24 = vld [vmem:[%s1 + $0x28] sm:$0xff]
  %v25 = vld [vmem:[%s1 + $0x30] sm:$0xff]
  %v26 = vld [vmem:[%s1 + $0x38] sm:$0xff]
  %v27 = vld [vmem:[%s1 + $0x40] sm:$0xff]
  %v28 = vld [vmem:[%s1 + $0x48] sm:$0xff]
  %v29 = vld [vmem:[%s1 + $0x50] sm:$0xff]
  %v30 = vld [vmem:[%s1 + $0x58] sm:$0xff]
  %v31 = vld [vmem:[%s1 + $0x60] sm:$0xff]
  %v32 = vld [vmem:[%s1 + $0x68] sm:$0xff]
  %v33 = vld [vmem:[%s1 + $0x70] sm:$0xff]
  %v34 = vld [vmem:[%s1 + $0x78] sm:$0xff]
  %v37 = vunpack.c.l.b16 %v17
  %v38 = vunpack.c.l.b16 %v18
  %v39 = vpack.c.b16 %v38, %v37
  %v57 = vunpack.c.l.b16 %v19
  %v58 = vunpack.c.h.b16 %v19
  %v59 = vunpack.c.l.b16 %v20
  %v60 = vunpack.c.h.b16 %v20
  %v61 = vunpack.c.l.b16 %v21
  %v62 = vunpack.c.h.b16 %v21
  %v63 = vunpack.c.l.b16 %v22
  %v64 = vunpack.c.h.b16 %v22
  %v65 = vunpack.c.l.b16 %v23
  %v66 = vunpack.c.h.b16 %v23
  %v67 = vunpack.c.l.b16 %v24
  %v68 = vunpack.c.h.b16 %v24
  %v69 = vunpack.c.l.b16 %v25
  %v70 = vunpack.c.h.b16 %v25
  %v71 = vunpack.c.l.b16 %v26
  %v72 = vunpack.c.h.b16 %v26
  %v73 = vunpack.c.l.b16 %v27
  %v74 = vunpack.c.h.b16 %v27
  %v75 = vunpack.c.l.b16 %v28
  %v76 = vunpack.c.h.b16 %v28
  %v77 = vunpack.c.l.b16 %v29
  %v78 = vunpack.c.h.b16 %v29
  %v79 = vunpack.c.l.b16 %v30
  %v80 = vunpack.c.h.b16 %v30
  %v81 = vunpack.c.l.b16 %v31
  %v82 = vunpack.c.h.b16 %v31
  %v83 = vunpack.c.l.b16 %v32
  %v84 = vunpack.c.h.b16 %v32
  %v85 = vunpack.c.l.b16 %v33
  %v86 = vunpack.c.h.b16 %v33
  %v87 = vunpack.c.l.b16 %v34
  %v88 = vunpack.c.h.b16 %v34
  %v89 = vpack.c.b16 %v59, %v57
  %v90 = vpack.c.b16 %v60, %v58
  %v91 = vpack.c.b16 %v63, %v61
  %v92 = vpack.c.b16 %v64, %v62
  %v93 = vpack.c.b16 %v67, %v65
  %v94 = vpack.c.b16 %v68, %v66
  %v95 = vpack.c.b16 %v71, %v69
  %v96 = vpack.c.b16 %v72, %v70
  %v97 = vpack.c.b16 %v75, %v73
  %v98 = vpack.c.b16 %v76, %v74
  %v99 = vpack.c.b16 %v79, %v77
  %v100 = vpack.c.b16 %v80, %v78
  %v101 = vpack.c.b16 %v83, %v81
  %v102 = vpack.c.b16 %v84, %v82
  %v103 = vpack.c.b16 %v87, %v85
  %v104 = vpack.c.b16 %v88, %v86
  %121 = vmatpush.bf16.msra.mxu0 %v103
  %122 = vmatpush.bf16.msra.mxu0 %v101
  %123 = vmatpush.bf16.msra.mxu0 %v99
  %124 = vmatpush.bf16.msra.mxu0 %v97
  %125 = vmatpush.bf16.msra.mxu0 %v95
  %126 = vmatpush.bf16.msra.mxu0 %v93
  %127 = vmatpush.bf16.msra.mxu0 %v91
  %128 = vmatpush.bf16.msra.mxu0 %v89
  %129 = vmatmul.bf16.gmra.mxu0 %v39
  %v130 = vpop.f32.mrf.mxu0
  %v131 = vadd.f32 0.0, %v130
  %v132 = vpop.f32.mrf.mxu0
  %v133 = vadd.f32 0.0, %v132
  %134 = vdwg.mxu0
  %135 = vmatpush.bf16.msra.mxu0 %v104
  %136 = vmatpush.bf16.msra.mxu0 %v102
  %137 = vmatpush.bf16.msra.mxu0 %v100
  %138 = vmatpush.bf16.msra.mxu0 %v98
  %139 = vmatpush.bf16.msra.mxu0 %v96
  %140 = vmatpush.bf16.msra.mxu0 %v94
  %141 = vmatpush.bf16.msra.mxu0 %v92
  %142 = vmatpush.bf16.msra.mxu0 %v90
  %143 = vmatmul.bf16.gmra.mxu0 %v39
  %v144 = vpop.f32.mrf.mxu0
  %v145 = vadd.f32 0.0, %v144
  %v146 = vpop.f32.mrf.mxu0
  %v147 = vadd.f32 0.0, %v146
  %148 = vdwg.mxu0
  %v149 = vld [vmem:[%s2] sm:$0x3]
  %v151 = vperm.slane %v149, 0
  %v152 = vperm.slane %v149, 1
  %v155 = vmul.f32 %v131, %v151
  %v156 = vmul.f32 %v145, %v152
  %v157 = vmul.f32 %v133, %v151
  %v158 = vmul.f32 %v147, %v152
  %v159 = vld [vmem:[%s3] sm:$0x3]
  %v161 = vperm.slane %v159, 0
  %v162 = vperm.slane %v159, 1
  %v165 = vadd.f32 %v155, %v161
  %v166 = vadd.f32 %v156, %v162
  %v167 = vadd.f32 %v157, %v161
  %v168 = vadd.f32 %v158, %v162
  %v169 = vpack.c.bf16 %v166, %v165
  %v170 = vpack.c.bf16 %v168, %v167
  %171 = vst [vmem:[%s4] sm:$0xff] %v169
  %172 = vst [vmem:[%s4 + $0x8] sm:$0xff] %v170
  // Predicated region
  $region18: #{_lambda_.32} parent=0 // pred_check
    _
  $region19: #{_lambda_.32} parent=0 // pred_check_branch
    %174 = sbr.rel (0) target = $region21
  $region20: #{_lambda_.32} parent=0 // pred_region
    _
  $region21: #{_lambda_.32} parent=0 // pred_fallthru
    _
  // Predicated region
  $region22: #{_lambda_.32} parent=0 // pred_check
    _
  $region23: #{_lambda_.32} parent=0 // pred_check_branch
    %176 = sbr.rel (0) target = $region25
  $region24: #{_lambda_.32} parent=0 // pred_region
    _
  $region25: #{_lambda_.32} parent=0 // pred_fallthru
    _

// kernel: _lambda_.34
$region0: #{_lambda_.34}
  #allocation0 [shape = 'u32[]', space=smem, size = 0x4, offset = 0x4, fixed_abs, tag = 'smem constant byte address 0x4 - core index']
  #allocation1 [shape = 'u32[72,128]{1,0:T(1,128)}', space=vmem, size = 0x9000, scoped, tag = 'internal scratch']
  %s0 = inlined_call_operand.vmem [shape: bf16[16,256], index: 0, kind: input, shape index: {}]
  %s1 = inlined_call_operand.vmem [shape: bf16[256,128], index: 1, kind: input, shape index: {}]
  %s2 = inlined_call_operand.vmem [shape: f32[1,128], index: 2, kind: input, shape index: {}]
  %s3 = inlined_call_operand.vmem [shape: f32[1,128], index: 3, kind: input, shape index: {}]
  %s4 = inlined_call_operand.vmem [shape: bf16[16,128], index: 4, kind: output, shape index: {}]
  %s5 = sld [smem:[#allocation0]]
  $region26: #{_lambda_.34} parent=0
    _
  %s7 = ssub.s32 1, %s5
  %s8 = scalar_select 0, %s7, %s5
  // Predicated region
  $region2: #{_lambda_.34} parent=0 // pred_check
    _
  $region3: #{_lambda_.34} parent=0 // pred_check_branch
    %10 = sbr.rel (0) target = $region5
  $region4: #{_lambda_.34} parent=0 // pred_region
    _
  $region5: #{_lambda_.34} parent=0 // pred_fallthru
    _
  // Predicated region
  $region6: #{_lambda_.34} parent=0 // pred_check
    _
  $region7: #{_lambda_.34} parent=0 // pred_check_branch
    %12 = sbr.rel (0) target = $region9
  $region8: #{_lambda_.34} parent=0 // pred_region
    _
  $region9: #{_lambda_.34} parent=0 // pred_fallthru
    _
  // Predicated region
  $region10: #{_lambda_.34} parent=0 // pred_check
    _
  $region11: #{_lambda_.34} parent=0 // pred_check_branch
    %14 = sbr.rel (0) target = $region13
  $region12: #{_lambda_.34} parent=0 // pred_region
    _
  $region13: #{_lambda_.34} parent=0 // pred_fallthru
    _
  // Predicated region
  $region14: #{_lambda_.34} parent=0 // pred_check
    _
  $region15: #{_lambda_.34} parent=0 // pred_check_branch
    %16 = sbr.rel (0) target = $region17
  $region16: #{_lambda_.34} parent=0 // pred_region
    _
  $region17: #{_lambda_.34} parent=0 // pred_fallthru
    _
  %v17 = vld [vmem:[%s0] sm:$0xff]
  %v18 = vld [vmem:[%s0 + $0x8] sm:$0xff]
  %v19 = vld [vmem:[%s1] sm:$0xf]
  %v20 = vld [vmem:[%s1 + $0x4] sm:$0xf]
  %v21 = vld [vmem:[%s1 + $0x8] sm:$0xf]
  %v22 = vld [vmem:[%s1 + $0xc] sm:$0xf]
  %v23 = vld [vmem:[%s1 + $0x10] sm:$0xf]
  %v24 = vld [vmem:[%s1 + $0x14] sm:$0xf]
  %v25 = vld [vmem:[%s1 + $0x18] sm:$0xf]
  %v26 = vld [vmem:[%s1 + $0x1c] sm:$0xf]
  %v27 = vld [vmem:[%s1 + $0x20] sm:$0xf]
  %v28 = vld [vmem:[%s1 + $0x24] sm:$0xf]
  %v29 = vld [vmem:[%s1 + $0x28] sm:$0xf]
  %v30 = vld [vmem:[%s1 + $0x2c] sm:$0xf]
  %v31 = vld [vmem:[%s1 + $0x30] sm:$0xf]
  %v32 = vld [vmem:[%s1 + $0x34] sm:$0xf]
  %v33 = vld [vmem:[%s1 + $0x38] sm:$0xf]
  %v34 = vld [vmem:[%s1 + $0x3c] sm:$0xf]
  %v35 = vld [vmem:[%s1 + $0x40] sm:$0xf]
  %v36 = vld [vmem:[%s1 + $0x44] sm:$0xf]
  %v37 = vld [vmem:[%s1 + $0x48] sm:$0xf]
  %v38 = vld [vmem:[%s1 + $0x4c] sm:$0xf]
  %v39 = vld [vmem:[%s1 + $0x50] sm:$0xf]
  %v40 = vld [vmem:[%s1 + $0x54] sm:$0xf]
  %v41 = vld [vmem:[%s1 + $0x58] sm:$0xf]
  %v42 = vld [vmem:[%s1 + $0x5c] sm:$0xf]
  %v43 = vld [vmem:[%s1 + $0x60] sm:$0xf]
  %v44 = vld [vmem:[%s1 + $0x64] sm:$0xf]
  %v45 = vld [vmem:[%s1 + $0x68] sm:$0xf]
  %v46 = vld [vmem:[%s1 + $0x6c] sm:$0xf]
  %v47 = vld [vmem:[%s1 + $0x70] sm:$0xf]
  %v48 = vld [vmem:[%s1 + $0x74] sm:$0xf]
  %v49 = vld [vmem:[%s1 + $0x78] sm:$0xf]
  %v50 = vld [vmem:[%s1 + $0x7c] sm:$0xf]
  %v53 = vunpack.c.l.b16 %v17
  %v54 = vunpack.c.h.b16 %v17
  %v55 = vunpack.c.l.b16 %v18
  %v56 = vunpack.c.h.b16 %v18
  %v57 = vpack.c.b16 %v55, %v53
  %v58 = vpack.c.b16 %v56, %v54
  %v93 = vunpack.c.l.b16 %v19
  %v94 = vunpack.c.l.b16 %v20
  %v95 = vunpack.c.l.b16 %v21
  %v96 = vunpack.c.l.b16 %v22
  %v97 = vunpack.c.l.b16 %v23
  %v98 = vunpack.c.l.b16 %v24
  %v99 = vunpack.c.l.b16 %v25
  %v100 = vunpack.c.l.b16 %v26
  %v101 = vunpack.c.l.b16 %v27
  %v102 = vunpack.c.l.b16 %v28
  %v103 = vunpack.c.l.b16 %v29
  %v104 = vunpack.c.l.b16 %v30
  %v105 = vunpack.c.l.b16 %v31
  %v106 = vunpack.c.l.b16 %v32
  %v107 = vunpack.c.l.b16 %v33
  %v108 = vunpack.c.l.b16 %v34
  %v109 = vunpack.c.l.b16 %v35
  %v110 = vunpack.c.l.b16 %v36
  %v111 = vunpack.c.l.b16 %v37
  %v112 = vunpack.c.l.b16 %v38
  %v113 = vunpack.c.l.b16 %v39
  %v114 = vunpack.c.l.b16 %v40
  %v115 = vunpack.c.l.b16 %v41
  %v116 = vunpack.c.l.b16 %v42
  %v117 = vunpack.c.l.b16 %v43
  %v118 = vunpack.c.l.b16 %v44
  %v119 = vunpack.c.l.b16 %v45
  %v120 = vunpack.c.l.b16 %v46
  %v121 = vunpack.c.l.b16 %v47
  %v122 = vunpack.c.l.b16 %v48
  %v123 = vunpack.c.l.b16 %v49
  %v124 = vunpack.c.l.b16 %v50
  %v125 = vpack.c.b16 %v94, %v93
  %v126 = vpack.c.b16 %v96, %v95
  %v127 = vpack.c.b16 %v98, %v97
  %v128 = vpack.c.b16 %v100, %v99
  %v129 = vpack.c.b16 %v102, %v101
  %v130 = vpack.c.b16 %v104, %v103
  %v131 = vpack.c.b16 %v106, %v105
  %v132 = vpack.c.b16 %v108, %v107
  %v133 = vpack.c.b16 %v110, %v109
  %v134 = vpack.c.b16 %v112, %v111
  %v135 = vpack.c.b16 %v114, %v113
  %v136 = vpack.c.b16 %v116, %v115
  %v137 = vpack.c.b16 %v118, %v117
  %v138 = vpack.c.b16 %v120, %v119
  %v139 = vpack.c.b16 %v122, %v121
  %v140 = vpack.c.b16 %v124, %v123
  %157 = vmatpush.bf16.msra.mxu0 %v132
  %158 = vmatpush.bf16.msra.mxu0 %v131
  %159 = vmatpush.bf16.msra.mxu0 %v130
  %160 = vmatpush.bf16.msra.mxu0 %v129
  %161 = vmatpush.bf16.msra.mxu0 %v128
  %162 = vmatpush.bf16.msra.mxu0 %v127
  %163 = vmatpush.bf16.msra.mxu0 %v126
  %164 = vmatpush.bf16.msra.mxu0 %v125
  %165 = vmatmul.bf16.gmra.mxu0 %v57
  %v166 = vpop.f32.mrf.mxu0
  %v167 = vadd.f32 0.0, %v166
  %v168 = vpop.f32.mrf.mxu0
  %v169 = vadd.f32 0.0, %v168
  %170 = vdwg.mxu0
  %171 = vmatpush.bf16.msra.mxu0 %v140
  %172 = vmatpush.bf16.msra.mxu0 %v139
  %173 = vmatpush.bf16.msra.mxu0 %v138
  %174 = vmatpush.bf16.msra.mxu0 %v137
  %175 = vmatpush.bf16.msra.mxu0 %v136
  %176 = vmatpush.bf16.msra.mxu0 %v135
  %177 = vmatpush.bf16.msra.mxu0 %v134
  %178 = vmatpush.bf16.msra.mxu0 %v133
  %179 = vmatmul.bf16.gmra.mxu0 %v58
  %v180 = vpop.f32.mrf.mxu0
  %v181 = vadd.f32 %v167, %v180
  %v182 = vpop.f32.mrf.mxu0
  %v183 = vadd.f32 %v169, %v182
  %184 = vdwg.mxu0
  %v185 = vld [vmem:[%s2] sm:$0x1]
  %v187 = vperm.slane %v185, 0
  %v189 = vmul.f32 %v181, %v187
  %v190 = vmul.f32 %v183, %v187
  %v191 = vld [vmem:[%s3] sm:$0x1]
  %v193 = vperm.slane %v191, 0
  %v195 = vadd.f32 %v189, %v193
  %v196 = vadd.f32 %v190, %v193
  %v197 = vmax.f32 %v195, 0.0
  %v198 = vmax.f32 %v196, 0.0
  %v199 = vpack.c.bf16 %v197, %v197
  %v200 = vpack.c.bf16 %v198, %v198
  %201 = vst [vmem:[%s4] sm:$0xf] %v199
  %202 = vst [vmem:[%s4 + $0x4] sm:$0xf] %v200
  // Predicated region
  $region18: #{_lambda_.34} parent=0 // pred_check
    _
  $region19: #{_lambda_.34} parent=0 // pred_check_branch
    %204 = sbr.rel (0) target = $region21
  $region20: #{_lambda_.34} parent=0 // pred_region
    _
  $region21: #{_lambda_.34} parent=0 // pred_fallthru
    _
  // Predicated region
  $region22: #{_lambda_.34} parent=0 // pred_check
    _
  $region23: #{_lambda_.34} parent=0 // pred_check_branch
    %206 = sbr.rel (0) target = $region25
  $region24: #{_lambda_.34} parent=0 // pred_region
    _
  $region25: #{_lambda_.34} parent=0 // pred_fallthru
    _

// kernel: _lambda_.33
$region0: #{_lambda_.33}
  #allocation0 [shape = 'u32[]', space=smem, size = 0x4, offset = 0x4, fixed_abs, tag = 'smem constant byte address 0x4 - core index']
  #allocation1 [shape = 'u32[72,128]{1,0:T(1,128)}', space=vmem, size = 0x9000, scoped, tag = 'internal scratch']
  %s0 = inlined_call_operand.vmem [shape: bf16[16,128], index: 0, kind: input, shape index: {}]
  %s1 = inlined_call_operand.vmem [shape: bf16[128,256], index: 1, kind: input, shape index: {}]
  %s2 = inlined_call_operand.vmem [shape: f32[1,256], index: 2, kind: input, shape index: {}]
  %s3 = inlined_call_operand.vmem [shape: f32[1,256], index: 3, kind: input, shape index: {}]
  %s4 = inlined_call_operand.vmem [shape: bf16[16,256], index: 4, kind: input, shape index: {}]
  %s5 = inlined_call_operand.vmem [shape: bf16[16,256], index: 5, kind: output, shape index: {}]
  %s6 = sld [smem:[#allocation0]]
  $region30: #{_lambda_.33} parent=0
    _
  %s8 = ssub.s32 1, %s6
  %s9 = scalar_select 0, %s8, %s6
  // Predicated region
  $region2: #{_lambda_.33} parent=0 // pred_check
    _
  $region3: #{_lambda_.33} parent=0 // pred_check_branch
    %11 = sbr.rel (0) target = $region5
  $region4: #{_lambda_.33} parent=0 // pred_region
    _
  $region5: #{_lambda_.33} parent=0 // pred_fallthru
    _
  // Predicated region
  $region6: #{_lambda_.33} parent=0 // pred_check
    _
  $region7: #{_lambda_.33} parent=0 // pred_check_branch
    %13 = sbr.rel (0) target = $region9
  $region8: #{_lambda_.33} parent=0 // pred_region
    _
  $region9: #{_lambda_.33} parent=0 // pred_fallthru
    _
  // Predicated region
  $region10: #{_lambda_.33} parent=0 // pred_check
    _
  $region11: #{_lambda_.33} parent=0 // pred_check_branch
    %15 = sbr.rel (0) target = $region13
  $region12: #{_lambda_.33} parent=0 // pred_region
    _
  $region13: #{_lambda_.33} parent=0 // pred_fallthru
    _
  // Predicated region
  $region14: #{_lambda_.33} parent=0 // pred_check
    _
  $region15: #{_lambda_.33} parent=0 // pred_check_branch
    %17 = sbr.rel (0) target = $region17
  $region16: #{_lambda_.33} parent=0 // pred_region
    _
  $region17: #{_lambda_.33} parent=0 // pred_fallthru
    _
  // Predicated region
  $region18: #{_lambda_.33} parent=0 // pred_check
    _
  $region19: #{_lambda_.33} parent=0 // pred_check_branch
    %19 = sbr.rel (0) target = $region21
  $region20: #{_lambda_.33} parent=0 // pred_region
    _
  $region21: #{_lambda_.33} parent=0 // pred_fallthru
    _
  %v20 = vld [vmem:[%s0] sm:$0xf]
  %v21 = vld [vmem:[%s0 + $0x4] sm:$0xf]
  %v22 = vld [vmem:[%s1] sm:$0xff]
  %v23 = vld [vmem:[%s1 + $0x8] sm:$0xff]
  %v24 = vld [vmem:[%s1 + $0x10] sm:$0xff]
  %v25 = vld [vmem:[%s1 + $0x18] sm:$0xff]
  %v26 = vld [vmem:[%s1 + $0x20] sm:$0xff]
  %v27 = vld [vmem:[%s1 + $0x28] sm:$0xff]
  %v28 = vld [vmem:[%s1 + $0x30] sm:$0xff]
  %v29 = vld [vmem:[%s1 + $0x38] sm:$0xff]
  %v30 = vld [vmem:[%s1 + $0x40] sm:$0xff]
  %v31 = vld [vmem:[%s1 + $0x48] sm:$0xff]
  %v32 = vld [vmem:[%s1 + $0x50] sm:$0xff]
  %v33 = vld [vmem:[%s1 + $0x58] sm:$0xff]
  %v34 = vld [vmem:[%s1 + $0x60] sm:$0xff]
  %v35 = vld [vmem:[%s1 + $0x68] sm:$0xff]
  %v36 = vld [vmem:[%s1 + $0x70] sm:$0xff]
  %v37 = vld [vmem:[%s1 + $0x78] sm:$0xff]
  %v40 = vunpack.c.l.b16 %v20
  %v41 = vunpack.c.l.b16 %v21
  %v42 = vpack.c.b16 %v41, %v40
  %v60 = vunpack.c.l.b16 %v22
  %v61 = vunpack.c.h.b16 %v22
  %v62 = vunpack.c.l.b16 %v23
  %v63 = vunpack.c.h.b16 %v23
  %v64 = vunpack.c.l.b16 %v24
  %v65 = vunpack.c.h.b16 %v24
  %v66 = vunpack.c.l.b16 %v25
  %v67 = vunpack.c.h.b16 %v25
  %v68 = vunpack.c.l.b16 %v26
  %v69 = vunpack.c.h.b16 %v26
  %v70 = vunpack.c.l.b16 %v27
  %v71 = vunpack.c.h.b16 %v27
  %v72 = vunpack.c.l.b16 %v28
  %v73 = vunpack.c.h.b16 %v28
  %v74 = vunpack.c.l.b16 %v29
  %v75 = vunpack.c.h.b16 %v29
  %v76 = vunpack.c.l.b16 %v30
  %v77 = vunpack.c.h.b16 %v30
  %v78 = vunpack.c.l.b16 %v31
  %v79 = vunpack.c.h.b16 %v31
  %v80 = vunpack.c.l.b16 %v32
  %v81 = vunpack.c.h.b16 %v32
  %v82 = vunpack.c.l.b16 %v33
  %v83 = vunpack.c.h.b16 %v33
  %v84 = vunpack.c.l.b16 %v34
  %v85 = vunpack.c.h.b16 %v34
  %v86 = vunpack.c.l.b16 %v35
  %v87 = vunpack.c.h.b16 %v35
  %v88 = vunpack.c.l.b16 %v36
  %v89 = vunpack.c.h.b16 %v36
  %v90 = vunpack.c.l.b16 %v37
  %v91 = vunpack.c.h.b16 %v37
  %v92 = vpack.c.b16 %v62, %v60
  %v93 = vpack.c.b16 %v63, %v61
  %v94 = vpack.c.b16 %v66, %v64
  %v95 = vpack.c.b16 %v67, %v65
  %v96 = vpack.c.b16 %v70, %v68
  %v97 = vpack.c.b16 %v71, %v69
  %v98 = vpack.c.b16 %v74, %v72
  %v99 = vpack.c.b16 %v75, %v73
  %v100 = vpack.c.b16 %v78, %v76
  %v101 = vpack.c.b16 %v79, %v77
  %v102 = vpack.c.b16 %v82, %v80
  %v103 = vpack.c.b16 %v83, %v81
  %v104 = vpack.c.b16 %v86, %v84
  %v105 = vpack.c.b16 %v87, %v85
  %v106 = vpack.c.b16 %v90, %v88
  %v107 = vpack.c.b16 %v91, %v89
  %124 = vmatpush.bf16.msra.mxu0 %v106
  %125 = vmatpush.bf16.msra.mxu0 %v104
  %126 = vmatpush.bf16.msra.mxu0 %v102
  %127 = vmatpush.bf16.msra.mxu0 %v100
  %128 = vmatpush.bf16.msra.mxu0 %v98
  %129 = vmatpush.bf16.msra.mxu0 %v96
  %130 = vmatpush.bf16.msra.mxu0 %v94
  %131 = vmatpush.bf16.msra.mxu0 %v92
  %132 = vmatmul.bf16.gmra.mxu0 %v42
  %v133 = vpop.f32.mrf.mxu0
  %v134 = vadd.f32 0.0, %v133
  %v135 = vpop.f32.mrf.mxu0
  %v136 = vadd.f32 0.0, %v135
  %137 = vdwg.mxu0
  %138 = vmatpush.bf16.msra.mxu0 %v107
  %139 = vmatpush.bf16.msra.mxu0 %v105
  %140 = vmatpush.bf16.msra.mxu0 %v103
  %141 = vmatpush.bf16.msra.mxu0 %v101
  %142 = vmatpush.bf16.msra.mxu0 %v99
  %143 = vmatpush.bf16.msra.mxu0 %v97
  %144 = vmatpush.bf16.msra.mxu0 %v95
  %145 = vmatpush.bf16.msra.mxu0 %v93
  %146 = vmatmul.bf16.gmra.mxu0 %v42
  %v147 = vpop.f32.mrf.mxu0
  %v148 = vadd.f32 0.0, %v147
  %v149 = vpop.f32.mrf.mxu0
  %v150 = vadd.f32 0.0, %v149
  %151 = vdwg.mxu0
  %v152 = vld [vmem:[%s2] sm:$0x3]
  %v154 = vperm.slane %v152, 0
  %v155 = vperm.slane %v152, 1
  %v158 = vmul.f32 %v134, %v154
  %v159 = vmul.f32 %v148, %v155
  %v160 = vmul.f32 %v136, %v154
  %v161 = vmul.f32 %v150, %v155
  %v162 = vld [vmem:[%s3] sm:$0x3]
  %v164 = vperm.slane %v162, 0
  %v165 = vperm.slane %v162, 1
  %v168 = vadd.f32 %v158, %v164
  %v169 = vadd.f32 %v159, %v165
  %v170 = vadd.f32 %v160, %v164
  %v171 = vadd.f32 %v161, %v165
  %v172 = vld [vmem:[%s4] sm:$0xff]
  %v173 = vld [vmem:[%s4 + $0x8] sm:$0xff]
  %v174 = vunpack.c.l.bf16 %v172
  %v175 = vunpack.c.h.bf16 %v172
  %v176 = vunpack.c.l.bf16 %v173
  %v177 = vunpack.c.h.bf16 %v173
  %v178 = vadd.f32 %v168, %v174
  %v179 = vadd.f32 %v169, %v175
  %v180 = vadd.f32 %v170, %v176
  %v181 = vadd.f32 %v171, %v177
  %v182 = vmax.f32 %v178, 0.0
  %v183 = vmax.f32 %v179, 0.0
  %v184 = vmax.f32 %v180, 0.0
  %v185 = vmax.f32 %v181, 0.0
  %v186 = vpack.c.bf16 %v183, %v182
  %v187 = vpack.c.bf16 %v185, %v184
  %188 = vst [vmem:[%s5] sm:$0xff] %v186
  %189 = vst [vmem:[%s5 + $0x8] sm:$0xff] %v187
  // Predicated region
  $region22: #{_lambda_.33} parent=0 // pred_check
    _
  $region23: #{_lambda_.33} parent=0 // pred_check_branch
    %191 = sbr.rel (0) target = $region25
  $region24: #{_lambda_.33} parent=0 // pred_region
    _
  $region25: #{_lambda_.33} parent=0 // pred_fallthru
    _
  // Predicated region
  $region26: #{_lambda_.33} parent=0 // pred_check
    _
  $region27: #{_lambda_.33} parent=0 // pred_check_branch
    %193 = sbr.rel (0) target = $region29
  $region28: #{_lambda_.33} parent=0 // pred_region
    _
  $region29: #{_lambda_.33} parent=0 // pred_fallthru
    _

// kernel: _lambda_.31
$region0: #{_lambda_.31}
  #allocation0 [shape = 'u32[]', space=smem, size = 0x4, offset = 0x4, fixed_abs, tag = 'smem constant byte address 0x4 - core index']
  #allocation1 [shape = 'u32[72,128]{1,0:T(1,128)}', space=vmem, size = 0x9000, scoped, tag = 'internal scratch']
  %s0 = inlined_call_operand.vmem [shape: bf16[32,1152], index: 0, kind: input, shape index: {}]
  %s1 = inlined_call_operand.vmem [shape: bf16[1152,128], index: 1, kind: input, shape index: {}]
  %s2 = inlined_call_operand.vmem [shape: f32[1,128], index: 2, kind: input, shape index: {}]
  %s3 = inlined_call_operand.vmem [shape: f32[1,128], index: 3, kind: input, shape index: {}]
  %s4 = inlined_call_operand.vmem [shape: bf16[32,128], index: 4, kind: output, shape index: {}]
  %s5 = sld [smem:[#allocation0]]
  $region26: #{_lambda_.31} parent=0
    _
  %s7 = ssub.s32 1, %s5
  %s8 = scalar_select 0, %s7, %s5
  // Predicated region
  $region2: #{_lambda_.31} parent=0 // pred_check
    _
  $region3: #{_lambda_.31} parent=0 // pred_check_branch
    %10 = sbr.rel (0) target = $region5
  $region4: #{_lambda_.31} parent=0 // pred_region
    _
  $region5: #{_lambda_.31} parent=0 // pred_fallthru
    _
  // Predicated region
  $region6: #{_lambda_.31} parent=0 // pred_check
    _
  $region7: #{_lambda_.31} parent=0 // pred_check_branch
    %12 = sbr.rel (0) target = $region9
  $region8: #{_lambda_.31} parent=0 // pred_region
    _
  $region9: #{_lambda_.31} parent=0 // pred_fallthru
    _
  // Predicated region
  $region10: #{_lambda_.31} parent=0 // pred_check
    _
  $region11: #{_lambda_.31} parent=0 // pred_check_branch
    %14 = sbr.rel (0) target = $region13
  $region12: #{_lambda_.31} parent=0 // pred_region
    _
  $region13: #{_lambda_.31} parent=0 // pred_fallthru
    _
  // Predicated region
  $region14: #{_lambda_.31} parent=0 // pred_check
    _
  $region15: #{_lambda_.31} parent=0 // pred_check_branch
    %16 = sbr.rel (0) target = $region17
  $region16: #{_lambda_.31} parent=0 // pred_region
    _
  $region17: #{_lambda_.31} parent=0 // pred_fallthru
    _
  %v17 = vld [vmem:[%s0] sm:$0xff]
  %v18 = vld [vmem:[%s0 + $0x8] sm:$0xff]
  %v19 = vld [vmem:[%s0 + $0x10] sm:$0xff]
  %v20 = vld [vmem:[%s0 + $0x18] sm:$0xff]
  %v21 = vld [vmem:[%s0 + $0x20] sm:$0xf]
  %v22 = vld [vmem:[%s0 + $0x24] sm:$0xff]
  %v23 = vld [vmem:[%s0 + $0x2c] sm:$0xff]
  %v24 = vld [vmem:[%s0 + $0x34] sm:$0xff]
  %v25 = vld [vmem:[%s0 + $0x3c] sm:$0xff]
  %v26 = vld [vmem:[%s0 + $0x44] sm:$0xf]
  %v27 = vld [vmem:[%s0 + $0x48] sm:$0xff]
  %v28 = vld [vmem:[%s0 + $0x50] sm:$0xff]
  %v29 = vld [vmem:[%s0 + $0x58] sm:$0xff]
  %v30 = vld [vmem:[%s0 + $0x60] sm:$0xff]
  %v31 = vld [vmem:[%s0 + $0x68] sm:$0xf]
  %v32 = vld [vmem:[%s0 + $0x6c] sm:$0xff]
  %v33 = vld [vmem:[%s0 + $0x74] sm:$0xff]
  %v34 = vld [vmem:[%s0 + $0x7c] sm:$0xff]
  %v35 = vld [vmem:[%s0 + $0x84] sm:$0xff]
  %v36 = vld [vmem:[%s0 + $0x8c] sm:$0xf]
  %v37 = vld [vmem:[%s1] sm:$0xf]
  %v38 = vld [vmem:[%s1 + $0x4] sm:$0xf]
  %v39 = vld [vmem:[%s1 + $0x8] sm:$0xf]
  %v40 = vld [vmem:[%s1 + $0xc] sm:$0xf]
  %v41 = vld [vmem:[%s1 + $0x10] sm:$0xf]
  %v42 = vld [vmem:[%s1 + $0x14] sm:$0xf]
  %v43 = vld [vmem:[%s1 + $0x18] sm:$0xf]
  %v44 = vld [vmem:[%s1 + $0x1c] sm:$0xf]
  %v45 = vld [vmem:[%s1 + $0x20] sm:$0xf]
  %v46 = vld [vmem:[%s1 + $0x24] sm:$0xf]
  %v47 = vld [vmem:[%s1 + $0x28] sm:$0xf]
  %v48 = vld [vmem:[%s1 + $0x2c] sm:$0xf]
  %v49 = vld [vmem:[%s1 + $0x30] sm:$0xf]
  %v50 = vld [vmem:[%s1 + $0x34] sm:$0xf]
  %v51 = vld [vmem:[%s1 + $0x38] sm:$0xf]
  %v52 = vld [vmem:[%s1 + $0x3c] sm:$0xf]
  %v53 = vld [vmem:[%s1 + $0x40] sm:$0xf]
  %v54 = vld [vmem:[%s1 + $0x44] sm:$0xf]
  %v55 = vld [vmem:[%s1 + $0x48] sm:$0xf]
  %v56 = vld [vmem:[%s1 + $0x4c] sm:$0xf]
  %v57 = vld [vmem:[%s1 + $0x50] sm:$0xf]
  %v58 = vld [vmem:[%s1 + $0x54] sm:$0xf]
  %v59 = vld [vmem:[%s1 + $0x58] sm:$0xf]
  %v60 = vld [vmem:[%s1 + $0x5c] sm:$0xf]
  %v61 = vld [vmem:[%s1 + $0x60] sm:$0xf]
  %v62 = vld [vmem:[%s1 + $0x64] sm:$0xf]
  %v63 = vld [vmem:[%s1 + $0x68] sm:$0xf]
  %v64 = vld [vmem:[%s1 + $0x6c] sm:$0xf]
  %v65 = vld [vmem:[%s1 + $0x70] sm:$0xf]
  %v66 = vld [vmem:[%s1 + $0x74] sm:$0xf]
  %v67 = vld [vmem:[%s1 + $0x78] sm:$0xf]
  %v68 = vld [vmem:[%s1 + $0x7c] sm:$0xf]
  %v69 = vld [vmem:[%s1 + $0x80] sm:$0xf]
  %v70 = vld [vmem:[%s1 + $0x84] sm:$0xf]
  %v71 = vld [vmem:[%s1 + $0x88] sm:$0xf]
  %v72 = vld [vmem:[%s1 + $0x8c] sm:$0xf]
  %v73 = vld [vmem:[%s1 + $0x90] sm:$0xf]
  %v74 = vld [vmem:[%s1 + $0x94] sm:$0xf]
  %v75 = vld [vmem:[%s1 + $0x98] sm:$0xf]
  %v76 = vld [vmem:[%s1 + $0x9c] sm:$0xf]
  %v77 = vld [vmem:[%s1 + $0xa0] sm:$0xf]
  %v78 = vld [vmem:[%s1 + $0xa4] sm:$0xf]
  %v79 = vld [vmem:[%s1 + $0xa8] sm:$0xf]
  %v80 = vld [vmem:[%s1 + $0xac] sm:$0xf]
  %v81 = vld [vmem:[%s1 + $0xb0] sm:$0xf]
  %v82 = vld [vmem:[%s1 + $0xb4] sm:$0xf]
  %v83 = vld [vmem:[%s1 + $0xb8] sm:$0xf]
  %v84 = vld [vmem:[%s1 + $0xbc] sm:$0xf]
  %v85 = vld [vmem:[%s1 + $0xc0] sm:$0xf]
  %v86 = vld [vmem:[%s1 + $0xc4] sm:$0xf]
  %v87 = vld [vmem:[%s1 + $0xc8] sm:$0xf]
  %v88 = vld [vmem:[%s1 + $0xcc] sm:$0xf]
  %v89 = vld [vmem:[%s1 + $0xd0] sm:$0xf]
  %v90 = vld [vmem:[%s1 + $0xd4] sm:$0xf]
  %v91 = vld [vmem:[%s1 + $0xd8] sm:$0xf]
  %v92 = vld [vmem:[%s1 + $0xdc] sm:$0xf]
  %v93 = vld [vmem:[%s1 + $0xe0] sm:$0xf]
  %v94 = vld [vmem:[%s1 + $0xe4] sm:$0xf]
  %v95 = vld [vmem:[%s1 + $0xe8] sm:$0xf]
  %v96 = vld [vmem:[%s1 + $0xec] sm:$0xf]
  %v97 = vld [vmem:[%s1 + $0xf0] sm:$0xf]
  %v98 = vld [vmem:[%s1 + $0xf4] sm:$0xf]
  %v99 = vld [vmem:[%s1 + $0xf8] sm:$0xf]
  %v100 = vld [vmem:[%s1 + $0xfc] sm:$0xf]
  %v101 = vld [vmem:[%s1 + $0x100] sm:$0xf]
  %v102 = vld [vmem:[%s1 + $0x104] sm:$0xf]
  %v103 = vld [vmem:[%s1 + $0x108] sm:$0xf]
  %v104 = vld [vmem:[%s1 + $0x10c] sm:$0xf]
  %v105 = vld [vmem:[%s1 + $0x110] sm:$0xf]
  %v106 = vld [vmem:[%s1 + $0x114] sm:$0xf]
  %v107 = vld [vmem:[%s1 + $0x118] sm:$0xf]
  %v108 = vld [vmem:[%s1 + $0x11c] sm:$0xf]
  %v109 = vld [vmem:[%s1 + $0x120] sm:$0xf]
  %v110 = vld [vmem:[%s1 + $0x124] sm:$0xf]
  %v111 = vld [vmem:[%s1 + $0x128] sm:$0xf]
  %v112 = vld [vmem:[%s1 + $0x12c] sm:$0xf]
  %v113 = vld [vmem:[%s1 + $0x130] sm:$0xf]
  %v114 = vld [vmem:[%s1 + $0x134] sm:$0xf]
  %v115 = vld [vmem:[%s1 + $0x138] sm:$0xf]
  %v116 = vld [vmem:[%s1 + $0x13c] sm:$0xf]
  %v117 = vld [vmem:[%s1 + $0x140] sm:$0xf]
  %v118 = vld [vmem:[%s1 + $0x144] sm:$0xf]
  %v119 = vld [vmem:[%s1 + $0x148] sm:$0xf]
  %v120 = vld [vmem:[%s1 + $0x14c] sm:$0xf]
  %v121 = vld [vmem:[%s1 + $0x150] sm:$0xf]
  %v122 = vld [vmem:[%s1 + $0x154] sm:$0xf]
  %v123 = vld [vmem:[%s1 + $0x158] sm:$0xf]
  %v124 = vld [vmem:[%s1 + $0x15c] sm:$0xf]
  %v125 = vld [vmem:[%s1 + $0x160] sm:$0xf]
  %v126 = vld [vmem:[%s1 + $0x164] sm:$0xf]
  %v127 = vld [vmem:[%s1 + $0x168] sm:$0xf]
  %v128 = vld [vmem:[%s1 + $0x16c] sm:$0xf]
  %v129 = vld [vmem:[%s1 + $0x170] sm:$0xf]
  %v130 = vld [vmem:[%s1 + $0x174] sm:$0xf]
  %v131 = vld [vmem:[%s1 + $0x178] sm:$0xf]
  %v132 = vld [vmem:[%s1 + $0x17c] sm:$0xf]
  %v133 = vld [vmem:[%s1 + $0x180] sm:$0xf]
  %v134 = vld [vmem:[%s1 + $0x184] sm:$0xf]
  %v135 = vld [vmem:[%s1 + $0x188] sm:$0xf]
  %v136 = vld [vmem:[%s1 + $0x18c] sm:$0xf]
  %v137 = vld [vmem:[%s1 + $0x190] sm:$0xf]
  %v138 = vld [vmem:[%s1 + $0x194] sm:$0xf]
  %v139 = vld [vmem:[%s1 + $0x198] sm:$0xf]
  %v140 = vld [vmem:[%s1 + $0x19c] sm:$0xf]
  %v141 = vld [vmem:[%s1 + $0x1a0] sm:$0xf]
  %v142 = vld [vmem:[%s1 + $0x1a4] sm:$0xf]
  %v143 = vld [vmem:[%s1 + $0x1a8] sm:$0xf]
  %v144 = vld [vmem:[%s1 + $0x1ac] sm:$0xf]
  %v145 = vld [vmem:[%s1 + $0x1b0] sm:$0xf]
  %v146 = vld [vmem:[%s1 + $0x1b4] sm:$0xf]
  %v147 = vld [vmem:[%s1 + $0x1b8] sm:$0xf]
  %v148 = vld [vmem:[%s1 + $0x1bc] sm:$0xf]
  %v149 = vld [vmem:[%s1 + $0x1c0] sm:$0xf]
  %v150 = vld [vmem:[%s1 + $0x1c4] sm:$0xf]
  %v151 = vld [vmem:[%s1 + $0x1c8] sm:$0xf]
  %v152 = vld [vmem:[%s1 + $0x1cc] sm:$0xf]
  %v153 = vld [vmem:[%s1 + $0x1d0] sm:$0xf]
  %v154 = vld [vmem:[%s1 + $0x1d4] sm:$0xf]
  %v155 = vld [vmem:[%s1 + $0x1d8] sm:$0xf]
  %v156 = vld [vmem:[%s1 + $0x1dc] sm:$0xf]
  %v157 = vld [vmem:[%s1 + $0x1e0] sm:$0xf]
  %v158 = vld [vmem:[%s1 + $0x1e4] sm:$0xf]
  %v159 = vld [vmem:[%s1 + $0x1e8] sm:$0xf]
  %v160 = vld [vmem:[%s1 + $0x1ec] sm:$0xf]
  %v161 = vld [vmem:[%s1 + $0x1f0] sm:$0xf]
  %v162 = vld [vmem:[%s1 + $0x1f4] sm:$0xf]
  %v163 = vld [vmem:[%s1 + $0x1f8] sm:$0xf]
  %v164 = vld [vmem:[%s1 + $0x1fc] sm:$0xf]
  %v165 = vld [vmem:[%s1 + $0x200] sm:$0xf]
  %v166 = vld [vmem:[%s1 + $0x204] sm:$0xf]
  %v167 = vld [vmem:[%s1 + $0x208] sm:$0xf]
  %v168 = vld [vmem:[%s1 + $0x20c] sm:$0xf]
  %v169 = vld [vmem:[%s1 + $0x210] sm:$0xf]
  %v170 = vld [vmem:[%s1 + $0x214] sm:$0xf]
  %v171 = vld [vmem:[%s1 + $0x218] sm:$0xf]
  %v172 = vld [vmem:[%s1 + $0x21c] sm:$0xf]
  %v173 = vld [vmem:[%s1 + $0x220] sm:$0xf]
  %v174 = vld [vmem:[%s1 + $0x224] sm:$0xf]
  %v175 = vld [vmem:[%s1 + $0x228] sm:$0xf]
  %v176 = vld [vmem:[%s1 + $0x22c] sm:$0xf]
  %v177 = vld [vmem:[%s1 + $0x230] sm:$0xf]
  %v178 = vld [vmem:[%s1 + $0x234] sm:$0xf]
  %v179 = vld [vmem:[%s1 + $0x238] sm:$0xf]
  %v180 = vld [vmem:[%s1 + $0x23c] sm:$0xf]
  %v201 = vunpack.c.l.b16 %v17
  %v202 = vunpack.c.h.b16 %v17
  %v203 = vunpack.c.l.b16 %v18
  %v204 = vunpack.c.h.b16 %v18
  %v205 = vunpack.c.l.b16 %v19
  %v206 = vunpack.c.h.b16 %v19
  %v207 = vunpack.c.l.b16 %v20
  %v208 = vunpack.c.h.b16 %v20
  %v209 = vunpack.c.l.b16 %v21
  %v210 = vunpack.c.l.b16 %v22
  %v211 = vunpack.c.h.b16 %v22
  %v212 = vunpack.c.l.b16 %v23
  %v213 = vunpack.c.h.b16 %v23
  %v214 = vunpack.c.l.b16 %v24
  %v215 = vunpack.c.h.b16 %v24
  %v216 = vunpack.c.l.b16 %v25
  %v217 = vunpack.c.h.b16 %v25
  %v218 = vunpack.c.l.b16 %v26
  %v219 = vunpack.c.l.b16 %v27
  %v220 = vunpack.c.h.b16 %v27
  %v221 = vunpack.c.l.b16 %v28
  %v222 = vunpack.c.h.b16 %v28
  %v223 = vunpack.c.l.b16 %v29
  %v224 = vunpack.c.h.b16 %v29
  %v225 = vunpack.c.l.b16 %v30
  %v226 = vunpack.c.h.b16 %v30
  %v227 = vunpack.c.l.b16 %v31
  %v228 = vunpack.c.l.b16 %v32
  %v229 = vunpack.c.h.b16 %v32
  %v230 = vunpack.c.l.b16 %v33
  %v231 = vunpack.c.h.b16 %v33
  %v232 = vunpack.c.l.b16 %v34
  %v233 = vunpack.c.h.b16 %v34
  %v234 = vunpack.c.l.b16 %v35
  %v235 = vunpack.c.h.b16 %v35
  %v236 = vunpack.c.l.b16 %v36
  %v237 = vpack.c.b16 %v210, %v201
  %v238 = vpack.c.b16 %v211, %v202
  %v239 = vpack.c.b16 %v212, %v203
  %v240 = vpack.c.b16 %v213, %v204
  %v241 = vpack.c.b16 %v214, %v205
  %v242 = vpack.c.b16 %v215, %v206
  %v243 = vpack.c.b16 %v216, %v207
  %v244 = vpack.c.b16 %v217, %v208
  %v245 = vpack.c.b16 %v218, %v209
  %v246 = vpack.c.b16 %v228, %v219
  %v247 = vpack.c.b16 %v229, %v220
  %v248 = vpack.c.b16 %v230, %v221
  %v249 = vpack.c.b16 %v231, %v222
  %v250 = vpack.c.b16 %v232, %v223
  %v251 = vpack.c.b16 %v233, %v224
  %v252 = vpack.c.b16 %v234, %v225
  %v253 = vpack.c.b16 %v235, %v226
  %v254 = vpack.c.b16 %v236, %v227
  %v417 = vunpack.c.l.b16 %v37
  %v418 = vunpack.c.l.b16 %v38
  %v419 = vunpack.c.l.b16 %v39
  %v420 = vunpack.c.l.b16 %v40
  %v421 = vunpack.c.l.b16 %v41
  %v422 = vunpack.c.l.b16 %v42
  %v423 = vunpack.c.l.b16 %v43
  %v424 = vunpack.c.l.b16 %v44
  %v425 = vunpack.c.l.b16 %v45
  %v426 = vunpack.c.l.b16 %v46
  %v427 = vunpack.c.l.b16 %v47
  %v428 = vunpack.c.l.b16 %v48
  %v429 = vunpack.c.l.b16 %v49
  %v430 = vunpack.c.l.b16 %v50
  %v431 = vunpack.c.l.b16 %v51
  %v432 = vunpack.c.l.b16 %v52
  %v433 = vunpack.c.l.b16 %v53
  %v434 = vunpack.c.l.b16 %v54
  %v435 = vunpack.c.l.b16 %v55
  %v436 = vunpack.c.l.b16 %v56
  %v437 = vunpack.c.l.b16 %v57
  %v438 = vunpack.c.l.b16 %v58
  %v439 = vunpack.c.l.b16 %v59
  %v440 = vunpack.c.l.b16 %v60
  %v441 = vunpack.c.l.b16 %v61
  %v442 = vunpack.c.l.b16 %v62
  %v443 = vunpack.c.l.b16 %v63
  %v444 = vunpack.c.l.b16 %v64
  %v445 = vunpack.c.l.b16 %v65
  %v446 = vunpack.c.l.b16 %v66
  %v447 = vunpack.c.l.b16 %v67
  %v448 = vunpack.c.l.b16 %v68
  %v449 = vunpack.c.l.b16 %v69
  %v450 = vunpack.c.l.b16 %v70
  %v451 = vunpack.c.l.b16 %v71
  %v452 = vunpack.c.l.b16 %v72
  %v453 = vunpack.c.l.b16 %v73
  %v454 = vunpack.c.l.b16 %v74
  %v455 = vunpack.c.l.b16 %v75
  %v456 = vunpack.c.l.b16 %v76
  %v457 = vunpack.c.l.b16 %v77
  %v458 = vunpack.c.l.b16 %v78
  %v459 = vunpack.c.l.b16 %v79
  %v460 = vunpack.c.l.b16 %v80
  %v461 = vunpack.c.l.b16 %v81
  %v462 = vunpack.c.l.b16 %v82
  %v463 = vunpack.c.l.b16 %v83
  %v464 = vunpack.c.l.b16 %v84
  %v465 = vunpack.c.l.b16 %v85
  %v466 = vunpack.c.l.b16 %v86
  %v467 = vunpack.c.l.b16 %v87
  %v468 = vunpack.c.l.b16 %v88
  %v469 = vunpack.c.l.b16 %v89
  %v470 = vunpack.c.l.b16 %v90
  %v471 = vunpack.c.l.b16 %v91
  %v472 = vunpack.c.l.b16 %v92
  %v473 = vunpack.c.l.b16 %v93
  %v474 = vunpack.c.l.b16 %v94
  %v475 = vunpack.c.l.b16 %v95
  %v476 = vunpack.c.l.b16 %v96
  %v477 = vunpack.c.l.b16 %v97
  %v478 = vunpack.c.l.b16 %v98
  %v479 = vunpack.c.l.b16 %v99
  %v480 = vunpack.c.l.b16 %v100
  %v481 = vunpack.c.l.b16 %v101
  %v482 = vunpack.c.l.b16 %v102
  %v483 = vunpack.c.l.b16 %v103
  %v484 = vunpack.c.l.b16 %v104
  %v485 = vunpack.c.l.b16 %v105
  %v486 = vunpack.c.l.b16 %v106
  %v487 = vunpack.c.l.b16 %v107
  %v488 = vunpack.c.l.b16 %v108
  %v489 = vunpack.c.l.b16 %v109
  %v490 = vunpack.c.l.b16 %v110
  %v491 = vunpack.c.l.b16 %v111
  %v492 = vunpack.c.l.b16 %v112
  %v493 = vunpack.c.l.b16 %v113
  %v494 = vunpack.c.l.b16 %v114
  %v495 = vunpack.c.l.b16 %v115
  %v496 = vunpack.c.l.b16 %v116
  %v497 = vunpack.c.l.b16 %v117
  %v498 = vunpack.c.l.b16 %v118
  %v499 = vunpack.c.l.b16 %v119
  %v500 = vunpack.c.l.b16 %v120
  %v501 = vunpack.c.l.b16 %v121
  %v502 = vunpack.c.l.b16 %v122
  %v503 = vunpack.c.l.b16 %v123
  %v504 = vunpack.c.l.b16 %v124
  %v505 = vunpack.c.l.b16 %v125
  %v506 = vunpack.c.l.b16 %v126
  %v507 = vunpack.c.l.b16 %v127
  %v508 = vunpack.c.l.b16 %v128
  %v509 = vunpack.c.l.b16 %v129
  %v510 = vunpack.c.l.b16 %v130
  %v511 = vunpack.c.l.b16 %v131
  %v512 = vunpack.c.l.b16 %v132
  %v513 = vunpack.c.l.b16 %v133
  %v514 = vunpack.c.l.b16 %v134
  %v515 = vunpack.c.l.b16 %v135
  %v516 = vunpack.c.l.b16 %v136
  %v517 = vunpack.c.l.b16 %v137
  %v518 = vunpack.c.l.b16 %v138
  %v519 = vunpack.c.l.b16 %v139
  %v520 = vunpack.c.l.b16 %v140
  %v521 = vunpack.c.l.b16 %v141
  %v522 = vunpack.c.l.b16 %v142
  %v523 = vunpack.c.l.b16 %v143
  %v524 = vunpack.c.l.b16 %v144
  %v525 = vunpack.c.l.b16 %v145
  %v526 = vunpack.c.l.b16 %v146
  %v527 = vunpack.c.l.b16 %v147
  %v528 = vunpack.c.l.b16 %v148
  %v529 = vunpack.c.l.b16 %v149
  %v530 = vunpack.c.l.b16 %v150
  %v531 = vunpack.c.l.b16 %v151
  %v532 = vunpack.c.l.b16 %v152
  %v533 = vunpack.c.l.b16 %v153
  %v534 = vunpack.c.l.b16 %v154
  %v535 = vunpack.c.l.b16 %v155
  %v536 = vunpack.c.l.b16 %v156
  %v537 = vunpack.c.l.b16 %v157
  %v538 = vunpack.c.l.b16 %v158
  %v539 = vunpack.c.l.b16 %v159
  %v540 = vunpack.c.l.b16 %v160
  %v541 = vunpack.c.l.b16 %v161
  %v542 = vunpack.c.l.b16 %v162
  %v543 = vunpack.c.l.b16 %v163
  %v544 = vunpack.c.l.b16 %v164
  %v545 = vunpack.c.l.b16 %v165
  %v546 = vunpack.c.l.b16 %v166
  %v547 = vunpack.c.l.b16 %v167
  %v548 = vunpack.c.l.b16 %v168
  %v549 = vunpack.c.l.b16 %v169
  %v550 = vunpack.c.l.b16 %v170
  %v551 = vunpack.c.l.b16 %v171
  %v552 = vunpack.c.l.b16 %v172
  %v553 = vunpack.c.l.b16 %v173
  %v554 = vunpack.c.l.b16 %v174
  %v555 = vunpack.c.l.b16 %v175
  %v556 = vunpack.c.l.b16 %v176
  %v557 = vunpack.c.l.b16 %v177
  %v558 = vunpack.c.l.b16 %v178
  %v559 = vunpack.c.l.b16 %v179
  %v560 = vunpack.c.l.b16 %v180
  %v561 = vpack.c.b16 %v418, %v417
  %v562 = vpack.c.b16 %v420, %v419
  %v563 = vpack.c.b16 %v422, %v421
  %v564 = vpack.c.b16 %v424, %v423
  %v565 = vpack.c.b16 %v426, %v425
  %v566 = vpack.c.b16 %v428, %v427
  %v567 = vpack.c.b16 %v430, %v429
  %v568 = vpack.c.b16 %v432, %v431
  %v569 = vpack.c.b16 %v434, %v433
  %v570 = vpack.c.b16 %v436, %v435
  %v571 = vpack.c.b16 %v438, %v437
  %v572 = vpack.c.b16 %v440, %v439
  %v573 = vpack.c.b16 %v442, %v441
  %v574 = vpack.c.b16 %v444, %v443
  %v575 = vpack.c.b16 %v446, %v445
  %v576 = vpack.c.b16 %v448, %v447
  %v577 = vpack.c.b16 %v450, %v449
  %v578 = vpack.c.b16 %v452, %v451
  %v579 = vpack.c.b16 %v454, %v453
  %v580 = vpack.c.b16 %v456, %v455
  %v581 = vpack.c.b16 %v458, %v457
  %v582 = vpack.c.b16 %v460, %v459
  %v583 = vpack.c.b16 %v462, %v461
  %v584 = vpack.c.b16 %v464, %v463
  %v585 = vpack.c.b16 %v466, %v465
  %v586 = vpack.c.b16 %v468, %v467
  %v587 = vpack.c.b16 %v470, %v469
  %v588 = vpack.c.b16 %v472, %v471
  %v589 = vpack.c.b16 %v474, %v473
  %v590 = vpack.c.b16 %v476, %v475
  %v591 = vpack.c.b16 %v478, %v477
  %v592 = vpack.c.b16 %v480, %v479
  %v593 = vpack.c.b16 %v482, %v481
  %v594 = vpack.c.b16 %v484, %v483
  %v595 = vpack.c.b16 %v486, %v485
  %v596 = vpack.c.b16 %v488, %v487
  %v597 = vpack.c.b16 %v490, %v489
  %v598 = vpack.c.b16 %v492, %v491
  %v599 = vpack.c.b16 %v494, %v493
  %v600 = vpack.c.b16 %v496, %v495
  %v601 = vpack.c.b16 %v498, %v497
  %v602 = vpack.c.b16 %v500, %v499
  %v603 = vpack.c.b16 %v502, %v501
  %v604 = vpack.c.b16 %v504, %v503
  %v605 = vpack.c.b16 %v506, %v505
  %v606 = vpack.c.b16 %v508, %v507
  %v607 = vpack.c.b16 %v510, %v509
  %v608 = vpack.c.b16 %v512, %v511
  %v609 = vpack.c.b16 %v514, %v513
  %v610 = vpack.c.b16 %v516, %v515
  %v611 = vpack.c.b16 %v518, %v517
  %v612 = vpack.c.b16 %v520, %v519
  %v613 = vpack.c.b16 %v522, %v521
  %v614 = vpack.c.b16 %v524, %v523
  %v615 = vpack.c.b16 %v526, %v525
  %v616 = vpack.c.b16 %v528, %v527
  %v617 = vpack.c.b16 %v530, %v529
  %v618 = vpack.c.b16 %v532, %v531
  %v619 = vpack.c.b16 %v534, %v533
  %v620 = vpack.c.b16 %v536, %v535
  %v621 = vpack.c.b16 %v538, %v537
  %v622 = vpack.c.b16 %v540, %v539
  %v623 = vpack.c.b16 %v542, %v541
  %v624 = vpack.c.b16 %v544, %v543
  %v625 = vpack.c.b16 %v546, %v545
  %v626 = vpack.c.b16 %v548, %v547
  %v627 = vpack.c.b16 %v550, %v549
  %v628 = vpack.c.b16 %v552, %v551
  %v629 = vpack.c.b16 %v554, %v553
  %v630 = vpack.c.b16 %v556, %v555
  %v631 = vpack.c.b16 %v558, %v557
  %v632 = vpack.c.b16 %v560, %v559
  %705 = vmatpush.bf16.msra.mxu0 %v568
  %706 = vmatpush.bf16.msra.mxu0 %v567
  %707 = vmatpush.bf16.msra.mxu0 %v566
  %708 = vmatpush.bf16.msra.mxu0 %v565
  %709 = vmatpush.bf16.msra.mxu0 %v564
  %710 = vmatpush.bf16.msra.mxu0 %v563
  %711 = vmatpush.bf16.msra.mxu0 %v562
  %712 = vmatpush.bf16.msra.mxu0 %v561
  %713 = vmatmul.bf16.gmra.mxu0 %v237
  %v714 = vpop.f32.mrf.mxu0
  %v715 = vadd.f32 0.0, %v714
  %v716 = vpop.f32.mrf.mxu0
  %v717 = vadd.f32 0.0, %v716
  %718 = vmatmul.bf16.gmra.mxu0 %v246
  %v719 = vpop.f32.mrf.mxu0
  %v720 = vadd.f32 0.0, %v719
  %v721 = vpop.f32.mrf.mxu0
  %v722 = vadd.f32 0.0, %v721
  %723 = vdwg.mxu0
  %724 = vmatpush.bf16.msra.mxu0 %v576
  %725 = vmatpush.bf16.msra.mxu0 %v575
  %726 = vmatpush.bf16.msra.mxu0 %v574
  %727 = vmatpush.bf16.msra.mxu0 %v573
  %728 = vmatpush.bf16.msra.mxu0 %v572
  %729 = vmatpush.bf16.msra.mxu0 %v571
  %730 = vmatpush.bf16.msra.mxu0 %v570
  %731 = vmatpush.bf16.msra.mxu0 %v569
  %732 = vmatmul.bf16.gmra.mxu0 %v238
  %v733 = vpop.f32.mrf.mxu0
  %v734 = vadd.f32 %v715, %v733
  %v735 = vpop.f32.mrf.mxu0
  %v736 = vadd.f32 %v717, %v735
  %737 = vmatmul.bf16.gmra.mxu0 %v247
  %v738 = vpop.f32.mrf.mxu0
  %v739 = vadd.f32 %v720, %v738
  %v740 = vpop.f32.mrf.mxu0
  %v741 = vadd.f32 %v722, %v740
  %742 = vdwg.mxu0
  %743 = vmatpush.bf16.msra.mxu0 %v584
  %744 = vmatpush.bf16.msra.mxu0 %v583
  %745 = vmatpush.bf16.msra.mxu0 %v582
  %746 = vmatpush.bf16.msra.mxu0 %v581
  %747 = vmatpush.bf16.msra.mxu0 %v580
  %748 = vmatpush.bf16.msra.mxu0 %v579
  %749 = vmatpush.bf16.msra.mxu0 %v578
  %750 = vmatpush.bf16.msra.mxu0 %v577
  %751 = vmatmul.bf16.gmra.mxu0 %v239
  %v752 = vpop.f32.mrf.mxu0
  %v753 = vadd.f32 %v734, %v752
  %v754 = vpop.f32.mrf.mxu0
  %v755 = vadd.f32 %v736, %v754
  %756 = vmatmul.bf16.gmra.mxu0 %v248
  %v757 = vpop.f32.mrf.mxu0
  %v758 = vadd.f32 %v739, %v757
  %v759 = vpop.f32.mrf.mxu0
  %v760 = vadd.f32 %v741, %v759
  %761 = vdwg.mxu0
  %762 = vmatpush.bf16.msra.mxu0 %v592
  %763 = vmatpush.bf16.msra.mxu0 %v591
  %764 = vmatpush.bf16.msra.mxu0 %v590
  %765 = vmatpush.bf16.msra.mxu0 %v589
  %766 = vmatpush.bf16.msra.mxu0 %v588
  %767 = vmatpush.bf16.msra.mxu0 %v587
  %768 = vmatpush.bf16.msra.mxu0 %v586
  %769 = vmatpush.bf16.msra.mxu0 %v585
  %770 = vmatmul.bf16.gmra.mxu0 %v240
  %v771 = vpop.f32.mrf.mxu0
  %v772 = vadd.f32 %v753, %v771
  %v773 = vpop.f32.mrf.mxu0
  %v774 = vadd.f32 %v755, %v773
  %775 = vmatmul.bf16.gmra.mxu0 %v249
  %v776 = vpop.f32.mrf.mxu0
  %v777 = vadd.f32 %v758, %v776
  %v778 = vpop.f32.mrf.mxu0
  %v779 = vadd.f32 %v760, %v778
  %780 = vdwg.mxu0
  %781 = vmatpush.bf16.msra.mxu0 %v600
  %782 = vmatpush.bf16.msra.mxu0 %v599
  %783 = vmatpush.bf16.msra.mxu0 %v598
  %784 = vmatpush.bf16.msra.mxu0 %v597
  %785 = vmatpush.bf16.msra.mxu0 %v596
  %786 = vmatpush.bf16.msra.mxu0 %v595
  %787 = vmatpush.bf16.msra.mxu0 %v594
  %788 = vmatpush.bf16.msra.mxu0 %v593
  %789 = vmatmul.bf16.gmra.mxu0 %v241
  %v790 = vpop.f32.mrf.mxu0
  %v791 = vadd.f32 %v772, %v790
  %v792 = vpop.f32.mrf.mxu0
  %v793 = vadd.f32 %v774, %v792
  %794 = vmatmul.bf16.gmra.mxu0 %v250
  %v795 = vpop.f32.mrf.mxu0
  %v796 = vadd.f32 %v777, %v795
  %v797 = vpop.f32.mrf.mxu0
  %v798 = vadd.f32 %v779, %v797
  %799 = vdwg.mxu0
  %800 = vmatpush.bf16.msra.mxu0 %v608
  %801 = vmatpush.bf16.msra.mxu0 %v607
  %802 = vmatpush.bf16.msra.mxu0 %v606
  %803 = vmatpush.bf16.msra.mxu0 %v605
  %804 = vmatpush.bf16.msra.mxu0 %v604
  %805 = vmatpush.bf16.msra.mxu0 %v603
  %806 = vmatpush.bf16.msra.mxu0 %v602
  %807 = vmatpush.bf16.msra.mxu0 %v601
  %808 = vmatmul.bf16.gmra.mxu0 %v242
  %v809 = vpop.f32.mrf.mxu0
  %v810 = vadd.f32 %v791, %v809
  %v811 = vpop.f32.mrf.mxu0
  %v812 = vadd.f32 %v793, %v811
  %813 = vmatmul.bf16.gmra.mxu0 %v251
  %v814 = vpop.f32.mrf.mxu0
  %v815 = vadd.f32 %v796, %v814
  %v816 = vpop.f32.mrf.mxu0
  %v817 = vadd.f32 %v798, %v816
  %818 = vdwg.mxu0
  %819 = vmatpush.bf16.msra.mxu0 %v616
  %820 = vmatpush.bf16.msra.mxu0 %v615
  %821 = vmatpush.bf16.msra.mxu0 %v614
  %822 = vmatpush.bf16.msra.mxu0 %v613
  %823 = vmatpush.bf16.msra.mxu0 %v612
  %824 = vmatpush.bf16.msra.mxu0 %v611
  %825 = vmatpush.bf16.msra.mxu0 %v610
  %826 = vmatpush.bf16.msra.mxu0 %v609
  %827 = vmatmul.bf16.gmra.mxu0 %v243
  %v828 = vpop.f32.mrf.mxu0
  %v829 = vadd.f32 %v810, %v828
  %v830 = vpop.f32.mrf.mxu0
  %v831 = vadd.f32 %v812, %v830
  %832 = vmatmul.bf16.gmra.mxu0 %v252
  %v833 = vpop.f32.mrf.mxu0
  %v834 = vadd.f32 %v815, %v833
  %v835 = vpop.f32.mrf.mxu0
  %v836 = vadd.f32 %v817, %v835
  %837 = vdwg.mxu0
  %838 = vmatpush.bf16.msra.mxu0 %v624
  %839 = vmatpush.bf16.msra.mxu0 %v623
  %840 = vmatpush.bf16.msra.mxu0 %v622
  %841 = vmatpush.bf16.msra.mxu0 %v621
  %842 = vmatpush.bf16.msra.mxu0 %v620
  %843 = vmatpush.bf16.msra.mxu0 %v619
  %844 = vmatpush.bf16.msra.mxu0 %v618
  %845 = vmatpush.bf16.msra.mxu0 %v617
  %846 = vmatmul.bf16.gmra.mxu0 %v244
  %v847 = vpop.f32.mrf.mxu0
  %v848 = vadd.f32 %v829, %v847
  %v849 = vpop.f32.mrf.mxu0
  %v850 = vadd.f32 %v831, %v849
  %851 = vmatmul.bf16.gmra.mxu0 %v253
  %v852 = vpop.f32.mrf.mxu0
  %v853 = vadd.f32 %v834, %v852
  %v854 = vpop.f32.mrf.mxu0
  %v855 = vadd.f32 %v836, %v854
  %856 = vdwg.mxu0
  %857 = vmatpush.bf16.msra.mxu0 %v632
  %858 = vmatpush.bf16.msra.mxu0 %v631
  %859 = vmatpush.bf16.msra.mxu0 %v630
  %860 = vmatpush.bf16.msra.mxu0 %v629
  %861 = vmatpush.bf16.msra.mxu0 %v628
  %862 = vmatpush.bf16.msra.mxu0 %v627
  %863 = vmatpush.bf16.msra.mxu0 %v626
  %864 = vmatpush.bf16.msra.mxu0 %v625
  %865 = vmatmul.bf16.gmra.mxu0 %v245
  %v866 = vpop.f32.mrf.mxu0
  %v867 = vadd.f32 %v848, %v866
  %v868 = vpop.f32.mrf.mxu0
  %v869 = vadd.f32 %v850, %v868
  %870 = vmatmul.bf16.gmra.mxu0 %v254
  %v871 = vpop.f32.mrf.mxu0
  %v872 = vadd.f32 %v853, %v871
  %v873 = vpop.f32.mrf.mxu0
  %v874 = vadd.f32 %v855, %v873
  %875 = vdwg.mxu0
  %v876 = vld [vmem:[%s2] sm:$0x1]
  %v878 = vperm.slane %v876, 0
  %v880 = vmul.f32 %v867, %v878
  %v881 = vmul.f32 %v869, %v878
  %v882 = vmul.f32 %v872, %v878
  %v883 = vmul.f32 %v874, %v878
  %v884 = vld [vmem:[%s3] sm:$0x1]
  %v886 = vperm.slane %v884, 0
  %v888 = vadd.f32 %v880, %v886
  %v889 = vadd.f32 %v881, %v886
  %v890 = vadd.f32 %v882, %v886
  %v891 = vadd.f32 %v883, %v886
  %v892 = vmax.f32 %v888, 0.0
  %v893 = vmax.f32 %v889, 0.0
  %v894 = vmax.f32 %v890, 0.0
  %v895 = vmax.f32 %v891, 0.0
  %v896 = vpack.c.bf16 %v892, %v892
  %v897 = vpack.c.bf16 %v893, %v893
  %v898 = vpack.c.bf16 %v894, %v894
  %v899 = vpack.c.bf16 %v895, %v895
  %900 = vst [vmem:[%s4] sm:$0xf] %v896
  %901 = vst [vmem:[%s4 + $0x4] sm:$0xf] %v897
  %902 = vst [vmem:[%s4 + $0x8] sm:$0xf] %v898
  %903 = vst [vmem:[%s4 + $0xc] sm:$0xf] %v899
  // Predicated region
  $region18: #{_lambda_.31} parent=0 // pred_check
    _
  $region19: #{_lambda_.31} parent=0 // pred_check_branch
    %905 = sbr.rel (0) target = $region21
  $region20: #{_lambda_.31} parent=0 // pred_region
    _
  $region21: #{_lambda_.31} parent=0 // pred_fallthru
    _
  // Predicated region
  $region22: #{_lambda_.31} parent=0 // pred_check
    _
  $region23: #{_lambda_.31} parent=0 // pred_check_branch
    %907 = sbr.rel (0) target = $region25
  $region24: #{_lambda_.31} parent=0 // pred_region
    _
  $region25: #{_lambda_.31} parent=0 // pred_fallthru
    _

// kernel: _lambda_.36
$region0: #{_lambda_.36}
  #allocation0 [shape = 'u32[]', space=smem, size = 0x4, offset = 0x4, fixed_abs, tag = 'smem constant byte address 0x4 - core index']
  #allocation1 [shape = 'u32[72,128]{1,0:T(1,128)}', space=vmem, size = 0x9000, scoped, tag = 'internal scratch']
  %s0 = inlined_call_operand.vmem [shape: bf16[16,256], index: 0, kind: input, shape index: {}]
  %s1 = inlined_call_operand.vmem [shape: bf16[256,512], index: 1, kind: input, shape index: {}]
  %s2 = inlined_call_operand.vmem [shape: f32[1,512], index: 2, kind: input, shape index: {}]
  %s3 = inlined_call_operand.vmem [shape: f32[1,512], index: 3, kind: input, shape index: {}]
  %s4 = inlined_call_operand.vmem [shape: bf16[16,512], index: 4, kind: output, shape index: {}]
  %s5 = sld [smem:[#allocation0]]
  $region26: #{_lambda_.36} parent=0
    _
  %s7 = ssub.s32 1, %s5
  %s8 = scalar_select 0, %s7, %s5
  // Predicated region
  $region2: #{_lambda_.36} parent=0 // pred_check
    _
  $region3: #{_lambda_.36} parent=0 // pred_check_branch
    %10 = sbr.rel (0) target = $region5
  $region4: #{_lambda_.36} parent=0 // pred_region
    _
  $region5: #{_lambda_.36} parent=0 // pred_fallthru
    _
  // Predicated region
  $region6: #{_lambda_.36} parent=0 // pred_check
    _
  $region7: #{_lambda_.36} parent=0 // pred_check_branch
    %12 = sbr.rel (0) target = $region9
  $region8: #{_lambda_.36} parent=0 // pred_region
    _
  $region9: #{_lambda_.36} parent=0 // pred_fallthru
    _
  // Predicated region
  $region10: #{_lambda_.36} parent=0 // pred_check
    _
  $region11: #{_lambda_.36} parent=0 // pred_check_branch
    %14 = sbr.rel (0) target = $region13
  $region12: #{_lambda_.36} parent=0 // pred_region
    _
  $region13: #{_lambda_.36} parent=0 // pred_fallthru
    _
  // Predicated region
  $region14: #{_lambda_.36} parent=0 // pred_check
    _
  $region15: #{_lambda_.36} parent=0 // pred_check_branch
    %16 = sbr.rel (0) target = $region17
  $region16: #{_lambda_.36} parent=0 // pred_region
    _
  $region17: #{_lambda_.36} parent=0 // pred_fallthru
    _
  %v17 = vld [vmem:[%s0] sm:$0xff]
  %v18 = vld [vmem:[%s0 + $0x8] sm:$0xff]
  %v19 = vld [vmem:[%s1] sm:$0xff]
  %v20 = vld [vmem:[%s1 + $0x8] sm:$0xff]
  %v21 = vld [vmem:[%s1 + $0x10] sm:$0xff]
  %v22 = vld [vmem:[%s1 + $0x18] sm:$0xff]
  %v23 = vld [vmem:[%s1 + $0x20] sm:$0xff]
  %v24 = vld [vmem:[%s1 + $0x28] sm:$0xff]
  %v25 = vld [vmem:[%s1 + $0x30] sm:$0xff]
  %v26 = vld [vmem:[%s1 + $0x38] sm:$0xff]
  %v27 = vld [vmem:[%s1 + $0x40] sm:$0xff]
  %v28 = vld [vmem:[%s1 + $0x48] sm:$0xff]
  %v29 = vld [vmem:[%s1 + $0x50] sm:$0xff]
  %v30 = vld [vmem:[%s1 + $0x58] sm:$0xff]
  %v31 = vld [vmem:[%s1 + $0x60] sm:$0xff]
  %v32 = vld [vmem:[%s1 + $0x68] sm:$0xff]
  %v33 = vld [vmem:[%s1 + $0x70] sm:$0xff]
  %v34 = vld [vmem:[%s1 + $0x78] sm:$0xff]
  %v35 = vld [vmem:[%s1 + $0x80] sm:$0xff]
  %v36 = vld [vmem:[%s1 + $0x88] sm:$0xff]
  %v37 = vld [vmem:[%s1 + $0x90] sm:$0xff]
  %v38 = vld [vmem:[%s1 + $0x98] sm:$0xff]
  %v39 = vld [vmem:[%s1 + $0xa0] sm:$0xff]
  %v40 = vld [vmem:[%s1 + $0xa8] sm:$0xff]
  %v41 = vld [vmem:[%s1 + $0xb0] sm:$0xff]
  %v42 = vld [vmem:[%s1 + $0xb8] sm:$0xff]
  %v43 = vld [vmem:[%s1 + $0xc0] sm:$0xff]
  %v44 = vld [vmem:[%s1 + $0xc8] sm:$0xff]
  %v45 = vld [vmem:[%s1 + $0xd0] sm:$0xff]
  %v46 = vld [vmem:[%s1 + $0xd8] sm:$0xff]
  %v47 = vld [vmem:[%s1 + $0xe0] sm:$0xff]
  %v48 = vld [vmem:[%s1 + $0xe8] sm:$0xff]
  %v49 = vld [vmem:[%s1 + $0xf0] sm:$0xff]
  %v50 = vld [vmem:[%s1 + $0xf8] sm:$0xff]
  %v51 = vld [vmem:[%s1 + $0x100] sm:$0xff]
  %v52 = vld [vmem:[%s1 + $0x108] sm:$0xff]
  %v53 = vld [vmem:[%s1 + $0x110] sm:$0xff]
  %v54 = vld [vmem:[%s1 + $0x118] sm:$0xff]
  %v55 = vld [vmem:[%s1 + $0x120] sm:$0xff]
  %v56 = vld [vmem:[%s1 + $0x128] sm:$0xff]
  %v57 = vld [vmem:[%s1 + $0x130] sm:$0xff]
  %v58 = vld [vmem:[%s1 + $0x138] sm:$0xff]
  %v59 = vld [vmem:[%s1 + $0x140] sm:$0xff]
  %v60 = vld [vmem:[%s1 + $0x148] sm:$0xff]
  %v61 = vld [vmem:[%s1 + $0x150] sm:$0xff]
  %v62 = vld [vmem:[%s1 + $0x158] sm:$0xff]
  %v63 = vld [vmem:[%s1 + $0x160] sm:$0xff]
  %v64 = vld [vmem:[%s1 + $0x168] sm:$0xff]
  %v65 = vld [vmem:[%s1 + $0x170] sm:$0xff]
  %v66 = vld [vmem:[%s1 + $0x178] sm:$0xff]
  %v67 = vld [vmem:[%s1 + $0x180] sm:$0xff]
  %v68 = vld [vmem:[%s1 + $0x188] sm:$0xff]
  %v69 = vld [vmem:[%s1 + $0x190] sm:$0xff]
  %v70 = vld [vmem:[%s1 + $0x198] sm:$0xff]
  %v71 = vld [vmem:[%s1 + $0x1a0] sm:$0xff]
  %v72 = vld [vmem:[%s1 + $0x1a8] sm:$0xff]
  %v73 = vld [vmem:[%s1 + $0x1b0] sm:$0xff]
  %v74 = vld [vmem:[%s1 + $0x1b8] sm:$0xff]
  %v75 = vld [vmem:[%s1 + $0x1c0] sm:$0xff]
  %v76 = vld [vmem:[%s1 + $0x1c8] sm:$0xff]
  %v77 = vld [vmem:[%s1 + $0x1d0] sm:$0xff]
  %v78 = vld [vmem:[%s1 + $0x1d8] sm:$0xff]
  %v79 = vld [vmem:[%s1 + $0x1e0] sm:$0xff]
  %v80 = vld [vmem:[%s1 + $0x1e8] sm:$0xff]
  %v81 = vld [vmem:[%s1 + $0x1f0] sm:$0xff]
  %v82 = vld [vmem:[%s1 + $0x1f8] sm:$0xff]
  %v85 = vunpack.c.l.b16 %v17
  %v86 = vunpack.c.h.b16 %v17
  %v87 = vunpack.c.l.b16 %v18
  %v88 = vunpack.c.h.b16 %v18
  %v89 = vpack.c.b16 %v87, %v85
  %v90 = vpack.c.b16 %v88, %v86
  %v157 = vunpack.c.l.b16 %v19
  %v158 = vunpack.c.h.b16 %v19
  %v159 = vunpack.c.l.b16 %v20
  %v160 = vunpack.c.h.b16 %v20
  %v161 = vunpack.c.l.b16 %v21
  %v162 = vunpack.c.h.b16 %v21
  %v163 = vunpack.c.l.b16 %v22
  %v164 = vunpack.c.h.b16 %v22
  %v165 = vunpack.c.l.b16 %v23
  %v166 = vunpack.c.h.b16 %v23
  %v167 = vunpack.c.l.b16 %v24
  %v168 = vunpack.c.h.b16 %v24
  %v169 = vunpack.c.l.b16 %v25
  %v170 = vunpack.c.h.b16 %v25
  %v171 = vunpack.c.l.b16 %v26
  %v172 = vunpack.c.h.b16 %v26
  %v173 = vunpack.c.l.b16 %v27
  %v174 = vunpack.c.h.b16 %v27
  %v175 = vunpack.c.l.b16 %v28
  %v176 = vunpack.c.h.b16 %v28
  %v177 = vunpack.c.l.b16 %v29
  %v178 = vunpack.c.h.b16 %v29
  %v179 = vunpack.c.l.b16 %v30
  %v180 = vunpack.c.h.b16 %v30
  %v181 = vunpack.c.l.b16 %v31
  %v182 = vunpack.c.h.b16 %v31
  %v183 = vunpack.c.l.b16 %v32
  %v184 = vunpack.c.h.b16 %v32
  %v185 = vunpack.c.l.b16 %v33
  %v186 = vunpack.c.h.b16 %v33
  %v187 = vunpack.c.l.b16 %v34
  %v188 = vunpack.c.h.b16 %v34
  %v189 = vunpack.c.l.b16 %v35
  %v190 = vunpack.c.h.b16 %v35
  %v191 = vunpack.c.l.b16 %v36
  %v192 = vunpack.c.h.b16 %v36
  %v193 = vunpack.c.l.b16 %v37
  %v194 = vunpack.c.h.b16 %v37
  %v195 = vunpack.c.l.b16 %v38
  %v196 = vunpack.c.h.b16 %v38
  %v197 = vunpack.c.l.b16 %v39
  %v198 = vunpack.c.h.b16 %v39
  %v199 = vunpack.c.l.b16 %v40
  %v200 = vunpack.c.h.b16 %v40
  %v201 = vunpack.c.l.b16 %v41
  %v202 = vunpack.c.h.b16 %v41
  %v203 = vunpack.c.l.b16 %v42
  %v204 = vunpack.c.h.b16 %v42
  %v205 = vunpack.c.l.b16 %v43
  %v206 = vunpack.c.h.b16 %v43
  %v207 = vunpack.c.l.b16 %v44
  %v208 = vunpack.c.h.b16 %v44
  %v209 = vunpack.c.l.b16 %v45
  %v210 = vunpack.c.h.b16 %v45
  %v211 = vunpack.c.l.b16 %v46
  %v212 = vunpack.c.h.b16 %v46
  %v213 = vunpack.c.l.b16 %v47
  %v214 = vunpack.c.h.b16 %v47
  %v215 = vunpack.c.l.b16 %v48
  %v216 = vunpack.c.h.b16 %v48
  %v217 = vunpack.c.l.b16 %v49
  %v218 = vunpack.c.h.b16 %v49
  %v219 = vunpack.c.l.b16 %v50
  %v220 = vunpack.c.h.b16 %v50
  %v221 = vunpack.c.l.b16 %v51
  %v222 = vunpack.c.h.b16 %v51
  %v223 = vunpack.c.l.b16 %v52
  %v224 = vunpack.c.h.b16 %v52
  %v225 = vunpack.c.l.b16 %v53
  %v226 = vunpack.c.h.b16 %v53
  %v227 = vunpack.c.l.b16 %v54
  %v228 = vunpack.c.h.b16 %v54
  %v229 = vunpack.c.l.b16 %v55
  %v230 = vunpack.c.h.b16 %v55
  %v231 = vunpack.c.l.b16 %v56
  %v232 = vunpack.c.h.b16 %v56
  %v233 = vunpack.c.l.b16 %v57
  %v234 = vunpack.c.h.b16 %v57
  %v235 = vunpack.c.l.b16 %v58
  %v236 = vunpack.c.h.b16 %v58
  %v237 = vunpack.c.l.b16 %v59
  %v238 = vunpack.c.h.b16 %v59
  %v239 = vunpack.c.l.b16 %v60
  %v240 = vunpack.c.h.b16 %v60
  %v241 = vunpack.c.l.b16 %v61
  %v242 = vunpack.c.h.b16 %v61
  %v243 = vunpack.c.l.b16 %v62
  %v244 = vunpack.c.h.b16 %v62
  %v245 = vunpack.c.l.b16 %v63
  %v246 = vunpack.c.h.b16 %v63
  %v247 = vunpack.c.l.b16 %v64
  %v248 = vunpack.c.h.b16 %v64
  %v249 = vunpack.c.l.b16 %v65
  %v250 = vunpack.c.h.b16 %v65
  %v251 = vunpack.c.l.b16 %v66
  %v252 = vunpack.c.h.b16 %v66
  %v253 = vunpack.c.l.b16 %v67
  %v254 = vunpack.c.h.b16 %v67
  %v255 = vunpack.c.l.b16 %v68
  %v256 = vunpack.c.h.b16 %v68
  %v257 = vunpack.c.l.b16 %v69
  %v258 = vunpack.c.h.b16 %v69
  %v259 = vunpack.c.l.b16 %v70
  %v260 = vunpack.c.h.b16 %v70
  %v261 = vunpack.c.l.b16 %v71
  %v262 = vunpack.c.h.b16 %v71
  %v263 = vunpack.c.l.b16 %v72
  %v264 = vunpack.c.h.b16 %v72
  %v265 = vunpack.c.l.b16 %v73
  %v266 = vunpack.c.h.b16 %v73
  %v267 = vunpack.c.l.b16 %v74
  %v268 = vunpack.c.h.b16 %v74
  %v269 = vunpack.c.l.b16 %v75
  %v270 = vunpack.c.h.b16 %v75
  %v271 = vunpack.c.l.b16 %v76
  %v272 = vunpack.c.h.b16 %v76
  %v273 = vunpack.c.l.b16 %v77
  %v274 = vunpack.c.h.b16 %v77
  %v275 = vunpack.c.l.b16 %v78
  %v276 = vunpack.c.h.b16 %v78
  %v277 = vunpack.c.l.b16 %v79
  %v278 = vunpack.c.h.b16 %v79
  %v279 = vunpack.c.l.b16 %v80
  %v280 = vunpack.c.h.b16 %v80
  %v281 = vunpack.c.l.b16 %v81
  %v282 = vunpack.c.h.b16 %v81
  %v283 = vunpack.c.l.b16 %v82
  %v284 = vunpack.c.h.b16 %v82
  %v285 = vpack.c.b16 %v161, %v157
  %v286 = vpack.c.b16 %v162, %v158
  %v287 = vpack.c.b16 %v163, %v159
  %v288 = vpack.c.b16 %v164, %v160
  %v289 = vpack.c.b16 %v169, %v165
  %v290 = vpack.c.b16 %v170, %v166
  %v291 = vpack.c.b16 %v171, %v167
  %v292 = vpack.c.b16 %v172, %v168
  %v293 = vpack.c.b16 %v177, %v173
  %v294 = vpack.c.b16 %v178, %v174
  %v295 = vpack.c.b16 %v179, %v175
  %v296 = vpack.c.b16 %v180, %v176
  %v297 = vpack.c.b16 %v185, %v181
  %v298 = vpack.c.b16 %v186, %v182
  %v299 = vpack.c.b16 %v187, %v183
  %v300 = vpack.c.b16 %v188, %v184
  %v301 = vpack.c.b16 %v193, %v189
  %v302 = vpack.c.b16 %v194, %v190
  %v303 = vpack.c.b16 %v195, %v191
  %v304 = vpack.c.b16 %v196, %v192
  %v305 = vpack.c.b16 %v201, %v197
  %v306 = vpack.c.b16 %v202, %v198
  %v307 = vpack.c.b16 %v203, %v199
  %v308 = vpack.c.b16 %v204, %v200
  %v309 = vpack.c.b16 %v209, %v205
  %v310 = vpack.c.b16 %v210, %v206
  %v311 = vpack.c.b16 %v211, %v207
  %v312 = vpack.c.b16 %v212, %v208
  %v313 = vpack.c.b16 %v217, %v213
  %v314 = vpack.c.b16 %v218, %v214
  %v315 = vpack.c.b16 %v219, %v215
  %v316 = vpack.c.b16 %v220, %v216
  %v317 = vpack.c.b16 %v225, %v221
  %v318 = vpack.c.b16 %v226, %v222
  %v319 = vpack.c.b16 %v227, %v223
  %v320 = vpack.c.b16 %v228, %v224
  %v321 = vpack.c.b16 %v233, %v229
  %v322 = vpack.c.b16 %v234, %v230
  %v323 = vpack.c.b16 %v235, %v231
  %v324 = vpack.c.b16 %v236, %v232
  %v325 = vpack.c.b16 %v241, %v237
  %v326 = vpack.c.b16 %v242, %v238
  %v327 = vpack.c.b16 %v243, %v239
  %v328 = vpack.c.b16 %v244, %v240
  %v329 = vpack.c.b16 %v249, %v245
  %v330 = vpack.c.b16 %v250, %v246
  %v331 = vpack.c.b16 %v251, %v247
  %v332 = vpack.c.b16 %v252, %v248
  %v333 = vpack.c.b16 %v257, %v253
  %v334 = vpack.c.b16 %v258, %v254
  %v335 = vpack.c.b16 %v259, %v255
  %v336 = vpack.c.b16 %v260, %v256
  %v337 = vpack.c.b16 %v265, %v261
  %v338 = vpack.c.b16 %v266, %v262
  %v339 = vpack.c.b16 %v267, %v263
  %v340 = vpack.c.b16 %v268, %v264
  %v341 = vpack.c.b16 %v273, %v269
  %v342 = vpack.c.b16 %v274, %v270
  %v343 = vpack.c.b16 %v275, %v271
  %v344 = vpack.c.b16 %v276, %v272
  %v345 = vpack.c.b16 %v281, %v277
  %v346 = vpack.c.b16 %v282, %v278
  %v347 = vpack.c.b16 %v283, %v279
  %v348 = vpack.c.b16 %v284, %v280
  %413 = vmatpush.bf16.msra.mxu0 %v313
  %414 = vmatpush.bf16.msra.mxu0 %v309
  %415 = vmatpush.bf16.msra.mxu0 %v305
  %416 = vmatpush.bf16.msra.mxu0 %v301
  %417 = vmatpush.bf16.msra.mxu0 %v297
  %418 = vmatpush.bf16.msra.mxu0 %v293
  %419 = vmatpush.bf16.msra.mxu0 %v289
  %420 = vmatpush.bf16.msra.mxu0 %v285
  %421 = vmatmul.bf16.gmra.mxu0 %v89
  %v422 = vpop.f32.mrf.mxu0
  %v423 = vadd.f32 0.0, %v422
  %v424 = vpop.f32.mrf.mxu0
  %v425 = vadd.f32 0.0, %v424
  %426 = vdwg.mxu0
  %427 = vmatpush.bf16.msra.mxu0 %v345
  %428 = vmatpush.bf16.msra.mxu0 %v341
  %429 = vmatpush.bf16.msra.mxu0 %v337
  %430 = vmatpush.bf16.msra.mxu0 %v333
  %431 = vmatpush.bf16.msra.mxu0 %v329
  %432 = vmatpush.bf16.msra.mxu0 %v325
  %433 = vmatpush.bf16.msra.mxu0 %v321
  %434 = vmatpush.bf16.msra.mxu0 %v317
  %435 = vmatmul.bf16.gmra.mxu0 %v90
  %v436 = vpop.f32.mrf.mxu0
  %v437 = vadd.f32 %v423, %v436
  %v438 = vpop.f32.mrf.mxu0
  %v439 = vadd.f32 %v425, %v438
  %440 = vdwg.mxu0
  %441 = vmatpush.bf16.msra.mxu0 %v314
  %442 = vmatpush.bf16.msra.mxu0 %v310
  %443 = vmatpush.bf16.msra.mxu0 %v306
  %444 = vmatpush.bf16.msra.mxu0 %v302
  %445 = vmatpush.bf16.msra.mxu0 %v298
  %446 = vmatpush.bf16.msra.mxu0 %v294
  %447 = vmatpush.bf16.msra.mxu0 %v290
  %448 = vmatpush.bf16.msra.mxu0 %v286
  %449 = vmatmul.bf16.gmra.mxu0 %v89
  %v450 = vpop.f32.mrf.mxu0
  %v451 = vadd.f32 0.0, %v450
  %v452 = vpop.f32.mrf.mxu0
  %v453 = vadd.f32 0.0, %v452
  %454 = vdwg.mxu0
  %455 = vmatpush.bf16.msra.mxu0 %v346
  %456 = vmatpush.bf16.msra.mxu0 %v342
  %457 = vmatpush.bf16.msra.mxu0 %v338
  %458 = vmatpush.bf16.msra.mxu0 %v334
  %459 = vmatpush.bf16.msra.mxu0 %v330
  %460 = vmatpush.bf16.msra.mxu0 %v326
  %461 = vmatpush.bf16.msra.mxu0 %v322
  %462 = vmatpush.bf16.msra.mxu0 %v318
  %463 = vmatmul.bf16.gmra.mxu0 %v90
  %v464 = vpop.f32.mrf.mxu0
  %v465 = vadd.f32 %v451, %v464
  %v466 = vpop.f32.mrf.mxu0
  %v467 = vadd.f32 %v453, %v466
  %468 = vdwg.mxu0
  %469 = vmatpush.bf16.msra.mxu0 %v315
  %470 = vmatpush.bf16.msra.mxu0 %v311
  %471 = vmatpush.bf16.msra.mxu0 %v307
  %472 = vmatpush.bf16.msra.mxu0 %v303
  %473 = vmatpush.bf16.msra.mxu0 %v299
  %474 = vmatpush.bf16.msra.mxu0 %v295
  %475 = vmatpush.bf16.msra.mxu0 %v291
  %476 = vmatpush.bf16.msra.mxu0 %v287
  %477 = vmatmul.bf16.gmra.mxu0 %v89
  %v478 = vpop.f32.mrf.mxu0
  %v479 = vadd.f32 0.0, %v478
  %v480 = vpop.f32.mrf.mxu0
  %v481 = vadd.f32 0.0, %v480
  %482 = vdwg.mxu0
  %483 = vmatpush.bf16.msra.mxu0 %v347
  %484 = vmatpush.bf16.msra.mxu0 %v343
  %485 = vmatpush.bf16.msra.mxu0 %v339
  %486 = vmatpush.bf16.msra.mxu0 %v335
  %487 = vmatpush.bf16.msra.mxu0 %v331
  %488 = vmatpush.bf16.msra.mxu0 %v327
  %489 = vmatpush.bf16.msra.mxu0 %v323
  %490 = vmatpush.bf16.msra.mxu0 %v319
  %491 = vmatmul.bf16.gmra.mxu0 %v90
  %v492 = vpop.f32.mrf.mxu0
  %v493 = vadd.f32 %v479, %v492
  %v494 = vpop.f32.mrf.mxu0
  %v495 = vadd.f32 %v481, %v494
  %496 = vdwg.mxu0
  %497 = vmatpush.bf16.msra.mxu0 %v316
  %498 = vmatpush.bf16.msra.mxu0 %v312
  %499 = vmatpush.bf16.msra.mxu0 %v308
  %500 = vmatpush.bf16.msra.mxu0 %v304
  %501 = vmatpush.bf16.msra.mxu0 %v300
  %502 = vmatpush.bf16.msra.mxu0 %v296
  %503 = vmatpush.bf16.msra.mxu0 %v292
  %504 = vmatpush.bf16.msra.mxu0 %v288
  %505 = vmatmul.bf16.gmra.mxu0 %v89
  %v506 = vpop.f32.mrf.mxu0
  %v507 = vadd.f32 0.0, %v506
  %v508 = vpop.f32.mrf.mxu0
  %v509 = vadd.f32 0.0, %v508
  %510 = vdwg.mxu0
  %511 = vmatpush.bf16.msra.mxu0 %v348
  %512 = vmatpush.bf16.msra.mxu0 %v344
  %513 = vmatpush.bf16.msra.mxu0 %v340
  %514 = vmatpush.bf16.msra.mxu0 %v336
  %515 = vmatpush.bf16.msra.mxu0 %v332
  %516 = vmatpush.bf16.msra.mxu0 %v328
  %517 = vmatpush.bf16.msra.mxu0 %v324
  %518 = vmatpush.bf16.msra.mxu0 %v320
  %519 = vmatmul.bf16.gmra.mxu0 %v90
  %v520 = vpop.f32.mrf.mxu0
  %v521 = vadd.f32 %v507, %v520
  %v522 = vpop.f32.mrf.mxu0
  %v523 = vadd.f32 %v509, %v522
  %524 = vdwg.mxu0
  %v525 = vld [vmem:[%s2] sm:$0xf]
  %v527 = vperm.slane %v525, 0
  %v528 = vperm.slane %v525, 1
  %v529 = vperm.slane %v525, 2
  %v530 = vperm.slane %v525, 3
  %v535 = vmul.f32 %v437, %v527
  %v536 = vmul.f32 %v465, %v528
  %v537 = vmul.f32 %v493, %v529
  %v538 = vmul.f32 %v521, %v530
  %v539 = vmul.f32 %v439, %v527
  %v540 = vmul.f32 %v467, %v528
  %v541 = vmul.f32 %v495, %v529
  %v542 = vmul.f32 %v523, %v530
  %v543 = vld [vmem:[%s3] sm:$0xf]
  %v545 = vperm.slane %v543, 0
  %v546 = vperm.slane %v543, 1
  %v547 = vperm.slane %v543, 2
  %v548 = vperm.slane %v543, 3
  %v553 = vadd.f32 %v535, %v545
  %v554 = vadd.f32 %v536, %v546
  %v555 = vadd.f32 %v537, %v547
  %v556 = vadd.f32 %v538, %v548
  %v557 = vadd.f32 %v539, %v545
  %v558 = vadd.f32 %v540, %v546
  %v559 = vadd.f32 %v541, %v547
  %v560 = vadd.f32 %v542, %v548
  %v561 = vpack.c.bf16 %v554, %v553
  %v562 = vpack.c.bf16 %v556, %v555
  %v563 = vpack.c.bf16 %v558, %v557
  %v564 = vpack.c.bf16 %v560, %v559
  %565 = vst [vmem:[%s4] sm:$0xff] %v561
  %566 = vst [vmem:[%s4 + $0x8] sm:$0xff] %v562
  %567 = vst [vmem:[%s4 + $0x10] sm:$0xff] %v563
  %568 = vst [vmem:[%s4 + $0x18] sm:$0xff] %v564
  // Predicated region
  $region18: #{_lambda_.36} parent=0 // pred_check
    _
  $region19: #{_lambda_.36} parent=0 // pred_check_branch
    %570 = sbr.rel (0) target = $region21
  $region20: #{_lambda_.36} parent=0 // pred_region
    _
  $region21: #{_lambda_.36} parent=0 // pred_fallthru
    _
  // Predicated region
  $region22: #{_lambda_.36} parent=0 // pred_check
    _
  $region23: #{_lambda_.36} parent=0 // pred_check_branch
    %572 = sbr.rel (0) target = $region25
  $region24: #{_lambda_.36} parent=0 // pred_region
    _
  $region25: #{_lambda_.36} parent=0 // pred_fallthru
    _

// kernel: _lambda_.37
$region0: #{_lambda_.37}
  #allocation0 [shape = 'u32[]', space=smem, size = 0x4, offset = 0x4, fixed_abs, tag = 'smem constant byte address 0x4 - core index']
  #allocation1 [shape = 'u32[72,128]{1,0:T(1,128)}', space=vmem, size = 0x9000, scoped, tag = 'internal scratch']
  %s0 = inlined_call_operand.vmem [shape: bf16[16,128], index: 0, kind: input, shape index: {}]
  %s1 = inlined_call_operand.vmem [shape: bf16[128,512], index: 1, kind: input, shape index: {}]
  %s2 = inlined_call_operand.vmem [shape: f32[1,512], index: 2, kind: input, shape index: {}]
  %s3 = inlined_call_operand.vmem [shape: f32[1,512], index: 3, kind: input, shape index: {}]
  %s4 = inlined_call_operand.vmem [shape: bf16[16,512], index: 4, kind: input, shape index: {}]
  %s5 = inlined_call_operand.vmem [shape: bf16[16,512], index: 5, kind: output, shape index: {}]
  %s6 = sld [smem:[#allocation0]]
  $region30: #{_lambda_.37} parent=0
    _
  %s8 = ssub.s32 1, %s6
  %s9 = scalar_select 0, %s8, %s6
  // Predicated region
  $region2: #{_lambda_.37} parent=0 // pred_check
    _
  $region3: #{_lambda_.37} parent=0 // pred_check_branch
    %11 = sbr.rel (0) target = $region5
  $region4: #{_lambda_.37} parent=0 // pred_region
    _
  $region5: #{_lambda_.37} parent=0 // pred_fallthru
    _
  // Predicated region
  $region6: #{_lambda_.37} parent=0 // pred_check
    _
  $region7: #{_lambda_.37} parent=0 // pred_check_branch
    %13 = sbr.rel (0) target = $region9
  $region8: #{_lambda_.37} parent=0 // pred_region
    _
  $region9: #{_lambda_.37} parent=0 // pred_fallthru
    _
  // Predicated region
  $region10: #{_lambda_.37} parent=0 // pred_check
    _
  $region11: #{_lambda_.37} parent=0 // pred_check_branch
    %15 = sbr.rel (0) target = $region13
  $region12: #{_lambda_.37} parent=0 // pred_region
    _
  $region13: #{_lambda_.37} parent=0 // pred_fallthru
    _
  // Predicated region
  $region14: #{_lambda_.37} parent=0 // pred_check
    _
  $region15: #{_lambda_.37} parent=0 // pred_check_branch
    %17 = sbr.rel (0) target = $region17
  $region16: #{_lambda_.37} parent=0 // pred_region
    _
  $region17: #{_lambda_.37} parent=0 // pred_fallthru
    _
  // Predicated region
  $region18: #{_lambda_.37} parent=0 // pred_check
    _
  $region19: #{_lambda_.37} parent=0 // pred_check_branch
    %19 = sbr.rel (0) target = $region21
  $region20: #{_lambda_.37} parent=0 // pred_region
    _
  $region21: #{_lambda_.37} parent=0 // pred_fallthru
    _
  %v20 = vld [vmem:[%s0] sm:$0xf]
  %v21 = vld [vmem:[%s0 + $0x4] sm:$0xf]
  %v22 = vld [vmem:[%s1] sm:$0xff]
  %v23 = vld [vmem:[%s1 + $0x8] sm:$0xff]
  %v24 = vld [vmem:[%s1 + $0x10] sm:$0xff]
  %v25 = vld [vmem:[%s1 + $0x18] sm:$0xff]
  %v26 = vld [vmem:[%s1 + $0x20] sm:$0xff]
  %v27 = vld [vmem:[%s1 + $0x28] sm:$0xff]
  %v28 = vld [vmem:[%s1 + $0x30] sm:$0xff]
  %v29 = vld [vmem:[%s1 + $0x38] sm:$0xff]
  %v30 = vld [vmem:[%s1 + $0x40] sm:$0xff]
  %v31 = vld [vmem:[%s1 + $0x48] sm:$0xff]
  %v32 = vld [vmem:[%s1 + $0x50] sm:$0xff]
  %v33 = vld [vmem:[%s1 + $0x58] sm:$0xff]
  %v34 = vld [vmem:[%s1 + $0x60] sm:$0xff]
  %v35 = vld [vmem:[%s1 + $0x68] sm:$0xff]
  %v36 = vld [vmem:[%s1 + $0x70] sm:$0xff]
  %v37 = vld [vmem:[%s1 + $0x78] sm:$0xff]
  %v38 = vld [vmem:[%s1 + $0x80] sm:$0xff]
  %v39 = vld [vmem:[%s1 + $0x88] sm:$0xff]
  %v40 = vld [vmem:[%s1 + $0x90] sm:$0xff]
  %v41 = vld [vmem:[%s1 + $0x98] sm:$0xff]
  %v42 = vld [vmem:[%s1 + $0xa0] sm:$0xff]
  %v43 = vld [vmem:[%s1 + $0xa8] sm:$0xff]
  %v44 = vld [vmem:[%s1 + $0xb0] sm:$0xff]
  %v45 = vld [vmem:[%s1 + $0xb8] sm:$0xff]
  %v46 = vld [vmem:[%s1 + $0xc0] sm:$0xff]
  %v47 = vld [vmem:[%s1 + $0xc8] sm:$0xff]
  %v48 = vld [vmem:[%s1 + $0xd0] sm:$0xff]
  %v49 = vld [vmem:[%s1 + $0xd8] sm:$0xff]
  %v50 = vld [vmem:[%s1 + $0xe0] sm:$0xff]
  %v51 = vld [vmem:[%s1 + $0xe8] sm:$0xff]
  %v52 = vld [vmem:[%s1 + $0xf0] sm:$0xff]
  %v53 = vld [vmem:[%s1 + $0xf8] sm:$0xff]
  %v56 = vunpack.c.l.b16 %v20
  %v57 = vunpack.c.l.b16 %v21
  %v58 = vpack.c.b16 %v57, %v56
  %v92 = vunpack.c.l.b16 %v22
  %v93 = vunpack.c.h.b16 %v22
  %v94 = vunpack.c.l.b16 %v23
  %v95 = vunpack.c.h.b16 %v23
  %v96 = vunpack.c.l.b16 %v24
  %v97 = vunpack.c.h.b16 %v24
  %v98 = vunpack.c.l.b16 %v25
  %v99 = vunpack.c.h.b16 %v25
  %v100 = vunpack.c.l.b16 %v26
  %v101 = vunpack.c.h.b16 %v26
  %v102 = vunpack.c.l.b16 %v27
  %v103 = vunpack.c.h.b16 %v27
  %v104 = vunpack.c.l.b16 %v28
  %v105 = vunpack.c.h.b16 %v28
  %v106 = vunpack.c.l.b16 %v29
  %v107 = vunpack.c.h.b16 %v29
  %v108 = vunpack.c.l.b16 %v30
  %v109 = vunpack.c.h.b16 %v30
  %v110 = vunpack.c.l.b16 %v31
  %v111 = vunpack.c.h.b16 %v31
  %v112 = vunpack.c.l.b16 %v32
  %v113 = vunpack.c.h.b16 %v32
  %v114 = vunpack.c.l.b16 %v33
  %v115 = vunpack.c.h.b16 %v33
  %v116 = vunpack.c.l.b16 %v34
  %v117 = vunpack.c.h.b16 %v34
  %v118 = vunpack.c.l.b16 %v35
  %v119 = vunpack.c.h.b16 %v35
  %v120 = vunpack.c.l.b16 %v36
  %v121 = vunpack.c.h.b16 %v36
  %v122 = vunpack.c.l.b16 %v37
  %v123 = vunpack.c.h.b16 %v37
  %v124 = vunpack.c.l.b16 %v38
  %v125 = vunpack.c.h.b16 %v38
  %v126 = vunpack.c.l.b16 %v39
  %v127 = vunpack.c.h.b16 %v39
  %v128 = vunpack.c.l.b16 %v40
  %v129 = vunpack.c.h.b16 %v40
  %v130 = vunpack.c.l.b16 %v41
  %v131 = vunpack.c.h.b16 %v41
  %v132 = vunpack.c.l.b16 %v42
  %v133 = vunpack.c.h.b16 %v42
  %v134 = vunpack.c.l.b16 %v43
  %v135 = vunpack.c.h.b16 %v43
  %v136 = vunpack.c.l.b16 %v44
  %v137 = vunpack.c.h.b16 %v44
  %v138 = vunpack.c.l.b16 %v45
  %v139 = vunpack.c.h.b16 %v45
  %v140 = vunpack.c.l.b16 %v46
  %v141 = vunpack.c.h.b16 %v46
  %v142 = vunpack.c.l.b16 %v47
  %v143 = vunpack.c.h.b16 %v47
  %v144 = vunpack.c.l.b16 %v48
  %v145 = vunpack.c.h.b16 %v48
  %v146 = vunpack.c.l.b16 %v49
  %v147 = vunpack.c.h.b16 %v49
  %v148 = vunpack.c.l.b16 %v50
  %v149 = vunpack.c.h.b16 %v50
  %v150 = vunpack.c.l.b16 %v51
  %v151 = vunpack.c.h.b16 %v51
  %v152 = vunpack.c.l.b16 %v52
  %v153 = vunpack.c.h.b16 %v52
  %v154 = vunpack.c.l.b16 %v53
  %v155 = vunpack.c.h.b16 %v53
  %v156 = vpack.c.b16 %v96, %v92
  %v157 = vpack.c.b16 %v97, %v93
  %v158 = vpack.c.b16 %v98, %v94
  %v159 = vpack.c.b16 %v99, %v95
  %v160 = vpack.c.b16 %v104, %v100
  %v161 = vpack.c.b16 %v105, %v101
  %v162 = vpack.c.b16 %v106, %v102
  %v163 = vpack.c.b16 %v107, %v103
  %v164 = vpack.c.b16 %v112, %v108
  %v165 = vpack.c.b16 %v113, %v109
  %v166 = vpack.c.b16 %v114, %v110
  %v167 = vpack.c.b16 %v115, %v111
  %v168 = vpack.c.b16 %v120, %v116
  %v169 = vpack.c.b16 %v121, %v117
  %v170 = vpack.c.b16 %v122, %v118
  %v171 = vpack.c.b16 %v123, %v119
  %v172 = vpack.c.b16 %v128, %v124
  %v173 = vpack.c.b16 %v129, %v125
  %v174 = vpack.c.b16 %v130, %v126
  %v175 = vpack.c.b16 %v131, %v127
  %v176 = vpack.c.b16 %v136, %v132
  %v177 = vpack.c.b16 %v137, %v133
  %v178 = vpack.c.b16 %v138, %v134
  %v179 = vpack.c.b16 %v139, %v135
  %v180 = vpack.c.b16 %v144, %v140
  %v181 = vpack.c.b16 %v145, %v141
  %v182 = vpack.c.b16 %v146, %v142
  %v183 = vpack.c.b16 %v147, %v143
  %v184 = vpack.c.b16 %v152, %v148
  %v185 = vpack.c.b16 %v153, %v149
  %v186 = vpack.c.b16 %v154, %v150
  %v187 = vpack.c.b16 %v155, %v151
  %220 = vmatpush.bf16.msra.mxu0 %v184
  %221 = vmatpush.bf16.msra.mxu0 %v180
  %222 = vmatpush.bf16.msra.mxu0 %v176
  %223 = vmatpush.bf16.msra.mxu0 %v172
  %224 = vmatpush.bf16.msra.mxu0 %v168
  %225 = vmatpush.bf16.msra.mxu0 %v164
  %226 = vmatpush.bf16.msra.mxu0 %v160
  %227 = vmatpush.bf16.msra.mxu0 %v156
  %228 = vmatmul.bf16.gmra.mxu0 %v58
  %v229 = vpop.f32.mrf.mxu0
  %v230 = vadd.f32 0.0, %v229
  %v231 = vpop.f32.mrf.mxu0
  %v232 = vadd.f32 0.0, %v231
  %233 = vdwg.mxu0
  %234 = vmatpush.bf16.msra.mxu0 %v185
  %235 = vmatpush.bf16.msra.mxu0 %v181
  %236 = vmatpush.bf16.msra.mxu0 %v177
  %237 = vmatpush.bf16.msra.mxu0 %v173
  %238 = vmatpush.bf16.msra.mxu0 %v169
  %239 = vmatpush.bf16.msra.mxu0 %v165
  %240 = vmatpush.bf16.msra.mxu0 %v161
  %241 = vmatpush.bf16.msra.mxu0 %v157
  %242 = vmatmul.bf16.gmra.mxu0 %v58
  %v243 = vpop.f32.mrf.mxu0
  %v244 = vadd.f32 0.0, %v243
  %v245 = vpop.f32.mrf.mxu0
  %v246 = vadd.f32 0.0, %v245
  %247 = vdwg.mxu0
  %248 = vmatpush.bf16.msra.mxu0 %v186
  %249 = vmatpush.bf16.msra.mxu0 %v182
  %250 = vmatpush.bf16.msra.mxu0 %v178
  %251 = vmatpush.bf16.msra.mxu0 %v174
  %252 = vmatpush.bf16.msra.mxu0 %v170
  %253 = vmatpush.bf16.msra.mxu0 %v166
  %254 = vmatpush.bf16.msra.mxu0 %v162
  %255 = vmatpush.bf16.msra.mxu0 %v158
  %256 = vmatmul.bf16.gmra.mxu0 %v58
  %v257 = vpop.f32.mrf.mxu0
  %v258 = vadd.f32 0.0, %v257
  %v259 = vpop.f32.mrf.mxu0
  %v260 = vadd.f32 0.0, %v259
  %261 = vdwg.mxu0
  %262 = vmatpush.bf16.msra.mxu0 %v187
  %263 = vmatpush.bf16.msra.mxu0 %v183
  %264 = vmatpush.bf16.msra.mxu0 %v179
  %265 = vmatpush.bf16.msra.mxu0 %v175
  %266 = vmatpush.bf16.msra.mxu0 %v171
  %267 = vmatpush.bf16.msra.mxu0 %v167
  %268 = vmatpush.bf16.msra.mxu0 %v163
  %269 = vmatpush.bf16.msra.mxu0 %v159
  %270 = vmatmul.bf16.gmra.mxu0 %v58
  %v271 = vpop.f32.mrf.mxu0
  %v272 = vadd.f32 0.0, %v271
  %v273 = vpop.f32.mrf.mxu0
  %v274 = vadd.f32 0.0, %v273
  %275 = vdwg.mxu0
  %v276 = vld [vmem:[%s2] sm:$0xf]
  %v278 = vperm.slane %v276, 0
  %v279 = vperm.slane %v276, 1
  %v280 = vperm.slane %v276, 2
  %v281 = vperm.slane %v276, 3
  %v286 = vmul.f32 %v230, %v278
  %v287 = vmul.f32 %v244, %v279
  %v288 = vmul.f32 %v258, %v280
  %v289 = vmul.f32 %v272, %v281
  %v290 = vmul.f32 %v232, %v278
  %v291 = vmul.f32 %v246, %v279
  %v292 = vmul.f32 %v260, %v280
  %v293 = vmul.f32 %v274, %v281
  %v294 = vld [vmem:[%s3] sm:$0xf]
  %v296 = vperm.slane %v294, 0
  %v297 = vperm.slane %v294, 1
  %v298 = vperm.slane %v294, 2
  %v299 = vperm.slane %v294, 3
  %v304 = vadd.f32 %v286, %v296
  %v305 = vadd.f32 %v287, %v297
  %v306 = vadd.f32 %v288, %v298
  %v307 = vadd.f32 %v289, %v299
  %v308 = vadd.f32 %v290, %v296
  %v309 = vadd.f32 %v291, %v297
  %v310 = vadd.f32 %v292, %v298
  %v311 = vadd.f32 %v293, %v299
  %v312 = vld [vmem:[%s4] sm:$0xff]
  %v313 = vld [vmem:[%s4 + $0x8] sm:$0xff]
  %v314 = vld [vmem:[%s4 + $0x10] sm:$0xff]
  %v315 = vld [vmem:[%s4 + $0x18] sm:$0xff]
  %v316 = vunpack.c.l.bf16 %v312
  %v317 = vunpack.c.h.bf16 %v312
  %v318 = vunpack.c.l.bf16 %v313
  %v319 = vunpack.c.h.bf16 %v313
  %v320 = vunpack.c.l.bf16 %v314
  %v321 = vunpack.c.h.bf16 %v314
  %v322 = vunpack.c.l.bf16 %v315
  %v323 = vunpack.c.h.bf16 %v315
  %v324 = vadd.f32 %v304, %v316
  %v325 = vadd.f32 %v305, %v317
  %v326 = vadd.f32 %v306, %v318
  %v327 = vadd.f32 %v307, %v319
  %v328 = vadd.f32 %v308, %v320
  %v329 = vadd.f32 %v309, %v321
  %v330 = vadd.f32 %v310, %v322
  %v331 = vadd.f32 %v311, %v323
  %v332 = vmax.f32 %v324, 0.0
  %v333 = vmax.f32 %v325, 0.0
  %v334 = vmax.f32 %v326, 0.0
  %v335 = vmax.f32 %v327, 0.0
  %v336 = vmax.f32 %v328, 0.0
  %v337 = vmax.f32 %v329, 0.0
  %v338 = vmax.f32 %v330, 0.0
  %v339 = vmax.f32 %v331, 0.0
  %v340 = vpack.c.bf16 %v333, %v332
  %v341 = vpack.c.bf16 %v335, %v334
  %v342 = vpack.c.bf16 %v337, %v336
  %v343 = vpack.c.bf16 %v339, %v338
  %344 = vst [vmem:[%s5] sm:$0xff] %v340
  %345 = vst [vmem:[%s5 + $0x8] sm:$0xff] %v341
  %346 = vst [vmem:[%s5 + $0x10] sm:$0xff] %v342
  %347 = vst [vmem:[%s5 + $0x18] sm:$0xff] %v343
  // Predicated region
  $region22: #{_lambda_.37} parent=0 // pred_check
    _
  $region23: #{_lambda_.37} parent=0 // pred_check_branch
    %349 = sbr.rel (0) target = $region25
  $region24: #{_lambda_.37} parent=0 // pred_region
    _
  $region25: #{_lambda_.37} parent=0 // pred_fallthru
    _
  // Predicated region
  $region26: #{_lambda_.37} parent=0 // pred_check
    _
  $region27: #{_lambda_.37} parent=0 // pred_check_branch
    %351 = sbr.rel (0) target = $region29
  $region28: #{_lambda_.37} parent=0 // pred_region
    _
  $region29: #{_lambda_.37} parent=0 // pred_fallthru
    _

// kernel: _lambda_.35
$region0: #{_lambda_.35}
  #allocation0 [shape = 'u32[]', space=smem, size = 0x4, offset = 0x4, fixed_abs, tag = 'smem constant byte address 0x4 - core index']
  #allocation1 [shape = 'u32[72,128]{1,0:T(1,128)}', space=vmem, size = 0x9000, scoped, tag = 'internal scratch']
  %s0 = inlined_call_operand.vmem [shape: bf16[16,1152], index: 0, kind: input, shape index: {}]
  %s1 = inlined_call_operand.vmem [shape: bf16[1152,128], index: 1, kind: input, shape index: {}]
  %s2 = inlined_call_operand.vmem [shape: f32[1,128], index: 2, kind: input, shape index: {}]
  %s3 = inlined_call_operand.vmem [shape: f32[1,128], index: 3, kind: input, shape index: {}]
  %s4 = inlined_call_operand.vmem [shape: bf16[16,128], index: 4, kind: output, shape index: {}]
  %s5 = sld [smem:[#allocation0]]
  $region26: #{_lambda_.35} parent=0
    _
  %s7 = ssub.s32 1, %s5
  %s8 = scalar_select 0, %s7, %s5
  // Predicated region
  $region2: #{_lambda_.35} parent=0 // pred_check
    _
  $region3: #{_lambda_.35} parent=0 // pred_check_branch
    %10 = sbr.rel (0) target = $region5
  $region4: #{_lambda_.35} parent=0 // pred_region
    _
  $region5: #{_lambda_.35} parent=0 // pred_fallthru
    _
  // Predicated region
  $region6: #{_lambda_.35} parent=0 // pred_check
    _
  $region7: #{_lambda_.35} parent=0 // pred_check_branch
    %12 = sbr.rel (0) target = $region9
  $region8: #{_lambda_.35} parent=0 // pred_region
    _
  $region9: #{_lambda_.35} parent=0 // pred_fallthru
    _
  // Predicated region
  $region10: #{_lambda_.35} parent=0 // pred_check
    _
  $region11: #{_lambda_.35} parent=0 // pred_check_branch
    %14 = sbr.rel (0) target = $region13
  $region12: #{_lambda_.35} parent=0 // pred_region
    _
  $region13: #{_lambda_.35} parent=0 // pred_fallthru
    _
  // Predicated region
  $region14: #{_lambda_.35} parent=0 // pred_check
    _
  $region15: #{_lambda_.35} parent=0 // pred_check_branch
    %16 = sbr.rel (0) target = $region17
  $region16: #{_lambda_.35} parent=0 // pred_region
    _
  $region17: #{_lambda_.35} parent=0 // pred_fallthru
    _
  %v17 = vld [vmem:[%s0] sm:$0xff]
  %v18 = vld [vmem:[%s0 + $0x8] sm:$0xff]
  %v19 = vld [vmem:[%s0 + $0x10] sm:$0xff]
  %v20 = vld [vmem:[%s0 + $0x18] sm:$0xff]
  %v21 = vld [vmem:[%s0 + $0x20] sm:$0xf]
  %v22 = vld [vmem:[%s0 + $0x24] sm:$0xff]
  %v23 = vld [vmem:[%s0 + $0x2c] sm:$0xff]
  %v24 = vld [vmem:[%s0 + $0x34] sm:$0xff]
  %v25 = vld [vmem:[%s0 + $0x3c] sm:$0xff]
  %v26 = vld [vmem:[%s0 + $0x44] sm:$0xf]
  %v27 = vld [vmem:[%s1] sm:$0xf]
  %v28 = vld [vmem:[%s1 + $0x4] sm:$0xf]
  %v29 = vld [vmem:[%s1 + $0x8] sm:$0xf]
  %v30 = vld [vmem:[%s1 + $0xc] sm:$0xf]
  %v31 = vld [vmem:[%s1 + $0x10] sm:$0xf]
  %v32 = vld [vmem:[%s1 + $0x14] sm:$0xf]
  %v33 = vld [vmem:[%s1 + $0x18] sm:$0xf]
  %v34 = vld [vmem:[%s1 + $0x1c] sm:$0xf]
  %v35 = vld [vmem:[%s1 + $0x20] sm:$0xf]
  %v36 = vld [vmem:[%s1 + $0x24] sm:$0xf]
  %v37 = vld [vmem:[%s1 + $0x28] sm:$0xf]
  %v38 = vld [vmem:[%s1 + $0x2c] sm:$0xf]
  %v39 = vld [vmem:[%s1 + $0x30] sm:$0xf]
  %v40 = vld [vmem:[%s1 + $0x34] sm:$0xf]
  %v41 = vld [vmem:[%s1 + $0x38] sm:$0xf]
  %v42 = vld [vmem:[%s1 + $0x3c] sm:$0xf]
  %v43 = vld [vmem:[%s1 + $0x40] sm:$0xf]
  %v44 = vld [vmem:[%s1 + $0x44] sm:$0xf]
  %v45 = vld [vmem:[%s1 + $0x48] sm:$0xf]
  %v46 = vld [vmem:[%s1 + $0x4c] sm:$0xf]
  %v47 = vld [vmem:[%s1 + $0x50] sm:$0xf]
  %v48 = vld [vmem:[%s1 + $0x54] sm:$0xf]
  %v49 = vld [vmem:[%s1 + $0x58] sm:$0xf]
  %v50 = vld [vmem:[%s1 + $0x5c] sm:$0xf]
  %v51 = vld [vmem:[%s1 + $0x60] sm:$0xf]
  %v52 = vld [vmem:[%s1 + $0x64] sm:$0xf]
  %v53 = vld [vmem:[%s1 + $0x68] sm:$0xf]
  %v54 = vld [vmem:[%s1 + $0x6c] sm:$0xf]
  %v55 = vld [vmem:[%s1 + $0x70] sm:$0xf]
  %v56 = vld [vmem:[%s1 + $0x74] sm:$0xf]
  %v57 = vld [vmem:[%s1 + $0x78] sm:$0xf]
  %v58 = vld [vmem:[%s1 + $0x7c] sm:$0xf]
  %v59 = vld [vmem:[%s1 + $0x80] sm:$0xf]
  %v60 = vld [vmem:[%s1 + $0x84] sm:$0xf]
  %v61 = vld [vmem:[%s1 + $0x88] sm:$0xf]
  %v62 = vld [vmem:[%s1 + $0x8c] sm:$0xf]
  %v63 = vld [vmem:[%s1 + $0x90] sm:$0xf]
  %v64 = vld [vmem:[%s1 + $0x94] sm:$0xf]
  %v65 = vld [vmem:[%s1 + $0x98] sm:$0xf]
  %v66 = vld [vmem:[%s1 + $0x9c] sm:$0xf]
  %v67 = vld [vmem:[%s1 + $0xa0] sm:$0xf]
  %v68 = vld [vmem:[%s1 + $0xa4] sm:$0xf]
  %v69 = vld [vmem:[%s1 + $0xa8] sm:$0xf]
  %v70 = vld [vmem:[%s1 + $0xac] sm:$0xf]
  %v71 = vld [vmem:[%s1 + $0xb0] sm:$0xf]
  %v72 = vld [vmem:[%s1 + $0xb4] sm:$0xf]
  %v73 = vld [vmem:[%s1 + $0xb8] sm:$0xf]
  %v74 = vld [vmem:[%s1 + $0xbc] sm:$0xf]
  %v75 = vld [vmem:[%s1 + $0xc0] sm:$0xf]
  %v76 = vld [vmem:[%s1 + $0xc4] sm:$0xf]
  %v77 = vld [vmem:[%s1 + $0xc8] sm:$0xf]
  %v78 = vld [vmem:[%s1 + $0xcc] sm:$0xf]
  %v79 = vld [vmem:[%s1 + $0xd0] sm:$0xf]
  %v80 = vld [vmem:[%s1 + $0xd4] sm:$0xf]
  %v81 = vld [vmem:[%s1 + $0xd8] sm:$0xf]
  %v82 = vld [vmem:[%s1 + $0xdc] sm:$0xf]
  %v83 = vld [vmem:[%s1 + $0xe0] sm:$0xf]
  %v84 = vld [vmem:[%s1 + $0xe4] sm:$0xf]
  %v85 = vld [vmem:[%s1 + $0xe8] sm:$0xf]
  %v86 = vld [vmem:[%s1 + $0xec] sm:$0xf]
  %v87 = vld [vmem:[%s1 + $0xf0] sm:$0xf]
  %v88 = vld [vmem:[%s1 + $0xf4] sm:$0xf]
  %v89 = vld [vmem:[%s1 + $0xf8] sm:$0xf]
  %v90 = vld [vmem:[%s1 + $0xfc] sm:$0xf]
  %v91 = vld [vmem:[%s1 + $0x100] sm:$0xf]
  %v92 = vld [vmem:[%s1 + $0x104] sm:$0xf]
  %v93 = vld [vmem:[%s1 + $0x108] sm:$0xf]
  %v94 = vld [vmem:[%s1 + $0x10c] sm:$0xf]
  %v95 = vld [vmem:[%s1 + $0x110] sm:$0xf]
  %v96 = vld [vmem:[%s1 + $0x114] sm:$0xf]
  %v97 = vld [vmem:[%s1 + $0x118] sm:$0xf]
  %v98 = vld [vmem:[%s1 + $0x11c] sm:$0xf]
  %v99 = vld [vmem:[%s1 + $0x120] sm:$0xf]
  %v100 = vld [vmem:[%s1 + $0x124] sm:$0xf]
  %v101 = vld [vmem:[%s1 + $0x128] sm:$0xf]
  %v102 = vld [vmem:[%s1 + $0x12c] sm:$0xf]
  %v103 = vld [vmem:[%s1 + $0x130] sm:$0xf]
  %v104 = vld [vmem:[%s1 + $0x134] sm:$0xf]
  %v105 = vld [vmem:[%s1 + $0x138] sm:$0xf]
  %v106 = vld [vmem:[%s1 + $0x13c] sm:$0xf]
  %v107 = vld [vmem:[%s1 + $0x140] sm:$0xf]
  %v108 = vld [vmem:[%s1 + $0x144] sm:$0xf]
  %v109 = vld [vmem:[%s1 + $0x148] sm:$0xf]
  %v110 = vld [vmem:[%s1 + $0x14c] sm:$0xf]
  %v111 = vld [vmem:[%s1 + $0x150] sm:$0xf]
  %v112 = vld [vmem:[%s1 + $0x154] sm:$0xf]
  %v113 = vld [vmem:[%s1 + $0x158] sm:$0xf]
  %v114 = vld [vmem:[%s1 + $0x15c] sm:$0xf]
  %v115 = vld [vmem:[%s1 + $0x160] sm:$0xf]
  %v116 = vld [vmem:[%s1 + $0x164] sm:$0xf]
  %v117 = vld [vmem:[%s1 + $0x168] sm:$0xf]
  %v118 = vld [vmem:[%s1 + $0x16c] sm:$0xf]
  %v119 = vld [vmem:[%s1 + $0x170] sm:$0xf]
  %v120 = vld [vmem:[%s1 + $0x174] sm:$0xf]
  %v121 = vld [vmem:[%s1 + $0x178] sm:$0xf]
  %v122 = vld [vmem:[%s1 + $0x17c] sm:$0xf]
  %v123 = vld [vmem:[%s1 + $0x180] sm:$0xf]
  %v124 = vld [vmem:[%s1 + $0x184] sm:$0xf]
  %v125 = vld [vmem:[%s1 + $0x188] sm:$0xf]
  %v126 = vld [vmem:[%s1 + $0x18c] sm:$0xf]
  %v127 = vld [vmem:[%s1 + $0x190] sm:$0xf]
  %v128 = vld [vmem:[%s1 + $0x194] sm:$0xf]
  %v129 = vld [vmem:[%s1 + $0x198] sm:$0xf]
  %v130 = vld [vmem:[%s1 + $0x19c] sm:$0xf]
  %v131 = vld [vmem:[%s1 + $0x1a0] sm:$0xf]
  %v132 = vld [vmem:[%s1 + $0x1a4] sm:$0xf]
  %v133 = vld [vmem:[%s1 + $0x1a8] sm:$0xf]
  %v134 = vld [vmem:[%s1 + $0x1ac] sm:$0xf]
  %v135 = vld [vmem:[%s1 + $0x1b0] sm:$0xf]
  %v136 = vld [vmem:[%s1 + $0x1b4] sm:$0xf]
  %v137 = vld [vmem:[%s1 + $0x1b8] sm:$0xf]
  %v138 = vld [vmem:[%s1 + $0x1bc] sm:$0xf]
  %v139 = vld [vmem:[%s1 + $0x1c0] sm:$0xf]
  %v140 = vld [vmem:[%s1 + $0x1c4] sm:$0xf]
  %v141 = vld [vmem:[%s1 + $0x1c8] sm:$0xf]
  %v142 = vld [vmem:[%s1 + $0x1cc] sm:$0xf]
  %v143 = vld [vmem:[%s1 + $0x1d0] sm:$0xf]
  %v144 = vld [vmem:[%s1 + $0x1d4] sm:$0xf]
  %v145 = vld [vmem:[%s1 + $0x1d8] sm:$0xf]
  %v146 = vld [vmem:[%s1 + $0x1dc] sm:$0xf]
  %v147 = vld [vmem:[%s1 + $0x1e0] sm:$0xf]
  %v148 = vld [vmem:[%s1 + $0x1e4] sm:$0xf]
  %v149 = vld [vmem:[%s1 + $0x1e8] sm:$0xf]
  %v150 = vld [vmem:[%s1 + $0x1ec] sm:$0xf]
  %v151 = vld [vmem:[%s1 + $0x1f0] sm:$0xf]
  %v152 = vld [vmem:[%s1 + $0x1f4] sm:$0xf]
  %v153 = vld [vmem:[%s1 + $0x1f8] sm:$0xf]
  %v154 = vld [vmem:[%s1 + $0x1fc] sm:$0xf]
  %v155 = vld [vmem:[%s1 + $0x200] sm:$0xf]
  %v156 = vld [vmem:[%s1 + $0x204] sm:$0xf]
  %v157 = vld [vmem:[%s1 + $0x208] sm:$0xf]
  %v158 = vld [vmem:[%s1 + $0x20c] sm:$0xf]
  %v159 = vld [vmem:[%s1 + $0x210] sm:$0xf]
  %v160 = vld [vmem:[%s1 + $0x214] sm:$0xf]
  %v161 = vld [vmem:[%s1 + $0x218] sm:$0xf]
  %v162 = vld [vmem:[%s1 + $0x21c] sm:$0xf]
  %v163 = vld [vmem:[%s1 + $0x220] sm:$0xf]
  %v164 = vld [vmem:[%s1 + $0x224] sm:$0xf]
  %v165 = vld [vmem:[%s1 + $0x228] sm:$0xf]
  %v166 = vld [vmem:[%s1 + $0x22c] sm:$0xf]
  %v167 = vld [vmem:[%s1 + $0x230] sm:$0xf]
  %v168 = vld [vmem:[%s1 + $0x234] sm:$0xf]
  %v169 = vld [vmem:[%s1 + $0x238] sm:$0xf]
  %v170 = vld [vmem:[%s1 + $0x23c] sm:$0xf]
  %v181 = vunpack.c.l.b16 %v17
  %v182 = vunpack.c.h.b16 %v17
  %v183 = vunpack.c.l.b16 %v18
  %v184 = vunpack.c.h.b16 %v18
  %v185 = vunpack.c.l.b16 %v19
  %v186 = vunpack.c.h.b16 %v19
  %v187 = vunpack.c.l.b16 %v20
  %v188 = vunpack.c.h.b16 %v20
  %v189 = vunpack.c.l.b16 %v21
  %v190 = vunpack.c.l.b16 %v22
  %v191 = vunpack.c.h.b16 %v22
  %v192 = vunpack.c.l.b16 %v23
  %v193 = vunpack.c.h.b16 %v23
  %v194 = vunpack.c.l.b16 %v24
  %v195 = vunpack.c.h.b16 %v24
  %v196 = vunpack.c.l.b16 %v25
  %v197 = vunpack.c.h.b16 %v25
  %v198 = vunpack.c.l.b16 %v26
  %v199 = vpack.c.b16 %v190, %v181
  %v200 = vpack.c.b16 %v191, %v182
  %v201 = vpack.c.b16 %v192, %v183
  %v202 = vpack.c.b16 %v193, %v184
  %v203 = vpack.c.b16 %v194, %v185
  %v204 = vpack.c.b16 %v195, %v186
  %v205 = vpack.c.b16 %v196, %v187
  %v206 = vpack.c.b16 %v197, %v188
  %v207 = vpack.c.b16 %v198, %v189
  %v361 = vunpack.c.l.b16 %v27
  %v362 = vunpack.c.l.b16 %v28
  %v363 = vunpack.c.l.b16 %v29
  %v364 = vunpack.c.l.b16 %v30
  %v365 = vunpack.c.l.b16 %v31
  %v366 = vunpack.c.l.b16 %v32
  %v367 = vunpack.c.l.b16 %v33
  %v368 = vunpack.c.l.b16 %v34
  %v369 = vunpack.c.l.b16 %v35
  %v370 = vunpack.c.l.b16 %v36
  %v371 = vunpack.c.l.b16 %v37
  %v372 = vunpack.c.l.b16 %v38
  %v373 = vunpack.c.l.b16 %v39
  %v374 = vunpack.c.l.b16 %v40
  %v375 = vunpack.c.l.b16 %v41
  %v376 = vunpack.c.l.b16 %v42
  %v377 = vunpack.c.l.b16 %v43
  %v378 = vunpack.c.l.b16 %v44
  %v379 = vunpack.c.l.b16 %v45
  %v380 = vunpack.c.l.b16 %v46
  %v381 = vunpack.c.l.b16 %v47
  %v382 = vunpack.c.l.b16 %v48
  %v383 = vunpack.c.l.b16 %v49
  %v384 = vunpack.c.l.b16 %v50
  %v385 = vunpack.c.l.b16 %v51
  %v386 = vunpack.c.l.b16 %v52
  %v387 = vunpack.c.l.b16 %v53
  %v388 = vunpack.c.l.b16 %v54
  %v389 = vunpack.c.l.b16 %v55
  %v390 = vunpack.c.l.b16 %v56
  %v391 = vunpack.c.l.b16 %v57
  %v392 = vunpack.c.l.b16 %v58
  %v393 = vunpack.c.l.b16 %v59
  %v394 = vunpack.c.l.b16 %v60
  %v395 = vunpack.c.l.b16 %v61
  %v396 = vunpack.c.l.b16 %v62
  %v397 = vunpack.c.l.b16 %v63
  %v398 = vunpack.c.l.b16 %v64
  %v399 = vunpack.c.l.b16 %v65
  %v400 = vunpack.c.l.b16 %v66
  %v401 = vunpack.c.l.b16 %v67
  %v402 = vunpack.c.l.b16 %v68
  %v403 = vunpack.c.l.b16 %v69
  %v404 = vunpack.c.l.b16 %v70
  %v405 = vunpack.c.l.b16 %v71
  %v406 = vunpack.c.l.b16 %v72
  %v407 = vunpack.c.l.b16 %v73
  %v408 = vunpack.c.l.b16 %v74
  %v409 = vunpack.c.l.b16 %v75
  %v410 = vunpack.c.l.b16 %v76
  %v411 = vunpack.c.l.b16 %v77
  %v412 = vunpack.c.l.b16 %v78
  %v413 = vunpack.c.l.b16 %v79
  %v414 = vunpack.c.l.b16 %v80
  %v415 = vunpack.c.l.b16 %v81
  %v416 = vunpack.c.l.b16 %v82
  %v417 = vunpack.c.l.b16 %v83
  %v418 = vunpack.c.l.b16 %v84
  %v419 = vunpack.c.l.b16 %v85
  %v420 = vunpack.c.l.b16 %v86
  %v421 = vunpack.c.l.b16 %v87
  %v422 = vunpack.c.l.b16 %v88
  %v423 = vunpack.c.l.b16 %v89
  %v424 = vunpack.c.l.b16 %v90
  %v425 = vunpack.c.l.b16 %v91
  %v426 = vunpack.c.l.b16 %v92
  %v427 = vunpack.c.l.b16 %v93
  %v428 = vunpack.c.l.b16 %v94
  %v429 = vunpack.c.l.b16 %v95
  %v430 = vunpack.c.l.b16 %v96
  %v431 = vunpack.c.l.b16 %v97
  %v432 = vunpack.c.l.b16 %v98
  %v433 = vunpack.c.l.b16 %v99
  %v434 = vunpack.c.l.b16 %v100
  %v435 = vunpack.c.l.b16 %v101
  %v436 = vunpack.c.l.b16 %v102
  %v437 = vunpack.c.l.b16 %v103
  %v438 = vunpack.c.l.b16 %v104
  %v439 = vunpack.c.l.b16 %v105
  %v440 = vunpack.c.l.b16 %v106
  %v441 = vunpack.c.l.b16 %v107
  %v442 = vunpack.c.l.b16 %v108
  %v443 = vunpack.c.l.b16 %v109
  %v444 = vunpack.c.l.b16 %v110
  %v445 = vunpack.c.l.b16 %v111
  %v446 = vunpack.c.l.b16 %v112
  %v447 = vunpack.c.l.b16 %v113
  %v448 = vunpack.c.l.b16 %v114
  %v449 = vunpack.c.l.b16 %v115
  %v450 = vunpack.c.l.b16 %v116
  %v451 = vunpack.c.l.b16 %v117
  %v452 = vunpack.c.l.b16 %v118
  %v453 = vunpack.c.l.b16 %v119
  %v454 = vunpack.c.l.b16 %v120
  %v455 = vunpack.c.l.b16 %v121
  %v456 = vunpack.c.l.b16 %v122
  %v457 = vunpack.c.l.b16 %v123
  %v458 = vunpack.c.l.b16 %v124
  %v459 = vunpack.c.l.b16 %v125
  %v460 = vunpack.c.l.b16 %v126
  %v461 = vunpack.c.l.b16 %v127
  %v462 = vunpack.c.l.b16 %v128
  %v463 = vunpack.c.l.b16 %v129
  %v464 = vunpack.c.l.b16 %v130
  %v465 = vunpack.c.l.b16 %v131
  %v466 = vunpack.c.l.b16 %v132
  %v467 = vunpack.c.l.b16 %v133
  %v468 = vunpack.c.l.b16 %v134
  %v469 = vunpack.c.l.b16 %v135
  %v470 = vunpack.c.l.b16 %v136
  %v471 = vunpack.c.l.b16 %v137
  %v472 = vunpack.c.l.b16 %v138
  %v473 = vunpack.c.l.b16 %v139
  %v474 = vunpack.c.l.b16 %v140
  %v475 = vunpack.c.l.b16 %v141
  %v476 = vunpack.c.l.b16 %v142
  %v477 = vunpack.c.l.b16 %v143
  %v478 = vunpack.c.l.b16 %v144
  %v479 = vunpack.c.l.b16 %v145
  %v480 = vunpack.c.l.b16 %v146
  %v481 = vunpack.c.l.b16 %v147
  %v482 = vunpack.c.l.b16 %v148
  %v483 = vunpack.c.l.b16 %v149
  %v484 = vunpack.c.l.b16 %v150
  %v485 = vunpack.c.l.b16 %v151
  %v486 = vunpack.c.l.b16 %v152
  %v487 = vunpack.c.l.b16 %v153
  %v488 = vunpack.c.l.b16 %v154
  %v489 = vunpack.c.l.b16 %v155
  %v490 = vunpack.c.l.b16 %v156
  %v491 = vunpack.c.l.b16 %v157
  %v492 = vunpack.c.l.b16 %v158
  %v493 = vunpack.c.l.b16 %v159
  %v494 = vunpack.c.l.b16 %v160
  %v495 = vunpack.c.l.b16 %v161
  %v496 = vunpack.c.l.b16 %v162
  %v497 = vunpack.c.l.b16 %v163
  %v498 = vunpack.c.l.b16 %v164
  %v499 = vunpack.c.l.b16 %v165
  %v500 = vunpack.c.l.b16 %v166
  %v501 = vunpack.c.l.b16 %v167
  %v502 = vunpack.c.l.b16 %v168
  %v503 = vunpack.c.l.b16 %v169
  %v504 = vunpack.c.l.b16 %v170
  %v505 = vpack.c.b16 %v362, %v361
  %v506 = vpack.c.b16 %v364, %v363
  %v507 = vpack.c.b16 %v366, %v365
  %v508 = vpack.c.b16 %v368, %v367
  %v509 = vpack.c.b16 %v370, %v369
  %v510 = vpack.c.b16 %v372, %v371
  %v511 = vpack.c.b16 %v374, %v373
  %v512 = vpack.c.b16 %v376, %v375
  %v513 = vpack.c.b16 %v378, %v377
  %v514 = vpack.c.b16 %v380, %v379
  %v515 = vpack.c.b16 %v382, %v381
  %v516 = vpack.c.b16 %v384, %v383
  %v517 = vpack.c.b16 %v386, %v385
  %v518 = vpack.c.b16 %v388, %v387
  %v519 = vpack.c.b16 %v390, %v389
  %v520 = vpack.c.b16 %v392, %v391
  %v521 = vpack.c.b16 %v394, %v393
  %v522 = vpack.c.b16 %v396, %v395
  %v523 = vpack.c.b16 %v398, %v397
  %v524 = vpack.c.b16 %v400, %v399
  %v525 = vpack.c.b16 %v402, %v401
  %v526 = vpack.c.b16 %v404, %v403
  %v527 = vpack.c.b16 %v406, %v405
  %v528 = vpack.c.b16 %v408, %v407
  %v529 = vpack.c.b16 %v410, %v409
  %v530 = vpack.c.b16 %v412, %v411
  %v531 = vpack.c.b16 %v414, %v413
  %v532 = vpack.c.b16 %v416, %v415
  %v533 = vpack.c.b16 %v418, %v417
  %v534 = vpack.c.b16 %v420, %v419
  %v535 = vpack.c.b16 %v422, %v421
  %v536 = vpack.c.b16 %v424, %v423
  %v537 = vpack.c.b16 %v426, %v425
  %v538 = vpack.c.b16 %v428, %v427
  %v539 = vpack.c.b16 %v430, %v429
  %v540 = vpack.c.b16 %v432, %v431
  %v541 = vpack.c.b16 %v434, %v433
  %v542 = vpack.c.b16 %v436, %v435
  %v543 = vpack.c.b16 %v438, %v437
  %v544 = vpack.c.b16 %v440, %v439
  %v545 = vpack.c.b16 %v442, %v441
  %v546 = vpack.c.b16 %v444, %v443
  %v547 = vpack.c.b16 %v446, %v445
  %v548 = vpack.c.b16 %v448, %v447
  %v549 = vpack.c.b16 %v450, %v449
  %v550 = vpack.c.b16 %v452, %v451
  %v551 = vpack.c.b16 %v454, %v453
  %v552 = vpack.c.b16 %v456, %v455
  %v553 = vpack.c.b16 %v458, %v457
  %v554 = vpack.c.b16 %v460, %v459
  %v555 = vpack.c.b16 %v462, %v461
  %v556 = vpack.c.b16 %v464, %v463
  %v557 = vpack.c.b16 %v466, %v465
  %v558 = vpack.c.b16 %v468, %v467
  %v559 = vpack.c.b16 %v470, %v469
  %v560 = vpack.c.b16 %v472, %v471
  %v561 = vpack.c.b16 %v474, %v473
  %v562 = vpack.c.b16 %v476, %v475
  %v563 = vpack.c.b16 %v478, %v477
  %v564 = vpack.c.b16 %v480, %v479
  %v565 = vpack.c.b16 %v482, %v481
  %v566 = vpack.c.b16 %v484, %v483
  %v567 = vpack.c.b16 %v486, %v485
  %v568 = vpack.c.b16 %v488, %v487
  %v569 = vpack.c.b16 %v490, %v489
  %v570 = vpack.c.b16 %v492, %v491
  %v571 = vpack.c.b16 %v494, %v493
  %v572 = vpack.c.b16 %v496, %v495
  %v573 = vpack.c.b16 %v498, %v497
  %v574 = vpack.c.b16 %v500, %v499
  %v575 = vpack.c.b16 %v502, %v501
  %v576 = vpack.c.b16 %v504, %v503
  %649 = vmatpush.bf16.msra.mxu0 %v512
  %650 = vmatpush.bf16.msra.mxu0 %v511
  %651 = vmatpush.bf16.msra.mxu0 %v510
  %652 = vmatpush.bf16.msra.mxu0 %v509
  %653 = vmatpush.bf16.msra.mxu0 %v508
  %654 = vmatpush.bf16.msra.mxu0 %v507
  %655 = vmatpush.bf16.msra.mxu0 %v506
  %656 = vmatpush.bf16.msra.mxu0 %v505
  %657 = vmatmul.bf16.gmra.mxu0 %v199
  %v658 = vpop.f32.mrf.mxu0
  %v659 = vadd.f32 0.0, %v658
  %v660 = vpop.f32.mrf.mxu0
  %v661 = vadd.f32 0.0, %v660
  %662 = vdwg.mxu0
  %663 = vmatpush.bf16.msra.mxu0 %v520
  %664 = vmatpush.bf16.msra.mxu0 %v519
  %665 = vmatpush.bf16.msra.mxu0 %v518
  %666 = vmatpush.bf16.msra.mxu0 %v517
  %667 = vmatpush.bf16.msra.mxu0 %v516
  %668 = vmatpush.bf16.msra.mxu0 %v515
  %669 = vmatpush.bf16.msra.mxu0 %v514
  %670 = vmatpush.bf16.msra.mxu0 %v513
  %671 = vmatmul.bf16.gmra.mxu0 %v200
  %v672 = vpop.f32.mrf.mxu0
  %v673 = vadd.f32 %v659, %v672
  %v674 = vpop.f32.mrf.mxu0
  %v675 = vadd.f32 %v661, %v674
  %676 = vdwg.mxu0
  %677 = vmatpush.bf16.msra.mxu0 %v528
  %678 = vmatpush.bf16.msra.mxu0 %v527
  %679 = vmatpush.bf16.msra.mxu0 %v526
  %680 = vmatpush.bf16.msra.mxu0 %v525
  %681 = vmatpush.bf16.msra.mxu0 %v524
  %682 = vmatpush.bf16.msra.mxu0 %v523
  %683 = vmatpush.bf16.msra.mxu0 %v522
  %684 = vmatpush.bf16.msra.mxu0 %v521
  %685 = vmatmul.bf16.gmra.mxu0 %v201
  %v686 = vpop.f32.mrf.mxu0
  %v687 = vadd.f32 %v673, %v686
  %v688 = vpop.f32.mrf.mxu0
  %v689 = vadd.f32 %v675, %v688
  %690 = vdwg.mxu0
  %691 = vmatpush.bf16.msra.mxu0 %v536
  %692 = vmatpush.bf16.msra.mxu0 %v535
  %693 = vmatpush.bf16.msra.mxu0 %v534
  %694 = vmatpush.bf16.msra.mxu0 %v533
  %695 = vmatpush.bf16.msra.mxu0 %v532
  %696 = vmatpush.bf16.msra.mxu0 %v531
  %697 = vmatpush.bf16.msra.mxu0 %v530
  %698 = vmatpush.bf16.msra.mxu0 %v529
  %699 = vmatmul.bf16.gmra.mxu0 %v202
  %v700 = vpop.f32.mrf.mxu0
  %v701 = vadd.f32 %v687, %v700
  %v702 = vpop.f32.mrf.mxu0
  %v703 = vadd.f32 %v689, %v702
  %704 = vdwg.mxu0
  %705 = vmatpush.bf16.msra.mxu0 %v544
  %706 = vmatpush.bf16.msra.mxu0 %v543
  %707 = vmatpush.bf16.msra.mxu0 %v542
  %708 = vmatpush.bf16.msra.mxu0 %v541
  %709 = vmatpush.bf16.msra.mxu0 %v540
  %710 = vmatpush.bf16.msra.mxu0 %v539
  %711 = vmatpush.bf16.msra.mxu0 %v538
  %712 = vmatpush.bf16.msra.mxu0 %v537
  %713 = vmatmul.bf16.gmra.mxu0 %v203
  %v714 = vpop.f32.mrf.mxu0
  %v715 = vadd.f32 %v701, %v714
  %v716 = vpop.f32.mrf.mxu0
  %v717 = vadd.f32 %v703, %v716
  %718 = vdwg.mxu0
  %719 = vmatpush.bf16.msra.mxu0 %v552
  %720 = vmatpush.bf16.msra.mxu0 %v551
  %721 = vmatpush.bf16.msra.mxu0 %v550
  %722 = vmatpush.bf16.msra.mxu0 %v549
  %723 = vmatpush.bf16.msra.mxu0 %v548
  %724 = vmatpush.bf16.msra.mxu0 %v547
  %725 = vmatpush.bf16.msra.mxu0 %v546
  %726 = vmatpush.bf16.msra.mxu0 %v545
  %727 = vmatmul.bf16.gmra.mxu0 %v204
  %v728 = vpop.f32.mrf.mxu0
  %v729 = vadd.f32 %v715, %v728
  %v730 = vpop.f32.mrf.mxu0
  %v731 = vadd.f32 %v717, %v730
  %732 = vdwg.mxu0
  %733 = vmatpush.bf16.msra.mxu0 %v560
  %734 = vmatpush.bf16.msra.mxu0 %v559
  %735 = vmatpush.bf16.msra.mxu0 %v558
  %736 = vmatpush.bf16.msra.mxu0 %v557
  %737 = vmatpush.bf16.msra.mxu0 %v556
  %738 = vmatpush.bf16.msra.mxu0 %v555
  %739 = vmatpush.bf16.msra.mxu0 %v554
  %740 = vmatpush.bf16.msra.mxu0 %v553
  %741 = vmatmul.bf16.gmra.mxu0 %v205
  %v742 = vpop.f32.mrf.mxu0
  %v743 = vadd.f32 %v729, %v742
  %v744 = vpop.f32.mrf.mxu0
  %v745 = vadd.f32 %v731, %v744
  %746 = vdwg.mxu0
  %747 = vmatpush.bf16.msra.mxu0 %v568
  %748 = vmatpush.bf16.msra.mxu0 %v567
  %749 = vmatpush.bf16.msra.mxu0 %v566
  %750 = vmatpush.bf16.msra.mxu0 %v565
  %751 = vmatpush.bf16.msra.mxu0 %v564
  %752 = vmatpush.bf16.msra.mxu0 %v563
  %753 = vmatpush.bf16.msra.mxu0 %v562
  %754 = vmatpush.bf16.msra.mxu0 %v561
  %755 = vmatmul.bf16.gmra.mxu0 %v206
  %v756 = vpop.f32.mrf.mxu0
  %v757 = vadd.f32 %v743, %v756
  %v758 = vpop.f32.mrf.mxu0
  %v759 = vadd.f32 %v745, %v758
  %760 = vdwg.mxu0
  %761 = vmatpush.bf16.msra.mxu0 %v576
  %762 = vmatpush.bf16.msra.mxu0 %v575
  %763 = vmatpush.bf16.msra.mxu0 %v574
  %764 = vmatpush.bf16.msra.mxu0 %v573
  %765 = vmatpush.bf16.msra.mxu0 %v572
  %766 = vmatpush.bf16.msra.mxu0 %v571
  %767 = vmatpush.bf16.msra.mxu0 %v570
  %768 = vmatpush.bf16.msra.mxu0 %v569
  %769 = vmatmul.bf16.gmra.mxu0 %v207
  %v770 = vpop.f32.mrf.mxu0
  %v771 = vadd.f32 %v757, %v770
  %v772 = vpop.f32.mrf.mxu0
  %v773 = vadd.f32 %v759, %v772
  %774 = vdwg.mxu0
  %v775 = vld [vmem:[%s2] sm:$0x1]
  %v777 = vperm.slane %v775, 0
  %v779 = vmul.f32 %v771, %v777
  %v780 = vmul.f32 %v773, %v777
  %v781 = vld [vmem:[%s3] sm:$0x1]
  %v783 = vperm.slane %v781, 0
  %v785 = vadd.f32 %v779, %v783
  %v786 = vadd.f32 %v780, %v783
  %v787 = vmax.f32 %v785, 0.0
  %v788 = vmax.f32 %v786, 0.0
  %v789 = vpack.c.bf16 %v787, %v787
  %v790 = vpack.c.bf16 %v788, %v788
  %791 = vst [vmem:[%s4] sm:$0xf] %v789
  %792 = vst [vmem:[%s4 + $0x4] sm:$0xf] %v790
  // Predicated region
  $region18: #{_lambda_.35} parent=0 // pred_check
    _
  $region19: #{_lambda_.35} parent=0 // pred_check_branch
    %794 = sbr.rel (0) target = $region21
  $region20: #{_lambda_.35} parent=0 // pred_region
    _
  $region21: #{_lambda_.35} parent=0 // pred_fallthru
    _
  // Predicated region
  $region22: #{_lambda_.35} parent=0 // pred_check
    _
  $region23: #{_lambda_.35} parent=0 // pred_check_branch
    %796 = sbr.rel (0) target = $region25
  $region24: #{_lambda_.35} parent=0 // pred_region
    _
  $region25: #{_lambda_.35} parent=0 // pred_fallthru
    _

</llo_original>
